<compile_context>
chip_gen: v7x
topology: tpu7x:2x2x1
jax: 0.10.0
libtpu: 0.0.40
codegen_flags: <defaults>
</compile_context>

<pallas_src>
import numpy as np

import jax
import jax.numpy as jnp
from jax.experimental import pallas as pl
from jax.experimental.pallas import tpu as pltpu


# ----------------------------------------------------------------------------
# Host-side (one-time, data-independent) weight preparation
# ----------------------------------------------------------------------------
def _conv_row_toeplitz(w_oihw, width):
    """PyTorch conv weight (Cout, Cin, 5, 5) -> (5, Cin, width, Cout*width).

    T[dy, ci, xin, co*width + xout] = w[co, ci, dy, xin - xout + 2]
    so that   out[y, co*width + xout] = sum_dy sum_ci  xpad_rows[y+dy] @ T[dy, ci]
    implements the 5x5 / pad=2 conv (x-padding absorbed into T, y-padding via
    zero rows of the padded input held in VMEM).
    """
    w = np.asarray(w_oihw, np.float32)
    cout, cin, k, _ = w.shape
    t = np.zeros((k, cin, width, cout * width), np.float32)
    for dy in range(k):
        for dx in range(k):
            wt = w[:, :, dy, dx].T                      # (Cin, Cout)
            for xout in range(width):
                xin = xout + dx - 2
                if 0 <= xin < width:
                    t[dy, :, xin, xout::width] = wt
    return t


def _pool_row_select(h):
    """(2, h//2, h): even/odd row selectors (left-multiply)."""
    p = np.zeros((2, h // 2, h), np.float32)
    for i in range(h // 2):
        p[0, i, 2 * i] = 1.0
        p[1, i, 2 * i + 1] = 1.0
    return p


def _pool_col_select(channels, width):
    """(2, channels*width, channels*(width//2)): even/odd lane compaction
    within per-channel lane blocks (right-multiply)."""
    half = width // 2
    p = np.zeros((2, channels * width, channels * half), np.float32)
    for c in range(channels):
        for j in range(half):
            p[0, c * width + 2 * j, c * half + j] = 1.0
            p[1, c * width + 2 * j + 1, c * half + j] = 1.0
    return p


def prepare_params(params, num_classes):
    """Convert PyTorch-layout params into the kernel's matrices (one-time)."""
    t1 = _conv_row_toeplitz(params["w1"], 28)                                 # (5,3,28,448)
    t2 = _conv_row_toeplitz(params["w2"], 14).reshape(5, 16 * 14, 32 * 14)    # (5,224,448)
    b1 = np.repeat(np.asarray(params["b1"], np.float32), 28)[None, :]         # (1,448)
    b2 = np.repeat(np.asarray(params["b2"], np.float32), 14)[None, :]         # (1,448)

    py1 = _pool_row_select(28)          # (2,14,28)
    px1 = _pool_col_select(16, 28)      # (2,448,224)
    py2 = _pool_row_select(14)          # (2,7,14)
    px2 = _pool_col_select(32, 14)      # (2,448,224)

    # fc1: PyTorch weight (128, 1568) with in-feature f = c*49 + y*7 + x (NCHW
    # flatten).  Re-index to the pooled-activation layout (y, c*7 + x, out).
    wfc1 = np.asarray(params["wfc1"], np.float32).reshape(128, 32, 7, 7)
    wfc1 = np.transpose(wfc1, (2, 1, 3, 0)).reshape(7, 32 * 7, 128)           # (7,224,128)
    bfc1 = np.asarray(params["bfc1"], np.float32)[None, :]                    # (1,128)

    # fc2: pad output dim to 128 lanes (lane-dense store), slice outside.
    wfc2 = np.zeros((128, 128), np.float32)
    wfc2[:, :num_classes] = np.asarray(params["wfc2"], np.float32).T
    bfc2 = np.zeros((1, 128), np.float32)
    bfc2[0, :num_classes] = np.asarray(params["bfc2"], np.float32)

    prep = dict(t1=t1, b1=b1, t2=t2, b2=b2, py1=py1, px1=px1, py2=py2, px2=px2,
                wfc1=wfc1, bfc1=bfc1, wfc2=wfc2, bfc2=bfc2)
    return {k: jnp.asarray(v) for k, v in prep.items()}


# ----------------------------------------------------------------------------
# Fused Pallas kernel: one grid step = one image, everything in VMEM
# ----------------------------------------------------------------------------
def _fused_cnn_kernel(x_ref, t1_ref, b1_ref, t2_ref, b2_ref,
                      py1_ref, px1_ref, py2_ref, px2_ref,
                      wfc1_ref, bfc1_ref, wfc2_ref, bfc2_ref,
                      out_ref,
                      xp1_ref, xp2_ref, p2_ref):
    f32 = jnp.float32

    # ---- stage 0: NCHW -> zero row-padded per-channel planes (VMEM only) ----
    xp1_ref[...] = jnp.zeros_like(xp1_ref)              # (3, 32, 28)
    for ci in range(3):
        xp1_ref[ci, 2:30, :] = x_ref[0, ci, :, :]

    # ---- conv1 (5x5, pad 2) + bias + ReLU: 15 row-Toeplitz MXU matmuls ------
    acc1 = jnp.zeros((28, 16 * 28), f32)
    for dy in range(5):
        for ci in range(3):
            acc1 = acc1 + jnp.dot(xp1_ref[ci, dy:dy + 28, :], t1_ref[dy, ci],
                                  preferred_element_type=f32)
    act1 = jnp.maximum(acc1 + b1_ref[...], 0.0)          # (28, 448) lanes = co*28+x

    # ---- maxpool 2x2: even/odd selection matmuls + elementwise max ----------
    rows1 = jnp.maximum(jnp.dot(py1_ref[0], act1, preferred_element_type=f32),
                        jnp.dot(py1_ref[1], act1, preferred_element_type=f32))
    pool1 = jnp.maximum(jnp.dot(rows1, px1_ref[0], preferred_element_type=f32),
                        jnp.dot(rows1, px1_ref[1], preferred_element_type=f32))
    # pool1: (14, 224) lanes = c*14+x

    # ---- conv2 input: zero row-padding held in VMEM scratch ------------------
    xp2_ref[...] = jnp.zeros_like(xp2_ref)               # (18, 224)
    xp2_ref[2:16, :] = pool1

    # ---- conv2 (5x5, pad 2) + bias + ReLU: 5 row-Toeplitz MXU matmuls --------
    acc2 = jnp.zeros((14, 32 * 14), f32)
    for dy in range(5):
        acc2 = acc2 + jnp.dot(xp2_ref[dy:dy + 14, :], t2_ref[dy],
                              preferred_element_type=f32)
    act2 = jnp.maximum(acc2 + b2_ref[...], 0.0)          # (14, 448) lanes = co*14+x

    # ---- maxpool 2x2 ---------------------------------------------------------
    rows2 = jnp.maximum(jnp.dot(py2_ref[0], act2, preferred_element_type=f32),
                        jnp.dot(py2_ref[1], act2, preferred_element_type=f32))
    pool2 = jnp.maximum(jnp.dot(rows2, px2_ref[0], preferred_element_type=f32),
                        jnp.dot(rows2, px2_ref[1], preferred_element_type=f32))
    p2_ref[...] = pool2                                  # (7, 224) lanes = c*7+x

    # ---- fc1 + ReLU (weights pre-permuted -> no activation relayout) --------
    h = jnp.zeros((1, 128), f32)
    for y in range(7):
        h = h + jnp.dot(p2_ref[y:y + 1, :], wfc1_ref[y], preferred_element_type=f32)
    h = jnp.maximum(h + bfc1_ref[...], 0.0)              # (1, 128)

    # ---- fc2 (128-lane padded output; sliced to num_classes outside) --------
    out_ref[0] = jnp.dot(h, wfc2_ref[...], preferred_element_type=f32) + bfc2_ref[...]


def cnn_forward(x, prep, *, num_classes):
    B = x.shape[0]

    def full(shape):
        return pl.BlockSpec(shape, lambda i, _n=len(shape): (0,) * _n)

    out3 = pl.pallas_call(
        _fused_cnn_kernel,
        out_shape=jax.ShapeDtypeStruct((B, 1, 128), jnp.float32),
        grid=(B,),
        in_specs=[
            pl.BlockSpec((1, 3, 28, 28), lambda i: (i, 0, 0, 0)),   # x (per image)
            full((5, 3, 28, 448)),    # t1
            full((1, 448)),           # b1 (repeated per x)
            full((5, 224, 448)),      # t2
            full((1, 448)),           # b2
            full((2, 14, 28)),        # py1 even/odd
            full((2, 448, 224)),      # px1 even/odd
            full((2, 7, 14)),         # py2
            full((2, 448, 224)),      # px2
            full((7, 224, 128)),      # fc1 weights (pre-permuted)
            full((1, 128)),           # fc1 bias
            full((128, 128)),         # fc2 weights (padded to 128 outputs)
            full((1, 128)),           # fc2 bias (padded)
        ],
        out_specs=pl.BlockSpec((1, 1, 128), lambda i: (i, 0, 0)),
        scratch_shapes=[
            pltpu.VMEM((3, 32, 28), jnp.float32),   # row-padded conv1 input planes
            pltpu.VMEM((18, 224), jnp.float32),     # row-padded conv2 input
            pltpu.VMEM((7, 224), jnp.float32),      # pooled features for fc1
        ],
        compiler_params=pltpu.CompilerParams(
            dimension_semantics=("parallel",),       # batch rows split across cores
            vmem_limit_bytes=32 * 1024 * 1024,
        ),
    )(x, prep["t1"], prep["b1"], prep["t2"], prep["b2"],
      prep["py1"], prep["px1"], prep["py2"], prep["px2"],
      prep["wfc1"], prep["bfc1"], prep["wfc2"], prep["bfc2"])

    return out3.reshape(B, 128)[:, :num_classes]


# ----------------------------------------------------------------------------
# Plain-JAX reference (PyTorch semantics) + param init in PyTorch layouts
# ----------------------------------------------------------------------------
def cnn_reference(x, params):
    hp = jax.lax.Precision.HIGHEST
    y = jax.lax.conv_general_dilated(
        x, params["w1"], window_strides=(1, 1), padding=((2, 2), (2, 2)),
        dimension_numbers=("NCHW", "OIHW", "NCHW"), precision=hp)
    y = jax.nn.relu(y + params["b1"][None, :, None, None])
    y = jax.lax.reduce_window(y, -jnp.inf, jax.lax.max, (1, 1, 2, 2), (1, 1, 2, 2), "VALID")
    y = jax.lax.conv_general_dilated(
        y, params["w2"], window_strides=(1, 1), padding=((2, 2), (2, 2)),
        dimension_numbers=("NCHW", "OIHW", "NCHW"), precision=hp)
    y = jax.nn.relu(y + params["b2"][None, :, None, None])
    y = jax.lax.reduce_window(y, -jnp.inf, jax.lax.max, (1, 1, 2, 2), (1, 1, 2, 2), "VALID")
    y = y.reshape(x.shape[0], 32 * 7 * 7)
    y = jax.nn.relu(jnp.dot(y, params["wfc1"].T, precision=hp) + params["bfc1"])
    return jnp.dot(y, params["wfc2"].T, precision=hp) + params["bfc2"]


def init_params(key, num_classes):
    """Params generated directly in PyTorch layouts (Conv: OIHW, Linear: (out,in))."""
    ks = jax.random.split(key, 8)
    s = 0.05
    return {
        "w1": s * jax.random.normal(ks[0], (16, 3, 5, 5), jnp.float32),
        "b1": s * jax.random.normal(ks[1], (16,), jnp.float32),
        "w2": s * jax.random.normal(ks[2], (32, 16, 5, 5), jnp.float32),
        "b2": s * jax.random.normal(ks[3], (32,), jnp.float32),
        "wfc1": s * jax.random.normal(ks[4], (128, 32 * 7 * 7), jnp.float32),
        "bfc1": s * jax.random.normal(ks[5], (128,), jnp.float32),
        "wfc2": s * jax.random.normal(ks[6], (num_classes, 128), jnp.float32),
        "bfc2": s * jax.random.normal(ks[7], (num_classes,), jnp.float32),
    }


if __name__ == "__main__":
    num_classes = 10
    key = jax.random.PRNGKey(0)
    k_x, k_p = jax.random.split(key)

    # spatial must be 28x28 so that two 2x2 pools give 7x7 (as fc1's shape implies)
    x = jax.random.normal(k_x, (2, 3, 28, 28), jnp.float32)
    params = init_params(k_p, num_classes)
    prep = prepare_params(params, num_classes)     # one-time weight preprocessing

    fwd = jax.jit(lambda xx, pp: cnn_forward(xx, pp, num_classes=num_classes))
    logits = jax.block_until_ready(fwd(x, prep))
    assert logits.shape == (2, num_classes)

    ref = jax.block_until_ready(jax.jit(cnn_reference)(x, params))
    np.testing.assert_allclose(np.asarray(logits), np.asarray(ref), rtol=5e-2, atol=5e-2)

    print("KERNEL_OK")
</pallas_src>

<mosaic_0001>
module attributes {stable_mosaic.version = 11 : i64} {
  func.func @_fused_cnn_kernel(%arg0: i32, %arg1: memref<1x3x28x28xf32, #tpu.memory_space<vmem>>, %arg2: memref<5x3x28x448xf32, #tpu.memory_space<vmem>>, %arg3: memref<1x448xf32, #tpu.memory_space<vmem>>, %arg4: memref<5x224x448xf32, #tpu.memory_space<vmem>>, %arg5: memref<1x448xf32, #tpu.memory_space<vmem>>, %arg6: memref<2x14x28xf32, #tpu.memory_space<vmem>>, %arg7: memref<2x448x224xf32, #tpu.memory_space<vmem>>, %arg8: memref<2x7x14xf32, #tpu.memory_space<vmem>>, %arg9: memref<2x448x224xf32, #tpu.memory_space<vmem>>, %arg10: memref<7x224x128xf32, #tpu.memory_space<vmem>>, %arg11: memref<1x128xf32, #tpu.memory_space<vmem>>, %arg12: memref<128x128xf32, #tpu.memory_space<vmem>>, %arg13: memref<1x128xf32, #tpu.memory_space<vmem>>, %arg14: memref<1x1x128xf32, #tpu.memory_space<vmem>>, %arg15: memref<3x32x28xf32, #tpu.memory_space<vmem>>, %arg16: memref<18x224xf32, #tpu.memory_space<vmem>>, %arg17: memref<7x224xf32, #tpu.memory_space<vmem>>) attributes {dimension_semantics = [#tpu.dimension_semantics<parallel>], iteration_bounds = array<i64: 2>, scalar_prefetch = 0 : i64, scratch_operands = 3 : i64, tpu.core_type = #tpu.core_type<tc>, window_params = [{transform_indices = @transform_0, window_bounds = array<i64: 1, 3, 28, 28>}, {pipeline_mode = #tpu.pipeline_mode<synchronous>, transform_indices = @transform_1, window_bounds = array<i64: 5, 3, 28, 448>}, {pipeline_mode = #tpu.pipeline_mode<synchronous>, transform_indices = @transform_2, window_bounds = array<i64: 1, 448>}, {pipeline_mode = #tpu.pipeline_mode<synchronous>, transform_indices = @transform_3, window_bounds = array<i64: 5, 224, 448>}, {pipeline_mode = #tpu.pipeline_mode<synchronous>, transform_indices = @transform_4, window_bounds = array<i64: 1, 448>}, {pipeline_mode = #tpu.pipeline_mode<synchronous>, transform_indices = @transform_5, window_bounds = array<i64: 2, 14, 28>}, {pipeline_mode = #tpu.pipeline_mode<synchronous>, transform_indices = @transform_6, window_bounds = array<i64: 2, 448, 224>}, {pipeline_mode = #tpu.pipeline_mode<synchronous>, transform_indices = @transform_7, window_bounds = array<i64: 2, 7, 14>}, {pipeline_mode = #tpu.pipeline_mode<synchronous>, transform_indices = @transform_8, window_bounds = array<i64: 2, 448, 224>}, {pipeline_mode = #tpu.pipeline_mode<synchronous>, transform_indices = @transform_9, window_bounds = array<i64: 7, 224, 128>}, {pipeline_mode = #tpu.pipeline_mode<synchronous>, transform_indices = @transform_10, window_bounds = array<i64: 1, 128>}, {pipeline_mode = #tpu.pipeline_mode<synchronous>, transform_indices = @transform_11, window_bounds = array<i64: 128, 128>}, {pipeline_mode = #tpu.pipeline_mode<synchronous>, transform_indices = @transform_12, window_bounds = array<i64: 1, 128>}, {transform_indices = @transform_13, window_bounds = array<i64: 1, 1, 128>}]} {
    %cst = arith.constant 0.000000e+00 : f32
    %0 = vector.broadcast %cst : f32 to vector<3x32x28xf32>
    %c0 = arith.constant 0 : index
    %c0_0 = arith.constant 0 : index
    %c0_1 = arith.constant 0 : index
    %1 = vector.load %arg15[%c0, %c0_0, %c0_1] : memref<3x32x28xf32, #tpu.memory_space<vmem>>, vector<3x32x28xf32>
    tpu.vector_store %arg15[%c0, %c0_0, %c0_1], %0 {strides = array<i32>} : memref<3x32x28xf32, #tpu.memory_space<vmem>>, vector<3x32x28xf32>,
    %c0_2 = arith.constant 0 : index
    %c0_3 = arith.constant 0 : index
    %c0_4 = arith.constant 0 : index
    %c0_5 = arith.constant 0 : index
    %2 = vector.load %arg1[%c0_2, %c0_3, %c0_4, %c0_5] : memref<1x3x28x28xf32, #tpu.memory_space<vmem>>, vector<1x1x28x28xf32>
    %3 = vector.shape_cast %2 : vector<1x1x28x28xf32> to vector<28x28xf32>
    %c0_6 = arith.constant 0 : index
    %c2 = arith.constant 2 : index
    %c0_7 = arith.constant 0 : index
    %4 = vector.load %arg15[%c0_6, %c2, %c0_7] : memref<3x32x28xf32, #tpu.memory_space<vmem>>, vector<1x28x28xf32>
    %5 = vector.shape_cast %4 : vector<1x28x28xf32> to vector<28x28xf32>
    %6 = vector.shape_cast %3 : vector<28x28xf32> to vector<1x28x28xf32>
    tpu.vector_store %arg15[%c0_6, %c2, %c0_7], %6 {strides = array<i32>} : memref<3x32x28xf32, #tpu.memory_space<vmem>>, vector<1x28x28xf32>,
    %c0_8 = arith.constant 0 : index
    %c1 = arith.constant 1 : index
    %c0_9 = arith.constant 0 : index
    %c0_10 = arith.constant 0 : index
    %7 = vector.load %arg1[%c0_8, %c1, %c0_9, %c0_10] : memref<1x3x28x28xf32, #tpu.memory_space<vmem>>, vector<1x1x28x28xf32>
    %8 = vector.shape_cast %7 : vector<1x1x28x28xf32> to vector<28x28xf32>
    %c1_11 = arith.constant 1 : index
    %c2_12 = arith.constant 2 : index
    %c0_13 = arith.constant 0 : index
    %9 = vector.load %arg15[%c1_11, %c2_12, %c0_13] : memref<3x32x28xf32, #tpu.memory_space<vmem>>, vector<1x28x28xf32>
    %10 = vector.shape_cast %9 : vector<1x28x28xf32> to vector<28x28xf32>
    %11 = vector.shape_cast %8 : vector<28x28xf32> to vector<1x28x28xf32>
    tpu.vector_store %arg15[%c1_11, %c2_12, %c0_13], %11 {strides = array<i32>} : memref<3x32x28xf32, #tpu.memory_space<vmem>>, vector<1x28x28xf32>,
    %c0_14 = arith.constant 0 : index
    %c2_15 = arith.constant 2 : index
    %c0_16 = arith.constant 0 : index
    %c0_17 = arith.constant 0 : index
    %12 = vector.load %arg1[%c0_14, %c2_15, %c0_16, %c0_17] : memref<1x3x28x28xf32, #tpu.memory_space<vmem>>, vector<1x1x28x28xf32>
    %13 = vector.shape_cast %12 : vector<1x1x28x28xf32> to vector<28x28xf32>
    %c2_18 = arith.constant 2 : index
    %c2_19 = arith.constant 2 : index
    %c0_20 = arith.constant 0 : index
    %14 = vector.load %arg15[%c2_18, %c2_19, %c0_20] : memref<3x32x28xf32, #tpu.memory_space<vmem>>, vector<1x28x28xf32>
    %15 = vector.shape_cast %14 : vector<1x28x28xf32> to vector<28x28xf32>
    %16 = vector.shape_cast %13 : vector<28x28xf32> to vector<1x28x28xf32>
    tpu.vector_store %arg15[%c2_18, %c2_19, %c0_20], %16 {strides = array<i32>} : memref<3x32x28xf32, #tpu.memory_space<vmem>>, vector<1x28x28xf32>,
    %cst_21 = arith.constant 0.000000e+00 : f32
    %17 = vector.broadcast %cst_21 : f32 to vector<28x448xf32>
    %c0_22 = arith.constant 0 : index
    %c0_23 = arith.constant 0 : index
    %c0_24 = arith.constant 0 : index
    %18 = vector.load %arg15[%c0_22, %c0_23, %c0_24] : memref<3x32x28xf32, #tpu.memory_space<vmem>>, vector<1x28x28xf32>
    %19 = vector.shape_cast %18 : vector<1x28x28xf32> to vector<28x28xf32>
    %c0_25 = arith.constant 0 : index
    %c0_26 = arith.constant 0 : index
    %c0_27 = arith.constant 0 : index
    %c0_28 = arith.constant 0 : index
    %20 = vector.load %arg2[%c0_25, %c0_26, %c0_27, %c0_28] : memref<5x3x28x448xf32, #tpu.memory_space<vmem>>, vector<1x1x28x448xf32>
    %21 = vector.shape_cast %20 : vector<1x1x28x448xf32> to vector<28x448xf32>
    %cst_29 = arith.constant dense<0.000000e+00> : vector<28x448xf32>
    %22 = tpu.matmul %19, %21, %cst_29 {dimension_numbers = #tpu.dot_dimension_numbers<[1], [0], [0], [1], [0, 0, 1, 1], [], []>} : vector<28x28xf32>, vector<28x448xf32>, vector<28x448xf32> -> vector<28x448xf32>
    %23 = arith.addf %17, %22 : vector<28x448xf32>
    %c1_30 = arith.constant 1 : index
    %c0_31 = arith.constant 0 : index
    %c0_32 = arith.constant 0 : index
    %24 = vector.load %arg15[%c1_30, %c0_31, %c0_32] : memref<3x32x28xf32, #tpu.memory_space<vmem>>, vector<1x28x28xf32>
    %25 = vector.shape_cast %24 : vector<1x28x28xf32> to vector<28x28xf32>
    %c0_33 = arith.constant 0 : index
    %c1_34 = arith.constant 1 : index
    %c0_35 = arith.constant 0 : index
    %c0_36 = arith.constant 0 : index
    %26 = vector.load %arg2[%c0_33, %c1_34, %c0_35, %c0_36] : memref<5x3x28x448xf32, #tpu.memory_space<vmem>>, vector<1x1x28x448xf32>
    %27 = vector.shape_cast %26 : vector<1x1x28x448xf32> to vector<28x448xf32>
    %cst_37 = arith.constant dense<0.000000e+00> : vector<28x448xf32>
    %28 = tpu.matmul %25, %27, %cst_37 {dimension_numbers = #tpu.dot_dimension_numbers<[1], [0], [0], [1], [0, 0, 1, 1], [], []>} : vector<28x28xf32>, vector<28x448xf32>, vector<28x448xf32> -> vector<28x448xf32>
    %29 = arith.addf %23, %28 : vector<28x448xf32>
    %c2_38 = arith.constant 2 : index
    %c0_39 = arith.constant 0 : index
    %c0_40 = arith.constant 0 : index
    %30 = vector.load %arg15[%c2_38, %c0_39, %c0_40] : memref<3x32x28xf32, #tpu.memory_space<vmem>>, vector<1x28x28xf32>
    %31 = vector.shape_cast %30 : vector<1x28x28xf32> to vector<28x28xf32>
    %c0_41 = arith.constant 0 : index
    %c2_42 = arith.constant 2 : index
    %c0_43 = arith.constant 0 : index
    %c0_44 = arith.constant 0 : index
    %32 = vector.load %arg2[%c0_41, %c2_42, %c0_43, %c0_44] : memref<5x3x28x448xf32, #tpu.memory_space<vmem>>, vector<1x1x28x448xf32>
    %33 = vector.shape_cast %32 : vector<1x1x28x448xf32> to vector<28x448xf32>
    %cst_45 = arith.constant dense<0.000000e+00> : vector<28x448xf32>
    %34 = tpu.matmul %31, %33, %cst_45 {dimension_numbers = #tpu.dot_dimension_numbers<[1], [0], [0], [1], [0, 0, 1, 1], [], []>} : vector<28x28xf32>, vector<28x448xf32>, vector<28x448xf32> -> vector<28x448xf32>
    %35 = arith.addf %29, %34 : vector<28x448xf32>
    %c0_46 = arith.constant 0 : index
    %c1_47 = arith.constant 1 : index
    %c0_48 = arith.constant 0 : index
    %36 = vector.load %arg15[%c0_46, %c1_47, %c0_48] : memref<3x32x28xf32, #tpu.memory_space<vmem>>, vector<1x28x28xf32>
    %37 = vector.shape_cast %36 : vector<1x28x28xf32> to vector<28x28xf32>
    %c1_49 = arith.constant 1 : index
    %c0_50 = arith.constant 0 : index
    %c0_51 = arith.constant 0 : index
    %c0_52 = arith.constant 0 : index
    %38 = vector.load %arg2[%c1_49, %c0_50, %c0_51, %c0_52] : memref<5x3x28x448xf32, #tpu.memory_space<vmem>>, vector<1x1x28x448xf32>
    %39 = vector.shape_cast %38 : vector<1x1x28x448xf32> to vector<28x448xf32>
    %cst_53 = arith.constant dense<0.000000e+00> : vector<28x448xf32>
    %40 = tpu.matmul %37, %39, %cst_53 {dimension_numbers = #tpu.dot_dimension_numbers<[1], [0], [0], [1], [0, 0, 1, 1], [], []>} : vector<28x28xf32>, vector<28x448xf32>, vector<28x448xf32> -> vector<28x448xf32>
    %41 = arith.addf %35, %40 : vector<28x448xf32>
    %c1_54 = arith.constant 1 : index
    %c1_55 = arith.constant 1 : index
    %c0_56 = arith.constant 0 : index
    %42 = vector.load %arg15[%c1_54, %c1_55, %c0_56] : memref<3x32x28xf32, #tpu.memory_space<vmem>>, vector<1x28x28xf32>
    %43 = vector.shape_cast %42 : vector<1x28x28xf32> to vector<28x28xf32>
    %c1_57 = arith.constant 1 : index
    %c1_58 = arith.constant 1 : index
    %c0_59 = arith.constant 0 : index
    %c0_60 = arith.constant 0 : index
    %44 = vector.load %arg2[%c1_57, %c1_58, %c0_59, %c0_60] : memref<5x3x28x448xf32, #tpu.memory_space<vmem>>, vector<1x1x28x448xf32>
    %45 = vector.shape_cast %44 : vector<1x1x28x448xf32> to vector<28x448xf32>
    %cst_61 = arith.constant dense<0.000000e+00> : vector<28x448xf32>
    %46 = tpu.matmul %43, %45, %cst_61 {dimension_numbers = #tpu.dot_dimension_numbers<[1], [0], [0], [1], [0, 0, 1, 1], [], []>} : vector<28x28xf32>, vector<28x448xf32>, vector<28x448xf32> -> vector<28x448xf32>
    %47 = arith.addf %41, %46 : vector<28x448xf32>
    %c2_62 = arith.constant 2 : index
    %c1_63 = arith.constant 1 : index
    %c0_64 = arith.constant 0 : index
    %48 = vector.load %arg15[%c2_62, %c1_63, %c0_64] : memref<3x32x28xf32, #tpu.memory_space<vmem>>, vector<1x28x28xf32>
    %49 = vector.shape_cast %48 : vector<1x28x28xf32> to vector<28x28xf32>
    %c1_65 = arith.constant 1 : index
    %c2_66 = arith.constant 2 : index
    %c0_67 = arith.constant 0 : index
    %c0_68 = arith.constant 0 : index
    %50 = vector.load %arg2[%c1_65, %c2_66, %c0_67, %c0_68] : memref<5x3x28x448xf32, #tpu.memory_space<vmem>>, vector<1x1x28x448xf32>
    %51 = vector.shape_cast %50 : vector<1x1x28x448xf32> to vector<28x448xf32>
    %cst_69 = arith.constant dense<0.000000e+00> : vector<28x448xf32>
    %52 = tpu.matmul %49, %51, %cst_69 {dimension_numbers = #tpu.dot_dimension_numbers<[1], [0], [0], [1], [0, 0, 1, 1], [], []>} : vector<28x28xf32>, vector<28x448xf32>, vector<28x448xf32> -> vector<28x448xf32>
    %53 = arith.addf %47, %52 : vector<28x448xf32>
    %c0_70 = arith.constant 0 : index
    %c2_71 = arith.constant 2 : index
    %c0_72 = arith.constant 0 : index
    %54 = vector.load %arg15[%c0_70, %c2_71, %c0_72] : memref<3x32x28xf32, #tpu.memory_space<vmem>>, vector<1x28x28xf32>
    %55 = vector.shape_cast %54 : vector<1x28x28xf32> to vector<28x28xf32>
    %c2_73 = arith.constant 2 : index
    %c0_74 = arith.constant 0 : index
    %c0_75 = arith.constant 0 : index
    %c0_76 = arith.constant 0 : index
    %56 = vector.load %arg2[%c2_73, %c0_74, %c0_75, %c0_76] : memref<5x3x28x448xf32, #tpu.memory_space<vmem>>, vector<1x1x28x448xf32>
    %57 = vector.shape_cast %56 : vector<1x1x28x448xf32> to vector<28x448xf32>
    %cst_77 = arith.constant dense<0.000000e+00> : vector<28x448xf32>
    %58 = tpu.matmul %55, %57, %cst_77 {dimension_numbers = #tpu.dot_dimension_numbers<[1], [0], [0], [1], [0, 0, 1, 1], [], []>} : vector<28x28xf32>, vector<28x448xf32>, vector<28x448xf32> -> vector<28x448xf32>
    %59 = arith.addf %53, %58 : vector<28x448xf32>
    %c1_78 = arith.constant 1 : index
    %c2_79 = arith.constant 2 : index
    %c0_80 = arith.constant 0 : index
    %60 = vector.load %arg15[%c1_78, %c2_79, %c0_80] : memref<3x32x28xf32, #tpu.memory_space<vmem>>, vector<1x28x28xf32>
    %61 = vector.shape_cast %60 : vector<1x28x28xf32> to vector<28x28xf32>
    %c2_81 = arith.constant 2 : index
    %c1_82 = arith.constant 1 : index
    %c0_83 = arith.constant 0 : index
    %c0_84 = arith.constant 0 : index
    %62 = vector.load %arg2[%c2_81, %c1_82, %c0_83, %c0_84] : memref<5x3x28x448xf32, #tpu.memory_space<vmem>>, vector<1x1x28x448xf32>
    %63 = vector.shape_cast %62 : vector<1x1x28x448xf32> to vector<28x448xf32>
    %cst_85 = arith.constant dense<0.000000e+00> : vector<28x448xf32>
    %64 = tpu.matmul %61, %63, %cst_85 {dimension_numbers = #tpu.dot_dimension_numbers<[1], [0], [0], [1], [0, 0, 1, 1], [], []>} : vector<28x28xf32>, vector<28x448xf32>, vector<28x448xf32> -> vector<28x448xf32>
    %65 = arith.addf %59, %64 : vector<28x448xf32>
    %c2_86 = arith.constant 2 : index
    %c2_87 = arith.constant 2 : index
    %c0_88 = arith.constant 0 : index
    %66 = vector.load %arg15[%c2_86, %c2_87, %c0_88] : memref<3x32x28xf32, #tpu.memory_space<vmem>>, vector<1x28x28xf32>
    %67 = vector.shape_cast %66 : vector<1x28x28xf32> to vector<28x28xf32>
    %c2_89 = arith.constant 2 : index
    %c2_90 = arith.constant 2 : index
    %c0_91 = arith.constant 0 : index
    %c0_92 = arith.constant 0 : index
    %68 = vector.load %arg2[%c2_89, %c2_90, %c0_91, %c0_92] : memref<5x3x28x448xf32, #tpu.memory_space<vmem>>, vector<1x1x28x448xf32>
    %69 = vector.shape_cast %68 : vector<1x1x28x448xf32> to vector<28x448xf32>
    %cst_93 = arith.constant dense<0.000000e+00> : vector<28x448xf32>
    %70 = tpu.matmul %67, %69, %cst_93 {dimension_numbers = #tpu.dot_dimension_numbers<[1], [0], [0], [1], [0, 0, 1, 1], [], []>} : vector<28x28xf32>, vector<28x448xf32>, vector<28x448xf32> -> vector<28x448xf32>
    %71 = arith.addf %65, %70 : vector<28x448xf32>
    %c0_94 = arith.constant 0 : index
    %c3 = arith.constant 3 : index
    %c0_95 = arith.constant 0 : index
    %72 = vector.load %arg15[%c0_94, %c3, %c0_95] : memref<3x32x28xf32, #tpu.memory_space<vmem>>, vector<1x28x28xf32>
    %73 = vector.shape_cast %72 : vector<1x28x28xf32> to vector<28x28xf32>
    %c3_96 = arith.constant 3 : index
    %c0_97 = arith.constant 0 : index
    %c0_98 = arith.constant 0 : index
    %c0_99 = arith.constant 0 : index
    %74 = vector.load %arg2[%c3_96, %c0_97, %c0_98, %c0_99] : memref<5x3x28x448xf32, #tpu.memory_space<vmem>>, vector<1x1x28x448xf32>
    %75 = vector.shape_cast %74 : vector<1x1x28x448xf32> to vector<28x448xf32>
    %cst_100 = arith.constant dense<0.000000e+00> : vector<28x448xf32>
    %76 = tpu.matmul %73, %75, %cst_100 {dimension_numbers = #tpu.dot_dimension_numbers<[1], [0], [0], [1], [0, 0, 1, 1], [], []>} : vector<28x28xf32>, vector<28x448xf32>, vector<28x448xf32> -> vector<28x448xf32>
    %77 = arith.addf %71, %76 : vector<28x448xf32>
    %c1_101 = arith.constant 1 : index
    %c3_102 = arith.constant 3 : index
    %c0_103 = arith.constant 0 : index
    %78 = vector.load %arg15[%c1_101, %c3_102, %c0_103] : memref<3x32x28xf32, #tpu.memory_space<vmem>>, vector<1x28x28xf32>
    %79 = vector.shape_cast %78 : vector<1x28x28xf32> to vector<28x28xf32>
    %c3_104 = arith.constant 3 : index
    %c1_105 = arith.constant 1 : index
    %c0_106 = arith.constant 0 : index
    %c0_107 = arith.constant 0 : index
    %80 = vector.load %arg2[%c3_104, %c1_105, %c0_106, %c0_107] : memref<5x3x28x448xf32, #tpu.memory_space<vmem>>, vector<1x1x28x448xf32>
    %81 = vector.shape_cast %80 : vector<1x1x28x448xf32> to vector<28x448xf32>
    %cst_108 = arith.constant dense<0.000000e+00> : vector<28x448xf32>
    %82 = tpu.matmul %79, %81, %cst_108 {dimension_numbers = #tpu.dot_dimension_numbers<[1], [0], [0], [1], [0, 0, 1, 1], [], []>} : vector<28x28xf32>, vector<28x448xf32>, vector<28x448xf32> -> vector<28x448xf32>
    %83 = arith.addf %77, %82 : vector<28x448xf32>
    %c2_109 = arith.constant 2 : index
    %c3_110 = arith.constant 3 : index
    %c0_111 = arith.constant 0 : index
    %84 = vector.load %arg15[%c2_109, %c3_110, %c0_111] : memref<3x32x28xf32, #tpu.memory_space<vmem>>, vector<1x28x28xf32>
    %85 = vector.shape_cast %84 : vector<1x28x28xf32> to vector<28x28xf32>
    %c3_112 = arith.constant 3 : index
    %c2_113 = arith.constant 2 : index
    %c0_114 = arith.constant 0 : index
    %c0_115 = arith.constant 0 : index
    %86 = vector.load %arg2[%c3_112, %c2_113, %c0_114, %c0_115] : memref<5x3x28x448xf32, #tpu.memory_space<vmem>>, vector<1x1x28x448xf32>
    %87 = vector.shape_cast %86 : vector<1x1x28x448xf32> to vector<28x448xf32>
    %cst_116 = arith.constant dense<0.000000e+00> : vector<28x448xf32>
    %88 = tpu.matmul %85, %87, %cst_116 {dimension_numbers = #tpu.dot_dimension_numbers<[1], [0], [0], [1], [0, 0, 1, 1], [], []>} : vector<28x28xf32>, vector<28x448xf32>, vector<28x448xf32> -> vector<28x448xf32>
    %89 = arith.addf %83, %88 : vector<28x448xf32>
    %c0_117 = arith.constant 0 : index
    %c4 = arith.constant 4 : index
    %c0_118 = arith.constant 0 : index
    %90 = vector.load %arg15[%c0_117, %c4, %c0_118] : memref<3x32x28xf32, #tpu.memory_space<vmem>>, vector<1x28x28xf32>
    %91 = vector.shape_cast %90 : vector<1x28x28xf32> to vector<28x28xf32>
    %c4_119 = arith.constant 4 : index
    %c0_120 = arith.constant 0 : index
    %c0_121 = arith.constant 0 : index
    %c0_122 = arith.constant 0 : index
    %92 = vector.load %arg2[%c4_119, %c0_120, %c0_121, %c0_122] : memref<5x3x28x448xf32, #tpu.memory_space<vmem>>, vector<1x1x28x448xf32>
    %93 = vector.shape_cast %92 : vector<1x1x28x448xf32> to vector<28x448xf32>
    %cst_123 = arith.constant dense<0.000000e+00> : vector<28x448xf32>
    %94 = tpu.matmul %91, %93, %cst_123 {dimension_numbers = #tpu.dot_dimension_numbers<[1], [0], [0], [1], [0, 0, 1, 1], [], []>} : vector<28x28xf32>, vector<28x448xf32>, vector<28x448xf32> -> vector<28x448xf32>
    %95 = arith.addf %89, %94 : vector<28x448xf32>
    %c1_124 = arith.constant 1 : index
    %c4_125 = arith.constant 4 : index
    %c0_126 = arith.constant 0 : index
    %96 = vector.load %arg15[%c1_124, %c4_125, %c0_126] : memref<3x32x28xf32, #tpu.memory_space<vmem>>, vector<1x28x28xf32>
    %97 = vector.shape_cast %96 : vector<1x28x28xf32> to vector<28x28xf32>
    %c4_127 = arith.constant 4 : index
    %c1_128 = arith.constant 1 : index
    %c0_129 = arith.constant 0 : index
    %c0_130 = arith.constant 0 : index
    %98 = vector.load %arg2[%c4_127, %c1_128, %c0_129, %c0_130] : memref<5x3x28x448xf32, #tpu.memory_space<vmem>>, vector<1x1x28x448xf32>
    %99 = vector.shape_cast %98 : vector<1x1x28x448xf32> to vector<28x448xf32>
    %cst_131 = arith.constant dense<0.000000e+00> : vector<28x448xf32>
    %100 = tpu.matmul %97, %99, %cst_131 {dimension_numbers = #tpu.dot_dimension_numbers<[1], [0], [0], [1], [0, 0, 1, 1], [], []>} : vector<28x28xf32>, vector<28x448xf32>, vector<28x448xf32> -> vector<28x448xf32>
    %101 = arith.addf %95, %100 : vector<28x448xf32>
    %c2_132 = arith.constant 2 : index
    %c4_133 = arith.constant 4 : index
    %c0_134 = arith.constant 0 : index
    %102 = vector.load %arg15[%c2_132, %c4_133, %c0_134] : memref<3x32x28xf32, #tpu.memory_space<vmem>>, vector<1x28x28xf32>
    %103 = vector.shape_cast %102 : vector<1x28x28xf32> to vector<28x28xf32>
    %c4_135 = arith.constant 4 : index
    %c2_136 = arith.constant 2 : index
    %c0_137 = arith.constant 0 : index
    %c0_138 = arith.constant 0 : index
    %104 = vector.load %arg2[%c4_135, %c2_136, %c0_137, %c0_138] : memref<5x3x28x448xf32, #tpu.memory_space<vmem>>, vector<1x1x28x448xf32>
    %105 = vector.shape_cast %104 : vector<1x1x28x448xf32> to vector<28x448xf32>
    %cst_139 = arith.constant dense<0.000000e+00> : vector<28x448xf32>
    %106 = tpu.matmul %103, %105, %cst_139 {dimension_numbers = #tpu.dot_dimension_numbers<[1], [0], [0], [1], [0, 0, 1, 1], [], []>} : vector<28x28xf32>, vector<28x448xf32>, vector<28x448xf32> -> vector<28x448xf32>
    %107 = arith.addf %101, %106 : vector<28x448xf32>
    %c0_140 = arith.constant 0 : index
    %c0_141 = arith.constant 0 : index
    %108 = vector.load %arg3[%c0_140, %c0_141] : memref<1x448xf32, #tpu.memory_space<vmem>>, vector<1x448xf32>
    %109 = vector.broadcast %108 : vector<1x448xf32> to vector<28x448xf32>
    %110 = arith.addf %107, %109 : vector<28x448xf32>
    %cst_142 = arith.constant 0.000000e+00 : f32
    %111 = vector.broadcast %cst_142 : f32 to vector<28x448xf32>
    %112 = arith.maximumf %110, %111 : vector<28x448xf32>
    %c0_143 = arith.constant 0 : index
    %c0_144 = arith.constant 0 : index
    %c0_145 = arith.constant 0 : index
    %113 = vector.load %arg6[%c0_143, %c0_144, %c0_145] : memref<2x14x28xf32, #tpu.memory_space<vmem>>, vector<1x14x28xf32>
    %114 = vector.shape_cast %113 : vector<1x14x28xf32> to vector<14x28xf32>
    %cst_146 = arith.constant dense<0.000000e+00> : vector<14x448xf32>
    %115 = tpu.matmul %114, %112, %cst_146 {dimension_numbers = #tpu.dot_dimension_numbers<[1], [0], [0], [1], [0, 0, 1, 1], [], []>} : vector<14x28xf32>, vector<28x448xf32>, vector<14x448xf32> -> vector<14x448xf32>
    %c1_147 = arith.constant 1 : index
    %c0_148 = arith.constant 0 : index
    %c0_149 = arith.constant 0 : index
    %116 = vector.load %arg6[%c1_147, %c0_148, %c0_149] : memref<2x14x28xf32, #tpu.memory_space<vmem>>, vector<1x14x28xf32>
    %117 = vector.shape_cast %116 : vector<1x14x28xf32> to vector<14x28xf32>
    %cst_150 = arith.constant dense<0.000000e+00> : vector<14x448xf32>
    %118 = tpu.matmul %117, %112, %cst_150 {dimension_numbers = #tpu.dot_dimension_numbers<[1], [0], [0], [1], [0, 0, 1, 1], [], []>} : vector<14x28xf32>, vector<28x448xf32>, vector<14x448xf32> -> vector<14x448xf32>
    %119 = arith.maximumf %115, %118 : vector<14x448xf32>
    %c0_151 = arith.constant 0 : index
    %c0_152 = arith.constant 0 : index
    %c0_153 = arith.constant 0 : index
    %120 = vector.load %arg7[%c0_151, %c0_152, %c0_153] : memref<2x448x224xf32, #tpu.memory_space<vmem>>, vector<1x448x224xf32>
    %121 = vector.shape_cast %120 : vector<1x448x224xf32> to vector<448x224xf32>
    %cst_154 = arith.constant dense<0.000000e+00> : vector<14x224xf32>
    %122 = tpu.matmul %119, %121, %cst_154 {dimension_numbers = #tpu.dot_dimension_numbers<[1], [0], [0], [1], [0, 0, 1, 1], [], []>} : vector<14x448xf32>, vector<448x224xf32>, vector<14x224xf32> -> vector<14x224xf32>
    %c1_155 = arith.constant 1 : index
    %c0_156 = arith.constant 0 : index
    %c0_157 = arith.constant 0 : index
    %123 = vector.load %arg7[%c1_155, %c0_156, %c0_157] : memref<2x448x224xf32, #tpu.memory_space<vmem>>, vector<1x448x224xf32>
    %124 = vector.shape_cast %123 : vector<1x448x224xf32> to vector<448x224xf32>
    %cst_158 = arith.constant dense<0.000000e+00> : vector<14x224xf32>
    %125 = tpu.matmul %119, %124, %cst_158 {dimension_numbers = #tpu.dot_dimension_numbers<[1], [0], [0], [1], [0, 0, 1, 1], [], []>} : vector<14x448xf32>, vector<448x224xf32>, vector<14x224xf32> -> vector<14x224xf32>
    %126 = arith.maximumf %122, %125 : vector<14x224xf32>
    %cst_159 = arith.constant 0.000000e+00 : f32
    %127 = vector.broadcast %cst_159 : f32 to vector<18x224xf32>
    %c0_160 = arith.constant 0 : index
    %c0_161 = arith.constant 0 : index
    %128 = vector.load %arg16[%c0_160, %c0_161] : memref<18x224xf32, #tpu.memory_space<vmem>>, vector<18x224xf32>
    tpu.vector_store %arg16[%c0_160, %c0_161], %127 {strides = array<i32>} : memref<18x224xf32, #tpu.memory_space<vmem>>, vector<18x224xf32>,
    %c2_162 = arith.constant 2 : index
    %c0_163 = arith.constant 0 : index
    %129 = vector.load %arg16[%c2_162, %c0_163] : memref<18x224xf32, #tpu.memory_space<vmem>>, vector<14x224xf32>
    tpu.vector_store %arg16[%c2_162, %c0_163], %126 {strides = array<i32>} : memref<18x224xf32, #tpu.memory_space<vmem>>, vector<14x224xf32>,
    %cst_164 = arith.constant 0.000000e+00 : f32
    %130 = vector.broadcast %cst_164 : f32 to vector<14x448xf32>
    %c0_165 = arith.constant 0 : index
    %c0_166 = arith.constant 0 : index
    %131 = vector.load %arg16[%c0_165, %c0_166] : memref<18x224xf32, #tpu.memory_space<vmem>>, vector<14x224xf32>
    %c0_167 = arith.constant 0 : index
    %c0_168 = arith.constant 0 : index
    %c0_169 = arith.constant 0 : index
    %132 = vector.load %arg4[%c0_167, %c0_168, %c0_169] : memref<5x224x448xf32, #tpu.memory_space<vmem>>, vector<1x224x448xf32>
    %133 = vector.shape_cast %132 : vector<1x224x448xf32> to vector<224x448xf32>
    %cst_170 = arith.constant dense<0.000000e+00> : vector<14x448xf32>
    %134 = tpu.matmul %131, %133, %cst_170 {dimension_numbers = #tpu.dot_dimension_numbers<[1], [0], [0], [1], [0, 0, 1, 1], [], []>} : vector<14x224xf32>, vector<224x448xf32>, vector<14x448xf32> -> vector<14x448xf32>
    %135 = arith.addf %130, %134 : vector<14x448xf32>
    %c1_171 = arith.constant 1 : index
    %c0_172 = arith.constant 0 : index
    %136 = vector.load %arg16[%c1_171, %c0_172] : memref<18x224xf32, #tpu.memory_space<vmem>>, vector<14x224xf32>
    %c1_173 = arith.constant 1 : index
    %c0_174 = arith.constant 0 : index
    %c0_175 = arith.constant 0 : index
    %137 = vector.load %arg4[%c1_173, %c0_174, %c0_175] : memref<5x224x448xf32, #tpu.memory_space<vmem>>, vector<1x224x448xf32>
    %138 = vector.shape_cast %137 : vector<1x224x448xf32> to vector<224x448xf32>
    %cst_176 = arith.constant dense<0.000000e+00> : vector<14x448xf32>
    %139 = tpu.matmul %136, %138, %cst_176 {dimension_numbers = #tpu.dot_dimension_numbers<[1], [0], [0], [1], [0, 0, 1, 1], [], []>} : vector<14x224xf32>, vector<224x448xf32>, vector<14x448xf32> -> vector<14x448xf32>
    %140 = arith.addf %135, %139 : vector<14x448xf32>
    %c2_177 = arith.constant 2 : index
    %c0_178 = arith.constant 0 : index
    %141 = vector.load %arg16[%c2_177, %c0_178] : memref<18x224xf32, #tpu.memory_space<vmem>>, vector<14x224xf32>
    %c2_179 = arith.constant 2 : index
    %c0_180 = arith.constant 0 : index
    %c0_181 = arith.constant 0 : index
    %142 = vector.load %arg4[%c2_179, %c0_180, %c0_181] : memref<5x224x448xf32, #tpu.memory_space<vmem>>, vector<1x224x448xf32>
    %143 = vector.shape_cast %142 : vector<1x224x448xf32> to vector<224x448xf32>
    %cst_182 = arith.constant dense<0.000000e+00> : vector<14x448xf32>
    %144 = tpu.matmul %141, %143, %cst_182 {dimension_numbers = #tpu.dot_dimension_numbers<[1], [0], [0], [1], [0, 0, 1, 1], [], []>} : vector<14x224xf32>, vector<224x448xf32>, vector<14x448xf32> -> vector<14x448xf32>
    %145 = arith.addf %140, %144 : vector<14x448xf32>
    %c3_183 = arith.constant 3 : index
    %c0_184 = arith.constant 0 : index
    %146 = vector.load %arg16[%c3_183, %c0_184] : memref<18x224xf32, #tpu.memory_space<vmem>>, vector<14x224xf32>
    %c3_185 = arith.constant 3 : index
    %c0_186 = arith.constant 0 : index
    %c0_187 = arith.constant 0 : index
    %147 = vector.load %arg4[%c3_185, %c0_186, %c0_187] : memref<5x224x448xf32, #tpu.memory_space<vmem>>, vector<1x224x448xf32>
    %148 = vector.shape_cast %147 : vector<1x224x448xf32> to vector<224x448xf32>
    %cst_188 = arith.constant dense<0.000000e+00> : vector<14x448xf32>
    %149 = tpu.matmul %146, %148, %cst_188 {dimension_numbers = #tpu.dot_dimension_numbers<[1], [0], [0], [1], [0, 0, 1, 1], [], []>} : vector<14x224xf32>, vector<224x448xf32>, vector<14x448xf32> -> vector<14x448xf32>
    %150 = arith.addf %145, %149 : vector<14x448xf32>
    %c4_189 = arith.constant 4 : index
    %c0_190 = arith.constant 0 : index
    %151 = vector.load %arg16[%c4_189, %c0_190] : memref<18x224xf32, #tpu.memory_space<vmem>>, vector<14x224xf32>
    %c4_191 = arith.constant 4 : index
    %c0_192 = arith.constant 0 : index
    %c0_193 = arith.constant 0 : index
    %152 = vector.load %arg4[%c4_191, %c0_192, %c0_193] : memref<5x224x448xf32, #tpu.memory_space<vmem>>, vector<1x224x448xf32>
    %153 = vector.shape_cast %152 : vector<1x224x448xf32> to vector<224x448xf32>
    %cst_194 = arith.constant dense<0.000000e+00> : vector<14x448xf32>
    %154 = tpu.matmul %151, %153, %cst_194 {dimension_numbers = #tpu.dot_dimension_numbers<[1], [0], [0], [1], [0, 0, 1, 1], [], []>} : vector<14x224xf32>, vector<224x448xf32>, vector<14x448xf32> -> vector<14x448xf32>
    %155 = arith.addf %150, %154 : vector<14x448xf32>
    %c0_195 = arith.constant 0 : index
    %c0_196 = arith.constant 0 : index
    %156 = vector.load %arg5[%c0_195, %c0_196] : memref<1x448xf32, #tpu.memory_space<vmem>>, vector<1x448xf32>
    %157 = vector.broadcast %156 : vector<1x448xf32> to vector<14x448xf32>
    %158 = arith.addf %155, %157 : vector<14x448xf32>
    %cst_197 = arith.constant 0.000000e+00 : f32
    %159 = vector.broadcast %cst_197 : f32 to vector<14x448xf32>
    %160 = arith.maximumf %158, %159 : vector<14x448xf32>
    %c0_198 = arith.constant 0 : index
    %c0_199 = arith.constant 0 : index
    %c0_200 = arith.constant 0 : index
    %161 = vector.load %arg8[%c0_198, %c0_199, %c0_200] : memref<2x7x14xf32, #tpu.memory_space<vmem>>, vector<1x7x14xf32>
    %162 = vector.shape_cast %161 : vector<1x7x14xf32> to vector<7x14xf32>
    %cst_201 = arith.constant dense<0.000000e+00> : vector<7x448xf32>
    %163 = tpu.matmul %162, %160, %cst_201 {dimension_numbers = #tpu.dot_dimension_numbers<[1], [0], [0], [1], [0, 0, 1, 1], [], []>} : vector<7x14xf32>, vector<14x448xf32>, vector<7x448xf32> -> vector<7x448xf32>
    %c1_202 = arith.constant 1 : index
    %c0_203 = arith.constant 0 : index
    %c0_204 = arith.constant 0 : index
    %164 = vector.load %arg8[%c1_202, %c0_203, %c0_204] : memref<2x7x14xf32, #tpu.memory_space<vmem>>, vector<1x7x14xf32>
    %165 = vector.shape_cast %164 : vector<1x7x14xf32> to vector<7x14xf32>
    %cst_205 = arith.constant dense<0.000000e+00> : vector<7x448xf32>
    %166 = tpu.matmul %165, %160, %cst_205 {dimension_numbers = #tpu.dot_dimension_numbers<[1], [0], [0], [1], [0, 0, 1, 1], [], []>} : vector<7x14xf32>, vector<14x448xf32>, vector<7x448xf32> -> vector<7x448xf32>
    %167 = arith.maximumf %163, %166 : vector<7x448xf32>
    %c0_206 = arith.constant 0 : index
    %c0_207 = arith.constant 0 : index
    %c0_208 = arith.constant 0 : index
    %168 = vector.load %arg9[%c0_206, %c0_207, %c0_208] : memref<2x448x224xf32, #tpu.memory_space<vmem>>, vector<1x448x224xf32>
    %169 = vector.shape_cast %168 : vector<1x448x224xf32> to vector<448x224xf32>
    %cst_209 = arith.constant dense<0.000000e+00> : vector<7x224xf32>
    %170 = tpu.matmul %167, %169, %cst_209 {dimension_numbers = #tpu.dot_dimension_numbers<[1], [0], [0], [1], [0, 0, 1, 1], [], []>} : vector<7x448xf32>, vector<448x224xf32>, vector<7x224xf32> -> vector<7x224xf32>
    %c1_210 = arith.constant 1 : index
    %c0_211 = arith.constant 0 : index
    %c0_212 = arith.constant 0 : index
    %171 = vector.load %arg9[%c1_210, %c0_211, %c0_212] : memref<2x448x224xf32, #tpu.memory_space<vmem>>, vector<1x448x224xf32>
    %172 = vector.shape_cast %171 : vector<1x448x224xf32> to vector<448x224xf32>
    %cst_213 = arith.constant dense<0.000000e+00> : vector<7x224xf32>
    %173 = tpu.matmul %167, %172, %cst_213 {dimension_numbers = #tpu.dot_dimension_numbers<[1], [0], [0], [1], [0, 0, 1, 1], [], []>} : vector<7x448xf32>, vector<448x224xf32>, vector<7x224xf32> -> vector<7x224xf32>
    %174 = arith.maximumf %170, %173 : vector<7x224xf32>
    %c0_214 = arith.constant 0 : index
    %c0_215 = arith.constant 0 : index
    %175 = vector.load %arg17[%c0_214, %c0_215] : memref<7x224xf32, #tpu.memory_space<vmem>>, vector<7x224xf32>
    tpu.vector_store %arg17[%c0_214, %c0_215], %174 {strides = array<i32>} : memref<7x224xf32, #tpu.memory_space<vmem>>, vector<7x224xf32>,
    %cst_216 = arith.constant 0.000000e+00 : f32
    %176 = vector.broadcast %cst_216 : f32 to vector<1x128xf32>
    %c0_217 = arith.constant 0 : index
    %c0_218 = arith.constant 0 : index
    %177 = vector.load %arg17[%c0_217, %c0_218] : memref<7x224xf32, #tpu.memory_space<vmem>>, vector<1x224xf32>
    %c0_219 = arith.constant 0 : index
    %c0_220 = arith.constant 0 : index
    %c0_221 = arith.constant 0 : index
    %178 = vector.load %arg10[%c0_219, %c0_220, %c0_221] : memref<7x224x128xf32, #tpu.memory_space<vmem>>, vector<1x224x128xf32>
    %179 = vector.shape_cast %178 : vector<1x224x128xf32> to vector<224x128xf32>
    %cst_222 = arith.constant dense<0.000000e+00> : vector<1x128xf32>
    %180 = tpu.matmul %177, %179, %cst_222 {dimension_numbers = #tpu.dot_dimension_numbers<[1], [0], [0], [1], [0, 0, 1, 1], [], []>} : vector<1x224xf32>, vector<224x128xf32>, vector<1x128xf32> -> vector<1x128xf32>
    %181 = arith.addf %176, %180 : vector<1x128xf32>
    %c1_223 = arith.constant 1 : index
    %c0_224 = arith.constant 0 : index
    %182 = vector.load %arg17[%c1_223, %c0_224] : memref<7x224xf32, #tpu.memory_space<vmem>>, vector<1x224xf32>
    %c1_225 = arith.constant 1 : index
    %c0_226 = arith.constant 0 : index
    %c0_227 = arith.constant 0 : index
    %183 = vector.load %arg10[%c1_225, %c0_226, %c0_227] : memref<7x224x128xf32, #tpu.memory_space<vmem>>, vector<1x224x128xf32>
    %184 = vector.shape_cast %183 : vector<1x224x128xf32> to vector<224x128xf32>
    %cst_228 = arith.constant dense<0.000000e+00> : vector<1x128xf32>
    %185 = tpu.matmul %182, %184, %cst_228 {dimension_numbers = #tpu.dot_dimension_numbers<[1], [0], [0], [1], [0, 0, 1, 1], [], []>} : vector<1x224xf32>, vector<224x128xf32>, vector<1x128xf32> -> vector<1x128xf32>
    %186 = arith.addf %181, %185 : vector<1x128xf32>
    %c2_229 = arith.constant 2 : index
    %c0_230 = arith.constant 0 : index
    %187 = vector.load %arg17[%c2_229, %c0_230] : memref<7x224xf32, #tpu.memory_space<vmem>>, vector<1x224xf32>
    %c2_231 = arith.constant 2 : index
    %c0_232 = arith.constant 0 : index
    %c0_233 = arith.constant 0 : index
    %188 = vector.load %arg10[%c2_231, %c0_232, %c0_233] : memref<7x224x128xf32, #tpu.memory_space<vmem>>, vector<1x224x128xf32>
    %189 = vector.shape_cast %188 : vector<1x224x128xf32> to vector<224x128xf32>
    %cst_234 = arith.constant dense<0.000000e+00> : vector<1x128xf32>
    %190 = tpu.matmul %187, %189, %cst_234 {dimension_numbers = #tpu.dot_dimension_numbers<[1], [0], [0], [1], [0, 0, 1, 1], [], []>} : vector<1x224xf32>, vector<224x128xf32>, vector<1x128xf32> -> vector<1x128xf32>
    %191 = arith.addf %186, %190 : vector<1x128xf32>
    %c3_235 = arith.constant 3 : index
    %c0_236 = arith.constant 0 : index
    %192 = vector.load %arg17[%c3_235, %c0_236] : memref<7x224xf32, #tpu.memory_space<vmem>>, vector<1x224xf32>
    %c3_237 = arith.constant 3 : index
    %c0_238 = arith.constant 0 : index
    %c0_239 = arith.constant 0 : index
    %193 = vector.load %arg10[%c3_237, %c0_238, %c0_239] : memref<7x224x128xf32, #tpu.memory_space<vmem>>, vector<1x224x128xf32>
    %194 = vector.shape_cast %193 : vector<1x224x128xf32> to vector<224x128xf32>
    %cst_240 = arith.constant dense<0.000000e+00> : vector<1x128xf32>
    %195 = tpu.matmul %192, %194, %cst_240 {dimension_numbers = #tpu.dot_dimension_numbers<[1], [0], [0], [1], [0, 0, 1, 1], [], []>} : vector<1x224xf32>, vector<224x128xf32>, vector<1x128xf32> -> vector<1x128xf32>
    %196 = arith.addf %191, %195 : vector<1x128xf32>
    %c4_241 = arith.constant 4 : index
    %c0_242 = arith.constant 0 : index
    %197 = vector.load %arg17[%c4_241, %c0_242] : memref<7x224xf32, #tpu.memory_space<vmem>>, vector<1x224xf32>
    %c4_243 = arith.constant 4 : index
    %c0_244 = arith.constant 0 : index
    %c0_245 = arith.constant 0 : index
    %198 = vector.load %arg10[%c4_243, %c0_244, %c0_245] : memref<7x224x128xf32, #tpu.memory_space<vmem>>, vector<1x224x128xf32>
    %199 = vector.shape_cast %198 : vector<1x224x128xf32> to vector<224x128xf32>
    %cst_246 = arith.constant dense<0.000000e+00> : vector<1x128xf32>
    %200 = tpu.matmul %197, %199, %cst_246 {dimension_numbers = #tpu.dot_dimension_numbers<[1], [0], [0], [1], [0, 0, 1, 1], [], []>} : vector<1x224xf32>, vector<224x128xf32>, vector<1x128xf32> -> vector<1x128xf32>
    %201 = arith.addf %196, %200 : vector<1x128xf32>
    %c5 = arith.constant 5 : index
    %c0_247 = arith.constant 0 : index
    %202 = vector.load %arg17[%c5, %c0_247] : memref<7x224xf32, #tpu.memory_space<vmem>>, vector<1x224xf32>
    %c5_248 = arith.constant 5 : index
    %c0_249 = arith.constant 0 : index
    %c0_250 = arith.constant 0 : index
    %203 = vector.load %arg10[%c5_248, %c0_249, %c0_250] : memref<7x224x128xf32, #tpu.memory_space<vmem>>, vector<1x224x128xf32>
    %204 = vector.shape_cast %203 : vector<1x224x128xf32> to vector<224x128xf32>
    %cst_251 = arith.constant dense<0.000000e+00> : vector<1x128xf32>
    %205 = tpu.matmul %202, %204, %cst_251 {dimension_numbers = #tpu.dot_dimension_numbers<[1], [0], [0], [1], [0, 0, 1, 1], [], []>} : vector<1x224xf32>, vector<224x128xf32>, vector<1x128xf32> -> vector<1x128xf32>
    %206 = arith.addf %201, %205 : vector<1x128xf32>
    %c6 = arith.constant 6 : index
    %c0_252 = arith.constant 0 : index
    %207 = vector.load %arg17[%c6, %c0_252] : memref<7x224xf32, #tpu.memory_space<vmem>>, vector<1x224xf32>
    %c6_253 = arith.constant 6 : index
    %c0_254 = arith.constant 0 : index
    %c0_255 = arith.constant 0 : index
    %208 = vector.load %arg10[%c6_253, %c0_254, %c0_255] : memref<7x224x128xf32, #tpu.memory_space<vmem>>, vector<1x224x128xf32>
    %209 = vector.shape_cast %208 : vector<1x224x128xf32> to vector<224x128xf32>
    %cst_256 = arith.constant dense<0.000000e+00> : vector<1x128xf32>
    %210 = tpu.matmul %207, %209, %cst_256 {dimension_numbers = #tpu.dot_dimension_numbers<[1], [0], [0], [1], [0, 0, 1, 1], [], []>} : vector<1x224xf32>, vector<224x128xf32>, vector<1x128xf32> -> vector<1x128xf32>
    %211 = arith.addf %206, %210 : vector<1x128xf32>
    %c0_257 = arith.constant 0 : index
    %c0_258 = arith.constant 0 : index
    %212 = vector.load %arg11[%c0_257, %c0_258] : memref<1x128xf32, #tpu.memory_space<vmem>>, vector<1x128xf32>
    %213 = arith.addf %211, %212 : vector<1x128xf32>
    %cst_259 = arith.constant 0.000000e+00 : f32
    %214 = vector.broadcast %cst_259 : f32 to vector<1x128xf32>
    %215 = arith.maximumf %213, %214 : vector<1x128xf32>
    %c0_260 = arith.constant 0 : index
    %c0_261 = arith.constant 0 : index
    %216 = vector.load %arg12[%c0_260, %c0_261] : memref<128x128xf32, #tpu.memory_space<vmem>>, vector<128x128xf32>
    %cst_262 = arith.constant dense<0.000000e+00> : vector<1x128xf32>
    %217 = tpu.matmul %215, %216, %cst_262 {dimension_numbers = #tpu.dot_dimension_numbers<[1], [0], [0], [1], [0, 0, 1, 1], [], []>} : vector<1x128xf32>, vector<128x128xf32>, vector<1x128xf32> -> vector<1x128xf32>
    %c0_263 = arith.constant 0 : index
    %c0_264 = arith.constant 0 : index
    %218 = vector.load %arg13[%c0_263, %c0_264] : memref<1x128xf32, #tpu.memory_space<vmem>>, vector<1x128xf32>
    %219 = arith.addf %217, %218 : vector<1x128xf32>
    %c0_265 = arith.constant 0 : index
    %c0_266 = arith.constant 0 : index
    %c0_267 = arith.constant 0 : index
    %220 = vector.load %arg14[%c0_265, %c0_266, %c0_267] : memref<1x1x128xf32, #tpu.memory_space<vmem>>, vector<1x1x128xf32>
    %221 = vector.shape_cast %220 : vector<1x1x128xf32> to vector<1x128xf32>
    %222 = vector.shape_cast %219 : vector<1x128xf32> to vector<1x1x128xf32>
    tpu.vector_store %arg14[%c0_265, %c0_266, %c0_267], %222 {strides = array<i32>} : memref<1x1x128xf32, #tpu.memory_space<vmem>>, vector<1x1x128xf32>,
    return
  }
  func.func @transform_0(%arg0: i32) -> (i32, i32, i32, i32) {
    %c0_i32 = arith.constant 0 : i32
    %c0_i32_0 = arith.constant 0 : i32
    %c0_i32_1 = arith.constant 0 : i32
    %c0_i32_2 = arith.constant 0 : i32
    return %arg0, %c0_i32, %c0_i32_0, %c0_i32_1 : i32, i32, i32, i32
  }
  func.func @transform_1(%arg0: i32) -> (i32, i32, i32, i32) {
    %c0_i32 = arith.constant 0 : i32
    %c0_i32_0 = arith.constant 0 : i32
    %c0_i32_1 = arith.constant 0 : i32
    %c0_i32_2 = arith.constant 0 : i32
    %c0_i32_3 = arith.constant 0 : i32
    return %c0_i32, %c0_i32_0, %c0_i32_1, %c0_i32_2 : i32, i32, i32, i32
  }
  func.func @transform_2(%arg0: i32) -> (i32, i32) {
    %c0_i32 = arith.constant 0 : i32
    %c0_i32_0 = arith.constant 0 : i32
    %c0_i32_1 = arith.constant 0 : i32
    return %c0_i32, %c0_i32_0 : i32, i32
  }
  func.func @transform_3(%arg0: i32) -> (i32, i32, i32) {
    %c0_i32 = arith.constant 0 : i32
    %c0_i32_0 = arith.constant 0 : i32
    %c0_i32_1 = arith.constant 0 : i32
    %c0_i32_2 = arith.constant 0 : i32
    return %c0_i32, %c0_i32_0, %c0_i32_1 : i32, i32, i32
  }
  func.func @transform_4(%arg0: i32) -> (i32, i32) {
    %c0_i32 = arith.constant 0 : i32
    %c0_i32_0 = arith.constant 0 : i32
    %c0_i32_1 = arith.constant 0 : i32
    return %c0_i32, %c0_i32_0 : i32, i32
  }
  func.func @transform_5(%arg0: i32) -> (i32, i32, i32) {
    %c0_i32 = arith.constant 0 : i32
    %c0_i32_0 = arith.constant 0 : i32
    %c0_i32_1 = arith.constant 0 : i32
    %c0_i32_2 = arith.constant 0 : i32
    return %c0_i32, %c0_i32_0, %c0_i32_1 : i32, i32, i32
  }
  func.func @transform_6(%arg0: i32) -> (i32, i32, i32) {
    %c0_i32 = arith.constant 0 : i32
    %c0_i32_0 = arith.constant 0 : i32
    %c0_i32_1 = arith.constant 0 : i32
    %c0_i32_2 = arith.constant 0 : i32
    return %c0_i32, %c0_i32_0, %c0_i32_1 : i32, i32, i32
  }
  func.func @transform_7(%arg0: i32) -> (i32, i32, i32) {
    %c0_i32 = arith.constant 0 : i32
    %c0_i32_0 = arith.constant 0 : i32
    %c0_i32_1 = arith.constant 0 : i32
    %c0_i32_2 = arith.constant 0 : i32
    return %c0_i32, %c0_i32_0, %c0_i32_1 : i32, i32, i32
  }
  func.func @transform_8(%arg0: i32) -> (i32, i32, i32) {
    %c0_i32 = arith.constant 0 : i32
    %c0_i32_0 = arith.constant 0 : i32
    %c0_i32_1 = arith.constant 0 : i32
    %c0_i32_2 = arith.constant 0 : i32
    return %c0_i32, %c0_i32_0, %c0_i32_1 : i32, i32, i32
  }
  func.func @transform_9(%arg0: i32) -> (i32, i32, i32) {
    %c0_i32 = arith.constant 0 : i32
    %c0_i32_0 = arith.constant 0 : i32
    %c0_i32_1 = arith.constant 0 : i32
    %c0_i32_2 = arith.constant 0 : i32
    return %c0_i32, %c0_i32_0, %c0_i32_1 : i32, i32, i32
  }
  func.func @transform_10(%arg0: i32) -> (i32, i32) {
    %c0_i32 = arith.constant 0 : i32
    %c0_i32_0 = arith.constant 0 : i32
    %c0_i32_1 = arith.constant 0 : i32
    return %c0_i32, %c0_i32_0 : i32, i32
  }
  func.func @transform_11(%arg0: i32) -> (i32, i32) {
    %c0_i32 = arith.constant 0 : i32
    %c0_i32_0 = arith.constant 0 : i32
    %c0_i32_1 = arith.constant 0 : i32
    return %c0_i32, %c0_i32_0 : i32, i32
  }
  func.func @transform_12(%arg0: i32) -> (i32, i32) {
    %c0_i32 = arith.constant 0 : i32
    %c0_i32_0 = arith.constant 0 : i32
    %c0_i32_1 = arith.constant 0 : i32
    return %c0_i32, %c0_i32_0 : i32, i32
  }
  func.func @transform_13(%arg0: i32) -> (i32, i32, i32) {
    %c0_i32 = arith.constant 0 : i32
    %c0_i32_0 = arith.constant 0 : i32
    %c0_i32_1 = arith.constant 0 : i32
    return %arg0, %c0_i32, %c0_i32_0 : i32, i32, i32
  }
}

</mosaic_0001>

<llo_original>
// kernel: _lambda_.1
$region0: #{_lambda_.1}
  #allocation0 [shape = 'u32[]', space=smem, size = 0x4, offset = 0x4, fixed_abs, tag = 'smem constant byte address 0x4 - core index']
  #allocation1 [shape = 'u32[144,128]{1,0:T(1,128)}', space=vmem, size = 0x12000, scoped, tag = 'internal scratch']
  #allocation2 [shape = 'f32[3,32,28]{2,1,0:T(8,128)}', space=vmem, size = 0xc000, scoped, tag = 'scratch operand']
  #allocation3 [shape = 'f32[18,224]{1,0:T(8,128)}', space=vmem, size = 0x6000, scoped, tag = 'scratch operand']
  #allocation4 [shape = 'f32[7,224]{1,0:T(8,128)}', space=vmem, size = 0x2000, scoped, tag = 'scratch operand']
  %s0 = inlined_call_operand.vmem [shape: f32[2,3,28,28], index: 0, kind: input, shape index: {}]
  %s1 = inlined_call_operand.hbm [shape: f32[5,3,28,448], index: 1, kind: input, shape index: {}]
  %s2 = inlined_call_operand.hbm [shape: f32[1,448], index: 2, kind: input, shape index: {}]
  %s3 = inlined_call_operand.hbm [shape: f32[5,224,448], index: 3, kind: input, shape index: {}]
  %s4 = inlined_call_operand.hbm [shape: f32[1,448], index: 4, kind: input, shape index: {}]
  %s5 = inlined_call_operand.vmem [shape: f32[2,14,28], index: 5, kind: input, shape index: {}]
  %s6 = inlined_call_operand.hbm [shape: f32[2,448,224], index: 6, kind: input, shape index: {}]
  %s7 = inlined_call_operand.vmem [shape: f32[2,7,14], index: 7, kind: input, shape index: {}]
  %s8 = inlined_call_operand.hbm [shape: f32[2,448,224], index: 8, kind: input, shape index: {}]
  %s9 = inlined_call_operand.hbm [shape: f32[7,224,128], index: 9, kind: input, shape index: {}]
  %s10 = inlined_call_operand.hbm [shape: f32[1,128], index: 10, kind: input, shape index: {}]
  %s11 = inlined_call_operand.hbm [shape: f32[128,128], index: 11, kind: input, shape index: {}]
  %s12 = inlined_call_operand.hbm [shape: f32[1,128], index: 12, kind: input, shape index: {}]
  %s13 = inlined_call_operand.hbm [shape: f32[2,1,128], index: 13, kind: output, shape index: {}]
  %s14 = sld [smem:[#allocation0]]
  $region125: #{_lambda_.1} parent=0
    _
  %s16 = ssub.s32 1, %s14
  %s17 = scalar_select 0, %s16, %s14
  $region1: #{_lambda_.1} parent=0
    #allocation5 [shape = 'u8[983040]{0}', space=vmem, size = 0xf0000, scoped, tag = 'input window, operand 1, single buffered']
    #allocation6 [shape = 's32[2]{0}', space=sflag, size = 0x8, scoped, tag = 'scoped memory for _lambda_.1']
    #allocation7 [shape = 's32[2]{0}', space=sflag, size = 0x8, scoped, tag = 'scoped memory for _lambda_.1']
    #allocation8 [shape = 'u8[2048]{0}', space=vmem, size = 0x800, scoped, tag = 'input window, operand 2, single buffered']
    #allocation9 [shape = 's32[1]{0}', space=sflag, size = 0x4, scoped, tag = 'scoped memory for _lambda_.1']
    #allocation10 [shape = 'u8[2293760]{0}', space=vmem, size = 0x230000, scoped, tag = 'input window, operand 3, single buffered']
    #allocation11 [shape = 'u8[2048]{0}', space=vmem, size = 0x800, scoped, tag = 'input window, operand 4, single buffered']
    #allocation12 [shape = 's32[1]{0}', space=sflag, size = 0x4, scoped, tag = 'scoped memory for _lambda_.1']
    #allocation13 [shape = 'u8[917504]{0}', space=vmem, size = 0xe0000, scoped, tag = 'input window, operand 6, single buffered']
    #allocation14 [shape = 'u8[917504]{0}', space=vmem, size = 0xe0000, scoped, tag = 'input window, operand 8, single buffered']
    #allocation15 [shape = 's32[1]{0}', space=sflag, size = 0x4, scoped, tag = 'scoped memory for _lambda_.1']
    #allocation16 [shape = 'u8[802816]{0}', space=vmem, size = 0xc4000, scoped, tag = 'input window, operand 9, single buffered']
    #allocation17 [shape = 'u8[512]{0}', space=vmem, size = 0x400, scoped, tag = 'input window, operand 10, single buffered']
    #allocation18 [shape = 's32[1]{0}', space=sflag, size = 0x4, scoped, tag = 'scoped memory for _lambda_.1']
    #allocation19 [shape = 'u8[65536]{0}', space=vmem, size = 0x10000, scoped, tag = 'input window, operand 11, single buffered']
    #allocation20 [shape = 'u8[512]{0}', space=vmem, size = 0x400, scoped, tag = 'input window, operand 12, single buffered']
    #allocation21 [shape = 's32[1]{0}', space=sflag, size = 0x4, scoped, tag = 'scoped memory for _lambda_.1']
    #allocation22 [shape = 'u8[1024]{0}', space=vmem, size = 0x400, scoped, tag = 'output window, operand 0']
    %18 = vsyncpa [#allocation6], 0
    %19 = vsyncpa [#allocation9], 0
    %20 = vsyncpa [#allocation12], 0
    %21 = vsyncpa [#allocation15], 0
    %22 = vsyncpa [#allocation18], 0
    %23 = vsyncpa [#allocation21], 0
    %24 = vsyncpa [#allocation7], 0
    %s25 = scalar_lea.sflag [#allocation7], 1
    %26 = vsyncpa %s25, 0
    loop: start=0, step=1, limit=4
    $region2: #{_lambda_.1} parent=1 // loop_pre_header
      _
    $region3: #{_lambda_.1} parent=1 // loop_header
      %s28 = sphi 0, %s32
      %p29 = scmp.ge.s32.totalorder %s28, 4
      %s38 = sphi 0, %s40
      %s41 = sphi 0, %s38
      %s42 = sphi 0, %s41
      %s58 = sphi 0, %s42
      %s62 = sphi 0, %s62
      %s64 = sphi 0, %s62
      %s65 = sphi 0, %s64
      %s79 = sphi 0, %s65
      %s83 = sphi 0, %s83
      %s85 = sphi 0, %s83
      %s86 = sphi 0, %s85
      %s100 = sphi 0, %s86
      %s104 = sphi 0, %s104
      %s106 = sphi 0, %s104
      %s107 = sphi 0, %s106
      %s121 = sphi 0, %s107
      %s125 = sphi 0, %s125
      %s127 = sphi 0, %s125
      %s128 = sphi 0, %s127
      %s142 = sphi 0, %s128
      %s146 = sphi 0, %s146
      %s148 = sphi 0, %s146
      %s149 = sphi 0, %s148
      %s163 = sphi 0, %s149
      %s167 = sphi 0, %s167
      %s169 = sphi 0, %s167
      %s170 = sphi 0, %s169
      %s184 = sphi 0, %s170
      %s188 = sphi 0, %s188
      %s190 = sphi 0, %s188
      %s191 = sphi 0, %s190
      %s205 = sphi 0, %s191
      %s209 = sphi 0, %s209
      %s211 = sphi 0, %s209
      %s212 = sphi 0, %s211
      %s226 = sphi 0, %s212
      %s230 = sphi 0, %s230
      %s232 = sphi 0, %s230
      %s233 = sphi 0, %s232
      %s247 = sphi 0, %s233
      %s251 = sphi 0, %s251
      %s253 = sphi 0, %s251
      %s254 = sphi 0, %s253
      %s268 = sphi 0, %s254
      %s272 = sphi 0, %s272
      %s274 = sphi 0, %s272
      %s275 = sphi 0, %s274
      %s289 = sphi 0, %s275
      %s293 = sphi 0, %s293
      %s295 = sphi 0, %s293
      %s296 = sphi 0, %s295
      %s310 = sphi 0, %s296
      %s316 = sphi 0, %s318
      %s319 = sphi 0, %s316
      %s320 = sphi 0, %s319
      %s336 = sphi 0, %s320
    $region4: #{_lambda_.1} parent=1 // loop_header_branch
      %31 = sbr.rel (%p29) target = $region8
    $region5: #{_lambda_.1} parent=1 // loop_body
      %s33 = ssub.s32 %s28, 1
      %s34 = ssub.s32 %s28, 2
      %s35 = sadd.s32 %s28, 1
      %s36 = ssub.s32 %s28, %s35
      %p37 = scmp.eq.s32.totalorder %s36, 0
      %s39 = sadd.s32 %s38, 1
      %s40 = scalar_select %p37, %s38, %s39
      %p43 = pneg %p37
      %p44 = scmp.eq.s32.totalorder %s28, 1
      %p45 = por %p43, %p44
      %p46 = scmp.ne.s32.totalorder %s38, %s41
      %p47 = scmp.eq.s32.totalorder %s28, 0
      %p48 = por %p46, %p47
      %p49 = scmp.ne.s32.totalorder %s38, %s41
      %p50 = scmp.eq.s32.totalorder %s33, 1
      %p51 = por %p49, %p50
      %p52 = scmp.ne.s32.totalorder %s41, %s42
      %p53 = scmp.eq.s32.totalorder %s33, 0
      %p54 = por %p52, %p53
      %p55 = scmp.ne.s32.totalorder %s41, %s42
      %p56 = scmp.eq.s32.totalorder %s34, 1
      %p57 = por %p55, %p56
      %p59 = scmp.ne.s32.totalorder %s42, %s58
      %p60 = scmp.eq.s32.totalorder %s34, 0
      %p61 = por %p59, %p60
      %s63 = sadd.s32 %s62, 1
      %p66 = scmp.eq.s32.totalorder %s28, 1
      %p67 = scmp.ne.s32.totalorder %s62, %s64
      %p68 = scmp.eq.s32.totalorder %s28, 0
      %p69 = por %p67, %p68
      %p70 = scmp.ne.s32.totalorder %s62, %s64
      %p71 = scmp.eq.s32.totalorder %s33, 1
      %p72 = por %p70, %p71
      %p73 = scmp.ne.s32.totalorder %s64, %s65
      %p74 = scmp.eq.s32.totalorder %s33, 0
      %p75 = por %p73, %p74
      %p76 = scmp.ne.s32.totalorder %s64, %s65
      %p77 = scmp.eq.s32.totalorder %s34, 1
      %p78 = por %p76, %p77
      %p80 = scmp.ne.s32.totalorder %s65, %s79
      %p81 = scmp.eq.s32.totalorder %s34, 0
      %p82 = por %p80, %p81
      %s84 = sadd.s32 %s83, 1
      %p87 = scmp.eq.s32.totalorder %s28, 1
      %p88 = scmp.ne.s32.totalorder %s83, %s85
      %p89 = scmp.eq.s32.totalorder %s28, 0
      %p90 = por %p88, %p89
      %p91 = scmp.ne.s32.totalorder %s83, %s85
      %p92 = scmp.eq.s32.totalorder %s33, 1
      %p93 = por %p91, %p92
      %p94 = scmp.ne.s32.totalorder %s85, %s86
      %p95 = scmp.eq.s32.totalorder %s33, 0
      %p96 = por %p94, %p95
      %p97 = scmp.ne.s32.totalorder %s85, %s86
      %p98 = scmp.eq.s32.totalorder %s34, 1
      %p99 = por %p97, %p98
      %p101 = scmp.ne.s32.totalorder %s86, %s100
      %p102 = scmp.eq.s32.totalorder %s34, 0
      %p103 = por %p101, %p102
      %s105 = sadd.s32 %s104, 1
      %p108 = scmp.eq.s32.totalorder %s28, 1
      %p109 = scmp.ne.s32.totalorder %s104, %s106
      %p110 = scmp.eq.s32.totalorder %s28, 0
      %p111 = por %p109, %p110
      %p112 = scmp.ne.s32.totalorder %s104, %s106
      %p113 = scmp.eq.s32.totalorder %s33, 1
      %p114 = por %p112, %p113
      %p115 = scmp.ne.s32.totalorder %s106, %s107
      %p116 = scmp.eq.s32.totalorder %s33, 0
      %p117 = por %p115, %p116
      %p118 = scmp.ne.s32.totalorder %s106, %s107
      %p119 = scmp.eq.s32.totalorder %s34, 1
      %p120 = por %p118, %p119
      %p122 = scmp.ne.s32.totalorder %s107, %s121
      %p123 = scmp.eq.s32.totalorder %s34, 0
      %p124 = por %p122, %p123
      %s126 = sadd.s32 %s125, 1
      %p129 = scmp.eq.s32.totalorder %s28, 1
      %p130 = scmp.ne.s32.totalorder %s125, %s127
      %p131 = scmp.eq.s32.totalorder %s28, 0
      %p132 = por %p130, %p131
      %p133 = scmp.ne.s32.totalorder %s125, %s127
      %p134 = scmp.eq.s32.totalorder %s33, 1
      %p135 = por %p133, %p134
      %p136 = scmp.ne.s32.totalorder %s127, %s128
      %p137 = scmp.eq.s32.totalorder %s33, 0
      %p138 = por %p136, %p137
      %p139 = scmp.ne.s32.totalorder %s127, %s128
      %p140 = scmp.eq.s32.totalorder %s34, 1
      %p141 = por %p139, %p140
      %p143 = scmp.ne.s32.totalorder %s128, %s142
      %p144 = scmp.eq.s32.totalorder %s34, 0
      %p145 = por %p143, %p144
      %s147 = sadd.s32 %s146, 1
      %p150 = scmp.eq.s32.totalorder %s28, 1
      %p151 = scmp.ne.s32.totalorder %s146, %s148
      %p152 = scmp.eq.s32.totalorder %s28, 0
      %p153 = por %p151, %p152
      %p154 = scmp.ne.s32.totalorder %s146, %s148
      %p155 = scmp.eq.s32.totalorder %s33, 1
      %p156 = por %p154, %p155
      %p157 = scmp.ne.s32.totalorder %s148, %s149
      %p158 = scmp.eq.s32.totalorder %s33, 0
      %p159 = por %p157, %p158
      %p160 = scmp.ne.s32.totalorder %s148, %s149
      %p161 = scmp.eq.s32.totalorder %s34, 1
      %p162 = por %p160, %p161
      %p164 = scmp.ne.s32.totalorder %s149, %s163
      %p165 = scmp.eq.s32.totalorder %s34, 0
      %p166 = por %p164, %p165
      %s168 = sadd.s32 %s167, 1
      %p171 = scmp.eq.s32.totalorder %s28, 1
      %p172 = scmp.ne.s32.totalorder %s167, %s169
      %p173 = scmp.eq.s32.totalorder %s28, 0
      %p174 = por %p172, %p173
      %p175 = scmp.ne.s32.totalorder %s167, %s169
      %p176 = scmp.eq.s32.totalorder %s33, 1
      %p177 = por %p175, %p176
      %p178 = scmp.ne.s32.totalorder %s169, %s170
      %p179 = scmp.eq.s32.totalorder %s33, 0
      %p180 = por %p178, %p179
      %p181 = scmp.ne.s32.totalorder %s169, %s170
      %p182 = scmp.eq.s32.totalorder %s34, 1
      %p183 = por %p181, %p182
      %p185 = scmp.ne.s32.totalorder %s170, %s184
      %p186 = scmp.eq.s32.totalorder %s34, 0
      %p187 = por %p185, %p186
      %s189 = sadd.s32 %s188, 1
      %p192 = scmp.eq.s32.totalorder %s28, 1
      %p193 = scmp.ne.s32.totalorder %s188, %s190
      %p194 = scmp.eq.s32.totalorder %s28, 0
      %p195 = por %p193, %p194
      %p196 = scmp.ne.s32.totalorder %s188, %s190
      %p197 = scmp.eq.s32.totalorder %s33, 1
      %p198 = por %p196, %p197
      %p199 = scmp.ne.s32.totalorder %s190, %s191
      %p200 = scmp.eq.s32.totalorder %s33, 0
      %p201 = por %p199, %p200
      %p202 = scmp.ne.s32.totalorder %s190, %s191
      %p203 = scmp.eq.s32.totalorder %s34, 1
      %p204 = por %p202, %p203
      %p206 = scmp.ne.s32.totalorder %s191, %s205
      %p207 = scmp.eq.s32.totalorder %s34, 0
      %p208 = por %p206, %p207
      %s210 = sadd.s32 %s209, 1
      %p213 = scmp.eq.s32.totalorder %s28, 1
      %p214 = scmp.ne.s32.totalorder %s209, %s211
      %p215 = scmp.eq.s32.totalorder %s28, 0
      %p216 = por %p214, %p215
      %p217 = scmp.ne.s32.totalorder %s209, %s211
      %p218 = scmp.eq.s32.totalorder %s33, 1
      %p219 = por %p217, %p218
      %p220 = scmp.ne.s32.totalorder %s211, %s212
      %p221 = scmp.eq.s32.totalorder %s33, 0
      %p222 = por %p220, %p221
      %p223 = scmp.ne.s32.totalorder %s211, %s212
      %p224 = scmp.eq.s32.totalorder %s34, 1
      %p225 = por %p223, %p224
      %p227 = scmp.ne.s32.totalorder %s212, %s226
      %p228 = scmp.eq.s32.totalorder %s34, 0
      %p229 = por %p227, %p228
      %s231 = sadd.s32 %s230, 1
      %p234 = scmp.eq.s32.totalorder %s28, 1
      %p235 = scmp.ne.s32.totalorder %s230, %s232
      %p236 = scmp.eq.s32.totalorder %s28, 0
      %p237 = por %p235, %p236
      %p238 = scmp.ne.s32.totalorder %s230, %s232
      %p239 = scmp.eq.s32.totalorder %s33, 1
      %p240 = por %p238, %p239
      %p241 = scmp.ne.s32.totalorder %s232, %s233
      %p242 = scmp.eq.s32.totalorder %s33, 0
      %p243 = por %p241, %p242
      %p244 = scmp.ne.s32.totalorder %s232, %s233
      %p245 = scmp.eq.s32.totalorder %s34, 1
      %p246 = por %p244, %p245
      %p248 = scmp.ne.s32.totalorder %s233, %s247
      %p249 = scmp.eq.s32.totalorder %s34, 0
      %p250 = por %p248, %p249
      %s252 = sadd.s32 %s251, 1
      %p255 = scmp.eq.s32.totalorder %s28, 1
      %p256 = scmp.ne.s32.totalorder %s251, %s253
      %p257 = scmp.eq.s32.totalorder %s28, 0
      %p258 = por %p256, %p257
      %p259 = scmp.ne.s32.totalorder %s251, %s253
      %p260 = scmp.eq.s32.totalorder %s33, 1
      %p261 = por %p259, %p260
      %p262 = scmp.ne.s32.totalorder %s253, %s254
      %p263 = scmp.eq.s32.totalorder %s33, 0
      %p264 = por %p262, %p263
      %p265 = scmp.ne.s32.totalorder %s253, %s254
      %p266 = scmp.eq.s32.totalorder %s34, 1
      %p267 = por %p265, %p266
      %p269 = scmp.ne.s32.totalorder %s254, %s268
      %p270 = scmp.eq.s32.totalorder %s34, 0
      %p271 = por %p269, %p270
      %s273 = sadd.s32 %s272, 1
      %p276 = scmp.eq.s32.totalorder %s28, 1
      %p277 = scmp.ne.s32.totalorder %s272, %s274
      %p278 = scmp.eq.s32.totalorder %s28, 0
      %p279 = por %p277, %p278
      %p280 = scmp.ne.s32.totalorder %s272, %s274
      %p281 = scmp.eq.s32.totalorder %s33, 1
      %p282 = por %p280, %p281
      %p283 = scmp.ne.s32.totalorder %s274, %s275
      %p284 = scmp.eq.s32.totalorder %s33, 0
      %p285 = por %p283, %p284
      %p286 = scmp.ne.s32.totalorder %s274, %s275
      %p287 = scmp.eq.s32.totalorder %s34, 1
      %p288 = por %p286, %p287
      %p290 = scmp.ne.s32.totalorder %s275, %s289
      %p291 = scmp.eq.s32.totalorder %s34, 0
      %p292 = por %p290, %p291
      %s294 = sadd.s32 %s293, 1
      %p297 = scmp.eq.s32.totalorder %s28, 1
      %p298 = scmp.ne.s32.totalorder %s293, %s295
      %p299 = scmp.eq.s32.totalorder %s28, 0
      %p300 = por %p298, %p299
      %p301 = scmp.ne.s32.totalorder %s293, %s295
      %p302 = scmp.eq.s32.totalorder %s33, 1
      %p303 = por %p301, %p302
      %p304 = scmp.ne.s32.totalorder %s295, %s296
      %p305 = scmp.eq.s32.totalorder %s33, 0
      %p306 = por %p304, %p305
      %p307 = scmp.ne.s32.totalorder %s295, %s296
      %p308 = scmp.eq.s32.totalorder %s34, 1
      %p309 = por %p307, %p308
      %p311 = scmp.ne.s32.totalorder %s296, %s310
      %p312 = scmp.eq.s32.totalorder %s34, 0
      %p313 = por %p311, %p312
      %s314 = ssub.s32 %s28, %s35
      %p315 = scmp.eq.s32.totalorder %s314, 0
      %s317 = sadd.s32 %s316, 1
      %s318 = scalar_select %p315, %s316, %s317
      %p321 = pneg %p315
      %p322 = scmp.eq.s32.totalorder %s28, 1
      %p323 = por %p321, %p322
      %p324 = scmp.ne.s32.totalorder %s316, %s319
      %p325 = scmp.eq.s32.totalorder %s28, 0
      %p326 = por %p324, %p325
      %p327 = scmp.ne.s32.totalorder %s316, %s319
      %p328 = scmp.eq.s32.totalorder %s33, 1
      %p329 = por %p327, %p328
      %p330 = scmp.ne.s32.totalorder %s319, %s320
      %p331 = scmp.eq.s32.totalorder %s33, 0
      %p332 = por %p330, %p331
      %p333 = scmp.ne.s32.totalorder %s319, %s320
      %p334 = scmp.eq.s32.totalorder %s34, 1
      %p335 = por %p333, %p334
      %p337 = scmp.ne.s32.totalorder %s320, %s336
      %p338 = scmp.eq.s32.totalorder %s34, 0
      %p339 = por %p337, %p338
      %p340 = scmp.le.s32.totalorder 1, %s28
      %p341 = scmp.lt.s32.totalorder %s28, 3
      %p342 = pnand %p340, %p341
      %p343 = pneg %p342
      // Predicated region
      $region9: #{_lambda_.1} parent=5 // pred_check
        _
      $region10: #{_lambda_.1} parent=5 // pred_check_branch
        %345 = sbr.rel (%p342) target = $region12
      $region11: #{_lambda_.1} parent=5 // pred_region
        %s346 = ssub.s32 %s28, 1
        // Predicated region
        $region13: #{_lambda_.1} parent=11 // pred_check
          %p347 = pneg %p75
        $region14: #{_lambda_.1} parent=11 // pred_check_branch
          %349 = sbr.rel (%p347) target = $region16
        $region15: #{_lambda_.1} parent=11 // pred_region
          %s351 = ssub.s32 30720, 30720
          %352 = vsyncadd [#allocation6], %s351
          %s353 = sshll.u32 [#allocation5], 4
          %s354 = int_to_ptr.vmem [resolvable:$true] %s353
          %359 = dma.hbm_to_vmem [thread:$0]  %s1, 30720, %s354, [#allocation6], 512, 512, 32
        $region16: #{_lambda_.1} parent=11 // pred_fallthru
          _
        // Predicated region
        $region17: #{_lambda_.1} parent=11 // pred_check
          %p360 = pneg %p96
        $region18: #{_lambda_.1} parent=11 // pred_check_branch
          %362 = sbr.rel (%p360) target = $region20
        $region19: #{_lambda_.1} parent=11 // pred_region
          %s364 = ssub.s32 64, 64
          %365 = vsyncadd [#allocation9], %s364
          %s367 = sshll.u32 [#allocation8], 4
          %s368 = int_to_ptr.vmem [resolvable:$true] %s367
          %370 = dma.hbm_to_vmem [thread:$0]  %s2, 64, %s368, [#allocation9]
        $region20: #{_lambda_.1} parent=11 // pred_fallthru
          _
        // Predicated region
        $region21: #{_lambda_.1} parent=11 // pred_check
          %p371 = pneg %p117
        $region22: #{_lambda_.1} parent=11 // pred_check_branch
          %373 = sbr.rel (%p371) target = $region24
        $region23: #{_lambda_.1} parent=11 // pred_region
          %s375 = ssub.s32 71680, 71680
          %376 = vsyncadd [#allocation9], %s375
          %s377 = sshll.u32 [#allocation10], 4
          %s378 = int_to_ptr.vmem [resolvable:$true] %s377
          %383 = dma.hbm_to_vmem [thread:$0]  %s3, 71680, %s378, [#allocation9], 512, 512, 32
        $region24: #{_lambda_.1} parent=11 // pred_fallthru
          _
        // Predicated region
        $region25: #{_lambda_.1} parent=11 // pred_check
          %p384 = pneg %p138
        $region26: #{_lambda_.1} parent=11 // pred_check_branch
          %386 = sbr.rel (%p384) target = $region28
        $region27: #{_lambda_.1} parent=11 // pred_region
          %s388 = ssub.s32 64, 64
          %389 = vsyncadd [#allocation12], %s388
          %s391 = sshll.u32 [#allocation11], 4
          %s392 = int_to_ptr.vmem [resolvable:$true] %s391
          %394 = dma.hbm_to_vmem [thread:$0]  %s4, 64, %s392, [#allocation12]
        $region28: #{_lambda_.1} parent=11 // pred_fallthru
          _
        // Predicated region
        $region29: #{_lambda_.1} parent=11 // pred_check
          %p395 = pneg %p159
        $region30: #{_lambda_.1} parent=11 // pred_check_branch
          %397 = sbr.rel (%p395) target = $region32
        $region31: #{_lambda_.1} parent=11 // pred_region
          _
        $region32: #{_lambda_.1} parent=11 // pred_fallthru
          _
        // Predicated region
        $region33: #{_lambda_.1} parent=11 // pred_check
          %p398 = pneg %p180
        $region34: #{_lambda_.1} parent=11 // pred_check_branch
          %400 = sbr.rel (%p398) target = $region36
        $region35: #{_lambda_.1} parent=11 // pred_region
          %s402 = ssub.s32 28672, 28672
          %403 = vsyncadd [#allocation12], %s402
          %s404 = sshll.u32 [#allocation13], 4
          %s405 = int_to_ptr.vmem [resolvable:$true] %s404
          %410 = dma.hbm_to_vmem [thread:$0]  %s6, 28672, %s405, [#allocation12], 256, 256, 16
        $region36: #{_lambda_.1} parent=11 // pred_fallthru
          _
        // Predicated region
        $region37: #{_lambda_.1} parent=11 // pred_check
          %p411 = pneg %p201
        $region38: #{_lambda_.1} parent=11 // pred_check_branch
          %413 = sbr.rel (%p411) target = $region40
        $region39: #{_lambda_.1} parent=11 // pred_region
          _
        $region40: #{_lambda_.1} parent=11 // pred_fallthru
          _
        // Predicated region
        $region41: #{_lambda_.1} parent=11 // pred_check
          %p414 = pneg %p222
        $region42: #{_lambda_.1} parent=11 // pred_check_branch
          %416 = sbr.rel (%p414) target = $region44
        $region43: #{_lambda_.1} parent=11 // pred_region
          %s418 = ssub.s32 28672, 28672
          %419 = vsyncadd [#allocation15], %s418
          %s420 = sshll.u32 [#allocation14], 4
          %s421 = int_to_ptr.vmem [resolvable:$true] %s420
          %426 = dma.hbm_to_vmem [thread:$0]  %s8, 28672, %s421, [#allocation15], 256, 256, 16
        $region44: #{_lambda_.1} parent=11 // pred_fallthru
          _
        // Predicated region
        $region45: #{_lambda_.1} parent=11 // pred_check
          %p427 = pneg %p243
        $region46: #{_lambda_.1} parent=11 // pred_check_branch
          %429 = sbr.rel (%p427) target = $region48
        $region47: #{_lambda_.1} parent=11 // pred_region
          %s431 = ssub.s32 25088, 25088
          %432 = vsyncadd [#allocation15], %s431
          %s433 = sshll.u32 [#allocation16], 4
          %s434 = int_to_ptr.vmem [resolvable:$true] %s433
          %439 = dma.hbm_to_vmem [thread:$0]  %s9, 25088, %s434, [#allocation15], 128, 128, 8
        $region48: #{_lambda_.1} parent=11 // pred_fallthru
          _
        // Predicated region
        $region49: #{_lambda_.1} parent=11 // pred_check
          %p440 = pneg %p264
        $region50: #{_lambda_.1} parent=11 // pred_check_branch
          %442 = sbr.rel (%p440) target = $region52
        $region51: #{_lambda_.1} parent=11 // pred_region
          %s444 = ssub.s32 16, 16
          %445 = vsyncadd [#allocation18], %s444
          %s447 = sshll.u32 [#allocation17], 4
          %s448 = int_to_ptr.vmem [resolvable:$true] %s447
          %450 = dma.hbm_to_vmem [thread:$0]  %s10, 16, %s448, [#allocation18]
        $region52: #{_lambda_.1} parent=11 // pred_fallthru
          _
        // Predicated region
        $region53: #{_lambda_.1} parent=11 // pred_check
          %p451 = pneg %p285
        $region54: #{_lambda_.1} parent=11 // pred_check_branch
          %453 = sbr.rel (%p451) target = $region56
        $region55: #{_lambda_.1} parent=11 // pred_region
          %s455 = ssub.s32 2048, 2048
          %456 = vsyncadd [#allocation18], %s455
          %s457 = sshll.u32 [#allocation19], 4
          %s458 = int_to_ptr.vmem [resolvable:$true] %s457
          %463 = dma.hbm_to_vmem [thread:$0]  %s11, 2048, %s458, [#allocation18], 128, 128, 8
        $region56: #{_lambda_.1} parent=11 // pred_fallthru
          _
        // Predicated region
        $region57: #{_lambda_.1} parent=11 // pred_check
          %p464 = pneg %p306
        $region58: #{_lambda_.1} parent=11 // pred_check_branch
          %466 = sbr.rel (%p464) target = $region60
        $region59: #{_lambda_.1} parent=11 // pred_region
          %s468 = ssub.s32 16, 16
          %469 = vsyncadd [#allocation21], %s468
          %s471 = sshll.u32 [#allocation20], 4
          %s472 = int_to_ptr.vmem [resolvable:$true] %s471
          %474 = dma.hbm_to_vmem [thread:$0]  %s12, 16, %s472, [#allocation21]
        $region60: #{_lambda_.1} parent=11 // pred_fallthru
          _
      $region12: #{_lambda_.1} parent=5 // pred_fallthru
        _
      %p475 = scmp.lt.s32.totalorder %s28, 2
      // Predicated region
      $region61: #{_lambda_.1} parent=5 // pred_check
        %p476 = pneg %p475
      $region62: #{_lambda_.1} parent=5 // pred_check_branch
        %478 = sbr.rel (%p476) target = $region64
      $region63: #{_lambda_.1} parent=5 // pred_region
        // Predicated region
        $region65: #{_lambda_.1} parent=63 // pred_check
          %p479 = pneg %p48
        $region66: #{_lambda_.1} parent=63 // pred_check_branch
          %481 = sbr.rel (%p479) target = $region68
        $region67: #{_lambda_.1} parent=63 // pred_region
          %p482 = scmp.lt.s32.totalorder %s28, 1
          %s483 = scalar_select %p482, %s28, 1
          %s484 = smul.addr %s483, 12
          %s485 = smul.addr %s484, 8
          %s486 = scalar_lea.vmem %s0, %s485
        $region68: #{_lambda_.1} parent=63 // pred_fallthru
          _
      $region64: #{_lambda_.1} parent=5 // pred_fallthru
        _
      %p487 = scmp.le.s32.totalorder 1, %s28
      %p488 = scmp.lt.s32.totalorder %s28, 3
      %p489 = pnand %p487, %p488
      %p490 = pneg %p489
      // Predicated region
      $region69: #{_lambda_.1} parent=5 // pred_check
        _
      $region70: #{_lambda_.1} parent=5 // pred_check_branch
        %492 = sbr.rel (%p489) target = $region72
      $region71: #{_lambda_.1} parent=5 // pred_region
        %s493 = ssub.s32 %s28, 1
        // Predicated region
        $region73: #{_lambda_.1} parent=71 // pred_check
          %p494 = pneg %p75
        $region74: #{_lambda_.1} parent=71 // pred_check_branch
          %496 = sbr.rel (%p494) target = $region76
        $region75: #{_lambda_.1} parent=71 // pred_region
          %497 = dma.done [#allocation6], 30720
        $region76: #{_lambda_.1} parent=71 // pred_fallthru
          _
        // Predicated region
        $region77: #{_lambda_.1} parent=71 // pred_check
          %p498 = pneg %p96
        $region78: #{_lambda_.1} parent=71 // pred_check_branch
          %500 = sbr.rel (%p498) target = $region80
        $region79: #{_lambda_.1} parent=71 // pred_region
          %501 = dma.done [#allocation9], 64
        $region80: #{_lambda_.1} parent=71 // pred_fallthru
          _
        // Predicated region
        $region81: #{_lambda_.1} parent=71 // pred_check
          %p502 = pneg %p117
        $region82: #{_lambda_.1} parent=71 // pred_check_branch
          %504 = sbr.rel (%p502) target = $region84
        $region83: #{_lambda_.1} parent=71 // pred_region
          %505 = dma.done [#allocation9], 71680
        $region84: #{_lambda_.1} parent=71 // pred_fallthru
          _
        // Predicated region
        $region85: #{_lambda_.1} parent=71 // pred_check
          %p506 = pneg %p138
        $region86: #{_lambda_.1} parent=71 // pred_check_branch
          %508 = sbr.rel (%p506) target = $region88
        $region87: #{_lambda_.1} parent=71 // pred_region
          %509 = dma.done [#allocation12], 64
        $region88: #{_lambda_.1} parent=71 // pred_fallthru
          _
        // Predicated region
        $region89: #{_lambda_.1} parent=71 // pred_check
          %p510 = pneg %p180
        $region90: #{_lambda_.1} parent=71 // pred_check_branch
          %512 = sbr.rel (%p510) target = $region92
        $region91: #{_lambda_.1} parent=71 // pred_region
          %513 = dma.done [#allocation12], 28672
        $region92: #{_lambda_.1} parent=71 // pred_fallthru
          _
        // Predicated region
        $region93: #{_lambda_.1} parent=71 // pred_check
          %p514 = pneg %p222
        $region94: #{_lambda_.1} parent=71 // pred_check_branch
          %516 = sbr.rel (%p514) target = $region96
        $region95: #{_lambda_.1} parent=71 // pred_region
          %517 = dma.done [#allocation15], 28672
        $region96: #{_lambda_.1} parent=71 // pred_fallthru
          _
        // Predicated region
        $region97: #{_lambda_.1} parent=71 // pred_check
          %p518 = pneg %p243
        $region98: #{_lambda_.1} parent=71 // pred_check_branch
          %520 = sbr.rel (%p518) target = $region100
        $region99: #{_lambda_.1} parent=71 // pred_region
          %521 = dma.done [#allocation15], 25088
        $region100: #{_lambda_.1} parent=71 // pred_fallthru
          _
        // Predicated region
        $region101: #{_lambda_.1} parent=71 // pred_check
          %p522 = pneg %p264
        $region102: #{_lambda_.1} parent=71 // pred_check_branch
          %524 = sbr.rel (%p522) target = $region104
        $region103: #{_lambda_.1} parent=71 // pred_region
          %525 = dma.done [#allocation18], 16
        $region104: #{_lambda_.1} parent=71 // pred_fallthru
          _
        // Predicated region
        $region105: #{_lambda_.1} parent=71 // pred_check
          %p526 = pneg %p285
        $region106: #{_lambda_.1} parent=71 // pred_check_branch
          %528 = sbr.rel (%p526) target = $region108
        $region107: #{_lambda_.1} parent=71 // pred_region
          %529 = dma.done [#allocation18], 2048
        $region108: #{_lambda_.1} parent=71 // pred_fallthru
          _
        // Predicated region
        $region109: #{_lambda_.1} parent=71 // pred_check
          %p530 = pneg %p306
        $region110: #{_lambda_.1} parent=71 // pred_check_branch
          %532 = sbr.rel (%p530) target = $region112
        $region111: #{_lambda_.1} parent=71 // pred_region
          %533 = dma.done [#allocation21], 16
        $region112: #{_lambda_.1} parent=71 // pred_fallthru
          _
        %p534 = scmp.lt.s32.totalorder %s33, 1
        %s535 = scalar_select %p534, %s33, 1
        %s536 = smul.addr %s535, 12
        %s537 = smul.addr %s536, 8
        %s538 = scalar_lea.vmem %s0, %s537
        %p539 = pneg %p54
        %p540 = pneg %p51
        %p541 = pneg %p75
        %p542 = pneg %p72
        %p543 = pneg %p96
        %p544 = pneg %p93
        %p545 = pneg %p117
        %p546 = pneg %p114
        %p547 = pneg %p138
        %p548 = pneg %p135
        %p549 = pneg %p159
        %p550 = pneg %p156
        %p551 = pneg %p180
        %p552 = pneg %p177
        %p553 = pneg %p201
        %p554 = pneg %p198
        %p555 = pneg %p222
        %p556 = pneg %p219
        %p557 = pneg %p243
        %p558 = pneg %p240
        %p559 = pneg %p264
        %p560 = pneg %p261
        %p561 = pneg %p285
        %p562 = pneg %p282
        %p563 = pneg %p306
        %p564 = pneg %p303
        %p565 = pneg %p332
        %p566 = pneg %p329
        %s567 = sand.u32 %s319, 1
        %s568 = scalar_lea.sflag [#allocation7], %s567
        %s569 = sand.u32 %s319, 1
        %s570 = scalar_lea.vmem [#allocation22], %s569
        %p571 = scmp.lt.s32.totalorder %s33, 1
        %s572 = scalar_select %p571, %s33, 1
        %s573 = smul.addr %s572, 12
        %s574 = smul.addr %s573, 8
        %s575 = scalar_lea.vmem %s0, %s574
        %vm576 = vcmask 228352
        %577 = vst.msk [vmem:[#allocation2] sm:$0xff] %vm576, 0.0
        %578 = vst.msk [vmem:[#allocation2 + $0x8] sm:$0xff] %vm576, 0.0
        %579 = vst.msk [vmem:[#allocation2 + $0x10] sm:$0xff] %vm576, 0.0
        %580 = vst.msk [vmem:[#allocation2 + $0x18] sm:$0xff] %vm576, 0.0
        %581 = vst.msk [vmem:[#allocation2 + $0x20] sm:$0xff] %vm576, 0.0
        %582 = vst.msk [vmem:[#allocation2 + $0x28] sm:$0xff] %vm576, 0.0
        %583 = vst.msk [vmem:[#allocation2 + $0x30] sm:$0xff] %vm576, 0.0
        %584 = vst.msk [vmem:[#allocation2 + $0x38] sm:$0xff] %vm576, 0.0
        %585 = vst.msk [vmem:[#allocation2 + $0x40] sm:$0xff] %vm576, 0.0
        %586 = vst.msk [vmem:[#allocation2 + $0x48] sm:$0xff] %vm576, 0.0
        %587 = vst.msk [vmem:[#allocation2 + $0x50] sm:$0xff] %vm576, 0.0
        %588 = vst.msk [vmem:[#allocation2 + $0x58] sm:$0xff] %vm576, 0.0
        %v589 = vld [vmem:[%s575] sm:$0xff]
        %v590 = vld [vmem:[%s575 + $0x8] sm:$0xff]
        %v591 = vld [vmem:[%s575 + $0x10] sm:$0xff]
        %v592 = vld [vmem:[%s575 + $0x18] sm:$0xf]
        %593 = vst.msk [vmem:[#allocation2 + $0x2] sm:$0xff] %vm576, %v589
        %594 = vst.msk [vmem:[#allocation2 + $0xa] sm:$0xff] %vm576, %v590
        %595 = vst.msk [vmem:[#allocation2 + $0x12] sm:$0xff] %vm576, %v591
        %vm596 = vcmask 224256
        %597 = vst.msk [vmem:[#allocation2 + $0x1a] sm:$0xf] %vm596, %v592
        %s598 = scalar_lea.vmem %s575, 32
        %v599 = vld [vmem:[%s598] sm:$0xff]
        %v600 = vld [vmem:[%s598 + $0x8] sm:$0xff]
        %v601 = vld [vmem:[%s598 + $0x10] sm:$0xff]
        %v602 = vld [vmem:[%s598 + $0x18] sm:$0xf]
        %s603 = scalar_lea.vmem [#allocation2], 32
        %604 = vst.msk [vmem:[%s603 + $0x2] sm:$0xff] %vm576, %v599
        %605 = vst.msk [vmem:[%s603 + $0xa] sm:$0xff] %vm576, %v600
        %606 = vst.msk [vmem:[%s603 + $0x12] sm:$0xff] %vm576, %v601
        %607 = vst.msk [vmem:[%s603 + $0x1a] sm:$0xf] %vm596, %v602
        %s608 = scalar_lea.vmem %s575, 64
        %v609 = vld [vmem:[%s608] sm:$0xff]
        %v610 = vld [vmem:[%s608 + $0x8] sm:$0xff]
        %v611 = vld [vmem:[%s608 + $0x10] sm:$0xff]
        %v612 = vld [vmem:[%s608 + $0x18] sm:$0xf]
        %s613 = scalar_lea.vmem [#allocation2], 64
        %614 = vst.msk [vmem:[%s613 + $0x2] sm:$0xff] %vm576, %v609
        %615 = vst.msk [vmem:[%s613 + $0xa] sm:$0xff] %vm576, %v610
        %616 = vst.msk [vmem:[%s613 + $0x12] sm:$0xff] %vm576, %v611
        %617 = vst.msk [vmem:[%s613 + $0x1a] sm:$0xf] %vm596, %v612
        %v618 = vld [vmem:[#allocation2] sm:$0xff]
        %v619 = vld [vmem:[#allocation2 + $0x8] sm:$0xff]
        %v620 = vld [vmem:[#allocation2 + $0x10] sm:$0xff]
        %v621 = vld [vmem:[#allocation2 + $0x18] sm:$0xf]
        %v622 = vld [vmem:[#allocation5] sm:$0xff]
        %v623 = vld [vmem:[#allocation5 + $0x8] sm:$0xff]
        %v624 = vld [vmem:[#allocation5 + $0x10] sm:$0xff]
        %v625 = vld [vmem:[#allocation5 + $0x18] sm:$0xff]
        %v626 = vld [vmem:[#allocation5 + $0x20] sm:$0xff]
        %v627 = vld [vmem:[#allocation5 + $0x28] sm:$0xff]
        %v628 = vld [vmem:[#allocation5 + $0x30] sm:$0xff]
        %v629 = vld [vmem:[#allocation5 + $0x38] sm:$0xff]
        %v630 = vld [vmem:[#allocation5 + $0x40] sm:$0xff]
        %v631 = vld [vmem:[#allocation5 + $0x48] sm:$0xff]
        %v632 = vld [vmem:[#allocation5 + $0x50] sm:$0xff]
        %v633 = vld [vmem:[#allocation5 + $0x58] sm:$0xff]
        %v634 = vld [vmem:[#allocation5 + $0x60] sm:$0xf]
        %v635 = vld [vmem:[#allocation5 + $0x68] sm:$0xf]
        %v636 = vld [vmem:[#allocation5 + $0x70] sm:$0xf]
        %v637 = vld [vmem:[#allocation5 + $0x78] sm:$0xf]
        %v638 = vld [vmem:[%s603] sm:$0xff]
        %v639 = vld [vmem:[%s603 + $0x8] sm:$0xff]
        %v640 = vld [vmem:[%s603 + $0x10] sm:$0xff]
        %v641 = vld [vmem:[%s603 + $0x18] sm:$0xf]
        %s642 = scalar_lea.vmem [#allocation5], 128
        %v643 = vld [vmem:[%s642] sm:$0xff]
        %v644 = vld [vmem:[%s642 + $0x8] sm:$0xff]
        %v645 = vld [vmem:[%s642 + $0x10] sm:$0xff]
        %v646 = vld [vmem:[%s642 + $0x18] sm:$0xff]
        %v647 = vld [vmem:[%s642 + $0x20] sm:$0xff]
        %v648 = vld [vmem:[%s642 + $0x28] sm:$0xff]
        %v649 = vld [vmem:[%s642 + $0x30] sm:$0xff]
        %v650 = vld [vmem:[%s642 + $0x38] sm:$0xff]
        %v651 = vld [vmem:[%s642 + $0x40] sm:$0xff]
        %v652 = vld [vmem:[%s642 + $0x48] sm:$0xff]
        %v653 = vld [vmem:[%s642 + $0x50] sm:$0xff]
        %v654 = vld [vmem:[%s642 + $0x58] sm:$0xff]
        %v655 = vld [vmem:[%s642 + $0x60] sm:$0xf]
        %v656 = vld [vmem:[%s642 + $0x68] sm:$0xf]
        %v657 = vld [vmem:[%s642 + $0x70] sm:$0xf]
        %v658 = vld [vmem:[%s642 + $0x78] sm:$0xf]
        %v660 = vsel %vm576, %v638, 0
        %v663 = vsel %vm576, %v639, 0
        %v666 = vsel %vm576, %v640, 0
        %v669 = vsel %vm576, %v641, 0
        %vm671 = vcmask 1043456
        %v673 = vsel %vm671, %v655, 0
        %v676 = vsel %vm671, %v656, 0
        %v679 = vsel %vm671, %v657, 0
        %v682 = vsel %vm671, %v658, 0
        %684 = vmatprep.subr.mxu0 %v644
        %685 = vmatpush1.msra.mxu0 %v643
        %686 = vmatprep.subr.mxu0 %v648
        %687 = vmatpush1.msra.mxu0 %v647
        %688 = vmatprep.subr.mxu0 %v652
        %689 = vmatpush1.msra.mxu0 %v651
        %690 = vmatprep.subr.mxu0 %v676
        %691 = vmatpush1.msra.mxu0 %v673
        %692 = vmatprep.subr.mxu0 0.0
        %693 = vmatpush1.msra.mxu0 0.0
        %694 = vmatprep.subr.mxu0 0.0
        %695 = vmatpush1.msra.mxu0 0.0
        %696 = vmatprep.subr.mxu0 0.0
        %697 = vmatpush1.msra.mxu0 0.0
        %698 = vmatprep.subr.mxu0 0.0
        %699 = vmatpush1.msra.mxu0 0.0
        %700 = vmatprep.subr.mxu0 0.0
        %701 = vmatpush1.msra.mxu0 0.0
        %702 = vmatprep.subr.mxu0 0.0
        %703 = vmatpush1.msra.mxu0 0.0
        %704 = vmatprep.subr.mxu0 0.0
        %705 = vmatpush1.msra.mxu0 0.0
        %706 = vmatprep.subr.mxu0 0.0
        %707 = vmatpush1.msra.mxu0 0.0
        %708 = vmatprep.subr.mxu0 0.0
        %709 = vmatpush1.msra.mxu0 0.0
        %710 = vmatprep.subr.mxu0 0.0
        %711 = vmatpush1.msra.mxu0 0.0
        %712 = vmatprep.subr.mxu0 0.0
        %713 = vmatpush1.msra.mxu0 0.0
        %714 = vmatprep.subr.mxu0 0.0
        %715 = vmatpush1.msra.mxu0 0.0
        %716 = vmatprep.subr.mxu0 0.0
        %717 = vmatpush1.msra.mxu0 0.0
        %718 = vmatprep.subr.mxu0 0.0
        %719 = vmatpush1.msra.mxu0 0.0
        %720 = vmatprep.subr.mxu0 0.0
        %721 = vmatpush1.msra.mxu0 0.0
        %722 = vmatprep.subr.mxu0 0.0
        %723 = vmatpush1.msra.mxu0 0.0
        %724 = vmatprep.subr.mxu0 0.0
        %725 = vmatpush1.msra.mxu0 0.0
        %726 = vmatprep.subr.mxu0 0.0
        %727 = vmatpush1.msra.mxu0 0.0
        %728 = vmatprep.subr.mxu0 0.0
        %729 = vmatpush1.msra.mxu0 0.0
        %730 = vmatprep.subr.mxu0 0.0
        %731 = vmatpush1.msra.mxu0 0.0
        %732 = vmatprep.subr.mxu0 0.0
        %733 = vmatpush1.msra.mxu0 0.0
        %734 = vmatprep.subr.mxu0 0.0
        %735 = vmatpush1.msra.mxu0 0.0
        %736 = vmatprep.subr.mxu0 0.0
        %737 = vmatpush1.msra.mxu0 0.0
        %738 = vmatprep.subr.mxu0 0.0
        %739 = vmatpush1.msra.mxu0 0.0
        %740 = vmatprep.subr.mxu0 0.0
        %741 = vmatpush1.msra.mxu0 0.0
        %742 = vmatprep.subr.mxu0 0.0
        %743 = vmatpush1.msra.mxu0 0.0
        %744 = vmatprep.subr.mxu0 0.0
        %745 = vmatpush1.msra.mxu0 0.0
        %746 = vmatprep.subr.mxu0 0.0
        %747 = vmatpush1.msra.mxu0 0.0
        %748 = vmatprep.mubr.f32.mxu0 0.0
        %749 = vmatmul.mubr.f32.gmra.mrb[0].mxu0 %v660
        %v750 = vpop.f32.mrb[0].mxu0
        %v751 = vadd.f32 0.0, %v750
        %v752 = vpop.f32.mrb[0].mxu0
        %v753 = vadd.f32 0.0, %v752
        %754 = vmatprep.mubr.f32.mxu0 0.0
        %755 = vmatmul.mubr.f32.gmra.mrb[0].mxu0 %v663
        %v756 = vpop.f32.mrb[0].mxu0
        %v757 = vadd.f32 0.0, %v756
        %v758 = vpop.f32.mrb[0].mxu0
        %v759 = vadd.f32 0.0, %v758
        %760 = vmatprep.mubr.f32.mxu0 0.0
        %761 = vmatmul.mubr.f32.gmra.mrb[0].mxu0 %v666
        %v762 = vpop.f32.mrb[0].mxu0
        %v763 = vadd.f32 0.0, %v762
        %v764 = vpop.f32.mrb[0].mxu0
        %v765 = vadd.f32 0.0, %v764
        %766 = vmatprep.mubr.f32.mxu0 0.0
        %767 = vmatmul.mubr.f32.gmra.mrb[0].mxu0 %v669
        %v768 = vpop.f32.mrb[0].mxu0
        %v769 = vadd.f32 0.0, %v768
        %v770 = vpop.f32.mrb[0].mxu0
        %v771 = vadd.f32 0.0, %v770
        %772 = vdwg.mxu0
        %773 = vmatprep.subr.mxu0 %v646
        %774 = vmatpush1.msra.mxu0 %v645
        %775 = vmatprep.subr.mxu0 %v650
        %776 = vmatpush1.msra.mxu0 %v649
        %777 = vmatprep.subr.mxu0 %v654
        %778 = vmatpush1.msra.mxu0 %v653
        %779 = vmatprep.subr.mxu0 %v682
        %780 = vmatpush1.msra.mxu0 %v679
        %781 = vmatprep.subr.mxu0 0.0
        %782 = vmatpush1.msra.mxu0 0.0
        %783 = vmatprep.subr.mxu0 0.0
        %784 = vmatpush1.msra.mxu0 0.0
        %785 = vmatprep.subr.mxu0 0.0
        %786 = vmatpush1.msra.mxu0 0.0
        %787 = vmatprep.subr.mxu0 0.0
        %788 = vmatpush1.msra.mxu0 0.0
        %789 = vmatprep.subr.mxu0 0.0
        %790 = vmatpush1.msra.mxu0 0.0
        %791 = vmatprep.subr.mxu0 0.0
        %792 = vmatpush1.msra.mxu0 0.0
        %793 = vmatprep.subr.mxu0 0.0
        %794 = vmatpush1.msra.mxu0 0.0
        %795 = vmatprep.subr.mxu0 0.0
        %796 = vmatpush1.msra.mxu0 0.0
        %797 = vmatprep.subr.mxu0 0.0
        %798 = vmatpush1.msra.mxu0 0.0
        %799 = vmatprep.subr.mxu0 0.0
        %800 = vmatpush1.msra.mxu0 0.0
        %801 = vmatprep.subr.mxu0 0.0
        %802 = vmatpush1.msra.mxu0 0.0
        %803 = vmatprep.subr.mxu0 0.0
        %804 = vmatpush1.msra.mxu0 0.0
        %805 = vmatprep.subr.mxu0 0.0
        %806 = vmatpush1.msra.mxu0 0.0
        %807 = vmatprep.subr.mxu0 0.0
        %808 = vmatpush1.msra.mxu0 0.0
        %809 = vmatprep.subr.mxu0 0.0
        %810 = vmatpush1.msra.mxu0 0.0
        %811 = vmatprep.subr.mxu0 0.0
        %812 = vmatpush1.msra.mxu0 0.0
        %813 = vmatprep.subr.mxu0 0.0
        %814 = vmatpush1.msra.mxu0 0.0
        %815 = vmatprep.subr.mxu0 0.0
        %816 = vmatpush1.msra.mxu0 0.0
        %817 = vmatprep.subr.mxu0 0.0
        %818 = vmatpush1.msra.mxu0 0.0
        %819 = vmatprep.subr.mxu0 0.0
        %820 = vmatpush1.msra.mxu0 0.0
        %821 = vmatprep.subr.mxu0 0.0
        %822 = vmatpush1.msra.mxu0 0.0
        %823 = vmatprep.subr.mxu0 0.0
        %824 = vmatpush1.msra.mxu0 0.0
        %825 = vmatprep.subr.mxu0 0.0
        %826 = vmatpush1.msra.mxu0 0.0
        %827 = vmatprep.subr.mxu0 0.0
        %828 = vmatpush1.msra.mxu0 0.0
        %829 = vmatprep.subr.mxu0 0.0
        %830 = vmatpush1.msra.mxu0 0.0
        %831 = vmatprep.subr.mxu0 0.0
        %832 = vmatpush1.msra.mxu0 0.0
        %833 = vmatprep.subr.mxu0 0.0
        %834 = vmatpush1.msra.mxu0 0.0
        %835 = vmatprep.subr.mxu0 0.0
        %836 = vmatpush1.msra.mxu0 0.0
        %837 = vmatprep.mubr.f32.mxu0 0.0
        %838 = vmatmul.mubr.f32.gmra.mrb[0].mxu0 %v660
        %v839 = vpop.f32.mrb[0].mxu0
        %v840 = vadd.f32 0.0, %v839
        %v841 = vpop.f32.mrb[0].mxu0
        %v842 = vadd.f32 0.0, %v841
        %843 = vmatprep.mubr.f32.mxu0 0.0
        %844 = vmatmul.mubr.f32.gmra.mrb[0].mxu0 %v663
        %v845 = vpop.f32.mrb[0].mxu0
        %v846 = vadd.f32 0.0, %v845
        %v847 = vpop.f32.mrb[0].mxu0
        %v848 = vadd.f32 0.0, %v847
        %849 = vmatprep.mubr.f32.mxu0 0.0
        %850 = vmatmul.mubr.f32.gmra.mrb[0].mxu0 %v666
        %v851 = vpop.f32.mrb[0].mxu0
        %v852 = vadd.f32 0.0, %v851
        %v853 = vpop.f32.mrb[0].mxu0
        %v854 = vadd.f32 0.0, %v853
        %855 = vmatprep.mubr.f32.mxu0 0.0
        %856 = vmatmul.mubr.f32.gmra.mrb[0].mxu0 %v669
        %v857 = vpop.f32.mrb[0].mxu0
        %v858 = vadd.f32 0.0, %v857
        %v859 = vpop.f32.mrb[0].mxu0
        %v860 = vadd.f32 0.0, %v859
        %861 = vdwg.mxu0
        %v863 = vsel %vm576, %v618, 0
        %v866 = vsel %vm576, %v619, 0
        %v869 = vsel %vm576, %v620, 0
        %v872 = vsel %vm576, %v621, 0
        %v875 = vsel %vm671, %v634, 0
        %v878 = vsel %vm671, %v635, 0
        %v881 = vsel %vm671, %v636, 0
        %v884 = vsel %vm671, %v637, 0
        %886 = vmatprep.subr.mxu0 %v623
        %887 = vmatpush1.msra.mxu0 %v622
        %888 = vmatprep.subr.mxu0 %v627
        %889 = vmatpush1.msra.mxu0 %v626
        %890 = vmatprep.subr.mxu0 %v631
        %891 = vmatpush1.msra.mxu0 %v630
        %892 = vmatprep.subr.mxu0 %v878
        %893 = vmatpush1.msra.mxu0 %v875
        %894 = vmatprep.subr.mxu0 0.0
        %895 = vmatpush1.msra.mxu0 0.0
        %896 = vmatprep.subr.mxu0 0.0
        %897 = vmatpush1.msra.mxu0 0.0
        %898 = vmatprep.subr.mxu0 0.0
        %899 = vmatpush1.msra.mxu0 0.0
        %900 = vmatprep.subr.mxu0 0.0
        %901 = vmatpush1.msra.mxu0 0.0
        %902 = vmatprep.subr.mxu0 0.0
        %903 = vmatpush1.msra.mxu0 0.0
        %904 = vmatprep.subr.mxu0 0.0
        %905 = vmatpush1.msra.mxu0 0.0
        %906 = vmatprep.subr.mxu0 0.0
        %907 = vmatpush1.msra.mxu0 0.0
        %908 = vmatprep.subr.mxu0 0.0
        %909 = vmatpush1.msra.mxu0 0.0
        %910 = vmatprep.subr.mxu0 0.0
        %911 = vmatpush1.msra.mxu0 0.0
        %912 = vmatprep.subr.mxu0 0.0
        %913 = vmatpush1.msra.mxu0 0.0
        %914 = vmatprep.subr.mxu0 0.0
        %915 = vmatpush1.msra.mxu0 0.0
        %916 = vmatprep.subr.mxu0 0.0
        %917 = vmatpush1.msra.mxu0 0.0
        %918 = vmatprep.subr.mxu0 0.0
        %919 = vmatpush1.msra.mxu0 0.0
        %920 = vmatprep.subr.mxu0 0.0
        %921 = vmatpush1.msra.mxu0 0.0
        %922 = vmatprep.subr.mxu0 0.0
        %923 = vmatpush1.msra.mxu0 0.0
        %924 = vmatprep.subr.mxu0 0.0
        %925 = vmatpush1.msra.mxu0 0.0
        %926 = vmatprep.subr.mxu0 0.0
        %927 = vmatpush1.msra.mxu0 0.0
        %928 = vmatprep.subr.mxu0 0.0
        %929 = vmatpush1.msra.mxu0 0.0
        %930 = vmatprep.subr.mxu0 0.0
        %931 = vmatpush1.msra.mxu0 0.0
        %932 = vmatprep.subr.mxu0 0.0
        %933 = vmatpush1.msra.mxu0 0.0
        %934 = vmatprep.subr.mxu0 0.0
        %935 = vmatpush1.msra.mxu0 0.0
        %936 = vmatprep.subr.mxu0 0.0
        %937 = vmatpush1.msra.mxu0 0.0
        %938 = vmatprep.subr.mxu0 0.0
        %939 = vmatpush1.msra.mxu0 0.0
        %940 = vmatprep.subr.mxu0 0.0
        %941 = vmatpush1.msra.mxu0 0.0
        %942 = vmatprep.subr.mxu0 0.0
        %943 = vmatpush1.msra.mxu0 0.0
        %944 = vmatprep.subr.mxu0 0.0
        %945 = vmatpush1.msra.mxu0 0.0
        %946 = vmatprep.subr.mxu0 0.0
        %947 = vmatpush1.msra.mxu0 0.0
        %948 = vmatprep.subr.mxu0 0.0
        %949 = vmatpush1.msra.mxu0 0.0
        %950 = vmatprep.mubr.f32.mxu0 0.0
        %951 = vmatmul.mubr.f32.gmra.mrb[0].mxu0 %v863
        %v952 = vpop.f32.mrb[0].mxu0
        %v953 = vadd.f32 %v751, %v952
        %v954 = vpop.f32.mrb[0].mxu0
        %v955 = vadd.f32 %v753, %v954
        %956 = vmatprep.mubr.f32.mxu0 0.0
        %957 = vmatmul.mubr.f32.gmra.mrb[0].mxu0 %v866
        %v958 = vpop.f32.mrb[0].mxu0
        %v959 = vadd.f32 %v757, %v958
        %v960 = vpop.f32.mrb[0].mxu0
        %v961 = vadd.f32 %v759, %v960
        %962 = vmatprep.mubr.f32.mxu0 0.0
        %963 = vmatmul.mubr.f32.gmra.mrb[0].mxu0 %v869
        %v964 = vpop.f32.mrb[0].mxu0
        %v965 = vadd.f32 %v763, %v964
        %v966 = vpop.f32.mrb[0].mxu0
        %v967 = vadd.f32 %v765, %v966
        %968 = vmatprep.mubr.f32.mxu0 0.0
        %969 = vmatmul.mubr.f32.gmra.mrb[0].mxu0 %v872
        %v970 = vpop.f32.mrb[0].mxu0
        %v971 = vadd.f32 %v769, %v970
        %v972 = vpop.f32.mrb[0].mxu0
        %v973 = vadd.f32 %v771, %v972
        %974 = vdwg.mxu0
        %975 = vmatprep.subr.mxu0 %v625
        %976 = vmatpush1.msra.mxu0 %v624
        %977 = vmatprep.subr.mxu0 %v629
        %978 = vmatpush1.msra.mxu0 %v628
        %979 = vmatprep.subr.mxu0 %v633
        %980 = vmatpush1.msra.mxu0 %v632
        %981 = vmatprep.subr.mxu0 %v884
        %982 = vmatpush1.msra.mxu0 %v881
        %983 = vmatprep.subr.mxu0 0.0
        %984 = vmatpush1.msra.mxu0 0.0
        %985 = vmatprep.subr.mxu0 0.0
        %986 = vmatpush1.msra.mxu0 0.0
        %987 = vmatprep.subr.mxu0 0.0
        %988 = vmatpush1.msra.mxu0 0.0
        %989 = vmatprep.subr.mxu0 0.0
        %990 = vmatpush1.msra.mxu0 0.0
        %991 = vmatprep.subr.mxu0 0.0
        %992 = vmatpush1.msra.mxu0 0.0
        %993 = vmatprep.subr.mxu0 0.0
        %994 = vmatpush1.msra.mxu0 0.0
        %995 = vmatprep.subr.mxu0 0.0
        %996 = vmatpush1.msra.mxu0 0.0
        %997 = vmatprep.subr.mxu0 0.0
        %998 = vmatpush1.msra.mxu0 0.0
        %999 = vmatprep.subr.mxu0 0.0
        %1000 = vmatpush1.msra.mxu0 0.0
        %1001 = vmatprep.subr.mxu0 0.0
        %1002 = vmatpush1.msra.mxu0 0.0
        %1003 = vmatprep.subr.mxu0 0.0
        %1004 = vmatpush1.msra.mxu0 0.0
        %1005 = vmatprep.subr.mxu0 0.0
        %1006 = vmatpush1.msra.mxu0 0.0
        %1007 = vmatprep.subr.mxu0 0.0
        %1008 = vmatpush1.msra.mxu0 0.0
        %1009 = vmatprep.subr.mxu0 0.0
        %1010 = vmatpush1.msra.mxu0 0.0
        %1011 = vmatprep.subr.mxu0 0.0
        %1012 = vmatpush1.msra.mxu0 0.0
        %1013 = vmatprep.subr.mxu0 0.0
        %1014 = vmatpush1.msra.mxu0 0.0
        %1015 = vmatprep.subr.mxu0 0.0
        %1016 = vmatpush1.msra.mxu0 0.0
        %1017 = vmatprep.subr.mxu0 0.0
        %1018 = vmatpush1.msra.mxu0 0.0
        %1019 = vmatprep.subr.mxu0 0.0
        %1020 = vmatpush1.msra.mxu0 0.0
        %1021 = vmatprep.subr.mxu0 0.0
        %1022 = vmatpush1.msra.mxu0 0.0
        %1023 = vmatprep.subr.mxu0 0.0
        %1024 = vmatpush1.msra.mxu0 0.0
        %1025 = vmatprep.subr.mxu0 0.0
        %1026 = vmatpush1.msra.mxu0 0.0
        %1027 = vmatprep.subr.mxu0 0.0
        %1028 = vmatpush1.msra.mxu0 0.0
        %1029 = vmatprep.subr.mxu0 0.0
        %1030 = vmatpush1.msra.mxu0 0.0
        %1031 = vmatprep.subr.mxu0 0.0
        %1032 = vmatpush1.msra.mxu0 0.0
        %1033 = vmatprep.subr.mxu0 0.0
        %1034 = vmatpush1.msra.mxu0 0.0
        %1035 = vmatprep.subr.mxu0 0.0
        %1036 = vmatpush1.msra.mxu0 0.0
        %1037 = vmatprep.subr.mxu0 0.0
        %1038 = vmatpush1.msra.mxu0 0.0
        %1039 = vmatprep.mubr.f32.mxu0 0.0
        %1040 = vmatmul.mubr.f32.gmra.mrb[0].mxu0 %v863
        %v1041 = vpop.f32.mrb[0].mxu0
        %v1042 = vadd.f32 %v840, %v1041
        %v1043 = vpop.f32.mrb[0].mxu0
        %v1044 = vadd.f32 %v842, %v1043
        %1045 = vmatprep.mubr.f32.mxu0 0.0
        %1046 = vmatmul.mubr.f32.gmra.mrb[0].mxu0 %v866
        %v1047 = vpop.f32.mrb[0].mxu0
        %v1048 = vadd.f32 %v846, %v1047
        %v1049 = vpop.f32.mrb[0].mxu0
        %v1050 = vadd.f32 %v848, %v1049
        %1051 = vmatprep.mubr.f32.mxu0 0.0
        %1052 = vmatmul.mubr.f32.gmra.mrb[0].mxu0 %v869
        %v1053 = vpop.f32.mrb[0].mxu0
        %v1054 = vadd.f32 %v852, %v1053
        %v1055 = vpop.f32.mrb[0].mxu0
        %v1056 = vadd.f32 %v854, %v1055
        %1057 = vmatprep.mubr.f32.mxu0 0.0
        %1058 = vmatmul.mubr.f32.gmra.mrb[0].mxu0 %v872
        %v1059 = vpop.f32.mrb[0].mxu0
        %v1060 = vadd.f32 %v858, %v1059
        %v1061 = vpop.f32.mrb[0].mxu0
        %v1062 = vadd.f32 %v860, %v1061
        %1063 = vdwg.mxu0
        %v1064 = vld [vmem:[%s613] sm:$0xff]
        %v1065 = vld [vmem:[%s613 + $0x8] sm:$0xff]
        %v1066 = vld [vmem:[%s613 + $0x10] sm:$0xff]
        %v1067 = vld [vmem:[%s613 + $0x18] sm:$0xf]
        %s1068 = scalar_lea.vmem [#allocation5], 256
        %v1069 = vld [vmem:[%s1068] sm:$0xff]
        %v1070 = vld [vmem:[%s1068 + $0x8] sm:$0xff]
        %v1071 = vld [vmem:[%s1068 + $0x10] sm:$0xff]
        %v1072 = vld [vmem:[%s1068 + $0x18] sm:$0xff]
        %v1073 = vld [vmem:[%s1068 + $0x20] sm:$0xff]
        %v1074 = vld [vmem:[%s1068 + $0x28] sm:$0xff]
        %v1075 = vld [vmem:[%s1068 + $0x30] sm:$0xff]
        %v1076 = vld [vmem:[%s1068 + $0x38] sm:$0xff]
        %v1077 = vld [vmem:[%s1068 + $0x40] sm:$0xff]
        %v1078 = vld [vmem:[%s1068 + $0x48] sm:$0xff]
        %v1079 = vld [vmem:[%s1068 + $0x50] sm:$0xff]
        %v1080 = vld [vmem:[%s1068 + $0x58] sm:$0xff]
        %v1081 = vld [vmem:[%s1068 + $0x60] sm:$0xf]
        %v1082 = vld [vmem:[%s1068 + $0x68] sm:$0xf]
        %v1083 = vld [vmem:[%s1068 + $0x70] sm:$0xf]
        %v1084 = vld [vmem:[%s1068 + $0x78] sm:$0xf]
        %v1086 = vsel %vm576, %v1064, 0
        %v1089 = vsel %vm576, %v1065, 0
        %v1092 = vsel %vm576, %v1066, 0
        %v1095 = vsel %vm576, %v1067, 0
        %v1098 = vsel %vm671, %v1081, 0
        %v1101 = vsel %vm671, %v1082, 0
        %v1104 = vsel %vm671, %v1083, 0
        %v1107 = vsel %vm671, %v1084, 0
        %1109 = vmatprep.subr.mxu0 %v1070
        %1110 = vmatpush1.msra.mxu0 %v1069
        %1111 = vmatprep.subr.mxu0 %v1074
        %1112 = vmatpush1.msra.mxu0 %v1073
        %1113 = vmatprep.subr.mxu0 %v1078
        %1114 = vmatpush1.msra.mxu0 %v1077
        %1115 = vmatprep.subr.mxu0 %v1101
        %1116 = vmatpush1.msra.mxu0 %v1098
        %1117 = vmatprep.subr.mxu0 0.0
        %1118 = vmatpush1.msra.mxu0 0.0
        %1119 = vmatprep.subr.mxu0 0.0
        %1120 = vmatpush1.msra.mxu0 0.0
        %1121 = vmatprep.subr.mxu0 0.0
        %1122 = vmatpush1.msra.mxu0 0.0
        %1123 = vmatprep.subr.mxu0 0.0
        %1124 = vmatpush1.msra.mxu0 0.0
        %1125 = vmatprep.subr.mxu0 0.0
        %1126 = vmatpush1.msra.mxu0 0.0
        %1127 = vmatprep.subr.mxu0 0.0
        %1128 = vmatpush1.msra.mxu0 0.0
        %1129 = vmatprep.subr.mxu0 0.0
        %1130 = vmatpush1.msra.mxu0 0.0
        %1131 = vmatprep.subr.mxu0 0.0
        %1132 = vmatpush1.msra.mxu0 0.0
        %1133 = vmatprep.subr.mxu0 0.0
        %1134 = vmatpush1.msra.mxu0 0.0
        %1135 = vmatprep.subr.mxu0 0.0
        %1136 = vmatpush1.msra.mxu0 0.0
        %1137 = vmatprep.subr.mxu0 0.0
        %1138 = vmatpush1.msra.mxu0 0.0
        %1139 = vmatprep.subr.mxu0 0.0
        %1140 = vmatpush1.msra.mxu0 0.0
        %1141 = vmatprep.subr.mxu0 0.0
        %1142 = vmatpush1.msra.mxu0 0.0
        %1143 = vmatprep.subr.mxu0 0.0
        %1144 = vmatpush1.msra.mxu0 0.0
        %1145 = vmatprep.subr.mxu0 0.0
        %1146 = vmatpush1.msra.mxu0 0.0
        %1147 = vmatprep.subr.mxu0 0.0
        %1148 = vmatpush1.msra.mxu0 0.0
        %1149 = vmatprep.subr.mxu0 0.0
        %1150 = vmatpush1.msra.mxu0 0.0
        %1151 = vmatprep.subr.mxu0 0.0
        %1152 = vmatpush1.msra.mxu0 0.0
        %1153 = vmatprep.subr.mxu0 0.0
        %1154 = vmatpush1.msra.mxu0 0.0
        %1155 = vmatprep.subr.mxu0 0.0
        %1156 = vmatpush1.msra.mxu0 0.0
        %1157 = vmatprep.subr.mxu0 0.0
        %1158 = vmatpush1.msra.mxu0 0.0
        %1159 = vmatprep.subr.mxu0 0.0
        %1160 = vmatpush1.msra.mxu0 0.0
        %1161 = vmatprep.subr.mxu0 0.0
        %1162 = vmatpush1.msra.mxu0 0.0
        %1163 = vmatprep.subr.mxu0 0.0
        %1164 = vmatpush1.msra.mxu0 0.0
        %1165 = vmatprep.subr.mxu0 0.0
        %1166 = vmatpush1.msra.mxu0 0.0
        %1167 = vmatprep.subr.mxu0 0.0
        %1168 = vmatpush1.msra.mxu0 0.0
        %1169 = vmatprep.subr.mxu0 0.0
        %1170 = vmatpush1.msra.mxu0 0.0
        %1171 = vmatprep.subr.mxu0 0.0
        %1172 = vmatpush1.msra.mxu0 0.0
        %1173 = vmatprep.mubr.f32.mxu0 0.0
        %1174 = vmatmul.mubr.f32.gmra.mrb[0].mxu0 %v1086
        %v1175 = vpop.f32.mrb[0].mxu0
        %v1176 = vadd.f32 0.0, %v1175
        %v1177 = vpop.f32.mrb[0].mxu0
        %v1178 = vadd.f32 0.0, %v1177
        %1179 = vmatprep.mubr.f32.mxu0 0.0
        %1180 = vmatmul.mubr.f32.gmra.mrb[0].mxu0 %v1089
        %v1181 = vpop.f32.mrb[0].mxu0
        %v1182 = vadd.f32 0.0, %v1181
        %v1183 = vpop.f32.mrb[0].mxu0
        %v1184 = vadd.f32 0.0, %v1183
        %1185 = vmatprep.mubr.f32.mxu0 0.0
        %1186 = vmatmul.mubr.f32.gmra.mrb[0].mxu0 %v1092
        %v1187 = vpop.f32.mrb[0].mxu0
        %v1188 = vadd.f32 0.0, %v1187
        %v1189 = vpop.f32.mrb[0].mxu0
        %v1190 = vadd.f32 0.0, %v1189
        %1191 = vmatprep.mubr.f32.mxu0 0.0
        %1192 = vmatmul.mubr.f32.gmra.mrb[0].mxu0 %v1095
        %v1193 = vpop.f32.mrb[0].mxu0
        %v1194 = vadd.f32 0.0, %v1193
        %v1195 = vpop.f32.mrb[0].mxu0
        %v1196 = vadd.f32 0.0, %v1195
        %1197 = vdwg.mxu0
        %1198 = vmatprep.subr.mxu0 %v1072
        %1199 = vmatpush1.msra.mxu0 %v1071
        %1200 = vmatprep.subr.mxu0 %v1076
        %1201 = vmatpush1.msra.mxu0 %v1075
        %1202 = vmatprep.subr.mxu0 %v1080
        %1203 = vmatpush1.msra.mxu0 %v1079
        %1204 = vmatprep.subr.mxu0 %v1107
        %1205 = vmatpush1.msra.mxu0 %v1104
        %1206 = vmatprep.subr.mxu0 0.0
        %1207 = vmatpush1.msra.mxu0 0.0
        %1208 = vmatprep.subr.mxu0 0.0
        %1209 = vmatpush1.msra.mxu0 0.0
        %1210 = vmatprep.subr.mxu0 0.0
        %1211 = vmatpush1.msra.mxu0 0.0
        %1212 = vmatprep.subr.mxu0 0.0
        %1213 = vmatpush1.msra.mxu0 0.0
        %1214 = vmatprep.subr.mxu0 0.0
        %1215 = vmatpush1.msra.mxu0 0.0
        %1216 = vmatprep.subr.mxu0 0.0
        %1217 = vmatpush1.msra.mxu0 0.0
        %1218 = vmatprep.subr.mxu0 0.0
        %1219 = vmatpush1.msra.mxu0 0.0
        %1220 = vmatprep.subr.mxu0 0.0
        %1221 = vmatpush1.msra.mxu0 0.0
        %1222 = vmatprep.subr.mxu0 0.0
        %1223 = vmatpush1.msra.mxu0 0.0
        %1224 = vmatprep.subr.mxu0 0.0
        %1225 = vmatpush1.msra.mxu0 0.0
        %1226 = vmatprep.subr.mxu0 0.0
        %1227 = vmatpush1.msra.mxu0 0.0
        %1228 = vmatprep.subr.mxu0 0.0
        %1229 = vmatpush1.msra.mxu0 0.0
        %1230 = vmatprep.subr.mxu0 0.0
        %1231 = vmatpush1.msra.mxu0 0.0
        %1232 = vmatprep.subr.mxu0 0.0
        %1233 = vmatpush1.msra.mxu0 0.0
        %1234 = vmatprep.subr.mxu0 0.0
        %1235 = vmatpush1.msra.mxu0 0.0
        %1236 = vmatprep.subr.mxu0 0.0
        %1237 = vmatpush1.msra.mxu0 0.0
        %1238 = vmatprep.subr.mxu0 0.0
        %1239 = vmatpush1.msra.mxu0 0.0
        %1240 = vmatprep.subr.mxu0 0.0
        %1241 = vmatpush1.msra.mxu0 0.0
        %1242 = vmatprep.subr.mxu0 0.0
        %1243 = vmatpush1.msra.mxu0 0.0
        %1244 = vmatprep.subr.mxu0 0.0
        %1245 = vmatpush1.msra.mxu0 0.0
        %1246 = vmatprep.subr.mxu0 0.0
        %1247 = vmatpush1.msra.mxu0 0.0
        %1248 = vmatprep.subr.mxu0 0.0
        %1249 = vmatpush1.msra.mxu0 0.0
        %1250 = vmatprep.subr.mxu0 0.0
        %1251 = vmatpush1.msra.mxu0 0.0
        %1252 = vmatprep.subr.mxu0 0.0
        %1253 = vmatpush1.msra.mxu0 0.0
        %1254 = vmatprep.subr.mxu0 0.0
        %1255 = vmatpush1.msra.mxu0 0.0
        %1256 = vmatprep.subr.mxu0 0.0
        %1257 = vmatpush1.msra.mxu0 0.0
        %1258 = vmatprep.subr.mxu0 0.0
        %1259 = vmatpush1.msra.mxu0 0.0
        %1260 = vmatprep.subr.mxu0 0.0
        %1261 = vmatpush1.msra.mxu0 0.0
        %1262 = vmatprep.mubr.f32.mxu0 0.0
        %1263 = vmatmul.mubr.f32.gmra.mrb[0].mxu0 %v1086
        %v1264 = vpop.f32.mrb[0].mxu0
        %v1265 = vadd.f32 0.0, %v1264
        %v1266 = vpop.f32.mrb[0].mxu0
        %v1267 = vadd.f32 0.0, %v1266
        %1268 = vmatprep.mubr.f32.mxu0 0.0
        %1269 = vmatmul.mubr.f32.gmra.mrb[0].mxu0 %v1089
        %v1270 = vpop.f32.mrb[0].mxu0
        %v1271 = vadd.f32 0.0, %v1270
        %v1272 = vpop.f32.mrb[0].mxu0
        %v1273 = vadd.f32 0.0, %v1272
        %1274 = vmatprep.mubr.f32.mxu0 0.0
        %1275 = vmatmul.mubr.f32.gmra.mrb[0].mxu0 %v1092
        %v1276 = vpop.f32.mrb[0].mxu0
        %v1277 = vadd.f32 0.0, %v1276
        %v1278 = vpop.f32.mrb[0].mxu0
        %v1279 = vadd.f32 0.0, %v1278
        %1280 = vmatprep.mubr.f32.mxu0 0.0
        %1281 = vmatmul.mubr.f32.gmra.mrb[0].mxu0 %v1095
        %v1282 = vpop.f32.mrb[0].mxu0
        %v1283 = vadd.f32 0.0, %v1282
        %v1284 = vpop.f32.mrb[0].mxu0
        %v1285 = vadd.f32 0.0, %v1284
        %1286 = vdwg.mxu0
        %v1287 = vadd.f32 %v953, %v1176
        %v1288 = vadd.f32 %v955, %v1178
        %v1289 = vadd.f32 %v1042, %v1265
        %v1290 = vadd.f32 %v1044, %v1267
        %v1291 = vadd.f32 %v959, %v1182
        %v1292 = vadd.f32 %v961, %v1184
        %v1293 = vadd.f32 %v1048, %v1271
        %v1294 = vadd.f32 %v1050, %v1273
        %v1295 = vadd.f32 %v965, %v1188
        %v1296 = vadd.f32 %v967, %v1190
        %v1297 = vadd.f32 %v1054, %v1277
        %v1298 = vadd.f32 %v1056, %v1279
        %v1299 = vadd.f32 %v971, %v1194
        %v1300 = vadd.f32 %v973, %v1196
        %v1301 = vadd.f32 %v1060, %v1283
        %v1302 = vadd.f32 %v1062, %v1285
        %v1303 = vld [vmem:[#allocation2 + $0x1] sm:$0xff]
        %v1304 = vld [vmem:[#allocation2 + $0x9] sm:$0xff]
        %v1305 = vld [vmem:[#allocation2 + $0x11] sm:$0xff]
        %v1306 = vld [vmem:[#allocation2 + $0x19] sm:$0xf]
        %s1307 = scalar_lea.vmem [#allocation5], 384
        %v1308 = vld [vmem:[%s1307] sm:$0xff]
        %v1309 = vld [vmem:[%s1307 + $0x8] sm:$0xff]
        %v1310 = vld [vmem:[%s1307 + $0x10] sm:$0xff]
        %v1311 = vld [vmem:[%s1307 + $0x18] sm:$0xff]
        %v1312 = vld [vmem:[%s1307 + $0x20] sm:$0xff]
        %v1313 = vld [vmem:[%s1307 + $0x28] sm:$0xff]
        %v1314 = vld [vmem:[%s1307 + $0x30] sm:$0xff]
        %v1315 = vld [vmem:[%s1307 + $0x38] sm:$0xff]
        %v1316 = vld [vmem:[%s1307 + $0x40] sm:$0xff]
        %v1317 = vld [vmem:[%s1307 + $0x48] sm:$0xff]
        %v1318 = vld [vmem:[%s1307 + $0x50] sm:$0xff]
        %v1319 = vld [vmem:[%s1307 + $0x58] sm:$0xff]
        %v1320 = vld [vmem:[%s1307 + $0x60] sm:$0xf]
        %v1321 = vld [vmem:[%s1307 + $0x68] sm:$0xf]
        %v1322 = vld [vmem:[%s1307 + $0x70] sm:$0xf]
        %v1323 = vld [vmem:[%s1307 + $0x78] sm:$0xf]
        %v1325 = vsel %vm576, %v1303, 0
        %v1328 = vsel %vm576, %v1304, 0
        %v1331 = vsel %vm576, %v1305, 0
        %v1334 = vsel %vm576, %v1306, 0
        %v1337 = vsel %vm671, %v1320, 0
        %v1340 = vsel %vm671, %v1321, 0
        %v1343 = vsel %vm671, %v1322, 0
        %v1346 = vsel %vm671, %v1323, 0
        %1348 = vmatprep.subr.mxu0 %v1309
        %1349 = vmatpush1.msra.mxu0 %v1308
        %1350 = vmatprep.subr.mxu0 %v1313
        %1351 = vmatpush1.msra.mxu0 %v1312
        %1352 = vmatprep.subr.mxu0 %v1317
        %1353 = vmatpush1.msra.mxu0 %v1316
        %1354 = vmatprep.subr.mxu0 %v1340
        %1355 = vmatpush1.msra.mxu0 %v1337
        %1356 = vmatprep.subr.mxu0 0.0
        %1357 = vmatpush1.msra.mxu0 0.0
        %1358 = vmatprep.subr.mxu0 0.0
        %1359 = vmatpush1.msra.mxu0 0.0
        %1360 = vmatprep.subr.mxu0 0.0
        %1361 = vmatpush1.msra.mxu0 0.0
        %1362 = vmatprep.subr.mxu0 0.0
        %1363 = vmatpush1.msra.mxu0 0.0
        %1364 = vmatprep.subr.mxu0 0.0
        %1365 = vmatpush1.msra.mxu0 0.0
        %1366 = vmatprep.subr.mxu0 0.0
        %1367 = vmatpush1.msra.mxu0 0.0
        %1368 = vmatprep.subr.mxu0 0.0
        %1369 = vmatpush1.msra.mxu0 0.0
        %1370 = vmatprep.subr.mxu0 0.0
        %1371 = vmatpush1.msra.mxu0 0.0
        %1372 = vmatprep.subr.mxu0 0.0
        %1373 = vmatpush1.msra.mxu0 0.0
        %1374 = vmatprep.subr.mxu0 0.0
        %1375 = vmatpush1.msra.mxu0 0.0
        %1376 = vmatprep.subr.mxu0 0.0
        %1377 = vmatpush1.msra.mxu0 0.0
        %1378 = vmatprep.subr.mxu0 0.0
        %1379 = vmatpush1.msra.mxu0 0.0
        %1380 = vmatprep.subr.mxu0 0.0
        %1381 = vmatpush1.msra.mxu0 0.0
        %1382 = vmatprep.subr.mxu0 0.0
        %1383 = vmatpush1.msra.mxu0 0.0
        %1384 = vmatprep.subr.mxu0 0.0
        %1385 = vmatpush1.msra.mxu0 0.0
        %1386 = vmatprep.subr.mxu0 0.0
        %1387 = vmatpush1.msra.mxu0 0.0
        %1388 = vmatprep.subr.mxu0 0.0
        %1389 = vmatpush1.msra.mxu0 0.0
        %1390 = vmatprep.subr.mxu0 0.0
        %1391 = vmatpush1.msra.mxu0 0.0
        %1392 = vmatprep.subr.mxu0 0.0
        %1393 = vmatpush1.msra.mxu0 0.0
        %1394 = vmatprep.subr.mxu0 0.0
        %1395 = vmatpush1.msra.mxu0 0.0
        %1396 = vmatprep.subr.mxu0 0.0
        %1397 = vmatpush1.msra.mxu0 0.0
        %1398 = vmatprep.subr.mxu0 0.0
        %1399 = vmatpush1.msra.mxu0 0.0
        %1400 = vmatprep.subr.mxu0 0.0
        %1401 = vmatpush1.msra.mxu0 0.0
        %1402 = vmatprep.subr.mxu0 0.0
        %1403 = vmatpush1.msra.mxu0 0.0
        %1404 = vmatprep.subr.mxu0 0.0
        %1405 = vmatpush1.msra.mxu0 0.0
        %1406 = vmatprep.subr.mxu0 0.0
        %1407 = vmatpush1.msra.mxu0 0.0
        %1408 = vmatprep.subr.mxu0 0.0
        %1409 = vmatpush1.msra.mxu0 0.0
        %1410 = vmatprep.subr.mxu0 0.0
        %1411 = vmatpush1.msra.mxu0 0.0
        %1412 = vmatprep.mubr.f32.mxu0 0.0
        %1413 = vmatmul.mubr.f32.gmra.mrb[0].mxu0 %v1325
        %v1414 = vpop.f32.mrb[0].mxu0
        %v1415 = vadd.f32 0.0, %v1414
        %v1416 = vpop.f32.mrb[0].mxu0
        %v1417 = vadd.f32 0.0, %v1416
        %1418 = vmatprep.mubr.f32.mxu0 0.0
        %1419 = vmatmul.mubr.f32.gmra.mrb[0].mxu0 %v1328
        %v1420 = vpop.f32.mrb[0].mxu0
        %v1421 = vadd.f32 0.0, %v1420
        %v1422 = vpop.f32.mrb[0].mxu0
        %v1423 = vadd.f32 0.0, %v1422
        %1424 = vmatprep.mubr.f32.mxu0 0.0
        %1425 = vmatmul.mubr.f32.gmra.mrb[0].mxu0 %v1331
        %v1426 = vpop.f32.mrb[0].mxu0
        %v1427 = vadd.f32 0.0, %v1426
        %v1428 = vpop.f32.mrb[0].mxu0
        %v1429 = vadd.f32 0.0, %v1428
        %1430 = vmatprep.mubr.f32.mxu0 0.0
        %1431 = vmatmul.mubr.f32.gmra.mrb[0].mxu0 %v1334
        %v1432 = vpop.f32.mrb[0].mxu0
        %v1433 = vadd.f32 0.0, %v1432
        %v1434 = vpop.f32.mrb[0].mxu0
        %v1435 = vadd.f32 0.0, %v1434
        %1436 = vdwg.mxu0
        %1437 = vmatprep.subr.mxu0 %v1311
        %1438 = vmatpush1.msra.mxu0 %v1310
        %1439 = vmatprep.subr.mxu0 %v1315
        %1440 = vmatpush1.msra.mxu0 %v1314
        %1441 = vmatprep.subr.mxu0 %v1319
        %1442 = vmatpush1.msra.mxu0 %v1318
        %1443 = vmatprep.subr.mxu0 %v1346
        %1444 = vmatpush1.msra.mxu0 %v1343
        %1445 = vmatprep.subr.mxu0 0.0
        %1446 = vmatpush1.msra.mxu0 0.0
        %1447 = vmatprep.subr.mxu0 0.0
        %1448 = vmatpush1.msra.mxu0 0.0
        %1449 = vmatprep.subr.mxu0 0.0
        %1450 = vmatpush1.msra.mxu0 0.0
        %1451 = vmatprep.subr.mxu0 0.0
        %1452 = vmatpush1.msra.mxu0 0.0
        %1453 = vmatprep.subr.mxu0 0.0
        %1454 = vmatpush1.msra.mxu0 0.0
        %1455 = vmatprep.subr.mxu0 0.0
        %1456 = vmatpush1.msra.mxu0 0.0
        %1457 = vmatprep.subr.mxu0 0.0
        %1458 = vmatpush1.msra.mxu0 0.0
        %1459 = vmatprep.subr.mxu0 0.0
        %1460 = vmatpush1.msra.mxu0 0.0
        %1461 = vmatprep.subr.mxu0 0.0
        %1462 = vmatpush1.msra.mxu0 0.0
        %1463 = vmatprep.subr.mxu0 0.0
        %1464 = vmatpush1.msra.mxu0 0.0
        %1465 = vmatprep.subr.mxu0 0.0
        %1466 = vmatpush1.msra.mxu0 0.0
        %1467 = vmatprep.subr.mxu0 0.0
        %1468 = vmatpush1.msra.mxu0 0.0
        %1469 = vmatprep.subr.mxu0 0.0
        %1470 = vmatpush1.msra.mxu0 0.0
        %1471 = vmatprep.subr.mxu0 0.0
        %1472 = vmatpush1.msra.mxu0 0.0
        %1473 = vmatprep.subr.mxu0 0.0
        %1474 = vmatpush1.msra.mxu0 0.0
        %1475 = vmatprep.subr.mxu0 0.0
        %1476 = vmatpush1.msra.mxu0 0.0
        %1477 = vmatprep.subr.mxu0 0.0
        %1478 = vmatpush1.msra.mxu0 0.0
        %1479 = vmatprep.subr.mxu0 0.0
        %1480 = vmatpush1.msra.mxu0 0.0
        %1481 = vmatprep.subr.mxu0 0.0
        %1482 = vmatpush1.msra.mxu0 0.0
        %1483 = vmatprep.subr.mxu0 0.0
        %1484 = vmatpush1.msra.mxu0 0.0
        %1485 = vmatprep.subr.mxu0 0.0
        %1486 = vmatpush1.msra.mxu0 0.0
        %1487 = vmatprep.subr.mxu0 0.0
        %1488 = vmatpush1.msra.mxu0 0.0
        %1489 = vmatprep.subr.mxu0 0.0
        %1490 = vmatpush1.msra.mxu0 0.0
        %1491 = vmatprep.subr.mxu0 0.0
        %1492 = vmatpush1.msra.mxu0 0.0
        %1493 = vmatprep.subr.mxu0 0.0
        %1494 = vmatpush1.msra.mxu0 0.0
        %1495 = vmatprep.subr.mxu0 0.0
        %1496 = vmatpush1.msra.mxu0 0.0
        %1497 = vmatprep.subr.mxu0 0.0
        %1498 = vmatpush1.msra.mxu0 0.0
        %1499 = vmatprep.subr.mxu0 0.0
        %1500 = vmatpush1.msra.mxu0 0.0
        %1501 = vmatprep.mubr.f32.mxu0 0.0
        %1502 = vmatmul.mubr.f32.gmra.mrb[0].mxu0 %v1325
        %v1503 = vpop.f32.mrb[0].mxu0
        %v1504 = vadd.f32 0.0, %v1503
        %v1505 = vpop.f32.mrb[0].mxu0
        %v1506 = vadd.f32 0.0, %v1505
        %1507 = vmatprep.mubr.f32.mxu0 0.0
        %1508 = vmatmul.mubr.f32.gmra.mrb[0].mxu0 %v1328
        %v1509 = vpop.f32.mrb[0].mxu0
        %v1510 = vadd.f32 0.0, %v1509
        %v1511 = vpop.f32.mrb[0].mxu0
        %v1512 = vadd.f32 0.0, %v1511
        %1513 = vmatprep.mubr.f32.mxu0 0.0
        %1514 = vmatmul.mubr.f32.gmra.mrb[0].mxu0 %v1331
        %v1515 = vpop.f32.mrb[0].mxu0
        %v1516 = vadd.f32 0.0, %v1515
        %v1517 = vpop.f32.mrb[0].mxu0
        %v1518 = vadd.f32 0.0, %v1517
        %1519 = vmatprep.mubr.f32.mxu0 0.0
        %1520 = vmatmul.mubr.f32.gmra.mrb[0].mxu0 %v1334
        %v1521 = vpop.f32.mrb[0].mxu0
        %v1522 = vadd.f32 0.0, %v1521
        %v1523 = vpop.f32.mrb[0].mxu0
        %v1524 = vadd.f32 0.0, %v1523
        %1525 = vdwg.mxu0
        %v1526 = vadd.f32 %v1287, %v1415
        %v1527 = vadd.f32 %v1288, %v1417
        %v1528 = vadd.f32 %v1289, %v1504
        %v1529 = vadd.f32 %v1290, %v1506
        %v1530 = vadd.f32 %v1291, %v1421
        %v1531 = vadd.f32 %v1292, %v1423
        %v1532 = vadd.f32 %v1293, %v1510
        %v1533 = vadd.f32 %v1294, %v1512
        %v1534 = vadd.f32 %v1295, %v1427
        %v1535 = vadd.f32 %v1296, %v1429
        %v1536 = vadd.f32 %v1297, %v1516
        %v1537 = vadd.f32 %v1298, %v1518
        %v1538 = vadd.f32 %v1299, %v1433
        %v1539 = vadd.f32 %v1300, %v1435
        %v1540 = vadd.f32 %v1301, %v1522
        %v1541 = vadd.f32 %v1302, %v1524
        %v1542 = vld [vmem:[%s603 + $0x1] sm:$0xff]
        %v1543 = vld [vmem:[%s603 + $0x9] sm:$0xff]
        %v1544 = vld [vmem:[%s603 + $0x11] sm:$0xff]
        %v1545 = vld [vmem:[%s603 + $0x19] sm:$0xf]
        %s1546 = scalar_lea.vmem [#allocation5], 512
        %v1547 = vld [vmem:[%s1546] sm:$0xff]
        %v1548 = vld [vmem:[%s1546 + $0x8] sm:$0xff]
        %v1549 = vld [vmem:[%s1546 + $0x10] sm:$0xff]
        %v1550 = vld [vmem:[%s1546 + $0x18] sm:$0xff]
        %v1551 = vld [vmem:[%s1546 + $0x20] sm:$0xff]
        %v1552 = vld [vmem:[%s1546 + $0x28] sm:$0xff]
        %v1553 = vld [vmem:[%s1546 + $0x30] sm:$0xff]
        %v1554 = vld [vmem:[%s1546 + $0x38] sm:$0xff]
        %v1555 = vld [vmem:[%s1546 + $0x40] sm:$0xff]
        %v1556 = vld [vmem:[%s1546 + $0x48] sm:$0xff]
        %v1557 = vld [vmem:[%s1546 + $0x50] sm:$0xff]
        %v1558 = vld [vmem:[%s1546 + $0x58] sm:$0xff]
        %v1559 = vld [vmem:[%s1546 + $0x60] sm:$0xf]
        %v1560 = vld [vmem:[%s1546 + $0x68] sm:$0xf]
        %v1561 = vld [vmem:[%s1546 + $0x70] sm:$0xf]
        %v1562 = vld [vmem:[%s1546 + $0x78] sm:$0xf]
        %v1564 = vsel %vm576, %v1542, 0
        %v1567 = vsel %vm576, %v1543, 0
        %v1570 = vsel %vm576, %v1544, 0
        %v1573 = vsel %vm576, %v1545, 0
        %v1576 = vsel %vm671, %v1559, 0
        %v1579 = vsel %vm671, %v1560, 0
        %v1582 = vsel %vm671, %v1561, 0
        %v1585 = vsel %vm671, %v1562, 0
        %1587 = vmatprep.subr.mxu0 %v1548
        %1588 = vmatpush1.msra.mxu0 %v1547
        %1589 = vmatprep.subr.mxu0 %v1552
        %1590 = vmatpush1.msra.mxu0 %v1551
        %1591 = vmatprep.subr.mxu0 %v1556
        %1592 = vmatpush1.msra.mxu0 %v1555
        %1593 = vmatprep.subr.mxu0 %v1579
        %1594 = vmatpush1.msra.mxu0 %v1576
        %1595 = vmatprep.subr.mxu0 0.0
        %1596 = vmatpush1.msra.mxu0 0.0
        %1597 = vmatprep.subr.mxu0 0.0
        %1598 = vmatpush1.msra.mxu0 0.0
        %1599 = vmatprep.subr.mxu0 0.0
        %1600 = vmatpush1.msra.mxu0 0.0
        %1601 = vmatprep.subr.mxu0 0.0
        %1602 = vmatpush1.msra.mxu0 0.0
        %1603 = vmatprep.subr.mxu0 0.0
        %1604 = vmatpush1.msra.mxu0 0.0
        %1605 = vmatprep.subr.mxu0 0.0
        %1606 = vmatpush1.msra.mxu0 0.0
        %1607 = vmatprep.subr.mxu0 0.0
        %1608 = vmatpush1.msra.mxu0 0.0
        %1609 = vmatprep.subr.mxu0 0.0
        %1610 = vmatpush1.msra.mxu0 0.0
        %1611 = vmatprep.subr.mxu0 0.0
        %1612 = vmatpush1.msra.mxu0 0.0
        %1613 = vmatprep.subr.mxu0 0.0
        %1614 = vmatpush1.msra.mxu0 0.0
        %1615 = vmatprep.subr.mxu0 0.0
        %1616 = vmatpush1.msra.mxu0 0.0
        %1617 = vmatprep.subr.mxu0 0.0
        %1618 = vmatpush1.msra.mxu0 0.0
        %1619 = vmatprep.subr.mxu0 0.0
        %1620 = vmatpush1.msra.mxu0 0.0
        %1621 = vmatprep.subr.mxu0 0.0
        %1622 = vmatpush1.msra.mxu0 0.0
        %1623 = vmatprep.subr.mxu0 0.0
        %1624 = vmatpush1.msra.mxu0 0.0
        %1625 = vmatprep.subr.mxu0 0.0
        %1626 = vmatpush1.msra.mxu0 0.0
        %1627 = vmatprep.subr.mxu0 0.0
        %1628 = vmatpush1.msra.mxu0 0.0
        %1629 = vmatprep.subr.mxu0 0.0
        %1630 = vmatpush1.msra.mxu0 0.0
        %1631 = vmatprep.subr.mxu0 0.0
        %1632 = vmatpush1.msra.mxu0 0.0
        %1633 = vmatprep.subr.mxu0 0.0
        %1634 = vmatpush1.msra.mxu0 0.0
        %1635 = vmatprep.subr.mxu0 0.0
        %1636 = vmatpush1.msra.mxu0 0.0
        %1637 = vmatprep.subr.mxu0 0.0
        %1638 = vmatpush1.msra.mxu0 0.0
        %1639 = vmatprep.subr.mxu0 0.0
        %1640 = vmatpush1.msra.mxu0 0.0
        %1641 = vmatprep.subr.mxu0 0.0
        %1642 = vmatpush1.msra.mxu0 0.0
        %1643 = vmatprep.subr.mxu0 0.0
        %1644 = vmatpush1.msra.mxu0 0.0
        %1645 = vmatprep.subr.mxu0 0.0
        %1646 = vmatpush1.msra.mxu0 0.0
        %1647 = vmatprep.subr.mxu0 0.0
        %1648 = vmatpush1.msra.mxu0 0.0
        %1649 = vmatprep.subr.mxu0 0.0
        %1650 = vmatpush1.msra.mxu0 0.0
        %1651 = vmatprep.mubr.f32.mxu0 0.0
        %1652 = vmatmul.mubr.f32.gmra.mrb[0].mxu0 %v1564
        %v1653 = vpop.f32.mrb[0].mxu0
        %v1654 = vadd.f32 0.0, %v1653
        %v1655 = vpop.f32.mrb[0].mxu0
        %v1656 = vadd.f32 0.0, %v1655
        %1657 = vmatprep.mubr.f32.mxu0 0.0
        %1658 = vmatmul.mubr.f32.gmra.mrb[0].mxu0 %v1567
        %v1659 = vpop.f32.mrb[0].mxu0
        %v1660 = vadd.f32 0.0, %v1659
        %v1661 = vpop.f32.mrb[0].mxu0
        %v1662 = vadd.f32 0.0, %v1661
        %1663 = vmatprep.mubr.f32.mxu0 0.0
        %1664 = vmatmul.mubr.f32.gmra.mrb[0].mxu0 %v1570
        %v1665 = vpop.f32.mrb[0].mxu0
        %v1666 = vadd.f32 0.0, %v1665
        %v1667 = vpop.f32.mrb[0].mxu0
        %v1668 = vadd.f32 0.0, %v1667
        %1669 = vmatprep.mubr.f32.mxu0 0.0
        %1670 = vmatmul.mubr.f32.gmra.mrb[0].mxu0 %v1573
        %v1671 = vpop.f32.mrb[0].mxu0
        %v1672 = vadd.f32 0.0, %v1671
        %v1673 = vpop.f32.mrb[0].mxu0
        %v1674 = vadd.f32 0.0, %v1673
        %1675 = vdwg.mxu0
        %1676 = vmatprep.subr.mxu0 %v1550
        %1677 = vmatpush1.msra.mxu0 %v1549
        %1678 = vmatprep.subr.mxu0 %v1554
        %1679 = vmatpush1.msra.mxu0 %v1553
        %1680 = vmatprep.subr.mxu0 %v1558
        %1681 = vmatpush1.msra.mxu0 %v1557
        %1682 = vmatprep.subr.mxu0 %v1585
        %1683 = vmatpush1.msra.mxu0 %v1582
        %1684 = vmatprep.subr.mxu0 0.0
        %1685 = vmatpush1.msra.mxu0 0.0
        %1686 = vmatprep.subr.mxu0 0.0
        %1687 = vmatpush1.msra.mxu0 0.0
        %1688 = vmatprep.subr.mxu0 0.0
        %1689 = vmatpush1.msra.mxu0 0.0
        %1690 = vmatprep.subr.mxu0 0.0
        %1691 = vmatpush1.msra.mxu0 0.0
        %1692 = vmatprep.subr.mxu0 0.0
        %1693 = vmatpush1.msra.mxu0 0.0
        %1694 = vmatprep.subr.mxu0 0.0
        %1695 = vmatpush1.msra.mxu0 0.0
        %1696 = vmatprep.subr.mxu0 0.0
        %1697 = vmatpush1.msra.mxu0 0.0
        %1698 = vmatprep.subr.mxu0 0.0
        %1699 = vmatpush1.msra.mxu0 0.0
        %1700 = vmatprep.subr.mxu0 0.0
        %1701 = vmatpush1.msra.mxu0 0.0
        %1702 = vmatprep.subr.mxu0 0.0
        %1703 = vmatpush1.msra.mxu0 0.0
        %1704 = vmatprep.subr.mxu0 0.0
        %1705 = vmatpush1.msra.mxu0 0.0
        %1706 = vmatprep.subr.mxu0 0.0
        %1707 = vmatpush1.msra.mxu0 0.0
        %1708 = vmatprep.subr.mxu0 0.0
        %1709 = vmatpush1.msra.mxu0 0.0
        %1710 = vmatprep.subr.mxu0 0.0
        %1711 = vmatpush1.msra.mxu0 0.0
        %1712 = vmatprep.subr.mxu0 0.0
        %1713 = vmatpush1.msra.mxu0 0.0
        %1714 = vmatprep.subr.mxu0 0.0
        %1715 = vmatpush1.msra.mxu0 0.0
        %1716 = vmatprep.subr.mxu0 0.0
        %1717 = vmatpush1.msra.mxu0 0.0
        %1718 = vmatprep.subr.mxu0 0.0
        %1719 = vmatpush1.msra.mxu0 0.0
        %1720 = vmatprep.subr.mxu0 0.0
        %1721 = vmatpush1.msra.mxu0 0.0
        %1722 = vmatprep.subr.mxu0 0.0
        %1723 = vmatpush1.msra.mxu0 0.0
        %1724 = vmatprep.subr.mxu0 0.0
        %1725 = vmatpush1.msra.mxu0 0.0
        %1726 = vmatprep.subr.mxu0 0.0
        %1727 = vmatpush1.msra.mxu0 0.0
        %1728 = vmatprep.subr.mxu0 0.0
        %1729 = vmatpush1.msra.mxu0 0.0
        %1730 = vmatprep.subr.mxu0 0.0
        %1731 = vmatpush1.msra.mxu0 0.0
        %1732 = vmatprep.subr.mxu0 0.0
        %1733 = vmatpush1.msra.mxu0 0.0
        %1734 = vmatprep.subr.mxu0 0.0
        %1735 = vmatpush1.msra.mxu0 0.0
        %1736 = vmatprep.subr.mxu0 0.0
        %1737 = vmatpush1.msra.mxu0 0.0
        %1738 = vmatprep.subr.mxu0 0.0
        %1739 = vmatpush1.msra.mxu0 0.0
        %1740 = vmatprep.mubr.f32.mxu0 0.0
        %1741 = vmatmul.mubr.f32.gmra.mrb[0].mxu0 %v1564
        %v1742 = vpop.f32.mrb[0].mxu0
        %v1743 = vadd.f32 0.0, %v1742
        %v1744 = vpop.f32.mrb[0].mxu0
        %v1745 = vadd.f32 0.0, %v1744
        %1746 = vmatprep.mubr.f32.mxu0 0.0
        %1747 = vmatmul.mubr.f32.gmra.mrb[0].mxu0 %v1567
        %v1748 = vpop.f32.mrb[0].mxu0
        %v1749 = vadd.f32 0.0, %v1748
        %v1750 = vpop.f32.mrb[0].mxu0
        %v1751 = vadd.f32 0.0, %v1750
        %1752 = vmatprep.mubr.f32.mxu0 0.0
        %1753 = vmatmul.mubr.f32.gmra.mrb[0].mxu0 %v1570
        %v1754 = vpop.f32.mrb[0].mxu0
        %v1755 = vadd.f32 0.0, %v1754
        %v1756 = vpop.f32.mrb[0].mxu0
        %v1757 = vadd.f32 0.0, %v1756
        %1758 = vmatprep.mubr.f32.mxu0 0.0
        %1759 = vmatmul.mubr.f32.gmra.mrb[0].mxu0 %v1573
        %v1760 = vpop.f32.mrb[0].mxu0
        %v1761 = vadd.f32 0.0, %v1760
        %v1762 = vpop.f32.mrb[0].mxu0
        %v1763 = vadd.f32 0.0, %v1762
        %1764 = vdwg.mxu0
        %v1765 = vadd.f32 %v1526, %v1654
        %v1766 = vadd.f32 %v1527, %v1656
        %v1767 = vadd.f32 %v1528, %v1743
        %v1768 = vadd.f32 %v1529, %v1745
        %v1769 = vadd.f32 %v1530, %v1660
        %v1770 = vadd.f32 %v1531, %v1662
        %v1771 = vadd.f32 %v1532, %v1749
        %v1772 = vadd.f32 %v1533, %v1751
        %v1773 = vadd.f32 %v1534, %v1666
        %v1774 = vadd.f32 %v1535, %v1668
        %v1775 = vadd.f32 %v1536, %v1755
        %v1776 = vadd.f32 %v1537, %v1757
        %v1777 = vadd.f32 %v1538, %v1672
        %v1778 = vadd.f32 %v1539, %v1674
        %v1779 = vadd.f32 %v1540, %v1761
        %v1780 = vadd.f32 %v1541, %v1763
        %v1781 = vld [vmem:[%s613 + $0x1] sm:$0xff]
        %v1782 = vld [vmem:[%s613 + $0x9] sm:$0xff]
        %v1783 = vld [vmem:[%s613 + $0x11] sm:$0xff]
        %v1784 = vld [vmem:[%s613 + $0x19] sm:$0xf]
        %s1785 = scalar_lea.vmem [#allocation5], 640
        %v1786 = vld [vmem:[%s1785] sm:$0xff]
        %v1787 = vld [vmem:[%s1785 + $0x8] sm:$0xff]
        %v1788 = vld [vmem:[%s1785 + $0x10] sm:$0xff]
        %v1789 = vld [vmem:[%s1785 + $0x18] sm:$0xff]
        %v1790 = vld [vmem:[%s1785 + $0x20] sm:$0xff]
        %v1791 = vld [vmem:[%s1785 + $0x28] sm:$0xff]
        %v1792 = vld [vmem:[%s1785 + $0x30] sm:$0xff]
        %v1793 = vld [vmem:[%s1785 + $0x38] sm:$0xff]
        %v1794 = vld [vmem:[%s1785 + $0x40] sm:$0xff]
        %v1795 = vld [vmem:[%s1785 + $0x48] sm:$0xff]
        %v1796 = vld [vmem:[%s1785 + $0x50] sm:$0xff]
        %v1797 = vld [vmem:[%s1785 + $0x58] sm:$0xff]
        %v1798 = vld [vmem:[%s1785 + $0x60] sm:$0xf]
        %v1799 = vld [vmem:[%s1785 + $0x68] sm:$0xf]
        %v1800 = vld [vmem:[%s1785 + $0x70] sm:$0xf]
        %v1801 = vld [vmem:[%s1785 + $0x78] sm:$0xf]
        %v1803 = vsel %vm576, %v1781, 0
        %v1806 = vsel %vm576, %v1782, 0
        %v1809 = vsel %vm576, %v1783, 0
        %v1812 = vsel %vm576, %v1784, 0
        %v1815 = vsel %vm671, %v1798, 0
        %v1818 = vsel %vm671, %v1799, 0
        %v1821 = vsel %vm671, %v1800, 0
        %v1824 = vsel %vm671, %v1801, 0
        %1826 = vmatprep.subr.mxu0 %v1787
        %1827 = vmatpush1.msra.mxu0 %v1786
        %1828 = vmatprep.subr.mxu0 %v1791
        %1829 = vmatpush1.msra.mxu0 %v1790
        %1830 = vmatprep.subr.mxu0 %v1795
        %1831 = vmatpush1.msra.mxu0 %v1794
        %1832 = vmatprep.subr.mxu0 %v1818
        %1833 = vmatpush1.msra.mxu0 %v1815
        %1834 = vmatprep.subr.mxu0 0.0
        %1835 = vmatpush1.msra.mxu0 0.0
        %1836 = vmatprep.subr.mxu0 0.0
        %1837 = vmatpush1.msra.mxu0 0.0
        %1838 = vmatprep.subr.mxu0 0.0
        %1839 = vmatpush1.msra.mxu0 0.0
        %1840 = vmatprep.subr.mxu0 0.0
        %1841 = vmatpush1.msra.mxu0 0.0
        %1842 = vmatprep.subr.mxu0 0.0
        %1843 = vmatpush1.msra.mxu0 0.0
        %1844 = vmatprep.subr.mxu0 0.0
        %1845 = vmatpush1.msra.mxu0 0.0
        %1846 = vmatprep.subr.mxu0 0.0
        %1847 = vmatpush1.msra.mxu0 0.0
        %1848 = vmatprep.subr.mxu0 0.0
        %1849 = vmatpush1.msra.mxu0 0.0
        %1850 = vmatprep.subr.mxu0 0.0
        %1851 = vmatpush1.msra.mxu0 0.0
        %1852 = vmatprep.subr.mxu0 0.0
        %1853 = vmatpush1.msra.mxu0 0.0
        %1854 = vmatprep.subr.mxu0 0.0
        %1855 = vmatpush1.msra.mxu0 0.0
        %1856 = vmatprep.subr.mxu0 0.0
        %1857 = vmatpush1.msra.mxu0 0.0
        %1858 = vmatprep.subr.mxu0 0.0
        %1859 = vmatpush1.msra.mxu0 0.0
        %1860 = vmatprep.subr.mxu0 0.0
        %1861 = vmatpush1.msra.mxu0 0.0
        %1862 = vmatprep.subr.mxu0 0.0
        %1863 = vmatpush1.msra.mxu0 0.0
        %1864 = vmatprep.subr.mxu0 0.0
        %1865 = vmatpush1.msra.mxu0 0.0
        %1866 = vmatprep.subr.mxu0 0.0
        %1867 = vmatpush1.msra.mxu0 0.0
        %1868 = vmatprep.subr.mxu0 0.0
        %1869 = vmatpush1.msra.mxu0 0.0
        %1870 = vmatprep.subr.mxu0 0.0
        %1871 = vmatpush1.msra.mxu0 0.0
        %1872 = vmatprep.subr.mxu0 0.0
        %1873 = vmatpush1.msra.mxu0 0.0
        %1874 = vmatprep.subr.mxu0 0.0
        %1875 = vmatpush1.msra.mxu0 0.0
        %1876 = vmatprep.subr.mxu0 0.0
        %1877 = vmatpush1.msra.mxu0 0.0
        %1878 = vmatprep.subr.mxu0 0.0
        %1879 = vmatpush1.msra.mxu0 0.0
        %1880 = vmatprep.subr.mxu0 0.0
        %1881 = vmatpush1.msra.mxu0 0.0
        %1882 = vmatprep.subr.mxu0 0.0
        %1883 = vmatpush1.msra.mxu0 0.0
        %1884 = vmatprep.subr.mxu0 0.0
        %1885 = vmatpush1.msra.mxu0 0.0
        %1886 = vmatprep.subr.mxu0 0.0
        %1887 = vmatpush1.msra.mxu0 0.0
        %1888 = vmatprep.subr.mxu0 0.0
        %1889 = vmatpush1.msra.mxu0 0.0
        %1890 = vmatprep.mubr.f32.mxu0 0.0
        %1891 = vmatmul.mubr.f32.gmra.mrb[0].mxu0 %v1803
        %v1892 = vpop.f32.mrb[0].mxu0
        %v1893 = vadd.f32 0.0, %v1892
        %v1894 = vpop.f32.mrb[0].mxu0
        %v1895 = vadd.f32 0.0, %v1894
        %1896 = vmatprep.mubr.f32.mxu0 0.0
        %1897 = vmatmul.mubr.f32.gmra.mrb[0].mxu0 %v1806
        %v1898 = vpop.f32.mrb[0].mxu0
        %v1899 = vadd.f32 0.0, %v1898
        %v1900 = vpop.f32.mrb[0].mxu0
        %v1901 = vadd.f32 0.0, %v1900
        %1902 = vmatprep.mubr.f32.mxu0 0.0
        %1903 = vmatmul.mubr.f32.gmra.mrb[0].mxu0 %v1809
        %v1904 = vpop.f32.mrb[0].mxu0
        %v1905 = vadd.f32 0.0, %v1904
        %v1906 = vpop.f32.mrb[0].mxu0
        %v1907 = vadd.f32 0.0, %v1906
        %1908 = vmatprep.mubr.f32.mxu0 0.0
        %1909 = vmatmul.mubr.f32.gmra.mrb[0].mxu0 %v1812
        %v1910 = vpop.f32.mrb[0].mxu0
        %v1911 = vadd.f32 0.0, %v1910
        %v1912 = vpop.f32.mrb[0].mxu0
        %v1913 = vadd.f32 0.0, %v1912
        %1914 = vdwg.mxu0
        %1915 = vmatprep.subr.mxu0 %v1789
        %1916 = vmatpush1.msra.mxu0 %v1788
        %1917 = vmatprep.subr.mxu0 %v1793
        %1918 = vmatpush1.msra.mxu0 %v1792
        %1919 = vmatprep.subr.mxu0 %v1797
        %1920 = vmatpush1.msra.mxu0 %v1796
        %1921 = vmatprep.subr.mxu0 %v1824
        %1922 = vmatpush1.msra.mxu0 %v1821
        %1923 = vmatprep.subr.mxu0 0.0
        %1924 = vmatpush1.msra.mxu0 0.0
        %1925 = vmatprep.subr.mxu0 0.0
        %1926 = vmatpush1.msra.mxu0 0.0
        %1927 = vmatprep.subr.mxu0 0.0
        %1928 = vmatpush1.msra.mxu0 0.0
        %1929 = vmatprep.subr.mxu0 0.0
        %1930 = vmatpush1.msra.mxu0 0.0
        %1931 = vmatprep.subr.mxu0 0.0
        %1932 = vmatpush1.msra.mxu0 0.0
        %1933 = vmatprep.subr.mxu0 0.0
        %1934 = vmatpush1.msra.mxu0 0.0
        %1935 = vmatprep.subr.mxu0 0.0
        %1936 = vmatpush1.msra.mxu0 0.0
        %1937 = vmatprep.subr.mxu0 0.0
        %1938 = vmatpush1.msra.mxu0 0.0
        %1939 = vmatprep.subr.mxu0 0.0
        %1940 = vmatpush1.msra.mxu0 0.0
        %1941 = vmatprep.subr.mxu0 0.0
        %1942 = vmatpush1.msra.mxu0 0.0
        %1943 = vmatprep.subr.mxu0 0.0
        %1944 = vmatpush1.msra.mxu0 0.0
        %1945 = vmatprep.subr.mxu0 0.0
        %1946 = vmatpush1.msra.mxu0 0.0
        %1947 = vmatprep.subr.mxu0 0.0
        %1948 = vmatpush1.msra.mxu0 0.0
        %1949 = vmatprep.subr.mxu0 0.0
        %1950 = vmatpush1.msra.mxu0 0.0
        %1951 = vmatprep.subr.mxu0 0.0
        %1952 = vmatpush1.msra.mxu0 0.0
        %1953 = vmatprep.subr.mxu0 0.0
        %1954 = vmatpush1.msra.mxu0 0.0
        %1955 = vmatprep.subr.mxu0 0.0
        %1956 = vmatpush1.msra.mxu0 0.0
        %1957 = vmatprep.subr.mxu0 0.0
        %1958 = vmatpush1.msra.mxu0 0.0
        %1959 = vmatprep.subr.mxu0 0.0
        %1960 = vmatpush1.msra.mxu0 0.0
        %1961 = vmatprep.subr.mxu0 0.0
        %1962 = vmatpush1.msra.mxu0 0.0
        %1963 = vmatprep.subr.mxu0 0.0
        %1964 = vmatpush1.msra.mxu0 0.0
        %1965 = vmatprep.subr.mxu0 0.0
        %1966 = vmatpush1.msra.mxu0 0.0
        %1967 = vmatprep.subr.mxu0 0.0
        %1968 = vmatpush1.msra.mxu0 0.0
        %1969 = vmatprep.subr.mxu0 0.0
        %1970 = vmatpush1.msra.mxu0 0.0
        %1971 = vmatprep.subr.mxu0 0.0
        %1972 = vmatpush1.msra.mxu0 0.0
        %1973 = vmatprep.subr.mxu0 0.0
        %1974 = vmatpush1.msra.mxu0 0.0
        %1975 = vmatprep.subr.mxu0 0.0
        %1976 = vmatpush1.msra.mxu0 0.0
        %1977 = vmatprep.subr.mxu0 0.0
        %1978 = vmatpush1.msra.mxu0 0.0
        %1979 = vmatprep.mubr.f32.mxu0 0.0
        %1980 = vmatmul.mubr.f32.gmra.mrb[0].mxu0 %v1803
        %v1981 = vpop.f32.mrb[0].mxu0
        %v1982 = vadd.f32 0.0, %v1981
        %v1983 = vpop.f32.mrb[0].mxu0
        %v1984 = vadd.f32 0.0, %v1983
        %1985 = vmatprep.mubr.f32.mxu0 0.0
        %1986 = vmatmul.mubr.f32.gmra.mrb[0].mxu0 %v1806
        %v1987 = vpop.f32.mrb[0].mxu0
        %v1988 = vadd.f32 0.0, %v1987
        %v1989 = vpop.f32.mrb[0].mxu0
        %v1990 = vadd.f32 0.0, %v1989
        %1991 = vmatprep.mubr.f32.mxu0 0.0
        %1992 = vmatmul.mubr.f32.gmra.mrb[0].mxu0 %v1809
        %v1993 = vpop.f32.mrb[0].mxu0
        %v1994 = vadd.f32 0.0, %v1993
        %v1995 = vpop.f32.mrb[0].mxu0
        %v1996 = vadd.f32 0.0, %v1995
        %1997 = vmatprep.mubr.f32.mxu0 0.0
        %1998 = vmatmul.mubr.f32.gmra.mrb[0].mxu0 %v1812
        %v1999 = vpop.f32.mrb[0].mxu0
        %v2000 = vadd.f32 0.0, %v1999
        %v2001 = vpop.f32.mrb[0].mxu0
        %v2002 = vadd.f32 0.0, %v2001
        %2003 = vdwg.mxu0
        %v2004 = vadd.f32 %v1765, %v1893
        %v2005 = vadd.f32 %v1766, %v1895
        %v2006 = vadd.f32 %v1767, %v1982
        %v2007 = vadd.f32 %v1768, %v1984
        %v2008 = vadd.f32 %v1769, %v1899
        %v2009 = vadd.f32 %v1770, %v1901
        %v2010 = vadd.f32 %v1771, %v1988
        %v2011 = vadd.f32 %v1772, %v1990
        %v2012 = vadd.f32 %v1773, %v1905
        %v2013 = vadd.f32 %v1774, %v1907
        %v2014 = vadd.f32 %v1775, %v1994
        %v2015 = vadd.f32 %v1776, %v1996
        %v2016 = vadd.f32 %v1777, %v1911
        %v2017 = vadd.f32 %v1778, %v1913
        %v2018 = vadd.f32 %v1779, %v2000
        %v2019 = vadd.f32 %v1780, %v2002
        %v2020 = vld [vmem:[#allocation2 + $0x2] sm:$0xff]
        %v2021 = vld [vmem:[#allocation2 + $0xa] sm:$0xff]
        %v2022 = vld [vmem:[#allocation2 + $0x12] sm:$0xff]
        %v2023 = vld [vmem:[#allocation2 + $0x1a] sm:$0xf]
        %s2024 = scalar_lea.vmem [#allocation5], 768
        %v2025 = vld [vmem:[%s2024] sm:$0xff]
        %v2026 = vld [vmem:[%s2024 + $0x8] sm:$0xff]
        %v2027 = vld [vmem:[%s2024 + $0x10] sm:$0xff]
        %v2028 = vld [vmem:[%s2024 + $0x18] sm:$0xff]
        %v2029 = vld [vmem:[%s2024 + $0x20] sm:$0xff]
        %v2030 = vld [vmem:[%s2024 + $0x28] sm:$0xff]
        %v2031 = vld [vmem:[%s2024 + $0x30] sm:$0xff]
        %v2032 = vld [vmem:[%s2024 + $0x38] sm:$0xff]
        %v2033 = vld [vmem:[%s2024 + $0x40] sm:$0xff]
        %v2034 = vld [vmem:[%s2024 + $0x48] sm:$0xff]
        %v2035 = vld [vmem:[%s2024 + $0x50] sm:$0xff]
        %v2036 = vld [vmem:[%s2024 + $0x58] sm:$0xff]
        %v2037 = vld [vmem:[%s2024 + $0x60] sm:$0xf]
        %v2038 = vld [vmem:[%s2024 + $0x68] sm:$0xf]
        %v2039 = vld [vmem:[%s2024 + $0x70] sm:$0xf]
        %v2040 = vld [vmem:[%s2024 + $0x78] sm:$0xf]
        %v2042 = vsel %vm576, %v2020, 0
        %v2045 = vsel %vm576, %v2021, 0
        %v2048 = vsel %vm576, %v2022, 0
        %v2051 = vsel %vm576, %v2023, 0
        %v2054 = vsel %vm671, %v2037, 0
        %v2057 = vsel %vm671, %v2038, 0
        %v2060 = vsel %vm671, %v2039, 0
        %v2063 = vsel %vm671, %v2040, 0
        %2065 = vmatprep.subr.mxu0 %v2026
        %2066 = vmatpush1.msra.mxu0 %v2025
        %2067 = vmatprep.subr.mxu0 %v2030
        %2068 = vmatpush1.msra.mxu0 %v2029
        %2069 = vmatprep.subr.mxu0 %v2034
        %2070 = vmatpush1.msra.mxu0 %v2033
        %2071 = vmatprep.subr.mxu0 %v2057
        %2072 = vmatpush1.msra.mxu0 %v2054
        %2073 = vmatprep.subr.mxu0 0.0
        %2074 = vmatpush1.msra.mxu0 0.0
        %2075 = vmatprep.subr.mxu0 0.0
        %2076 = vmatpush1.msra.mxu0 0.0
        %2077 = vmatprep.subr.mxu0 0.0
        %2078 = vmatpush1.msra.mxu0 0.0
        %2079 = vmatprep.subr.mxu0 0.0
        %2080 = vmatpush1.msra.mxu0 0.0
        %2081 = vmatprep.subr.mxu0 0.0
        %2082 = vmatpush1.msra.mxu0 0.0
        %2083 = vmatprep.subr.mxu0 0.0
        %2084 = vmatpush1.msra.mxu0 0.0
        %2085 = vmatprep.subr.mxu0 0.0
        %2086 = vmatpush1.msra.mxu0 0.0
        %2087 = vmatprep.subr.mxu0 0.0
        %2088 = vmatpush1.msra.mxu0 0.0
        %2089 = vmatprep.subr.mxu0 0.0
        %2090 = vmatpush1.msra.mxu0 0.0
        %2091 = vmatprep.subr.mxu0 0.0
        %2092 = vmatpush1.msra.mxu0 0.0
        %2093 = vmatprep.subr.mxu0 0.0
        %2094 = vmatpush1.msra.mxu0 0.0
        %2095 = vmatprep.subr.mxu0 0.0
        %2096 = vmatpush1.msra.mxu0 0.0
        %2097 = vmatprep.subr.mxu0 0.0
        %2098 = vmatpush1.msra.mxu0 0.0
        %2099 = vmatprep.subr.mxu0 0.0
        %2100 = vmatpush1.msra.mxu0 0.0
        %2101 = vmatprep.subr.mxu0 0.0
        %2102 = vmatpush1.msra.mxu0 0.0
        %2103 = vmatprep.subr.mxu0 0.0
        %2104 = vmatpush1.msra.mxu0 0.0
        %2105 = vmatprep.subr.mxu0 0.0
        %2106 = vmatpush1.msra.mxu0 0.0
        %2107 = vmatprep.subr.mxu0 0.0
        %2108 = vmatpush1.msra.mxu0 0.0
        %2109 = vmatprep.subr.mxu0 0.0
        %2110 = vmatpush1.msra.mxu0 0.0
        %2111 = vmatprep.subr.mxu0 0.0
        %2112 = vmatpush1.msra.mxu0 0.0
        %2113 = vmatprep.subr.mxu0 0.0
        %2114 = vmatpush1.msra.mxu0 0.0
        %2115 = vmatprep.subr.mxu0 0.0
        %2116 = vmatpush1.msra.mxu0 0.0
        %2117 = vmatprep.subr.mxu0 0.0
        %2118 = vmatpush1.msra.mxu0 0.0
        %2119 = vmatprep.subr.mxu0 0.0
        %2120 = vmatpush1.msra.mxu0 0.0
        %2121 = vmatprep.subr.mxu0 0.0
        %2122 = vmatpush1.msra.mxu0 0.0
        %2123 = vmatprep.subr.mxu0 0.0
        %2124 = vmatpush1.msra.mxu0 0.0
        %2125 = vmatprep.subr.mxu0 0.0
        %2126 = vmatpush1.msra.mxu0 0.0
        %2127 = vmatprep.subr.mxu0 0.0
        %2128 = vmatpush1.msra.mxu0 0.0
        %2129 = vmatprep.mubr.f32.mxu0 0.0
        %2130 = vmatmul.mubr.f32.gmra.mrb[0].mxu0 %v2042
        %v2131 = vpop.f32.mrb[0].mxu0
        %v2132 = vadd.f32 0.0, %v2131
        %v2133 = vpop.f32.mrb[0].mxu0
        %v2134 = vadd.f32 0.0, %v2133
        %2135 = vmatprep.mubr.f32.mxu0 0.0
        %2136 = vmatmul.mubr.f32.gmra.mrb[0].mxu0 %v2045
        %v2137 = vpop.f32.mrb[0].mxu0
        %v2138 = vadd.f32 0.0, %v2137
        %v2139 = vpop.f32.mrb[0].mxu0
        %v2140 = vadd.f32 0.0, %v2139
        %2141 = vmatprep.mubr.f32.mxu0 0.0
        %2142 = vmatmul.mubr.f32.gmra.mrb[0].mxu0 %v2048
        %v2143 = vpop.f32.mrb[0].mxu0
        %v2144 = vadd.f32 0.0, %v2143
        %v2145 = vpop.f32.mrb[0].mxu0
        %v2146 = vadd.f32 0.0, %v2145
        %2147 = vmatprep.mubr.f32.mxu0 0.0
        %2148 = vmatmul.mubr.f32.gmra.mrb[0].mxu0 %v2051
        %v2149 = vpop.f32.mrb[0].mxu0
        %v2150 = vadd.f32 0.0, %v2149
        %v2151 = vpop.f32.mrb[0].mxu0
        %v2152 = vadd.f32 0.0, %v2151
        %2153 = vdwg.mxu0
        %2154 = vmatprep.subr.mxu0 %v2028
        %2155 = vmatpush1.msra.mxu0 %v2027
        %2156 = vmatprep.subr.mxu0 %v2032
        %2157 = vmatpush1.msra.mxu0 %v2031
        %2158 = vmatprep.subr.mxu0 %v2036
        %2159 = vmatpush1.msra.mxu0 %v2035
        %2160 = vmatprep.subr.mxu0 %v2063
        %2161 = vmatpush1.msra.mxu0 %v2060
        %2162 = vmatprep.subr.mxu0 0.0
        %2163 = vmatpush1.msra.mxu0 0.0
        %2164 = vmatprep.subr.mxu0 0.0
        %2165 = vmatpush1.msra.mxu0 0.0
        %2166 = vmatprep.subr.mxu0 0.0
        %2167 = vmatpush1.msra.mxu0 0.0
        %2168 = vmatprep.subr.mxu0 0.0
        %2169 = vmatpush1.msra.mxu0 0.0
        %2170 = vmatprep.subr.mxu0 0.0
        %2171 = vmatpush1.msra.mxu0 0.0
        %2172 = vmatprep.subr.mxu0 0.0
        %2173 = vmatpush1.msra.mxu0 0.0
        %2174 = vmatprep.subr.mxu0 0.0
        %2175 = vmatpush1.msra.mxu0 0.0
        %2176 = vmatprep.subr.mxu0 0.0
        %2177 = vmatpush1.msra.mxu0 0.0
        %2178 = vmatprep.subr.mxu0 0.0
        %2179 = vmatpush1.msra.mxu0 0.0
        %2180 = vmatprep.subr.mxu0 0.0
        %2181 = vmatpush1.msra.mxu0 0.0
        %2182 = vmatprep.subr.mxu0 0.0
        %2183 = vmatpush1.msra.mxu0 0.0
        %2184 = vmatprep.subr.mxu0 0.0
        %2185 = vmatpush1.msra.mxu0 0.0
        %2186 = vmatprep.subr.mxu0 0.0
        %2187 = vmatpush1.msra.mxu0 0.0
        %2188 = vmatprep.subr.mxu0 0.0
        %2189 = vmatpush1.msra.mxu0 0.0
        %2190 = vmatprep.subr.mxu0 0.0
        %2191 = vmatpush1.msra.mxu0 0.0
        %2192 = vmatprep.subr.mxu0 0.0
        %2193 = vmatpush1.msra.mxu0 0.0
        %2194 = vmatprep.subr.mxu0 0.0
        %2195 = vmatpush1.msra.mxu0 0.0
        %2196 = vmatprep.subr.mxu0 0.0
        %2197 = vmatpush1.msra.mxu0 0.0
        %2198 = vmatprep.subr.mxu0 0.0
        %2199 = vmatpush1.msra.mxu0 0.0
        %2200 = vmatprep.subr.mxu0 0.0
        %2201 = vmatpush1.msra.mxu0 0.0
        %2202 = vmatprep.subr.mxu0 0.0
        %2203 = vmatpush1.msra.mxu0 0.0
        %2204 = vmatprep.subr.mxu0 0.0
        %2205 = vmatpush1.msra.mxu0 0.0
        %2206 = vmatprep.subr.mxu0 0.0
        %2207 = vmatpush1.msra.mxu0 0.0
        %2208 = vmatprep.subr.mxu0 0.0
        %2209 = vmatpush1.msra.mxu0 0.0
        %2210 = vmatprep.subr.mxu0 0.0
        %2211 = vmatpush1.msra.mxu0 0.0
        %2212 = vmatprep.subr.mxu0 0.0
        %2213 = vmatpush1.msra.mxu0 0.0
        %2214 = vmatprep.subr.mxu0 0.0
        %2215 = vmatpush1.msra.mxu0 0.0
        %2216 = vmatprep.subr.mxu0 0.0
        %2217 = vmatpush1.msra.mxu0 0.0
        %2218 = vmatprep.mubr.f32.mxu0 0.0
        %2219 = vmatmul.mubr.f32.gmra.mrb[0].mxu0 %v2042
        %v2220 = vpop.f32.mrb[0].mxu0
        %v2221 = vadd.f32 0.0, %v2220
        %v2222 = vpop.f32.mrb[0].mxu0
        %v2223 = vadd.f32 0.0, %v2222
        %2224 = vmatprep.mubr.f32.mxu0 0.0
        %2225 = vmatmul.mubr.f32.gmra.mrb[0].mxu0 %v2045
        %v2226 = vpop.f32.mrb[0].mxu0
        %v2227 = vadd.f32 0.0, %v2226
        %v2228 = vpop.f32.mrb[0].mxu0
        %v2229 = vadd.f32 0.0, %v2228
        %2230 = vmatprep.mubr.f32.mxu0 0.0
        %2231 = vmatmul.mubr.f32.gmra.mrb[0].mxu0 %v2048
        %v2232 = vpop.f32.mrb[0].mxu0
        %v2233 = vadd.f32 0.0, %v2232
        %v2234 = vpop.f32.mrb[0].mxu0
        %v2235 = vadd.f32 0.0, %v2234
        %2236 = vmatprep.mubr.f32.mxu0 0.0
        %2237 = vmatmul.mubr.f32.gmra.mrb[0].mxu0 %v2051
        %v2238 = vpop.f32.mrb[0].mxu0
        %v2239 = vadd.f32 0.0, %v2238
        %v2240 = vpop.f32.mrb[0].mxu0
        %v2241 = vadd.f32 0.0, %v2240
        %2242 = vdwg.mxu0
        %v2243 = vadd.f32 %v2004, %v2132
        %v2244 = vadd.f32 %v2005, %v2134
        %v2245 = vadd.f32 %v2006, %v2221
        %v2246 = vadd.f32 %v2007, %v2223
        %v2247 = vadd.f32 %v2008, %v2138
        %v2248 = vadd.f32 %v2009, %v2140
        %v2249 = vadd.f32 %v2010, %v2227
        %v2250 = vadd.f32 %v2011, %v2229
        %v2251 = vadd.f32 %v2012, %v2144
        %v2252 = vadd.f32 %v2013, %v2146
        %v2253 = vadd.f32 %v2014, %v2233
        %v2254 = vadd.f32 %v2015, %v2235
        %v2255 = vadd.f32 %v2016, %v2150
        %v2256 = vadd.f32 %v2017, %v2152
        %v2257 = vadd.f32 %v2018, %v2239
        %v2258 = vadd.f32 %v2019, %v2241
        %v2259 = vld [vmem:[%s603 + $0x2] sm:$0xff]
        %v2260 = vld [vmem:[%s603 + $0xa] sm:$0xff]
        %v2261 = vld [vmem:[%s603 + $0x12] sm:$0xff]
        %v2262 = vld [vmem:[%s603 + $0x1a] sm:$0xf]
        %s2263 = scalar_lea.vmem [#allocation5], 896
        %v2264 = vld [vmem:[%s2263] sm:$0xff]
        %v2265 = vld [vmem:[%s2263 + $0x8] sm:$0xff]
        %v2266 = vld [vmem:[%s2263 + $0x10] sm:$0xff]
        %v2267 = vld [vmem:[%s2263 + $0x18] sm:$0xff]
        %v2268 = vld [vmem:[%s2263 + $0x20] sm:$0xff]
        %v2269 = vld [vmem:[%s2263 + $0x28] sm:$0xff]
        %v2270 = vld [vmem:[%s2263 + $0x30] sm:$0xff]
        %v2271 = vld [vmem:[%s2263 + $0x38] sm:$0xff]
        %v2272 = vld [vmem:[%s2263 + $0x40] sm:$0xff]
        %v2273 = vld [vmem:[%s2263 + $0x48] sm:$0xff]
        %v2274 = vld [vmem:[%s2263 + $0x50] sm:$0xff]
        %v2275 = vld [vmem:[%s2263 + $0x58] sm:$0xff]
        %v2276 = vld [vmem:[%s2263 + $0x60] sm:$0xf]
        %v2277 = vld [vmem:[%s2263 + $0x68] sm:$0xf]
        %v2278 = vld [vmem:[%s2263 + $0x70] sm:$0xf]
        %v2279 = vld [vmem:[%s2263 + $0x78] sm:$0xf]
        %v2281 = vsel %vm576, %v2259, 0
        %v2284 = vsel %vm576, %v2260, 0
        %v2287 = vsel %vm576, %v2261, 0
        %v2290 = vsel %vm576, %v2262, 0
        %v2293 = vsel %vm671, %v2276, 0
        %v2296 = vsel %vm671, %v2277, 0
        %v2299 = vsel %vm671, %v2278, 0
        %v2302 = vsel %vm671, %v2279, 0
        %2304 = vmatprep.subr.mxu0 %v2265
        %2305 = vmatpush1.msra.mxu0 %v2264
        %2306 = vmatprep.subr.mxu0 %v2269
        %2307 = vmatpush1.msra.mxu0 %v2268
        %2308 = vmatprep.subr.mxu0 %v2273
        %2309 = vmatpush1.msra.mxu0 %v2272
        %2310 = vmatprep.subr.mxu0 %v2296
        %2311 = vmatpush1.msra.mxu0 %v2293
        %2312 = vmatprep.subr.mxu0 0.0
        %2313 = vmatpush1.msra.mxu0 0.0
        %2314 = vmatprep.subr.mxu0 0.0
        %2315 = vmatpush1.msra.mxu0 0.0
        %2316 = vmatprep.subr.mxu0 0.0
        %2317 = vmatpush1.msra.mxu0 0.0
        %2318 = vmatprep.subr.mxu0 0.0
        %2319 = vmatpush1.msra.mxu0 0.0
        %2320 = vmatprep.subr.mxu0 0.0
        %2321 = vmatpush1.msra.mxu0 0.0
        %2322 = vmatprep.subr.mxu0 0.0
        %2323 = vmatpush1.msra.mxu0 0.0
        %2324 = vmatprep.subr.mxu0 0.0
        %2325 = vmatpush1.msra.mxu0 0.0
        %2326 = vmatprep.subr.mxu0 0.0
        %2327 = vmatpush1.msra.mxu0 0.0
        %2328 = vmatprep.subr.mxu0 0.0
        %2329 = vmatpush1.msra.mxu0 0.0
        %2330 = vmatprep.subr.mxu0 0.0
        %2331 = vmatpush1.msra.mxu0 0.0
        %2332 = vmatprep.subr.mxu0 0.0
        %2333 = vmatpush1.msra.mxu0 0.0
        %2334 = vmatprep.subr.mxu0 0.0
        %2335 = vmatpush1.msra.mxu0 0.0
        %2336 = vmatprep.subr.mxu0 0.0
        %2337 = vmatpush1.msra.mxu0 0.0
        %2338 = vmatprep.subr.mxu0 0.0
        %2339 = vmatpush1.msra.mxu0 0.0
        %2340 = vmatprep.subr.mxu0 0.0
        %2341 = vmatpush1.msra.mxu0 0.0
        %2342 = vmatprep.subr.mxu0 0.0
        %2343 = vmatpush1.msra.mxu0 0.0
        %2344 = vmatprep.subr.mxu0 0.0
        %2345 = vmatpush1.msra.mxu0 0.0
        %2346 = vmatprep.subr.mxu0 0.0
        %2347 = vmatpush1.msra.mxu0 0.0
        %2348 = vmatprep.subr.mxu0 0.0
        %2349 = vmatpush1.msra.mxu0 0.0
        %2350 = vmatprep.subr.mxu0 0.0
        %2351 = vmatpush1.msra.mxu0 0.0
        %2352 = vmatprep.subr.mxu0 0.0
        %2353 = vmatpush1.msra.mxu0 0.0
        %2354 = vmatprep.subr.mxu0 0.0
        %2355 = vmatpush1.msra.mxu0 0.0
        %2356 = vmatprep.subr.mxu0 0.0
        %2357 = vmatpush1.msra.mxu0 0.0
        %2358 = vmatprep.subr.mxu0 0.0
        %2359 = vmatpush1.msra.mxu0 0.0
        %2360 = vmatprep.subr.mxu0 0.0
        %2361 = vmatpush1.msra.mxu0 0.0
        %2362 = vmatprep.subr.mxu0 0.0
        %2363 = vmatpush1.msra.mxu0 0.0
        %2364 = vmatprep.subr.mxu0 0.0
        %2365 = vmatpush1.msra.mxu0 0.0
        %2366 = vmatprep.subr.mxu0 0.0
        %2367 = vmatpush1.msra.mxu0 0.0
        %2368 = vmatprep.mubr.f32.mxu0 0.0
        %2369 = vmatmul.mubr.f32.gmra.mrb[0].mxu0 %v2281
        %v2370 = vpop.f32.mrb[0].mxu0
        %v2371 = vadd.f32 0.0, %v2370
        %v2372 = vpop.f32.mrb[0].mxu0
        %v2373 = vadd.f32 0.0, %v2372
        %2374 = vmatprep.mubr.f32.mxu0 0.0
        %2375 = vmatmul.mubr.f32.gmra.mrb[0].mxu0 %v2284
        %v2376 = vpop.f32.mrb[0].mxu0
        %v2377 = vadd.f32 0.0, %v2376
        %v2378 = vpop.f32.mrb[0].mxu0
        %v2379 = vadd.f32 0.0, %v2378
        %2380 = vmatprep.mubr.f32.mxu0 0.0
        %2381 = vmatmul.mubr.f32.gmra.mrb[0].mxu0 %v2287
        %v2382 = vpop.f32.mrb[0].mxu0
        %v2383 = vadd.f32 0.0, %v2382
        %v2384 = vpop.f32.mrb[0].mxu0
        %v2385 = vadd.f32 0.0, %v2384
        %2386 = vmatprep.mubr.f32.mxu0 0.0
        %2387 = vmatmul.mubr.f32.gmra.mrb[0].mxu0 %v2290
        %v2388 = vpop.f32.mrb[0].mxu0
        %v2389 = vadd.f32 0.0, %v2388
        %v2390 = vpop.f32.mrb[0].mxu0
        %v2391 = vadd.f32 0.0, %v2390
        %2392 = vdwg.mxu0
        %2393 = vmatprep.subr.mxu0 %v2267
        %2394 = vmatpush1.msra.mxu0 %v2266
        %2395 = vmatprep.subr.mxu0 %v2271
        %2396 = vmatpush1.msra.mxu0 %v2270
        %2397 = vmatprep.subr.mxu0 %v2275
        %2398 = vmatpush1.msra.mxu0 %v2274
        %2399 = vmatprep.subr.mxu0 %v2302
        %2400 = vmatpush1.msra.mxu0 %v2299
        %2401 = vmatprep.subr.mxu0 0.0
        %2402 = vmatpush1.msra.mxu0 0.0
        %2403 = vmatprep.subr.mxu0 0.0
        %2404 = vmatpush1.msra.mxu0 0.0
        %2405 = vmatprep.subr.mxu0 0.0
        %2406 = vmatpush1.msra.mxu0 0.0
        %2407 = vmatprep.subr.mxu0 0.0
        %2408 = vmatpush1.msra.mxu0 0.0
        %2409 = vmatprep.subr.mxu0 0.0
        %2410 = vmatpush1.msra.mxu0 0.0
        %2411 = vmatprep.subr.mxu0 0.0
        %2412 = vmatpush1.msra.mxu0 0.0
        %2413 = vmatprep.subr.mxu0 0.0
        %2414 = vmatpush1.msra.mxu0 0.0
        %2415 = vmatprep.subr.mxu0 0.0
        %2416 = vmatpush1.msra.mxu0 0.0
        %2417 = vmatprep.subr.mxu0 0.0
        %2418 = vmatpush1.msra.mxu0 0.0
        %2419 = vmatprep.subr.mxu0 0.0
        %2420 = vmatpush1.msra.mxu0 0.0
        %2421 = vmatprep.subr.mxu0 0.0
        %2422 = vmatpush1.msra.mxu0 0.0
        %2423 = vmatprep.subr.mxu0 0.0
        %2424 = vmatpush1.msra.mxu0 0.0
        %2425 = vmatprep.subr.mxu0 0.0
        %2426 = vmatpush1.msra.mxu0 0.0
        %2427 = vmatprep.subr.mxu0 0.0
        %2428 = vmatpush1.msra.mxu0 0.0
        %2429 = vmatprep.subr.mxu0 0.0
        %2430 = vmatpush1.msra.mxu0 0.0
        %2431 = vmatprep.subr.mxu0 0.0
        %2432 = vmatpush1.msra.mxu0 0.0
        %2433 = vmatprep.subr.mxu0 0.0
        %2434 = vmatpush1.msra.mxu0 0.0
        %2435 = vmatprep.subr.mxu0 0.0
        %2436 = vmatpush1.msra.mxu0 0.0
        %2437 = vmatprep.subr.mxu0 0.0
        %2438 = vmatpush1.msra.mxu0 0.0
        %2439 = vmatprep.subr.mxu0 0.0
        %2440 = vmatpush1.msra.mxu0 0.0
        %2441 = vmatprep.subr.mxu0 0.0
        %2442 = vmatpush1.msra.mxu0 0.0
        %2443 = vmatprep.subr.mxu0 0.0
        %2444 = vmatpush1.msra.mxu0 0.0
        %2445 = vmatprep.subr.mxu0 0.0
        %2446 = vmatpush1.msra.mxu0 0.0
        %2447 = vmatprep.subr.mxu0 0.0
        %2448 = vmatpush1.msra.mxu0 0.0
        %2449 = vmatprep.subr.mxu0 0.0
        %2450 = vmatpush1.msra.mxu0 0.0
        %2451 = vmatprep.subr.mxu0 0.0
        %2452 = vmatpush1.msra.mxu0 0.0
        %2453 = vmatprep.subr.mxu0 0.0
        %2454 = vmatpush1.msra.mxu0 0.0
        %2455 = vmatprep.subr.mxu0 0.0
        %2456 = vmatpush1.msra.mxu0 0.0
        %2457 = vmatprep.mubr.f32.mxu0 0.0
        %2458 = vmatmul.mubr.f32.gmra.mrb[0].mxu0 %v2281
        %v2459 = vpop.f32.mrb[0].mxu0
        %v2460 = vadd.f32 0.0, %v2459
        %v2461 = vpop.f32.mrb[0].mxu0
        %v2462 = vadd.f32 0.0, %v2461
        %2463 = vmatprep.mubr.f32.mxu0 0.0
        %2464 = vmatmul.mubr.f32.gmra.mrb[0].mxu0 %v2284
        %v2465 = vpop.f32.mrb[0].mxu0
        %v2466 = vadd.f32 0.0, %v2465
        %v2467 = vpop.f32.mrb[0].mxu0
        %v2468 = vadd.f32 0.0, %v2467
        %2469 = vmatprep.mubr.f32.mxu0 0.0
        %2470 = vmatmul.mubr.f32.gmra.mrb[0].mxu0 %v2287
        %v2471 = vpop.f32.mrb[0].mxu0
        %v2472 = vadd.f32 0.0, %v2471
        %v2473 = vpop.f32.mrb[0].mxu0
        %v2474 = vadd.f32 0.0, %v2473
        %2475 = vmatprep.mubr.f32.mxu0 0.0
        %2476 = vmatmul.mubr.f32.gmra.mrb[0].mxu0 %v2290
        %v2477 = vpop.f32.mrb[0].mxu0
        %v2478 = vadd.f32 0.0, %v2477
        %v2479 = vpop.f32.mrb[0].mxu0
        %v2480 = vadd.f32 0.0, %v2479
        %2481 = vdwg.mxu0
        %v2482 = vadd.f32 %v2243, %v2371
        %v2483 = vadd.f32 %v2244, %v2373
        %v2484 = vadd.f32 %v2245, %v2460
        %v2485 = vadd.f32 %v2246, %v2462
        %v2486 = vadd.f32 %v2247, %v2377
        %v2487 = vadd.f32 %v2248, %v2379
        %v2488 = vadd.f32 %v2249, %v2466
        %v2489 = vadd.f32 %v2250, %v2468
        %v2490 = vadd.f32 %v2251, %v2383
        %v2491 = vadd.f32 %v2252, %v2385
        %v2492 = vadd.f32 %v2253, %v2472
        %v2493 = vadd.f32 %v2254, %v2474
        %v2494 = vadd.f32 %v2255, %v2389
        %v2495 = vadd.f32 %v2256, %v2391
        %v2496 = vadd.f32 %v2257, %v2478
        %v2497 = vadd.f32 %v2258, %v2480
        %v2498 = vld [vmem:[%s613 + $0x2] sm:$0xff]
        %v2499 = vld [vmem:[%s613 + $0xa] sm:$0xff]
        %v2500 = vld [vmem:[%s613 + $0x12] sm:$0xff]
        %v2501 = vld [vmem:[%s613 + $0x1a] sm:$0xf]
        %s2502 = scalar_lea.vmem [#allocation5], 1024
        %v2503 = vld [vmem:[%s2502] sm:$0xff]
        %v2504 = vld [vmem:[%s2502 + $0x8] sm:$0xff]
        %v2505 = vld [vmem:[%s2502 + $0x10] sm:$0xff]
        %v2506 = vld [vmem:[%s2502 + $0x18] sm:$0xff]
        %v2507 = vld [vmem:[%s2502 + $0x20] sm:$0xff]
        %v2508 = vld [vmem:[%s2502 + $0x28] sm:$0xff]
        %v2509 = vld [vmem:[%s2502 + $0x30] sm:$0xff]
        %v2510 = vld [vmem:[%s2502 + $0x38] sm:$0xff]
        %v2511 = vld [vmem:[%s2502 + $0x40] sm:$0xff]
        %v2512 = vld [vmem:[%s2502 + $0x48] sm:$0xff]
        %v2513 = vld [vmem:[%s2502 + $0x50] sm:$0xff]
        %v2514 = vld [vmem:[%s2502 + $0x58] sm:$0xff]
        %v2515 = vld [vmem:[%s2502 + $0x60] sm:$0xf]
        %v2516 = vld [vmem:[%s2502 + $0x68] sm:$0xf]
        %v2517 = vld [vmem:[%s2502 + $0x70] sm:$0xf]
        %v2518 = vld [vmem:[%s2502 + $0x78] sm:$0xf]
        %v2520 = vsel %vm576, %v2498, 0
        %v2523 = vsel %vm576, %v2499, 0
        %v2526 = vsel %vm576, %v2500, 0
        %v2529 = vsel %vm576, %v2501, 0
        %v2532 = vsel %vm671, %v2515, 0
        %v2535 = vsel %vm671, %v2516, 0
        %v2538 = vsel %vm671, %v2517, 0
        %v2541 = vsel %vm671, %v2518, 0
        %2543 = vmatprep.subr.mxu0 %v2504
        %2544 = vmatpush1.msra.mxu0 %v2503
        %2545 = vmatprep.subr.mxu0 %v2508
        %2546 = vmatpush1.msra.mxu0 %v2507
        %2547 = vmatprep.subr.mxu0 %v2512
        %2548 = vmatpush1.msra.mxu0 %v2511
        %2549 = vmatprep.subr.mxu0 %v2535
        %2550 = vmatpush1.msra.mxu0 %v2532
        %2551 = vmatprep.subr.mxu0 0.0
        %2552 = vmatpush1.msra.mxu0 0.0
        %2553 = vmatprep.subr.mxu0 0.0
        %2554 = vmatpush1.msra.mxu0 0.0
        %2555 = vmatprep.subr.mxu0 0.0
        %2556 = vmatpush1.msra.mxu0 0.0
        %2557 = vmatprep.subr.mxu0 0.0
        %2558 = vmatpush1.msra.mxu0 0.0
        %2559 = vmatprep.subr.mxu0 0.0
        %2560 = vmatpush1.msra.mxu0 0.0
        %2561 = vmatprep.subr.mxu0 0.0
        %2562 = vmatpush1.msra.mxu0 0.0
        %2563 = vmatprep.subr.mxu0 0.0
        %2564 = vmatpush1.msra.mxu0 0.0
        %2565 = vmatprep.subr.mxu0 0.0
        %2566 = vmatpush1.msra.mxu0 0.0
        %2567 = vmatprep.subr.mxu0 0.0
        %2568 = vmatpush1.msra.mxu0 0.0
        %2569 = vmatprep.subr.mxu0 0.0
        %2570 = vmatpush1.msra.mxu0 0.0
        %2571 = vmatprep.subr.mxu0 0.0
        %2572 = vmatpush1.msra.mxu0 0.0
        %2573 = vmatprep.subr.mxu0 0.0
        %2574 = vmatpush1.msra.mxu0 0.0
        %2575 = vmatprep.subr.mxu0 0.0
        %2576 = vmatpush1.msra.mxu0 0.0
        %2577 = vmatprep.subr.mxu0 0.0
        %2578 = vmatpush1.msra.mxu0 0.0
        %2579 = vmatprep.subr.mxu0 0.0
        %2580 = vmatpush1.msra.mxu0 0.0
        %2581 = vmatprep.subr.mxu0 0.0
        %2582 = vmatpush1.msra.mxu0 0.0
        %2583 = vmatprep.subr.mxu0 0.0
        %2584 = vmatpush1.msra.mxu0 0.0
        %2585 = vmatprep.subr.mxu0 0.0
        %2586 = vmatpush1.msra.mxu0 0.0
        %2587 = vmatprep.subr.mxu0 0.0
        %2588 = vmatpush1.msra.mxu0 0.0
        %2589 = vmatprep.subr.mxu0 0.0
        %2590 = vmatpush1.msra.mxu0 0.0
        %2591 = vmatprep.subr.mxu0 0.0
        %2592 = vmatpush1.msra.mxu0 0.0
        %2593 = vmatprep.subr.mxu0 0.0
        %2594 = vmatpush1.msra.mxu0 0.0
        %2595 = vmatprep.subr.mxu0 0.0
        %2596 = vmatpush1.msra.mxu0 0.0
        %2597 = vmatprep.subr.mxu0 0.0
        %2598 = vmatpush1.msra.mxu0 0.0
        %2599 = vmatprep.subr.mxu0 0.0
        %2600 = vmatpush1.msra.mxu0 0.0
        %2601 = vmatprep.subr.mxu0 0.0
        %2602 = vmatpush1.msra.mxu0 0.0
        %2603 = vmatprep.subr.mxu0 0.0
        %2604 = vmatpush1.msra.mxu0 0.0
        %2605 = vmatprep.subr.mxu0 0.0
        %2606 = vmatpush1.msra.mxu0 0.0
        %2607 = vmatprep.mubr.f32.mxu0 0.0
        %2608 = vmatmul.mubr.f32.gmra.mrb[0].mxu0 %v2520
        %v2609 = vpop.f32.mrb[0].mxu0
        %v2610 = vadd.f32 0.0, %v2609
        %v2611 = vpop.f32.mrb[0].mxu0
        %v2612 = vadd.f32 0.0, %v2611
        %2613 = vmatprep.mubr.f32.mxu0 0.0
        %2614 = vmatmul.mubr.f32.gmra.mrb[0].mxu0 %v2523
        %v2615 = vpop.f32.mrb[0].mxu0
        %v2616 = vadd.f32 0.0, %v2615
        %v2617 = vpop.f32.mrb[0].mxu0
        %v2618 = vadd.f32 0.0, %v2617
        %2619 = vmatprep.mubr.f32.mxu0 0.0
        %2620 = vmatmul.mubr.f32.gmra.mrb[0].mxu0 %v2526
        %v2621 = vpop.f32.mrb[0].mxu0
        %v2622 = vadd.f32 0.0, %v2621
        %v2623 = vpop.f32.mrb[0].mxu0
        %v2624 = vadd.f32 0.0, %v2623
        %2625 = vmatprep.mubr.f32.mxu0 0.0
        %2626 = vmatmul.mubr.f32.gmra.mrb[0].mxu0 %v2529
        %v2627 = vpop.f32.mrb[0].mxu0
        %v2628 = vadd.f32 0.0, %v2627
        %v2629 = vpop.f32.mrb[0].mxu0
        %v2630 = vadd.f32 0.0, %v2629
        %2631 = vdwg.mxu0
        %2632 = vmatprep.subr.mxu0 %v2506
        %2633 = vmatpush1.msra.mxu0 %v2505
        %2634 = vmatprep.subr.mxu0 %v2510
        %2635 = vmatpush1.msra.mxu0 %v2509
        %2636 = vmatprep.subr.mxu0 %v2514
        %2637 = vmatpush1.msra.mxu0 %v2513
        %2638 = vmatprep.subr.mxu0 %v2541
        %2639 = vmatpush1.msra.mxu0 %v2538
        %2640 = vmatprep.subr.mxu0 0.0
        %2641 = vmatpush1.msra.mxu0 0.0
        %2642 = vmatprep.subr.mxu0 0.0
        %2643 = vmatpush1.msra.mxu0 0.0
        %2644 = vmatprep.subr.mxu0 0.0
        %2645 = vmatpush1.msra.mxu0 0.0
        %2646 = vmatprep.subr.mxu0 0.0
        %2647 = vmatpush1.msra.mxu0 0.0
        %2648 = vmatprep.subr.mxu0 0.0
        %2649 = vmatpush1.msra.mxu0 0.0
        %2650 = vmatprep.subr.mxu0 0.0
        %2651 = vmatpush1.msra.mxu0 0.0
        %2652 = vmatprep.subr.mxu0 0.0
        %2653 = vmatpush1.msra.mxu0 0.0
        %2654 = vmatprep.subr.mxu0 0.0
        %2655 = vmatpush1.msra.mxu0 0.0
        %2656 = vmatprep.subr.mxu0 0.0
        %2657 = vmatpush1.msra.mxu0 0.0
        %2658 = vmatprep.subr.mxu0 0.0
        %2659 = vmatpush1.msra.mxu0 0.0
        %2660 = vmatprep.subr.mxu0 0.0
        %2661 = vmatpush1.msra.mxu0 0.0
        %2662 = vmatprep.subr.mxu0 0.0
        %2663 = vmatpush1.msra.mxu0 0.0
        %2664 = vmatprep.subr.mxu0 0.0
        %2665 = vmatpush1.msra.mxu0 0.0
        %2666 = vmatprep.subr.mxu0 0.0
        %2667 = vmatpush1.msra.mxu0 0.0
        %2668 = vmatprep.subr.mxu0 0.0
        %2669 = vmatpush1.msra.mxu0 0.0
        %2670 = vmatprep.subr.mxu0 0.0
        %2671 = vmatpush1.msra.mxu0 0.0
        %2672 = vmatprep.subr.mxu0 0.0
        %2673 = vmatpush1.msra.mxu0 0.0
        %2674 = vmatprep.subr.mxu0 0.0
        %2675 = vmatpush1.msra.mxu0 0.0
        %2676 = vmatprep.subr.mxu0 0.0
        %2677 = vmatpush1.msra.mxu0 0.0
        %2678 = vmatprep.subr.mxu0 0.0
        %2679 = vmatpush1.msra.mxu0 0.0
        %2680 = vmatprep.subr.mxu0 0.0
        %2681 = vmatpush1.msra.mxu0 0.0
        %2682 = vmatprep.subr.mxu0 0.0
        %2683 = vmatpush1.msra.mxu0 0.0
        %2684 = vmatprep.subr.mxu0 0.0
        %2685 = vmatpush1.msra.mxu0 0.0
        %2686 = vmatprep.subr.mxu0 0.0
        %2687 = vmatpush1.msra.mxu0 0.0
        %2688 = vmatprep.subr.mxu0 0.0
        %2689 = vmatpush1.msra.mxu0 0.0
        %2690 = vmatprep.subr.mxu0 0.0
        %2691 = vmatpush1.msra.mxu0 0.0
        %2692 = vmatprep.subr.mxu0 0.0
        %2693 = vmatpush1.msra.mxu0 0.0
        %2694 = vmatprep.subr.mxu0 0.0
        %2695 = vmatpush1.msra.mxu0 0.0
        %2696 = vmatprep.mubr.f32.mxu0 0.0
        %2697 = vmatmul.mubr.f32.gmra.mrb[0].mxu0 %v2520
        %v2698 = vpop.f32.mrb[0].mxu0
        %v2699 = vadd.f32 0.0, %v2698
        %v2700 = vpop.f32.mrb[0].mxu0
        %v2701 = vadd.f32 0.0, %v2700
        %2702 = vmatprep.mubr.f32.mxu0 0.0
        %2703 = vmatmul.mubr.f32.gmra.mrb[0].mxu0 %v2523
        %v2704 = vpop.f32.mrb[0].mxu0
        %v2705 = vadd.f32 0.0, %v2704
        %v2706 = vpop.f32.mrb[0].mxu0
        %v2707 = vadd.f32 0.0, %v2706
        %2708 = vmatprep.mubr.f32.mxu0 0.0
        %2709 = vmatmul.mubr.f32.gmra.mrb[0].mxu0 %v2526
        %v2710 = vpop.f32.mrb[0].mxu0
        %v2711 = vadd.f32 0.0, %v2710
        %v2712 = vpop.f32.mrb[0].mxu0
        %v2713 = vadd.f32 0.0, %v2712
        %2714 = vmatprep.mubr.f32.mxu0 0.0
        %2715 = vmatmul.mubr.f32.gmra.mrb[0].mxu0 %v2529
        %v2716 = vpop.f32.mrb[0].mxu0
        %v2717 = vadd.f32 0.0, %v2716
        %v2718 = vpop.f32.mrb[0].mxu0
        %v2719 = vadd.f32 0.0, %v2718
        %2720 = vdwg.mxu0
        %v2721 = vadd.f32 %v2482, %v2610
        %v2722 = vadd.f32 %v2483, %v2612
        %v2723 = vadd.f32 %v2484, %v2699
        %v2724 = vadd.f32 %v2485, %v2701
        %v2725 = vadd.f32 %v2486, %v2616
        %v2726 = vadd.f32 %v2487, %v2618
        %v2727 = vadd.f32 %v2488, %v2705
        %v2728 = vadd.f32 %v2489, %v2707
        %v2729 = vadd.f32 %v2490, %v2622
        %v2730 = vadd.f32 %v2491, %v2624
        %v2731 = vadd.f32 %v2492, %v2711
        %v2732 = vadd.f32 %v2493, %v2713
        %v2733 = vadd.f32 %v2494, %v2628
        %v2734 = vadd.f32 %v2495, %v2630
        %v2735 = vadd.f32 %v2496, %v2717
        %v2736 = vadd.f32 %v2497, %v2719
        %v2737 = vld [vmem:[#allocation2 + $0x3] sm:$0xff]
        %v2738 = vld [vmem:[#allocation2 + $0xb] sm:$0xff]
        %v2739 = vld [vmem:[#allocation2 + $0x13] sm:$0xff]
        %v2740 = vld [vmem:[#allocation2 + $0x1b] sm:$0xf]
        %s2741 = scalar_lea.vmem [#allocation5], 1152
        %v2742 = vld [vmem:[%s2741] sm:$0xff]
        %v2743 = vld [vmem:[%s2741 + $0x8] sm:$0xff]
        %v2744 = vld [vmem:[%s2741 + $0x10] sm:$0xff]
        %v2745 = vld [vmem:[%s2741 + $0x18] sm:$0xff]
        %v2746 = vld [vmem:[%s2741 + $0x20] sm:$0xff]
        %v2747 = vld [vmem:[%s2741 + $0x28] sm:$0xff]
        %v2748 = vld [vmem:[%s2741 + $0x30] sm:$0xff]
        %v2749 = vld [vmem:[%s2741 + $0x38] sm:$0xff]
        %v2750 = vld [vmem:[%s2741 + $0x40] sm:$0xff]
        %v2751 = vld [vmem:[%s2741 + $0x48] sm:$0xff]
        %v2752 = vld [vmem:[%s2741 + $0x50] sm:$0xff]
        %v2753 = vld [vmem:[%s2741 + $0x58] sm:$0xff]
        %v2754 = vld [vmem:[%s2741 + $0x60] sm:$0xf]
        %v2755 = vld [vmem:[%s2741 + $0x68] sm:$0xf]
        %v2756 = vld [vmem:[%s2741 + $0x70] sm:$0xf]
        %v2757 = vld [vmem:[%s2741 + $0x78] sm:$0xf]
        %v2759 = vsel %vm576, %v2737, 0
        %v2762 = vsel %vm576, %v2738, 0
        %v2765 = vsel %vm576, %v2739, 0
        %v2768 = vsel %vm576, %v2740, 0
        %v2771 = vsel %vm671, %v2754, 0
        %v2774 = vsel %vm671, %v2755, 0
        %v2777 = vsel %vm671, %v2756, 0
        %v2780 = vsel %vm671, %v2757, 0
        %2782 = vmatprep.subr.mxu0 %v2743
        %2783 = vmatpush1.msra.mxu0 %v2742
        %2784 = vmatprep.subr.mxu0 %v2747
        %2785 = vmatpush1.msra.mxu0 %v2746
        %2786 = vmatprep.subr.mxu0 %v2751
        %2787 = vmatpush1.msra.mxu0 %v2750
        %2788 = vmatprep.subr.mxu0 %v2774
        %2789 = vmatpush1.msra.mxu0 %v2771
        %2790 = vmatprep.subr.mxu0 0.0
        %2791 = vmatpush1.msra.mxu0 0.0
        %2792 = vmatprep.subr.mxu0 0.0
        %2793 = vmatpush1.msra.mxu0 0.0
        %2794 = vmatprep.subr.mxu0 0.0
        %2795 = vmatpush1.msra.mxu0 0.0
        %2796 = vmatprep.subr.mxu0 0.0
        %2797 = vmatpush1.msra.mxu0 0.0
        %2798 = vmatprep.subr.mxu0 0.0
        %2799 = vmatpush1.msra.mxu0 0.0
        %2800 = vmatprep.subr.mxu0 0.0
        %2801 = vmatpush1.msra.mxu0 0.0
        %2802 = vmatprep.subr.mxu0 0.0
        %2803 = vmatpush1.msra.mxu0 0.0
        %2804 = vmatprep.subr.mxu0 0.0
        %2805 = vmatpush1.msra.mxu0 0.0
        %2806 = vmatprep.subr.mxu0 0.0
        %2807 = vmatpush1.msra.mxu0 0.0
        %2808 = vmatprep.subr.mxu0 0.0
        %2809 = vmatpush1.msra.mxu0 0.0
        %2810 = vmatprep.subr.mxu0 0.0
        %2811 = vmatpush1.msra.mxu0 0.0
        %2812 = vmatprep.subr.mxu0 0.0
        %2813 = vmatpush1.msra.mxu0 0.0
        %2814 = vmatprep.subr.mxu0 0.0
        %2815 = vmatpush1.msra.mxu0 0.0
        %2816 = vmatprep.subr.mxu0 0.0
        %2817 = vmatpush1.msra.mxu0 0.0
        %2818 = vmatprep.subr.mxu0 0.0
        %2819 = vmatpush1.msra.mxu0 0.0
        %2820 = vmatprep.subr.mxu0 0.0
        %2821 = vmatpush1.msra.mxu0 0.0
        %2822 = vmatprep.subr.mxu0 0.0
        %2823 = vmatpush1.msra.mxu0 0.0
        %2824 = vmatprep.subr.mxu0 0.0
        %2825 = vmatpush1.msra.mxu0 0.0
        %2826 = vmatprep.subr.mxu0 0.0
        %2827 = vmatpush1.msra.mxu0 0.0
        %2828 = vmatprep.subr.mxu0 0.0
        %2829 = vmatpush1.msra.mxu0 0.0
        %2830 = vmatprep.subr.mxu0 0.0
        %2831 = vmatpush1.msra.mxu0 0.0
        %2832 = vmatprep.subr.mxu0 0.0
        %2833 = vmatpush1.msra.mxu0 0.0
        %2834 = vmatprep.subr.mxu0 0.0
        %2835 = vmatpush1.msra.mxu0 0.0
        %2836 = vmatprep.subr.mxu0 0.0
        %2837 = vmatpush1.msra.mxu0 0.0
        %2838 = vmatprep.subr.mxu0 0.0
        %2839 = vmatpush1.msra.mxu0 0.0
        %2840 = vmatprep.subr.mxu0 0.0
        %2841 = vmatpush1.msra.mxu0 0.0
        %2842 = vmatprep.subr.mxu0 0.0
        %2843 = vmatpush1.msra.mxu0 0.0
        %2844 = vmatprep.subr.mxu0 0.0
        %2845 = vmatpush1.msra.mxu0 0.0
        %2846 = vmatprep.mubr.f32.mxu0 0.0
        %2847 = vmatmul.mubr.f32.gmra.mrb[0].mxu0 %v2759
        %v2848 = vpop.f32.mrb[0].mxu0
        %v2849 = vadd.f32 0.0, %v2848
        %v2850 = vpop.f32.mrb[0].mxu0
        %v2851 = vadd.f32 0.0, %v2850
        %2852 = vmatprep.mubr.f32.mxu0 0.0
        %2853 = vmatmul.mubr.f32.gmra.mrb[0].mxu0 %v2762
        %v2854 = vpop.f32.mrb[0].mxu0
        %v2855 = vadd.f32 0.0, %v2854
        %v2856 = vpop.f32.mrb[0].mxu0
        %v2857 = vadd.f32 0.0, %v2856
        %2858 = vmatprep.mubr.f32.mxu0 0.0
        %2859 = vmatmul.mubr.f32.gmra.mrb[0].mxu0 %v2765
        %v2860 = vpop.f32.mrb[0].mxu0
        %v2861 = vadd.f32 0.0, %v2860
        %v2862 = vpop.f32.mrb[0].mxu0
        %v2863 = vadd.f32 0.0, %v2862
        %2864 = vmatprep.mubr.f32.mxu0 0.0
        %2865 = vmatmul.mubr.f32.gmra.mrb[0].mxu0 %v2768
        %v2866 = vpop.f32.mrb[0].mxu0
        %v2867 = vadd.f32 0.0, %v2866
        %v2868 = vpop.f32.mrb[0].mxu0
        %v2869 = vadd.f32 0.0, %v2868
        %2870 = vdwg.mxu0
        %2871 = vmatprep.subr.mxu0 %v2745
        %2872 = vmatpush1.msra.mxu0 %v2744
        %2873 = vmatprep.subr.mxu0 %v2749
        %2874 = vmatpush1.msra.mxu0 %v2748
        %2875 = vmatprep.subr.mxu0 %v2753
        %2876 = vmatpush1.msra.mxu0 %v2752
        %2877 = vmatprep.subr.mxu0 %v2780
        %2878 = vmatpush1.msra.mxu0 %v2777
        %2879 = vmatprep.subr.mxu0 0.0
        %2880 = vmatpush1.msra.mxu0 0.0
        %2881 = vmatprep.subr.mxu0 0.0
        %2882 = vmatpush1.msra.mxu0 0.0
        %2883 = vmatprep.subr.mxu0 0.0
        %2884 = vmatpush1.msra.mxu0 0.0
        %2885 = vmatprep.subr.mxu0 0.0
        %2886 = vmatpush1.msra.mxu0 0.0
        %2887 = vmatprep.subr.mxu0 0.0
        %2888 = vmatpush1.msra.mxu0 0.0
        %2889 = vmatprep.subr.mxu0 0.0
        %2890 = vmatpush1.msra.mxu0 0.0
        %2891 = vmatprep.subr.mxu0 0.0
        %2892 = vmatpush1.msra.mxu0 0.0
        %2893 = vmatprep.subr.mxu0 0.0
        %2894 = vmatpush1.msra.mxu0 0.0
        %2895 = vmatprep.subr.mxu0 0.0
        %2896 = vmatpush1.msra.mxu0 0.0
        %2897 = vmatprep.subr.mxu0 0.0
        %2898 = vmatpush1.msra.mxu0 0.0
        %2899 = vmatprep.subr.mxu0 0.0
        %2900 = vmatpush1.msra.mxu0 0.0
        %2901 = vmatprep.subr.mxu0 0.0
        %2902 = vmatpush1.msra.mxu0 0.0
        %2903 = vmatprep.subr.mxu0 0.0
        %2904 = vmatpush1.msra.mxu0 0.0
        %2905 = vmatprep.subr.mxu0 0.0
        %2906 = vmatpush1.msra.mxu0 0.0
        %2907 = vmatprep.subr.mxu0 0.0
        %2908 = vmatpush1.msra.mxu0 0.0
        %2909 = vmatprep.subr.mxu0 0.0
        %2910 = vmatpush1.msra.mxu0 0.0
        %2911 = vmatprep.subr.mxu0 0.0
        %2912 = vmatpush1.msra.mxu0 0.0
        %2913 = vmatprep.subr.mxu0 0.0
        %2914 = vmatpush1.msra.mxu0 0.0
        %2915 = vmatprep.subr.mxu0 0.0
        %2916 = vmatpush1.msra.mxu0 0.0
        %2917 = vmatprep.subr.mxu0 0.0
        %2918 = vmatpush1.msra.mxu0 0.0
        %2919 = vmatprep.subr.mxu0 0.0
        %2920 = vmatpush1.msra.mxu0 0.0
        %2921 = vmatprep.subr.mxu0 0.0
        %2922 = vmatpush1.msra.mxu0 0.0
        %2923 = vmatprep.subr.mxu0 0.0
        %2924 = vmatpush1.msra.mxu0 0.0
        %2925 = vmatprep.subr.mxu0 0.0
        %2926 = vmatpush1.msra.mxu0 0.0
        %2927 = vmatprep.subr.mxu0 0.0
        %2928 = vmatpush1.msra.mxu0 0.0
        %2929 = vmatprep.subr.mxu0 0.0
        %2930 = vmatpush1.msra.mxu0 0.0
        %2931 = vmatprep.subr.mxu0 0.0
        %2932 = vmatpush1.msra.mxu0 0.0
        %2933 = vmatprep.subr.mxu0 0.0
        %2934 = vmatpush1.msra.mxu0 0.0
        %2935 = vmatprep.mubr.f32.mxu0 0.0
        %2936 = vmatmul.mubr.f32.gmra.mrb[0].mxu0 %v2759
        %v2937 = vpop.f32.mrb[0].mxu0
        %v2938 = vadd.f32 0.0, %v2937
        %v2939 = vpop.f32.mrb[0].mxu0
        %v2940 = vadd.f32 0.0, %v2939
        %2941 = vmatprep.mubr.f32.mxu0 0.0
        %2942 = vmatmul.mubr.f32.gmra.mrb[0].mxu0 %v2762
        %v2943 = vpop.f32.mrb[0].mxu0
        %v2944 = vadd.f32 0.0, %v2943
        %v2945 = vpop.f32.mrb[0].mxu0
        %v2946 = vadd.f32 0.0, %v2945
        %2947 = vmatprep.mubr.f32.mxu0 0.0
        %2948 = vmatmul.mubr.f32.gmra.mrb[0].mxu0 %v2765
        %v2949 = vpop.f32.mrb[0].mxu0
        %v2950 = vadd.f32 0.0, %v2949
        %v2951 = vpop.f32.mrb[0].mxu0
        %v2952 = vadd.f32 0.0, %v2951
        %2953 = vmatprep.mubr.f32.mxu0 0.0
        %2954 = vmatmul.mubr.f32.gmra.mrb[0].mxu0 %v2768
        %v2955 = vpop.f32.mrb[0].mxu0
        %v2956 = vadd.f32 0.0, %v2955
        %v2957 = vpop.f32.mrb[0].mxu0
        %v2958 = vadd.f32 0.0, %v2957
        %2959 = vdwg.mxu0
        %v2960 = vadd.f32 %v2721, %v2849
        %v2961 = vadd.f32 %v2722, %v2851
        %v2962 = vadd.f32 %v2723, %v2938
        %v2963 = vadd.f32 %v2724, %v2940
        %v2964 = vadd.f32 %v2725, %v2855
        %v2965 = vadd.f32 %v2726, %v2857
        %v2966 = vadd.f32 %v2727, %v2944
        %v2967 = vadd.f32 %v2728, %v2946
        %v2968 = vadd.f32 %v2729, %v2861
        %v2969 = vadd.f32 %v2730, %v2863
        %v2970 = vadd.f32 %v2731, %v2950
        %v2971 = vadd.f32 %v2732, %v2952
        %v2972 = vadd.f32 %v2733, %v2867
        %v2973 = vadd.f32 %v2734, %v2869
        %v2974 = vadd.f32 %v2735, %v2956
        %v2975 = vadd.f32 %v2736, %v2958
        %v2976 = vld [vmem:[%s603 + $0x3] sm:$0xff]
        %v2977 = vld [vmem:[%s603 + $0xb] sm:$0xff]
        %v2978 = vld [vmem:[%s603 + $0x13] sm:$0xff]
        %v2979 = vld [vmem:[%s603 + $0x1b] sm:$0xf]
        %s2980 = scalar_lea.vmem [#allocation5], 1280
        %v2981 = vld [vmem:[%s2980] sm:$0xff]
        %v2982 = vld [vmem:[%s2980 + $0x8] sm:$0xff]
        %v2983 = vld [vmem:[%s2980 + $0x10] sm:$0xff]
        %v2984 = vld [vmem:[%s2980 + $0x18] sm:$0xff]
        %v2985 = vld [vmem:[%s2980 + $0x20] sm:$0xff]
        %v2986 = vld [vmem:[%s2980 + $0x28] sm:$0xff]
        %v2987 = vld [vmem:[%s2980 + $0x30] sm:$0xff]
        %v2988 = vld [vmem:[%s2980 + $0x38] sm:$0xff]
        %v2989 = vld [vmem:[%s2980 + $0x40] sm:$0xff]
        %v2990 = vld [vmem:[%s2980 + $0x48] sm:$0xff]
        %v2991 = vld [vmem:[%s2980 + $0x50] sm:$0xff]
        %v2992 = vld [vmem:[%s2980 + $0x58] sm:$0xff]
        %v2993 = vld [vmem:[%s2980 + $0x60] sm:$0xf]
        %v2994 = vld [vmem:[%s2980 + $0x68] sm:$0xf]
        %v2995 = vld [vmem:[%s2980 + $0x70] sm:$0xf]
        %v2996 = vld [vmem:[%s2980 + $0x78] sm:$0xf]
        %v2998 = vsel %vm576, %v2976, 0
        %v3001 = vsel %vm576, %v2977, 0
        %v3004 = vsel %vm576, %v2978, 0
        %v3007 = vsel %vm576, %v2979, 0
        %v3010 = vsel %vm671, %v2993, 0
        %v3013 = vsel %vm671, %v2994, 0
        %v3016 = vsel %vm671, %v2995, 0
        %v3019 = vsel %vm671, %v2996, 0
        %3021 = vmatprep.subr.mxu0 %v2982
        %3022 = vmatpush1.msra.mxu0 %v2981
        %3023 = vmatprep.subr.mxu0 %v2986
        %3024 = vmatpush1.msra.mxu0 %v2985
        %3025 = vmatprep.subr.mxu0 %v2990
        %3026 = vmatpush1.msra.mxu0 %v2989
        %3027 = vmatprep.subr.mxu0 %v3013
        %3028 = vmatpush1.msra.mxu0 %v3010
        %3029 = vmatprep.subr.mxu0 0.0
        %3030 = vmatpush1.msra.mxu0 0.0
        %3031 = vmatprep.subr.mxu0 0.0
        %3032 = vmatpush1.msra.mxu0 0.0
        %3033 = vmatprep.subr.mxu0 0.0
        %3034 = vmatpush1.msra.mxu0 0.0
        %3035 = vmatprep.subr.mxu0 0.0
        %3036 = vmatpush1.msra.mxu0 0.0
        %3037 = vmatprep.subr.mxu0 0.0
        %3038 = vmatpush1.msra.mxu0 0.0
        %3039 = vmatprep.subr.mxu0 0.0
        %3040 = vmatpush1.msra.mxu0 0.0
        %3041 = vmatprep.subr.mxu0 0.0
        %3042 = vmatpush1.msra.mxu0 0.0
        %3043 = vmatprep.subr.mxu0 0.0
        %3044 = vmatpush1.msra.mxu0 0.0
        %3045 = vmatprep.subr.mxu0 0.0
        %3046 = vmatpush1.msra.mxu0 0.0
        %3047 = vmatprep.subr.mxu0 0.0
        %3048 = vmatpush1.msra.mxu0 0.0
        %3049 = vmatprep.subr.mxu0 0.0
        %3050 = vmatpush1.msra.mxu0 0.0
        %3051 = vmatprep.subr.mxu0 0.0
        %3052 = vmatpush1.msra.mxu0 0.0
        %3053 = vmatprep.subr.mxu0 0.0
        %3054 = vmatpush1.msra.mxu0 0.0
        %3055 = vmatprep.subr.mxu0 0.0
        %3056 = vmatpush1.msra.mxu0 0.0
        %3057 = vmatprep.subr.mxu0 0.0
        %3058 = vmatpush1.msra.mxu0 0.0
        %3059 = vmatprep.subr.mxu0 0.0
        %3060 = vmatpush1.msra.mxu0 0.0
        %3061 = vmatprep.subr.mxu0 0.0
        %3062 = vmatpush1.msra.mxu0 0.0
        %3063 = vmatprep.subr.mxu0 0.0
        %3064 = vmatpush1.msra.mxu0 0.0
        %3065 = vmatprep.subr.mxu0 0.0
        %3066 = vmatpush1.msra.mxu0 0.0
        %3067 = vmatprep.subr.mxu0 0.0
        %3068 = vmatpush1.msra.mxu0 0.0
        %3069 = vmatprep.subr.mxu0 0.0
        %3070 = vmatpush1.msra.mxu0 0.0
        %3071 = vmatprep.subr.mxu0 0.0
        %3072 = vmatpush1.msra.mxu0 0.0
        %3073 = vmatprep.subr.mxu0 0.0
        %3074 = vmatpush1.msra.mxu0 0.0
        %3075 = vmatprep.subr.mxu0 0.0
        %3076 = vmatpush1.msra.mxu0 0.0
        %3077 = vmatprep.subr.mxu0 0.0
        %3078 = vmatpush1.msra.mxu0 0.0
        %3079 = vmatprep.subr.mxu0 0.0
        %3080 = vmatpush1.msra.mxu0 0.0
        %3081 = vmatprep.subr.mxu0 0.0
        %3082 = vmatpush1.msra.mxu0 0.0
        %3083 = vmatprep.subr.mxu0 0.0
        %3084 = vmatpush1.msra.mxu0 0.0
        %3085 = vmatprep.mubr.f32.mxu0 0.0
        %3086 = vmatmul.mubr.f32.gmra.mrb[0].mxu0 %v2998
        %v3087 = vpop.f32.mrb[0].mxu0
        %v3088 = vadd.f32 0.0, %v3087
        %v3089 = vpop.f32.mrb[0].mxu0
        %v3090 = vadd.f32 0.0, %v3089
        %3091 = vmatprep.mubr.f32.mxu0 0.0
        %3092 = vmatmul.mubr.f32.gmra.mrb[0].mxu0 %v3001
        %v3093 = vpop.f32.mrb[0].mxu0
        %v3094 = vadd.f32 0.0, %v3093
        %v3095 = vpop.f32.mrb[0].mxu0
        %v3096 = vadd.f32 0.0, %v3095
        %3097 = vmatprep.mubr.f32.mxu0 0.0
        %3098 = vmatmul.mubr.f32.gmra.mrb[0].mxu0 %v3004
        %v3099 = vpop.f32.mrb[0].mxu0
        %v3100 = vadd.f32 0.0, %v3099
        %v3101 = vpop.f32.mrb[0].mxu0
        %v3102 = vadd.f32 0.0, %v3101
        %3103 = vmatprep.mubr.f32.mxu0 0.0
        %3104 = vmatmul.mubr.f32.gmra.mrb[0].mxu0 %v3007
        %v3105 = vpop.f32.mrb[0].mxu0
        %v3106 = vadd.f32 0.0, %v3105
        %v3107 = vpop.f32.mrb[0].mxu0
        %v3108 = vadd.f32 0.0, %v3107
        %3109 = vdwg.mxu0
        %3110 = vmatprep.subr.mxu0 %v2984
        %3111 = vmatpush1.msra.mxu0 %v2983
        %3112 = vmatprep.subr.mxu0 %v2988
        %3113 = vmatpush1.msra.mxu0 %v2987
        %3114 = vmatprep.subr.mxu0 %v2992
        %3115 = vmatpush1.msra.mxu0 %v2991
        %3116 = vmatprep.subr.mxu0 %v3019
        %3117 = vmatpush1.msra.mxu0 %v3016
        %3118 = vmatprep.subr.mxu0 0.0
        %3119 = vmatpush1.msra.mxu0 0.0
        %3120 = vmatprep.subr.mxu0 0.0
        %3121 = vmatpush1.msra.mxu0 0.0
        %3122 = vmatprep.subr.mxu0 0.0
        %3123 = vmatpush1.msra.mxu0 0.0
        %3124 = vmatprep.subr.mxu0 0.0
        %3125 = vmatpush1.msra.mxu0 0.0
        %3126 = vmatprep.subr.mxu0 0.0
        %3127 = vmatpush1.msra.mxu0 0.0
        %3128 = vmatprep.subr.mxu0 0.0
        %3129 = vmatpush1.msra.mxu0 0.0
        %3130 = vmatprep.subr.mxu0 0.0
        %3131 = vmatpush1.msra.mxu0 0.0
        %3132 = vmatprep.subr.mxu0 0.0
        %3133 = vmatpush1.msra.mxu0 0.0
        %3134 = vmatprep.subr.mxu0 0.0
        %3135 = vmatpush1.msra.mxu0 0.0
        %3136 = vmatprep.subr.mxu0 0.0
        %3137 = vmatpush1.msra.mxu0 0.0
        %3138 = vmatprep.subr.mxu0 0.0
        %3139 = vmatpush1.msra.mxu0 0.0
        %3140 = vmatprep.subr.mxu0 0.0
        %3141 = vmatpush1.msra.mxu0 0.0
        %3142 = vmatprep.subr.mxu0 0.0
        %3143 = vmatpush1.msra.mxu0 0.0
        %3144 = vmatprep.subr.mxu0 0.0
        %3145 = vmatpush1.msra.mxu0 0.0
        %3146 = vmatprep.subr.mxu0 0.0
        %3147 = vmatpush1.msra.mxu0 0.0
        %3148 = vmatprep.subr.mxu0 0.0
        %3149 = vmatpush1.msra.mxu0 0.0
        %3150 = vmatprep.subr.mxu0 0.0
        %3151 = vmatpush1.msra.mxu0 0.0
        %3152 = vmatprep.subr.mxu0 0.0
        %3153 = vmatpush1.msra.mxu0 0.0
        %3154 = vmatprep.subr.mxu0 0.0
        %3155 = vmatpush1.msra.mxu0 0.0
        %3156 = vmatprep.subr.mxu0 0.0
        %3157 = vmatpush1.msra.mxu0 0.0
        %3158 = vmatprep.subr.mxu0 0.0
        %3159 = vmatpush1.msra.mxu0 0.0
        %3160 = vmatprep.subr.mxu0 0.0
        %3161 = vmatpush1.msra.mxu0 0.0
        %3162 = vmatprep.subr.mxu0 0.0
        %3163 = vmatpush1.msra.mxu0 0.0
        %3164 = vmatprep.subr.mxu0 0.0
        %3165 = vmatpush1.msra.mxu0 0.0
        %3166 = vmatprep.subr.mxu0 0.0
        %3167 = vmatpush1.msra.mxu0 0.0
        %3168 = vmatprep.subr.mxu0 0.0
        %3169 = vmatpush1.msra.mxu0 0.0
        %3170 = vmatprep.subr.mxu0 0.0
        %3171 = vmatpush1.msra.mxu0 0.0
        %3172 = vmatprep.subr.mxu0 0.0
        %3173 = vmatpush1.msra.mxu0 0.0
        %3174 = vmatprep.mubr.f32.mxu0 0.0
        %3175 = vmatmul.mubr.f32.gmra.mrb[0].mxu0 %v2998
        %v3176 = vpop.f32.mrb[0].mxu0
        %v3177 = vadd.f32 0.0, %v3176
        %v3178 = vpop.f32.mrb[0].mxu0
        %v3179 = vadd.f32 0.0, %v3178
        %3180 = vmatprep.mubr.f32.mxu0 0.0
        %3181 = vmatmul.mubr.f32.gmra.mrb[0].mxu0 %v3001
        %v3182 = vpop.f32.mrb[0].mxu0
        %v3183 = vadd.f32 0.0, %v3182
        %v3184 = vpop.f32.mrb[0].mxu0
        %v3185 = vadd.f32 0.0, %v3184
        %3186 = vmatprep.mubr.f32.mxu0 0.0
        %3187 = vmatmul.mubr.f32.gmra.mrb[0].mxu0 %v3004
        %v3188 = vpop.f32.mrb[0].mxu0
        %v3189 = vadd.f32 0.0, %v3188
        %v3190 = vpop.f32.mrb[0].mxu0
        %v3191 = vadd.f32 0.0, %v3190
        %3192 = vmatprep.mubr.f32.mxu0 0.0
        %3193 = vmatmul.mubr.f32.gmra.mrb[0].mxu0 %v3007
        %v3194 = vpop.f32.mrb[0].mxu0
        %v3195 = vadd.f32 0.0, %v3194
        %v3196 = vpop.f32.mrb[0].mxu0
        %v3197 = vadd.f32 0.0, %v3196
        %3198 = vdwg.mxu0
        %v3199 = vadd.f32 %v2960, %v3088
        %v3200 = vadd.f32 %v2961, %v3090
        %v3201 = vadd.f32 %v2962, %v3177
        %v3202 = vadd.f32 %v2963, %v3179
        %v3203 = vadd.f32 %v2964, %v3094
        %v3204 = vadd.f32 %v2965, %v3096
        %v3205 = vadd.f32 %v2966, %v3183
        %v3206 = vadd.f32 %v2967, %v3185
        %v3207 = vadd.f32 %v2968, %v3100
        %v3208 = vadd.f32 %v2969, %v3102
        %v3209 = vadd.f32 %v2970, %v3189
        %v3210 = vadd.f32 %v2971, %v3191
        %v3211 = vadd.f32 %v2972, %v3106
        %v3212 = vadd.f32 %v2973, %v3108
        %v3213 = vadd.f32 %v2974, %v3195
        %v3214 = vadd.f32 %v2975, %v3197
        %v3215 = vld [vmem:[%s613 + $0x3] sm:$0xff]
        %v3216 = vld [vmem:[%s613 + $0xb] sm:$0xff]
        %v3217 = vld [vmem:[%s613 + $0x13] sm:$0xff]
        %v3218 = vld [vmem:[%s613 + $0x1b] sm:$0xf]
        %s3219 = scalar_lea.vmem [#allocation5], 1408
        %v3220 = vld [vmem:[%s3219] sm:$0xff]
        %v3221 = vld [vmem:[%s3219 + $0x8] sm:$0xff]
        %v3222 = vld [vmem:[%s3219 + $0x10] sm:$0xff]
        %v3223 = vld [vmem:[%s3219 + $0x18] sm:$0xff]
        %v3224 = vld [vmem:[%s3219 + $0x20] sm:$0xff]
        %v3225 = vld [vmem:[%s3219 + $0x28] sm:$0xff]
        %v3226 = vld [vmem:[%s3219 + $0x30] sm:$0xff]
        %v3227 = vld [vmem:[%s3219 + $0x38] sm:$0xff]
        %v3228 = vld [vmem:[%s3219 + $0x40] sm:$0xff]
        %v3229 = vld [vmem:[%s3219 + $0x48] sm:$0xff]
        %v3230 = vld [vmem:[%s3219 + $0x50] sm:$0xff]
        %v3231 = vld [vmem:[%s3219 + $0x58] sm:$0xff]
        %v3232 = vld [vmem:[%s3219 + $0x60] sm:$0xf]
        %v3233 = vld [vmem:[%s3219 + $0x68] sm:$0xf]
        %v3234 = vld [vmem:[%s3219 + $0x70] sm:$0xf]
        %v3235 = vld [vmem:[%s3219 + $0x78] sm:$0xf]
        %v3237 = vsel %vm576, %v3215, 0
        %v3240 = vsel %vm576, %v3216, 0
        %v3243 = vsel %vm576, %v3217, 0
        %v3246 = vsel %vm576, %v3218, 0
        %v3249 = vsel %vm671, %v3232, 0
        %v3252 = vsel %vm671, %v3233, 0
        %v3255 = vsel %vm671, %v3234, 0
        %v3258 = vsel %vm671, %v3235, 0
        %3260 = vmatprep.subr.mxu0 %v3221
        %3261 = vmatpush1.msra.mxu0 %v3220
        %3262 = vmatprep.subr.mxu0 %v3225
        %3263 = vmatpush1.msra.mxu0 %v3224
        %3264 = vmatprep.subr.mxu0 %v3229
        %3265 = vmatpush1.msra.mxu0 %v3228
        %3266 = vmatprep.subr.mxu0 %v3252
        %3267 = vmatpush1.msra.mxu0 %v3249
        %3268 = vmatprep.subr.mxu0 0.0
        %3269 = vmatpush1.msra.mxu0 0.0
        %3270 = vmatprep.subr.mxu0 0.0
        %3271 = vmatpush1.msra.mxu0 0.0
        %3272 = vmatprep.subr.mxu0 0.0
        %3273 = vmatpush1.msra.mxu0 0.0
        %3274 = vmatprep.subr.mxu0 0.0
        %3275 = vmatpush1.msra.mxu0 0.0
        %3276 = vmatprep.subr.mxu0 0.0
        %3277 = vmatpush1.msra.mxu0 0.0
        %3278 = vmatprep.subr.mxu0 0.0
        %3279 = vmatpush1.msra.mxu0 0.0
        %3280 = vmatprep.subr.mxu0 0.0
        %3281 = vmatpush1.msra.mxu0 0.0
        %3282 = vmatprep.subr.mxu0 0.0
        %3283 = vmatpush1.msra.mxu0 0.0
        %3284 = vmatprep.subr.mxu0 0.0
        %3285 = vmatpush1.msra.mxu0 0.0
        %3286 = vmatprep.subr.mxu0 0.0
        %3287 = vmatpush1.msra.mxu0 0.0
        %3288 = vmatprep.subr.mxu0 0.0
        %3289 = vmatpush1.msra.mxu0 0.0
        %3290 = vmatprep.subr.mxu0 0.0
        %3291 = vmatpush1.msra.mxu0 0.0
        %3292 = vmatprep.subr.mxu0 0.0
        %3293 = vmatpush1.msra.mxu0 0.0
        %3294 = vmatprep.subr.mxu0 0.0
        %3295 = vmatpush1.msra.mxu0 0.0
        %3296 = vmatprep.subr.mxu0 0.0
        %3297 = vmatpush1.msra.mxu0 0.0
        %3298 = vmatprep.subr.mxu0 0.0
        %3299 = vmatpush1.msra.mxu0 0.0
        %3300 = vmatprep.subr.mxu0 0.0
        %3301 = vmatpush1.msra.mxu0 0.0
        %3302 = vmatprep.subr.mxu0 0.0
        %3303 = vmatpush1.msra.mxu0 0.0
        %3304 = vmatprep.subr.mxu0 0.0
        %3305 = vmatpush1.msra.mxu0 0.0
        %3306 = vmatprep.subr.mxu0 0.0
        %3307 = vmatpush1.msra.mxu0 0.0
        %3308 = vmatprep.subr.mxu0 0.0
        %3309 = vmatpush1.msra.mxu0 0.0
        %3310 = vmatprep.subr.mxu0 0.0
        %3311 = vmatpush1.msra.mxu0 0.0
        %3312 = vmatprep.subr.mxu0 0.0
        %3313 = vmatpush1.msra.mxu0 0.0
        %3314 = vmatprep.subr.mxu0 0.0
        %3315 = vmatpush1.msra.mxu0 0.0
        %3316 = vmatprep.subr.mxu0 0.0
        %3317 = vmatpush1.msra.mxu0 0.0
        %3318 = vmatprep.subr.mxu0 0.0
        %3319 = vmatpush1.msra.mxu0 0.0
        %3320 = vmatprep.subr.mxu0 0.0
        %3321 = vmatpush1.msra.mxu0 0.0
        %3322 = vmatprep.subr.mxu0 0.0
        %3323 = vmatpush1.msra.mxu0 0.0
        %3324 = vmatprep.mubr.f32.mxu0 0.0
        %3325 = vmatmul.mubr.f32.gmra.mrb[0].mxu0 %v3237
        %v3326 = vpop.f32.mrb[0].mxu0
        %v3327 = vadd.f32 0.0, %v3326
        %v3328 = vpop.f32.mrb[0].mxu0
        %v3329 = vadd.f32 0.0, %v3328
        %3330 = vmatprep.mubr.f32.mxu0 0.0
        %3331 = vmatmul.mubr.f32.gmra.mrb[0].mxu0 %v3240
        %v3332 = vpop.f32.mrb[0].mxu0
        %v3333 = vadd.f32 0.0, %v3332
        %v3334 = vpop.f32.mrb[0].mxu0
        %v3335 = vadd.f32 0.0, %v3334
        %3336 = vmatprep.mubr.f32.mxu0 0.0
        %3337 = vmatmul.mubr.f32.gmra.mrb[0].mxu0 %v3243
        %v3338 = vpop.f32.mrb[0].mxu0
        %v3339 = vadd.f32 0.0, %v3338
        %v3340 = vpop.f32.mrb[0].mxu0
        %v3341 = vadd.f32 0.0, %v3340
        %3342 = vmatprep.mubr.f32.mxu0 0.0
        %3343 = vmatmul.mubr.f32.gmra.mrb[0].mxu0 %v3246
        %v3344 = vpop.f32.mrb[0].mxu0
        %v3345 = vadd.f32 0.0, %v3344
        %v3346 = vpop.f32.mrb[0].mxu0
        %v3347 = vadd.f32 0.0, %v3346
        %3348 = vdwg.mxu0
        %3349 = vmatprep.subr.mxu0 %v3223
        %3350 = vmatpush1.msra.mxu0 %v3222
        %3351 = vmatprep.subr.mxu0 %v3227
        %3352 = vmatpush1.msra.mxu0 %v3226
        %3353 = vmatprep.subr.mxu0 %v3231
        %3354 = vmatpush1.msra.mxu0 %v3230
        %3355 = vmatprep.subr.mxu0 %v3258
        %3356 = vmatpush1.msra.mxu0 %v3255
        %3357 = vmatprep.subr.mxu0 0.0
        %3358 = vmatpush1.msra.mxu0 0.0
        %3359 = vmatprep.subr.mxu0 0.0
        %3360 = vmatpush1.msra.mxu0 0.0
        %3361 = vmatprep.subr.mxu0 0.0
        %3362 = vmatpush1.msra.mxu0 0.0
        %3363 = vmatprep.subr.mxu0 0.0
        %3364 = vmatpush1.msra.mxu0 0.0
        %3365 = vmatprep.subr.mxu0 0.0
        %3366 = vmatpush1.msra.mxu0 0.0
        %3367 = vmatprep.subr.mxu0 0.0
        %3368 = vmatpush1.msra.mxu0 0.0
        %3369 = vmatprep.subr.mxu0 0.0
        %3370 = vmatpush1.msra.mxu0 0.0
        %3371 = vmatprep.subr.mxu0 0.0
        %3372 = vmatpush1.msra.mxu0 0.0
        %3373 = vmatprep.subr.mxu0 0.0
        %3374 = vmatpush1.msra.mxu0 0.0
        %3375 = vmatprep.subr.mxu0 0.0
        %3376 = vmatpush1.msra.mxu0 0.0
        %3377 = vmatprep.subr.mxu0 0.0
        %3378 = vmatpush1.msra.mxu0 0.0
        %3379 = vmatprep.subr.mxu0 0.0
        %3380 = vmatpush1.msra.mxu0 0.0
        %3381 = vmatprep.subr.mxu0 0.0
        %3382 = vmatpush1.msra.mxu0 0.0
        %3383 = vmatprep.subr.mxu0 0.0
        %3384 = vmatpush1.msra.mxu0 0.0
        %3385 = vmatprep.subr.mxu0 0.0
        %3386 = vmatpush1.msra.mxu0 0.0
        %3387 = vmatprep.subr.mxu0 0.0
        %3388 = vmatpush1.msra.mxu0 0.0
        %3389 = vmatprep.subr.mxu0 0.0
        %3390 = vmatpush1.msra.mxu0 0.0
        %3391 = vmatprep.subr.mxu0 0.0
        %3392 = vmatpush1.msra.mxu0 0.0
        %3393 = vmatprep.subr.mxu0 0.0
        %3394 = vmatpush1.msra.mxu0 0.0
        %3395 = vmatprep.subr.mxu0 0.0
        %3396 = vmatpush1.msra.mxu0 0.0
        %3397 = vmatprep.subr.mxu0 0.0
        %3398 = vmatpush1.msra.mxu0 0.0
        %3399 = vmatprep.subr.mxu0 0.0
        %3400 = vmatpush1.msra.mxu0 0.0
        %3401 = vmatprep.subr.mxu0 0.0
        %3402 = vmatpush1.msra.mxu0 0.0
        %3403 = vmatprep.subr.mxu0 0.0
        %3404 = vmatpush1.msra.mxu0 0.0
        %3405 = vmatprep.subr.mxu0 0.0
        %3406 = vmatpush1.msra.mxu0 0.0
        %3407 = vmatprep.subr.mxu0 0.0
        %3408 = vmatpush1.msra.mxu0 0.0
        %3409 = vmatprep.subr.mxu0 0.0
        %3410 = vmatpush1.msra.mxu0 0.0
        %3411 = vmatprep.subr.mxu0 0.0
        %3412 = vmatpush1.msra.mxu0 0.0
        %3413 = vmatprep.mubr.f32.mxu0 0.0
        %3414 = vmatmul.mubr.f32.gmra.mrb[0].mxu0 %v3237
        %v3415 = vpop.f32.mrb[0].mxu0
        %v3416 = vadd.f32 0.0, %v3415
        %v3417 = vpop.f32.mrb[0].mxu0
        %v3418 = vadd.f32 0.0, %v3417
        %3419 = vmatprep.mubr.f32.mxu0 0.0
        %3420 = vmatmul.mubr.f32.gmra.mrb[0].mxu0 %v3240
        %v3421 = vpop.f32.mrb[0].mxu0
        %v3422 = vadd.f32 0.0, %v3421
        %v3423 = vpop.f32.mrb[0].mxu0
        %v3424 = vadd.f32 0.0, %v3423
        %3425 = vmatprep.mubr.f32.mxu0 0.0
        %3426 = vmatmul.mubr.f32.gmra.mrb[0].mxu0 %v3243
        %v3427 = vpop.f32.mrb[0].mxu0
        %v3428 = vadd.f32 0.0, %v3427
        %v3429 = vpop.f32.mrb[0].mxu0
        %v3430 = vadd.f32 0.0, %v3429
        %3431 = vmatprep.mubr.f32.mxu0 0.0
        %3432 = vmatmul.mubr.f32.gmra.mrb[0].mxu0 %v3246
        %v3433 = vpop.f32.mrb[0].mxu0
        %v3434 = vadd.f32 0.0, %v3433
        %v3435 = vpop.f32.mrb[0].mxu0
        %v3436 = vadd.f32 0.0, %v3435
        %3437 = vdwg.mxu0
        %v3438 = vadd.f32 %v3199, %v3327
        %v3439 = vadd.f32 %v3200, %v3329
        %v3440 = vadd.f32 %v3201, %v3416
        %v3441 = vadd.f32 %v3202, %v3418
        %v3442 = vadd.f32 %v3203, %v3333
        %v3443 = vadd.f32 %v3204, %v3335
        %v3444 = vadd.f32 %v3205, %v3422
        %v3445 = vadd.f32 %v3206, %v3424
        %v3446 = vadd.f32 %v3207, %v3339
        %v3447 = vadd.f32 %v3208, %v3341
        %v3448 = vadd.f32 %v3209, %v3428
        %v3449 = vadd.f32 %v3210, %v3430
        %v3450 = vadd.f32 %v3211, %v3345
        %v3451 = vadd.f32 %v3212, %v3347
        %v3452 = vadd.f32 %v3213, %v3434
        %v3453 = vadd.f32 %v3214, %v3436
        %v3454 = vld [vmem:[#allocation2 + $0x4] sm:$0xff]
        %v3455 = vld [vmem:[#allocation2 + $0xc] sm:$0xff]
        %v3456 = vld [vmem:[#allocation2 + $0x14] sm:$0xff]
        %v3457 = vld [vmem:[#allocation2 + $0x1c] sm:$0xf]
        %s3458 = scalar_lea.vmem [#allocation5], 1536
        %v3459 = vld [vmem:[%s3458] sm:$0xff]
        %v3460 = vld [vmem:[%s3458 + $0x8] sm:$0xff]
        %v3461 = vld [vmem:[%s3458 + $0x10] sm:$0xff]
        %v3462 = vld [vmem:[%s3458 + $0x18] sm:$0xff]
        %v3463 = vld [vmem:[%s3458 + $0x20] sm:$0xff]
        %v3464 = vld [vmem:[%s3458 + $0x28] sm:$0xff]
        %v3465 = vld [vmem:[%s3458 + $0x30] sm:$0xff]
        %v3466 = vld [vmem:[%s3458 + $0x38] sm:$0xff]
        %v3467 = vld [vmem:[%s3458 + $0x40] sm:$0xff]
        %v3468 = vld [vmem:[%s3458 + $0x48] sm:$0xff]
        %v3469 = vld [vmem:[%s3458 + $0x50] sm:$0xff]
        %v3470 = vld [vmem:[%s3458 + $0x58] sm:$0xff]
        %v3471 = vld [vmem:[%s3458 + $0x60] sm:$0xf]
        %v3472 = vld [vmem:[%s3458 + $0x68] sm:$0xf]
        %v3473 = vld [vmem:[%s3458 + $0x70] sm:$0xf]
        %v3474 = vld [vmem:[%s3458 + $0x78] sm:$0xf]
        %v3476 = vsel %vm576, %v3454, 0
        %v3479 = vsel %vm576, %v3455, 0
        %v3482 = vsel %vm576, %v3456, 0
        %v3485 = vsel %vm576, %v3457, 0
        %v3488 = vsel %vm671, %v3471, 0
        %v3491 = vsel %vm671, %v3472, 0
        %v3494 = vsel %vm671, %v3473, 0
        %v3497 = vsel %vm671, %v3474, 0
        %3499 = vmatprep.subr.mxu0 %v3460
        %3500 = vmatpush1.msra.mxu0 %v3459
        %3501 = vmatprep.subr.mxu0 %v3464
        %3502 = vmatpush1.msra.mxu0 %v3463
        %3503 = vmatprep.subr.mxu0 %v3468
        %3504 = vmatpush1.msra.mxu0 %v3467
        %3505 = vmatprep.subr.mxu0 %v3491
        %3506 = vmatpush1.msra.mxu0 %v3488
        %3507 = vmatprep.subr.mxu0 0.0
        %3508 = vmatpush1.msra.mxu0 0.0
        %3509 = vmatprep.subr.mxu0 0.0
        %3510 = vmatpush1.msra.mxu0 0.0
        %3511 = vmatprep.subr.mxu0 0.0
        %3512 = vmatpush1.msra.mxu0 0.0
        %3513 = vmatprep.subr.mxu0 0.0
        %3514 = vmatpush1.msra.mxu0 0.0
        %3515 = vmatprep.subr.mxu0 0.0
        %3516 = vmatpush1.msra.mxu0 0.0
        %3517 = vmatprep.subr.mxu0 0.0
        %3518 = vmatpush1.msra.mxu0 0.0
        %3519 = vmatprep.subr.mxu0 0.0
        %3520 = vmatpush1.msra.mxu0 0.0
        %3521 = vmatprep.subr.mxu0 0.0
        %3522 = vmatpush1.msra.mxu0 0.0
        %3523 = vmatprep.subr.mxu0 0.0
        %3524 = vmatpush1.msra.mxu0 0.0
        %3525 = vmatprep.subr.mxu0 0.0
        %3526 = vmatpush1.msra.mxu0 0.0
        %3527 = vmatprep.subr.mxu0 0.0
        %3528 = vmatpush1.msra.mxu0 0.0
        %3529 = vmatprep.subr.mxu0 0.0
        %3530 = vmatpush1.msra.mxu0 0.0
        %3531 = vmatprep.subr.mxu0 0.0
        %3532 = vmatpush1.msra.mxu0 0.0
        %3533 = vmatprep.subr.mxu0 0.0
        %3534 = vmatpush1.msra.mxu0 0.0
        %3535 = vmatprep.subr.mxu0 0.0
        %3536 = vmatpush1.msra.mxu0 0.0
        %3537 = vmatprep.subr.mxu0 0.0
        %3538 = vmatpush1.msra.mxu0 0.0
        %3539 = vmatprep.subr.mxu0 0.0
        %3540 = vmatpush1.msra.mxu0 0.0
        %3541 = vmatprep.subr.mxu0 0.0
        %3542 = vmatpush1.msra.mxu0 0.0
        %3543 = vmatprep.subr.mxu0 0.0
        %3544 = vmatpush1.msra.mxu0 0.0
        %3545 = vmatprep.subr.mxu0 0.0
        %3546 = vmatpush1.msra.mxu0 0.0
        %3547 = vmatprep.subr.mxu0 0.0
        %3548 = vmatpush1.msra.mxu0 0.0
        %3549 = vmatprep.subr.mxu0 0.0
        %3550 = vmatpush1.msra.mxu0 0.0
        %3551 = vmatprep.subr.mxu0 0.0
        %3552 = vmatpush1.msra.mxu0 0.0
        %3553 = vmatprep.subr.mxu0 0.0
        %3554 = vmatpush1.msra.mxu0 0.0
        %3555 = vmatprep.subr.mxu0 0.0
        %3556 = vmatpush1.msra.mxu0 0.0
        %3557 = vmatprep.subr.mxu0 0.0
        %3558 = vmatpush1.msra.mxu0 0.0
        %3559 = vmatprep.subr.mxu0 0.0
        %3560 = vmatpush1.msra.mxu0 0.0
        %3561 = vmatprep.subr.mxu0 0.0
        %3562 = vmatpush1.msra.mxu0 0.0
        %3563 = vmatprep.mubr.f32.mxu0 0.0
        %3564 = vmatmul.mubr.f32.gmra.mrb[0].mxu0 %v3476
        %v3565 = vpop.f32.mrb[0].mxu0
        %v3566 = vadd.f32 0.0, %v3565
        %v3567 = vpop.f32.mrb[0].mxu0
        %v3568 = vadd.f32 0.0, %v3567
        %3569 = vmatprep.mubr.f32.mxu0 0.0
        %3570 = vmatmul.mubr.f32.gmra.mrb[0].mxu0 %v3479
        %v3571 = vpop.f32.mrb[0].mxu0
        %v3572 = vadd.f32 0.0, %v3571
        %v3573 = vpop.f32.mrb[0].mxu0
        %v3574 = vadd.f32 0.0, %v3573
        %3575 = vmatprep.mubr.f32.mxu0 0.0
        %3576 = vmatmul.mubr.f32.gmra.mrb[0].mxu0 %v3482
        %v3577 = vpop.f32.mrb[0].mxu0
        %v3578 = vadd.f32 0.0, %v3577
        %v3579 = vpop.f32.mrb[0].mxu0
        %v3580 = vadd.f32 0.0, %v3579
        %3581 = vmatprep.mubr.f32.mxu0 0.0
        %3582 = vmatmul.mubr.f32.gmra.mrb[0].mxu0 %v3485
        %v3583 = vpop.f32.mrb[0].mxu0
        %v3584 = vadd.f32 0.0, %v3583
        %v3585 = vpop.f32.mrb[0].mxu0
        %v3586 = vadd.f32 0.0, %v3585
        %3587 = vdwg.mxu0
        %3588 = vmatprep.subr.mxu0 %v3462
        %3589 = vmatpush1.msra.mxu0 %v3461
        %3590 = vmatprep.subr.mxu0 %v3466
        %3591 = vmatpush1.msra.mxu0 %v3465
        %3592 = vmatprep.subr.mxu0 %v3470
        %3593 = vmatpush1.msra.mxu0 %v3469
        %3594 = vmatprep.subr.mxu0 %v3497
        %3595 = vmatpush1.msra.mxu0 %v3494
        %3596 = vmatprep.subr.mxu0 0.0
        %3597 = vmatpush1.msra.mxu0 0.0
        %3598 = vmatprep.subr.mxu0 0.0
        %3599 = vmatpush1.msra.mxu0 0.0
        %3600 = vmatprep.subr.mxu0 0.0
        %3601 = vmatpush1.msra.mxu0 0.0
        %3602 = vmatprep.subr.mxu0 0.0
        %3603 = vmatpush1.msra.mxu0 0.0
        %3604 = vmatprep.subr.mxu0 0.0
        %3605 = vmatpush1.msra.mxu0 0.0
        %3606 = vmatprep.subr.mxu0 0.0
        %3607 = vmatpush1.msra.mxu0 0.0
        %3608 = vmatprep.subr.mxu0 0.0
        %3609 = vmatpush1.msra.mxu0 0.0
        %3610 = vmatprep.subr.mxu0 0.0
        %3611 = vmatpush1.msra.mxu0 0.0
        %3612 = vmatprep.subr.mxu0 0.0
        %3613 = vmatpush1.msra.mxu0 0.0
        %3614 = vmatprep.subr.mxu0 0.0
        %3615 = vmatpush1.msra.mxu0 0.0
        %3616 = vmatprep.subr.mxu0 0.0
        %3617 = vmatpush1.msra.mxu0 0.0
        %3618 = vmatprep.subr.mxu0 0.0
        %3619 = vmatpush1.msra.mxu0 0.0
        %3620 = vmatprep.subr.mxu0 0.0
        %3621 = vmatpush1.msra.mxu0 0.0
        %3622 = vmatprep.subr.mxu0 0.0
        %3623 = vmatpush1.msra.mxu0 0.0
        %3624 = vmatprep.subr.mxu0 0.0
        %3625 = vmatpush1.msra.mxu0 0.0
        %3626 = vmatprep.subr.mxu0 0.0
        %3627 = vmatpush1.msra.mxu0 0.0
        %3628 = vmatprep.subr.mxu0 0.0
        %3629 = vmatpush1.msra.mxu0 0.0
        %3630 = vmatprep.subr.mxu0 0.0
        %3631 = vmatpush1.msra.mxu0 0.0
        %3632 = vmatprep.subr.mxu0 0.0
        %3633 = vmatpush1.msra.mxu0 0.0
        %3634 = vmatprep.subr.mxu0 0.0
        %3635 = vmatpush1.msra.mxu0 0.0
        %3636 = vmatprep.subr.mxu0 0.0
        %3637 = vmatpush1.msra.mxu0 0.0
        %3638 = vmatprep.subr.mxu0 0.0
        %3639 = vmatpush1.msra.mxu0 0.0
        %3640 = vmatprep.subr.mxu0 0.0
        %3641 = vmatpush1.msra.mxu0 0.0
        %3642 = vmatprep.subr.mxu0 0.0
        %3643 = vmatpush1.msra.mxu0 0.0
        %3644 = vmatprep.subr.mxu0 0.0
        %3645 = vmatpush1.msra.mxu0 0.0
        %3646 = vmatprep.subr.mxu0 0.0
        %3647 = vmatpush1.msra.mxu0 0.0
        %3648 = vmatprep.subr.mxu0 0.0
        %3649 = vmatpush1.msra.mxu0 0.0
        %3650 = vmatprep.subr.mxu0 0.0
        %3651 = vmatpush1.msra.mxu0 0.0
        %3652 = vmatprep.mubr.f32.mxu0 0.0
        %3653 = vmatmul.mubr.f32.gmra.mrb[0].mxu0 %v3476
        %v3654 = vpop.f32.mrb[0].mxu0
        %v3655 = vadd.f32 0.0, %v3654
        %v3656 = vpop.f32.mrb[0].mxu0
        %v3657 = vadd.f32 0.0, %v3656
        %3658 = vmatprep.mubr.f32.mxu0 0.0
        %3659 = vmatmul.mubr.f32.gmra.mrb[0].mxu0 %v3479
        %v3660 = vpop.f32.mrb[0].mxu0
        %v3661 = vadd.f32 0.0, %v3660
        %v3662 = vpop.f32.mrb[0].mxu0
        %v3663 = vadd.f32 0.0, %v3662
        %3664 = vmatprep.mubr.f32.mxu0 0.0
        %3665 = vmatmul.mubr.f32.gmra.mrb[0].mxu0 %v3482
        %v3666 = vpop.f32.mrb[0].mxu0
        %v3667 = vadd.f32 0.0, %v3666
        %v3668 = vpop.f32.mrb[0].mxu0
        %v3669 = vadd.f32 0.0, %v3668
        %3670 = vmatprep.mubr.f32.mxu0 0.0
        %3671 = vmatmul.mubr.f32.gmra.mrb[0].mxu0 %v3485
        %v3672 = vpop.f32.mrb[0].mxu0
        %v3673 = vadd.f32 0.0, %v3672
        %v3674 = vpop.f32.mrb[0].mxu0
        %v3675 = vadd.f32 0.0, %v3674
        %3676 = vdwg.mxu0
        %v3677 = vadd.f32 %v3438, %v3566
        %v3678 = vadd.f32 %v3439, %v3568
        %v3679 = vadd.f32 %v3440, %v3655
        %v3680 = vadd.f32 %v3441, %v3657
        %v3681 = vadd.f32 %v3442, %v3572
        %v3682 = vadd.f32 %v3443, %v3574
        %v3683 = vadd.f32 %v3444, %v3661
        %v3684 = vadd.f32 %v3445, %v3663
        %v3685 = vadd.f32 %v3446, %v3578
        %v3686 = vadd.f32 %v3447, %v3580
        %v3687 = vadd.f32 %v3448, %v3667
        %v3688 = vadd.f32 %v3449, %v3669
        %v3689 = vadd.f32 %v3450, %v3584
        %v3690 = vadd.f32 %v3451, %v3586
        %v3691 = vadd.f32 %v3452, %v3673
        %v3692 = vadd.f32 %v3453, %v3675
        %v3693 = vld [vmem:[%s603 + $0x4] sm:$0xff]
        %v3694 = vld [vmem:[%s603 + $0xc] sm:$0xff]
        %v3695 = vld [vmem:[%s603 + $0x14] sm:$0xff]
        %v3696 = vld [vmem:[%s603 + $0x1c] sm:$0xf]
        %s3697 = scalar_lea.vmem [#allocation5], 1664
        %v3698 = vld [vmem:[%s3697] sm:$0xff]
        %v3699 = vld [vmem:[%s3697 + $0x8] sm:$0xff]
        %v3700 = vld [vmem:[%s3697 + $0x10] sm:$0xff]
        %v3701 = vld [vmem:[%s3697 + $0x18] sm:$0xff]
        %v3702 = vld [vmem:[%s3697 + $0x20] sm:$0xff]
        %v3703 = vld [vmem:[%s3697 + $0x28] sm:$0xff]
        %v3704 = vld [vmem:[%s3697 + $0x30] sm:$0xff]
        %v3705 = vld [vmem:[%s3697 + $0x38] sm:$0xff]
        %v3706 = vld [vmem:[%s3697 + $0x40] sm:$0xff]
        %v3707 = vld [vmem:[%s3697 + $0x48] sm:$0xff]
        %v3708 = vld [vmem:[%s3697 + $0x50] sm:$0xff]
        %v3709 = vld [vmem:[%s3697 + $0x58] sm:$0xff]
        %v3710 = vld [vmem:[%s3697 + $0x60] sm:$0xf]
        %v3711 = vld [vmem:[%s3697 + $0x68] sm:$0xf]
        %v3712 = vld [vmem:[%s3697 + $0x70] sm:$0xf]
        %v3713 = vld [vmem:[%s3697 + $0x78] sm:$0xf]
        %v3715 = vsel %vm576, %v3693, 0
        %v3718 = vsel %vm576, %v3694, 0
        %v3721 = vsel %vm576, %v3695, 0
        %v3724 = vsel %vm576, %v3696, 0
        %v3727 = vsel %vm671, %v3710, 0
        %v3730 = vsel %vm671, %v3711, 0
        %v3733 = vsel %vm671, %v3712, 0
        %v3736 = vsel %vm671, %v3713, 0
        %3738 = vmatprep.subr.mxu0 %v3699
        %3739 = vmatpush1.msra.mxu0 %v3698
        %3740 = vmatprep.subr.mxu0 %v3703
        %3741 = vmatpush1.msra.mxu0 %v3702
        %3742 = vmatprep.subr.mxu0 %v3707
        %3743 = vmatpush1.msra.mxu0 %v3706
        %3744 = vmatprep.subr.mxu0 %v3730
        %3745 = vmatpush1.msra.mxu0 %v3727
        %3746 = vmatprep.subr.mxu0 0.0
        %3747 = vmatpush1.msra.mxu0 0.0
        %3748 = vmatprep.subr.mxu0 0.0
        %3749 = vmatpush1.msra.mxu0 0.0
        %3750 = vmatprep.subr.mxu0 0.0
        %3751 = vmatpush1.msra.mxu0 0.0
        %3752 = vmatprep.subr.mxu0 0.0
        %3753 = vmatpush1.msra.mxu0 0.0
        %3754 = vmatprep.subr.mxu0 0.0
        %3755 = vmatpush1.msra.mxu0 0.0
        %3756 = vmatprep.subr.mxu0 0.0
        %3757 = vmatpush1.msra.mxu0 0.0
        %3758 = vmatprep.subr.mxu0 0.0
        %3759 = vmatpush1.msra.mxu0 0.0
        %3760 = vmatprep.subr.mxu0 0.0
        %3761 = vmatpush1.msra.mxu0 0.0
        %3762 = vmatprep.subr.mxu0 0.0
        %3763 = vmatpush1.msra.mxu0 0.0
        %3764 = vmatprep.subr.mxu0 0.0
        %3765 = vmatpush1.msra.mxu0 0.0
        %3766 = vmatprep.subr.mxu0 0.0
        %3767 = vmatpush1.msra.mxu0 0.0
        %3768 = vmatprep.subr.mxu0 0.0
        %3769 = vmatpush1.msra.mxu0 0.0
        %3770 = vmatprep.subr.mxu0 0.0
        %3771 = vmatpush1.msra.mxu0 0.0
        %3772 = vmatprep.subr.mxu0 0.0
        %3773 = vmatpush1.msra.mxu0 0.0
        %3774 = vmatprep.subr.mxu0 0.0
        %3775 = vmatpush1.msra.mxu0 0.0
        %3776 = vmatprep.subr.mxu0 0.0
        %3777 = vmatpush1.msra.mxu0 0.0
        %3778 = vmatprep.subr.mxu0 0.0
        %3779 = vmatpush1.msra.mxu0 0.0
        %3780 = vmatprep.subr.mxu0 0.0
        %3781 = vmatpush1.msra.mxu0 0.0
        %3782 = vmatprep.subr.mxu0 0.0
        %3783 = vmatpush1.msra.mxu0 0.0
        %3784 = vmatprep.subr.mxu0 0.0
        %3785 = vmatpush1.msra.mxu0 0.0
        %3786 = vmatprep.subr.mxu0 0.0
        %3787 = vmatpush1.msra.mxu0 0.0
        %3788 = vmatprep.subr.mxu0 0.0
        %3789 = vmatpush1.msra.mxu0 0.0
        %3790 = vmatprep.subr.mxu0 0.0
        %3791 = vmatpush1.msra.mxu0 0.0
        %3792 = vmatprep.subr.mxu0 0.0
        %3793 = vmatpush1.msra.mxu0 0.0
        %3794 = vmatprep.subr.mxu0 0.0
        %3795 = vmatpush1.msra.mxu0 0.0
        %3796 = vmatprep.subr.mxu0 0.0
        %3797 = vmatpush1.msra.mxu0 0.0
        %3798 = vmatprep.subr.mxu0 0.0
        %3799 = vmatpush1.msra.mxu0 0.0
        %3800 = vmatprep.subr.mxu0 0.0
        %3801 = vmatpush1.msra.mxu0 0.0
        %3802 = vmatprep.mubr.f32.mxu0 0.0
        %3803 = vmatmul.mubr.f32.gmra.mrb[0].mxu0 %v3715
        %v3804 = vpop.f32.mrb[0].mxu0
        %v3805 = vadd.f32 0.0, %v3804
        %v3806 = vpop.f32.mrb[0].mxu0
        %v3807 = vadd.f32 0.0, %v3806
        %3808 = vmatprep.mubr.f32.mxu0 0.0
        %3809 = vmatmul.mubr.f32.gmra.mrb[0].mxu0 %v3718
        %v3810 = vpop.f32.mrb[0].mxu0
        %v3811 = vadd.f32 0.0, %v3810
        %v3812 = vpop.f32.mrb[0].mxu0
        %v3813 = vadd.f32 0.0, %v3812
        %3814 = vmatprep.mubr.f32.mxu0 0.0
        %3815 = vmatmul.mubr.f32.gmra.mrb[0].mxu0 %v3721
        %v3816 = vpop.f32.mrb[0].mxu0
        %v3817 = vadd.f32 0.0, %v3816
        %v3818 = vpop.f32.mrb[0].mxu0
        %v3819 = vadd.f32 0.0, %v3818
        %3820 = vmatprep.mubr.f32.mxu0 0.0
        %3821 = vmatmul.mubr.f32.gmra.mrb[0].mxu0 %v3724
        %v3822 = vpop.f32.mrb[0].mxu0
        %v3823 = vadd.f32 0.0, %v3822
        %v3824 = vpop.f32.mrb[0].mxu0
        %v3825 = vadd.f32 0.0, %v3824
        %3826 = vdwg.mxu0
        %3827 = vmatprep.subr.mxu0 %v3701
        %3828 = vmatpush1.msra.mxu0 %v3700
        %3829 = vmatprep.subr.mxu0 %v3705
        %3830 = vmatpush1.msra.mxu0 %v3704
        %3831 = vmatprep.subr.mxu0 %v3709
        %3832 = vmatpush1.msra.mxu0 %v3708
        %3833 = vmatprep.subr.mxu0 %v3736
        %3834 = vmatpush1.msra.mxu0 %v3733
        %3835 = vmatprep.subr.mxu0 0.0
        %3836 = vmatpush1.msra.mxu0 0.0
        %3837 = vmatprep.subr.mxu0 0.0
        %3838 = vmatpush1.msra.mxu0 0.0
        %3839 = vmatprep.subr.mxu0 0.0
        %3840 = vmatpush1.msra.mxu0 0.0
        %3841 = vmatprep.subr.mxu0 0.0
        %3842 = vmatpush1.msra.mxu0 0.0
        %3843 = vmatprep.subr.mxu0 0.0
        %3844 = vmatpush1.msra.mxu0 0.0
        %3845 = vmatprep.subr.mxu0 0.0
        %3846 = vmatpush1.msra.mxu0 0.0
        %3847 = vmatprep.subr.mxu0 0.0
        %3848 = vmatpush1.msra.mxu0 0.0
        %3849 = vmatprep.subr.mxu0 0.0
        %3850 = vmatpush1.msra.mxu0 0.0
        %3851 = vmatprep.subr.mxu0 0.0
        %3852 = vmatpush1.msra.mxu0 0.0
        %3853 = vmatprep.subr.mxu0 0.0
        %3854 = vmatpush1.msra.mxu0 0.0
        %3855 = vmatprep.subr.mxu0 0.0
        %3856 = vmatpush1.msra.mxu0 0.0
        %3857 = vmatprep.subr.mxu0 0.0
        %3858 = vmatpush1.msra.mxu0 0.0
        %3859 = vmatprep.subr.mxu0 0.0
        %3860 = vmatpush1.msra.mxu0 0.0
        %3861 = vmatprep.subr.mxu0 0.0
        %3862 = vmatpush1.msra.mxu0 0.0
        %3863 = vmatprep.subr.mxu0 0.0
        %3864 = vmatpush1.msra.mxu0 0.0
        %3865 = vmatprep.subr.mxu0 0.0
        %3866 = vmatpush1.msra.mxu0 0.0
        %3867 = vmatprep.subr.mxu0 0.0
        %3868 = vmatpush1.msra.mxu0 0.0
        %3869 = vmatprep.subr.mxu0 0.0
        %3870 = vmatpush1.msra.mxu0 0.0
        %3871 = vmatprep.subr.mxu0 0.0
        %3872 = vmatpush1.msra.mxu0 0.0
        %3873 = vmatprep.subr.mxu0 0.0
        %3874 = vmatpush1.msra.mxu0 0.0
        %3875 = vmatprep.subr.mxu0 0.0
        %3876 = vmatpush1.msra.mxu0 0.0
        %3877 = vmatprep.subr.mxu0 0.0
        %3878 = vmatpush1.msra.mxu0 0.0
        %3879 = vmatprep.subr.mxu0 0.0
        %3880 = vmatpush1.msra.mxu0 0.0
        %3881 = vmatprep.subr.mxu0 0.0
        %3882 = vmatpush1.msra.mxu0 0.0
        %3883 = vmatprep.subr.mxu0 0.0
        %3884 = vmatpush1.msra.mxu0 0.0
        %3885 = vmatprep.subr.mxu0 0.0
        %3886 = vmatpush1.msra.mxu0 0.0
        %3887 = vmatprep.subr.mxu0 0.0
        %3888 = vmatpush1.msra.mxu0 0.0
        %3889 = vmatprep.subr.mxu0 0.0
        %3890 = vmatpush1.msra.mxu0 0.0
        %3891 = vmatprep.mubr.f32.mxu0 0.0
        %3892 = vmatmul.mubr.f32.gmra.mrb[0].mxu0 %v3715
        %v3893 = vpop.f32.mrb[0].mxu0
        %v3894 = vadd.f32 0.0, %v3893
        %v3895 = vpop.f32.mrb[0].mxu0
        %v3896 = vadd.f32 0.0, %v3895
        %3897 = vmatprep.mubr.f32.mxu0 0.0
        %3898 = vmatmul.mubr.f32.gmra.mrb[0].mxu0 %v3718
        %v3899 = vpop.f32.mrb[0].mxu0
        %v3900 = vadd.f32 0.0, %v3899
        %v3901 = vpop.f32.mrb[0].mxu0
        %v3902 = vadd.f32 0.0, %v3901
        %3903 = vmatprep.mubr.f32.mxu0 0.0
        %3904 = vmatmul.mubr.f32.gmra.mrb[0].mxu0 %v3721
        %v3905 = vpop.f32.mrb[0].mxu0
        %v3906 = vadd.f32 0.0, %v3905
        %v3907 = vpop.f32.mrb[0].mxu0
        %v3908 = vadd.f32 0.0, %v3907
        %3909 = vmatprep.mubr.f32.mxu0 0.0
        %3910 = vmatmul.mubr.f32.gmra.mrb[0].mxu0 %v3724
        %v3911 = vpop.f32.mrb[0].mxu0
        %v3912 = vadd.f32 0.0, %v3911
        %v3913 = vpop.f32.mrb[0].mxu0
        %v3914 = vadd.f32 0.0, %v3913
        %3915 = vdwg.mxu0
        %v3916 = vadd.f32 %v3677, %v3805
        %v3917 = vadd.f32 %v3678, %v3807
        %v3918 = vadd.f32 %v3679, %v3894
        %v3919 = vadd.f32 %v3680, %v3896
        %v3920 = vadd.f32 %v3681, %v3811
        %v3921 = vadd.f32 %v3682, %v3813
        %v3922 = vadd.f32 %v3683, %v3900
        %v3923 = vadd.f32 %v3684, %v3902
        %v3924 = vadd.f32 %v3685, %v3817
        %v3925 = vadd.f32 %v3686, %v3819
        %v3926 = vadd.f32 %v3687, %v3906
        %v3927 = vadd.f32 %v3688, %v3908
        %v3928 = vadd.f32 %v3689, %v3823
        %v3929 = vadd.f32 %v3690, %v3825
        %v3930 = vadd.f32 %v3691, %v3912
        %v3931 = vadd.f32 %v3692, %v3914
        %v3932 = vld [vmem:[%s613 + $0x4] sm:$0xff]
        %v3933 = vld [vmem:[%s613 + $0xc] sm:$0xff]
        %v3934 = vld [vmem:[%s613 + $0x14] sm:$0xff]
        %v3935 = vld [vmem:[%s613 + $0x1c] sm:$0xf]
        %s3936 = scalar_lea.vmem [#allocation5], 1792
        %v3937 = vld [vmem:[%s3936] sm:$0xff]
        %v3938 = vld [vmem:[%s3936 + $0x8] sm:$0xff]
        %v3939 = vld [vmem:[%s3936 + $0x10] sm:$0xff]
        %v3940 = vld [vmem:[%s3936 + $0x18] sm:$0xff]
        %v3941 = vld [vmem:[%s3936 + $0x20] sm:$0xff]
        %v3942 = vld [vmem:[%s3936 + $0x28] sm:$0xff]
        %v3943 = vld [vmem:[%s3936 + $0x30] sm:$0xff]
        %v3944 = vld [vmem:[%s3936 + $0x38] sm:$0xff]
        %v3945 = vld [vmem:[%s3936 + $0x40] sm:$0xff]
        %v3946 = vld [vmem:[%s3936 + $0x48] sm:$0xff]
        %v3947 = vld [vmem:[%s3936 + $0x50] sm:$0xff]
        %v3948 = vld [vmem:[%s3936 + $0x58] sm:$0xff]
        %v3949 = vld [vmem:[%s3936 + $0x60] sm:$0xf]
        %v3950 = vld [vmem:[%s3936 + $0x68] sm:$0xf]
        %v3951 = vld [vmem:[%s3936 + $0x70] sm:$0xf]
        %v3952 = vld [vmem:[%s3936 + $0x78] sm:$0xf]
        %v3954 = vsel %vm576, %v3932, 0
        %v3957 = vsel %vm576, %v3933, 0
        %v3960 = vsel %vm576, %v3934, 0
        %v3963 = vsel %vm576, %v3935, 0
        %v3966 = vsel %vm671, %v3949, 0
        %v3969 = vsel %vm671, %v3950, 0
        %v3972 = vsel %vm671, %v3951, 0
        %v3975 = vsel %vm671, %v3952, 0
        %3977 = vmatprep.subr.mxu0 %v3938
        %3978 = vmatpush1.msra.mxu0 %v3937
        %3979 = vmatprep.subr.mxu0 %v3942
        %3980 = vmatpush1.msra.mxu0 %v3941
        %3981 = vmatprep.subr.mxu0 %v3946
        %3982 = vmatpush1.msra.mxu0 %v3945
        %3983 = vmatprep.subr.mxu0 %v3969
        %3984 = vmatpush1.msra.mxu0 %v3966
        %3985 = vmatprep.subr.mxu0 0.0
        %3986 = vmatpush1.msra.mxu0 0.0
        %3987 = vmatprep.subr.mxu0 0.0
        %3988 = vmatpush1.msra.mxu0 0.0
        %3989 = vmatprep.subr.mxu0 0.0
        %3990 = vmatpush1.msra.mxu0 0.0
        %3991 = vmatprep.subr.mxu0 0.0
        %3992 = vmatpush1.msra.mxu0 0.0
        %3993 = vmatprep.subr.mxu0 0.0
        %3994 = vmatpush1.msra.mxu0 0.0
        %3995 = vmatprep.subr.mxu0 0.0
        %3996 = vmatpush1.msra.mxu0 0.0
        %3997 = vmatprep.subr.mxu0 0.0
        %3998 = vmatpush1.msra.mxu0 0.0
        %3999 = vmatprep.subr.mxu0 0.0
        %4000 = vmatpush1.msra.mxu0 0.0
        %4001 = vmatprep.subr.mxu0 0.0
        %4002 = vmatpush1.msra.mxu0 0.0
        %4003 = vmatprep.subr.mxu0 0.0
        %4004 = vmatpush1.msra.mxu0 0.0
        %4005 = vmatprep.subr.mxu0 0.0
        %4006 = vmatpush1.msra.mxu0 0.0
        %4007 = vmatprep.subr.mxu0 0.0
        %4008 = vmatpush1.msra.mxu0 0.0
        %4009 = vmatprep.subr.mxu0 0.0
        %4010 = vmatpush1.msra.mxu0 0.0
        %4011 = vmatprep.subr.mxu0 0.0
        %4012 = vmatpush1.msra.mxu0 0.0
        %4013 = vmatprep.subr.mxu0 0.0
        %4014 = vmatpush1.msra.mxu0 0.0
        %4015 = vmatprep.subr.mxu0 0.0
        %4016 = vmatpush1.msra.mxu0 0.0
        %4017 = vmatprep.subr.mxu0 0.0
        %4018 = vmatpush1.msra.mxu0 0.0
        %4019 = vmatprep.subr.mxu0 0.0
        %4020 = vmatpush1.msra.mxu0 0.0
        %4021 = vmatprep.subr.mxu0 0.0
        %4022 = vmatpush1.msra.mxu0 0.0
        %4023 = vmatprep.subr.mxu0 0.0
        %4024 = vmatpush1.msra.mxu0 0.0
        %4025 = vmatprep.subr.mxu0 0.0
        %4026 = vmatpush1.msra.mxu0 0.0
        %4027 = vmatprep.subr.mxu0 0.0
        %4028 = vmatpush1.msra.mxu0 0.0
        %4029 = vmatprep.subr.mxu0 0.0
        %4030 = vmatpush1.msra.mxu0 0.0
        %4031 = vmatprep.subr.mxu0 0.0
        %4032 = vmatpush1.msra.mxu0 0.0
        %4033 = vmatprep.subr.mxu0 0.0
        %4034 = vmatpush1.msra.mxu0 0.0
        %4035 = vmatprep.subr.mxu0 0.0
        %4036 = vmatpush1.msra.mxu0 0.0
        %4037 = vmatprep.subr.mxu0 0.0
        %4038 = vmatpush1.msra.mxu0 0.0
        %4039 = vmatprep.subr.mxu0 0.0
        %4040 = vmatpush1.msra.mxu0 0.0
        %4041 = vmatprep.mubr.f32.mxu0 0.0
        %4042 = vmatmul.mubr.f32.gmra.mrb[0].mxu0 %v3954
        %v4043 = vpop.f32.mrb[0].mxu0
        %v4044 = vadd.f32 0.0, %v4043
        %v4045 = vpop.f32.mrb[0].mxu0
        %v4046 = vadd.f32 0.0, %v4045
        %4047 = vmatprep.mubr.f32.mxu0 0.0
        %4048 = vmatmul.mubr.f32.gmra.mrb[0].mxu0 %v3957
        %v4049 = vpop.f32.mrb[0].mxu0
        %v4050 = vadd.f32 0.0, %v4049
        %v4051 = vpop.f32.mrb[0].mxu0
        %v4052 = vadd.f32 0.0, %v4051
        %4053 = vmatprep.mubr.f32.mxu0 0.0
        %4054 = vmatmul.mubr.f32.gmra.mrb[0].mxu0 %v3960
        %v4055 = vpop.f32.mrb[0].mxu0
        %v4056 = vadd.f32 0.0, %v4055
        %v4057 = vpop.f32.mrb[0].mxu0
        %v4058 = vadd.f32 0.0, %v4057
        %4059 = vmatprep.mubr.f32.mxu0 0.0
        %4060 = vmatmul.mubr.f32.gmra.mrb[0].mxu0 %v3963
        %v4061 = vpop.f32.mrb[0].mxu0
        %v4062 = vadd.f32 0.0, %v4061
        %v4063 = vpop.f32.mrb[0].mxu0
        %v4064 = vadd.f32 0.0, %v4063
        %4065 = vdwg.mxu0
        %4066 = vmatprep.subr.mxu0 %v3940
        %4067 = vmatpush1.msra.mxu0 %v3939
        %4068 = vmatprep.subr.mxu0 %v3944
        %4069 = vmatpush1.msra.mxu0 %v3943
        %4070 = vmatprep.subr.mxu0 %v3948
        %4071 = vmatpush1.msra.mxu0 %v3947
        %4072 = vmatprep.subr.mxu0 %v3975
        %4073 = vmatpush1.msra.mxu0 %v3972
        %4074 = vmatprep.subr.mxu0 0.0
        %4075 = vmatpush1.msra.mxu0 0.0
        %4076 = vmatprep.subr.mxu0 0.0
        %4077 = vmatpush1.msra.mxu0 0.0
        %4078 = vmatprep.subr.mxu0 0.0
        %4079 = vmatpush1.msra.mxu0 0.0
        %4080 = vmatprep.subr.mxu0 0.0
        %4081 = vmatpush1.msra.mxu0 0.0
        %4082 = vmatprep.subr.mxu0 0.0
        %4083 = vmatpush1.msra.mxu0 0.0
        %4084 = vmatprep.subr.mxu0 0.0
        %4085 = vmatpush1.msra.mxu0 0.0
        %4086 = vmatprep.subr.mxu0 0.0
        %4087 = vmatpush1.msra.mxu0 0.0
        %4088 = vmatprep.subr.mxu0 0.0
        %4089 = vmatpush1.msra.mxu0 0.0
        %4090 = vmatprep.subr.mxu0 0.0
        %4091 = vmatpush1.msra.mxu0 0.0
        %4092 = vmatprep.subr.mxu0 0.0
        %4093 = vmatpush1.msra.mxu0 0.0
        %4094 = vmatprep.subr.mxu0 0.0
        %4095 = vmatpush1.msra.mxu0 0.0
        %4096 = vmatprep.subr.mxu0 0.0
        %4097 = vmatpush1.msra.mxu0 0.0
        %4098 = vmatprep.subr.mxu0 0.0
        %4099 = vmatpush1.msra.mxu0 0.0
        %4100 = vmatprep.subr.mxu0 0.0
        %4101 = vmatpush1.msra.mxu0 0.0
        %4102 = vmatprep.subr.mxu0 0.0
        %4103 = vmatpush1.msra.mxu0 0.0
        %4104 = vmatprep.subr.mxu0 0.0
        %4105 = vmatpush1.msra.mxu0 0.0
        %4106 = vmatprep.subr.mxu0 0.0
        %4107 = vmatpush1.msra.mxu0 0.0
        %4108 = vmatprep.subr.mxu0 0.0
        %4109 = vmatpush1.msra.mxu0 0.0
        %4110 = vmatprep.subr.mxu0 0.0
        %4111 = vmatpush1.msra.mxu0 0.0
        %4112 = vmatprep.subr.mxu0 0.0
        %4113 = vmatpush1.msra.mxu0 0.0
        %4114 = vmatprep.subr.mxu0 0.0
        %4115 = vmatpush1.msra.mxu0 0.0
        %4116 = vmatprep.subr.mxu0 0.0
        %4117 = vmatpush1.msra.mxu0 0.0
        %4118 = vmatprep.subr.mxu0 0.0
        %4119 = vmatpush1.msra.mxu0 0.0
        %4120 = vmatprep.subr.mxu0 0.0
        %4121 = vmatpush1.msra.mxu0 0.0
        %4122 = vmatprep.subr.mxu0 0.0
        %4123 = vmatpush1.msra.mxu0 0.0
        %4124 = vmatprep.subr.mxu0 0.0
        %4125 = vmatpush1.msra.mxu0 0.0
        %4126 = vmatprep.subr.mxu0 0.0
        %4127 = vmatpush1.msra.mxu0 0.0
        %4128 = vmatprep.subr.mxu0 0.0
        %4129 = vmatpush1.msra.mxu0 0.0
        %4130 = vmatprep.mubr.f32.mxu0 0.0
        %4131 = vmatmul.mubr.f32.gmra.mrb[0].mxu0 %v3954
        %v4132 = vpop.f32.mrb[0].mxu0
        %v4133 = vadd.f32 0.0, %v4132
        %v4134 = vpop.f32.mrb[0].mxu0
        %v4135 = vadd.f32 0.0, %v4134
        %4136 = vmatprep.mubr.f32.mxu0 0.0
        %4137 = vmatmul.mubr.f32.gmra.mrb[0].mxu0 %v3957
        %v4138 = vpop.f32.mrb[0].mxu0
        %v4139 = vadd.f32 0.0, %v4138
        %v4140 = vpop.f32.mrb[0].mxu0
        %v4141 = vadd.f32 0.0, %v4140
        %4142 = vmatprep.mubr.f32.mxu0 0.0
        %4143 = vmatmul.mubr.f32.gmra.mrb[0].mxu0 %v3960
        %v4144 = vpop.f32.mrb[0].mxu0
        %v4145 = vadd.f32 0.0, %v4144
        %v4146 = vpop.f32.mrb[0].mxu0
        %v4147 = vadd.f32 0.0, %v4146
        %4148 = vmatprep.mubr.f32.mxu0 0.0
        %4149 = vmatmul.mubr.f32.gmra.mrb[0].mxu0 %v3963
        %v4150 = vpop.f32.mrb[0].mxu0
        %v4151 = vadd.f32 0.0, %v4150
        %v4152 = vpop.f32.mrb[0].mxu0
        %v4153 = vadd.f32 0.0, %v4152
        %4154 = vdwg.mxu0
        %v4155 = vadd.f32 %v3916, %v4044
        %v4156 = vadd.f32 %v3917, %v4046
        %v4157 = vadd.f32 %v3918, %v4133
        %v4158 = vadd.f32 %v3919, %v4135
        %v4159 = vadd.f32 %v3920, %v4050
        %v4160 = vadd.f32 %v3921, %v4052
        %v4161 = vadd.f32 %v3922, %v4139
        %v4162 = vadd.f32 %v3923, %v4141
        %v4163 = vadd.f32 %v3924, %v4056
        %v4164 = vadd.f32 %v3925, %v4058
        %v4165 = vadd.f32 %v3926, %v4145
        %v4166 = vadd.f32 %v3927, %v4147
        %v4167 = vadd.f32 %v3928, %v4062
        %v4168 = vadd.f32 %v3929, %v4064
        %v4169 = vadd.f32 %v3930, %v4151
        %v4170 = vadd.f32 %v3931, %v4153
        %v4171 = vld [vmem:[#allocation8] sm:$0xf]
        %v4173 = vlaneseq
        %v4174 = vshrl.u32 %v4173, 7
        %v4175 = vsub.s32 0, %v4174
        %v4176 = vrot.slane %v4171, %v4175
        %v4177 = vlaneseq
        %v4178 = vshrl.u32 %v4177, 7
        %v4179 = vsub.s32 1, %v4178
        %v4180 = vrot.slane %v4171, %v4179
        %v4181 = vlaneseq
        %v4182 = vshrl.u32 %v4181, 7
        %v4183 = vsub.s32 2, %v4182
        %v4184 = vrot.slane %v4171, %v4183
        %v4185 = vlaneseq
        %v4186 = vshrl.u32 %v4185, 7
        %v4187 = vsub.s32 3, %v4186
        %v4188 = vrot.slane %v4171, %v4187
        %v4193 = vadd.f32 %v4155, %v4176
        %v4194 = vadd.f32 %v4156, %v4180
        %v4195 = vadd.f32 %v4157, %v4184
        %v4196 = vadd.f32 %v4158, %v4188
        %v4197 = vadd.f32 %v4159, %v4176
        %v4198 = vadd.f32 %v4160, %v4180
        %v4199 = vadd.f32 %v4161, %v4184
        %v4200 = vadd.f32 %v4162, %v4188
        %v4201 = vadd.f32 %v4163, %v4176
        %v4202 = vadd.f32 %v4164, %v4180
        %v4203 = vadd.f32 %v4165, %v4184
        %v4204 = vadd.f32 %v4166, %v4188
        %v4205 = vadd.f32 %v4167, %v4176
        %v4206 = vadd.f32 %v4168, %v4180
        %v4207 = vadd.f32 %v4169, %v4184
        %v4208 = vadd.f32 %v4170, %v4188
        %v4209 = vmax.f32 %v4193, 0.0
        %v4210 = vmax.f32 %v4194, 0.0
        %v4211 = vmax.f32 %v4195, 0.0
        %v4212 = vmax.f32 %v4196, 0.0
        %v4213 = vmax.f32 %v4197, 0.0
        %v4214 = vmax.f32 %v4198, 0.0
        %v4215 = vmax.f32 %v4199, 0.0
        %v4216 = vmax.f32 %v4200, 0.0
        %v4217 = vmax.f32 %v4201, 0.0
        %v4218 = vmax.f32 %v4202, 0.0
        %v4219 = vmax.f32 %v4203, 0.0
        %v4220 = vmax.f32 %v4204, 0.0
        %v4221 = vmax.f32 %v4205, 0.0
        %v4222 = vmax.f32 %v4206, 0.0
        %v4223 = vmax.f32 %v4207, 0.0
        %v4224 = vmax.f32 %v4208, 0.0
        %v4225 = vld [vmem:[%s5] sm:$0xff]
        %v4226 = vld [vmem:[%s5 + $0x8] sm:$0x3f]
        %v4228 = vsel %vm576, %v4225, 0
        %v4231 = vsel %vm576, %v4226, 0
        %v4234 = vsel %vm671, %v4221, 0
        %v4237 = vsel %vm671, %v4222, 0
        %v4240 = vsel %vm671, %v4223, 0
        %v4243 = vsel %vm671, %v4224, 0
        %4245 = vmatprep.subr.mxu0 %v4210
        %4246 = vmatpush1.msra.mxu0 %v4209
        %4247 = vmatprep.subr.mxu0 %v4214
        %4248 = vmatpush1.msra.mxu0 %v4213
        %4249 = vmatprep.subr.mxu0 %v4218
        %4250 = vmatpush1.msra.mxu0 %v4217
        %4251 = vmatprep.subr.mxu0 %v4237
        %4252 = vmatpush1.msra.mxu0 %v4234
        %4253 = vmatprep.subr.mxu0 0.0
        %4254 = vmatpush1.msra.mxu0 0.0
        %4255 = vmatprep.subr.mxu0 0.0
        %4256 = vmatpush1.msra.mxu0 0.0
        %4257 = vmatprep.subr.mxu0 0.0
        %4258 = vmatpush1.msra.mxu0 0.0
        %4259 = vmatprep.subr.mxu0 0.0
        %4260 = vmatpush1.msra.mxu0 0.0
        %4261 = vmatprep.subr.mxu0 0.0
        %4262 = vmatpush1.msra.mxu0 0.0
        %4263 = vmatprep.subr.mxu0 0.0
        %4264 = vmatpush1.msra.mxu0 0.0
        %4265 = vmatprep.subr.mxu0 0.0
        %4266 = vmatpush1.msra.mxu0 0.0
        %4267 = vmatprep.subr.mxu0 0.0
        %4268 = vmatpush1.msra.mxu0 0.0
        %4269 = vmatprep.subr.mxu0 0.0
        %4270 = vmatpush1.msra.mxu0 0.0
        %4271 = vmatprep.subr.mxu0 0.0
        %4272 = vmatpush1.msra.mxu0 0.0
        %4273 = vmatprep.subr.mxu0 0.0
        %4274 = vmatpush1.msra.mxu0 0.0
        %4275 = vmatprep.subr.mxu0 0.0
        %4276 = vmatpush1.msra.mxu0 0.0
        %4277 = vmatprep.subr.mxu0 0.0
        %4278 = vmatpush1.msra.mxu0 0.0
        %4279 = vmatprep.subr.mxu0 0.0
        %4280 = vmatpush1.msra.mxu0 0.0
        %4281 = vmatprep.subr.mxu0 0.0
        %4282 = vmatpush1.msra.mxu0 0.0
        %4283 = vmatprep.subr.mxu0 0.0
        %4284 = vmatpush1.msra.mxu0 0.0
        %4285 = vmatprep.subr.mxu0 0.0
        %4286 = vmatpush1.msra.mxu0 0.0
        %4287 = vmatprep.subr.mxu0 0.0
        %4288 = vmatpush1.msra.mxu0 0.0
        %4289 = vmatprep.subr.mxu0 0.0
        %4290 = vmatpush1.msra.mxu0 0.0
        %4291 = vmatprep.subr.mxu0 0.0
        %4292 = vmatpush1.msra.mxu0 0.0
        %4293 = vmatprep.subr.mxu0 0.0
        %4294 = vmatpush1.msra.mxu0 0.0
        %4295 = vmatprep.subr.mxu0 0.0
        %4296 = vmatpush1.msra.mxu0 0.0
        %4297 = vmatprep.subr.mxu0 0.0
        %4298 = vmatpush1.msra.mxu0 0.0
        %4299 = vmatprep.subr.mxu0 0.0
        %4300 = vmatpush1.msra.mxu0 0.0
        %4301 = vmatprep.subr.mxu0 0.0
        %4302 = vmatpush1.msra.mxu0 0.0
        %4303 = vmatprep.subr.mxu0 0.0
        %4304 = vmatpush1.msra.mxu0 0.0
        %4305 = vmatprep.subr.mxu0 0.0
        %4306 = vmatpush1.msra.mxu0 0.0
        %4307 = vmatprep.subr.mxu0 0.0
        %4308 = vmatpush1.msra.mxu0 0.0
        %4309 = vmatprep.mubr.f32.mxu0 0.0
        %4310 = vmatmul.mubr.f32.gmra.mrb[0].mxu0 %v4228
        %v4311 = vpop.f32.mrb[0].mxu0
        %v4312 = vadd.f32 0.0, %v4311
        %v4313 = vpop.f32.mrb[0].mxu0
        %v4314 = vadd.f32 0.0, %v4313
        %4315 = vmatprep.mubr.f32.mxu0 0.0
        %4316 = vmatmul.mubr.f32.gmra.mrb[0].mxu0 %v4231
        %v4317 = vpop.f32.mrb[0].mxu0
        %v4318 = vadd.f32 0.0, %v4317
        %v4319 = vpop.f32.mrb[0].mxu0
        %v4320 = vadd.f32 0.0, %v4319
        %4321 = vdwg.mxu0
        %4322 = vmatprep.subr.mxu0 %v4212
        %4323 = vmatpush1.msra.mxu0 %v4211
        %4324 = vmatprep.subr.mxu0 %v4216
        %4325 = vmatpush1.msra.mxu0 %v4215
        %4326 = vmatprep.subr.mxu0 %v4220
        %4327 = vmatpush1.msra.mxu0 %v4219
        %4328 = vmatprep.subr.mxu0 %v4243
        %4329 = vmatpush1.msra.mxu0 %v4240
        %4330 = vmatprep.subr.mxu0 0.0
        %4331 = vmatpush1.msra.mxu0 0.0
        %4332 = vmatprep.subr.mxu0 0.0
        %4333 = vmatpush1.msra.mxu0 0.0
        %4334 = vmatprep.subr.mxu0 0.0
        %4335 = vmatpush1.msra.mxu0 0.0
        %4336 = vmatprep.subr.mxu0 0.0
        %4337 = vmatpush1.msra.mxu0 0.0
        %4338 = vmatprep.subr.mxu0 0.0
        %4339 = vmatpush1.msra.mxu0 0.0
        %4340 = vmatprep.subr.mxu0 0.0
        %4341 = vmatpush1.msra.mxu0 0.0
        %4342 = vmatprep.subr.mxu0 0.0
        %4343 = vmatpush1.msra.mxu0 0.0
        %4344 = vmatprep.subr.mxu0 0.0
        %4345 = vmatpush1.msra.mxu0 0.0
        %4346 = vmatprep.subr.mxu0 0.0
        %4347 = vmatpush1.msra.mxu0 0.0
        %4348 = vmatprep.subr.mxu0 0.0
        %4349 = vmatpush1.msra.mxu0 0.0
        %4350 = vmatprep.subr.mxu0 0.0
        %4351 = vmatpush1.msra.mxu0 0.0
        %4352 = vmatprep.subr.mxu0 0.0
        %4353 = vmatpush1.msra.mxu0 0.0
        %4354 = vmatprep.subr.mxu0 0.0
        %4355 = vmatpush1.msra.mxu0 0.0
        %4356 = vmatprep.subr.mxu0 0.0
        %4357 = vmatpush1.msra.mxu0 0.0
        %4358 = vmatprep.subr.mxu0 0.0
        %4359 = vmatpush1.msra.mxu0 0.0
        %4360 = vmatprep.subr.mxu0 0.0
        %4361 = vmatpush1.msra.mxu0 0.0
        %4362 = vmatprep.subr.mxu0 0.0
        %4363 = vmatpush1.msra.mxu0 0.0
        %4364 = vmatprep.subr.mxu0 0.0
        %4365 = vmatpush1.msra.mxu0 0.0
        %4366 = vmatprep.subr.mxu0 0.0
        %4367 = vmatpush1.msra.mxu0 0.0
        %4368 = vmatprep.subr.mxu0 0.0
        %4369 = vmatpush1.msra.mxu0 0.0
        %4370 = vmatprep.subr.mxu0 0.0
        %4371 = vmatpush1.msra.mxu0 0.0
        %4372 = vmatprep.subr.mxu0 0.0
        %4373 = vmatpush1.msra.mxu0 0.0
        %4374 = vmatprep.subr.mxu0 0.0
        %4375 = vmatpush1.msra.mxu0 0.0
        %4376 = vmatprep.subr.mxu0 0.0
        %4377 = vmatpush1.msra.mxu0 0.0
        %4378 = vmatprep.subr.mxu0 0.0
        %4379 = vmatpush1.msra.mxu0 0.0
        %4380 = vmatprep.subr.mxu0 0.0
        %4381 = vmatpush1.msra.mxu0 0.0
        %4382 = vmatprep.subr.mxu0 0.0
        %4383 = vmatpush1.msra.mxu0 0.0
        %4384 = vmatprep.subr.mxu0 0.0
        %4385 = vmatpush1.msra.mxu0 0.0
        %4386 = vmatprep.mubr.f32.mxu0 0.0
        %4387 = vmatmul.mubr.f32.gmra.mrb[0].mxu0 %v4228
        %v4388 = vpop.f32.mrb[0].mxu0
        %v4389 = vadd.f32 0.0, %v4388
        %v4390 = vpop.f32.mrb[0].mxu0
        %v4391 = vadd.f32 0.0, %v4390
        %4392 = vmatprep.mubr.f32.mxu0 0.0
        %4393 = vmatmul.mubr.f32.gmra.mrb[0].mxu0 %v4231
        %v4394 = vpop.f32.mrb[0].mxu0
        %v4395 = vadd.f32 0.0, %v4394
        %v4396 = vpop.f32.mrb[0].mxu0
        %v4397 = vadd.f32 0.0, %v4396
        %4398 = vdwg.mxu0
        %s4399 = scalar_lea.vmem %s5, 16
        %v4400 = vld [vmem:[%s4399] sm:$0xff]
        %v4401 = vld [vmem:[%s4399 + $0x8] sm:$0x3f]
        %v4403 = vsel %vm576, %v4400, 0
        %v4406 = vsel %vm576, %v4401, 0
        %4408 = vmatprep.subr.mxu0 %v4210
        %4409 = vmatpush1.msra.mxu0 %v4209
        %4410 = vmatprep.subr.mxu0 %v4214
        %4411 = vmatpush1.msra.mxu0 %v4213
        %4412 = vmatprep.subr.mxu0 %v4218
        %4413 = vmatpush1.msra.mxu0 %v4217
        %4414 = vmatprep.subr.mxu0 %v4237
        %4415 = vmatpush1.msra.mxu0 %v4234
        %4416 = vmatprep.subr.mxu0 0.0
        %4417 = vmatpush1.msra.mxu0 0.0
        %4418 = vmatprep.subr.mxu0 0.0
        %4419 = vmatpush1.msra.mxu0 0.0
        %4420 = vmatprep.subr.mxu0 0.0
        %4421 = vmatpush1.msra.mxu0 0.0
        %4422 = vmatprep.subr.mxu0 0.0
        %4423 = vmatpush1.msra.mxu0 0.0
        %4424 = vmatprep.subr.mxu0 0.0
        %4425 = vmatpush1.msra.mxu0 0.0
        %4426 = vmatprep.subr.mxu0 0.0
        %4427 = vmatpush1.msra.mxu0 0.0
        %4428 = vmatprep.subr.mxu0 0.0
        %4429 = vmatpush1.msra.mxu0 0.0
        %4430 = vmatprep.subr.mxu0 0.0
        %4431 = vmatpush1.msra.mxu0 0.0
        %4432 = vmatprep.subr.mxu0 0.0
        %4433 = vmatpush1.msra.mxu0 0.0
        %4434 = vmatprep.subr.mxu0 0.0
        %4435 = vmatpush1.msra.mxu0 0.0
        %4436 = vmatprep.subr.mxu0 0.0
        %4437 = vmatpush1.msra.mxu0 0.0
        %4438 = vmatprep.subr.mxu0 0.0
        %4439 = vmatpush1.msra.mxu0 0.0
        %4440 = vmatprep.subr.mxu0 0.0
        %4441 = vmatpush1.msra.mxu0 0.0
        %4442 = vmatprep.subr.mxu0 0.0
        %4443 = vmatpush1.msra.mxu0 0.0
        %4444 = vmatprep.subr.mxu0 0.0
        %4445 = vmatpush1.msra.mxu0 0.0
        %4446 = vmatprep.subr.mxu0 0.0
        %4447 = vmatpush1.msra.mxu0 0.0
        %4448 = vmatprep.subr.mxu0 0.0
        %4449 = vmatpush1.msra.mxu0 0.0
        %4450 = vmatprep.subr.mxu0 0.0
        %4451 = vmatpush1.msra.mxu0 0.0
        %4452 = vmatprep.subr.mxu0 0.0
        %4453 = vmatpush1.msra.mxu0 0.0
        %4454 = vmatprep.subr.mxu0 0.0
        %4455 = vmatpush1.msra.mxu0 0.0
        %4456 = vmatprep.subr.mxu0 0.0
        %4457 = vmatpush1.msra.mxu0 0.0
        %4458 = vmatprep.subr.mxu0 0.0
        %4459 = vmatpush1.msra.mxu0 0.0
        %4460 = vmatprep.subr.mxu0 0.0
        %4461 = vmatpush1.msra.mxu0 0.0
        %4462 = vmatprep.subr.mxu0 0.0
        %4463 = vmatpush1.msra.mxu0 0.0
        %4464 = vmatprep.subr.mxu0 0.0
        %4465 = vmatpush1.msra.mxu0 0.0
        %4466 = vmatprep.subr.mxu0 0.0
        %4467 = vmatpush1.msra.mxu0 0.0
        %4468 = vmatprep.subr.mxu0 0.0
        %4469 = vmatpush1.msra.mxu0 0.0
        %4470 = vmatprep.subr.mxu0 0.0
        %4471 = vmatpush1.msra.mxu0 0.0
        %4472 = vmatprep.mubr.f32.mxu0 0.0
        %4473 = vmatmul.mubr.f32.gmra.mrb[0].mxu0 %v4403
        %v4474 = vpop.f32.mrb[0].mxu0
        %v4475 = vadd.f32 0.0, %v4474
        %v4476 = vpop.f32.mrb[0].mxu0
        %v4477 = vadd.f32 0.0, %v4476
        %4478 = vmatprep.mubr.f32.mxu0 0.0
        %4479 = vmatmul.mubr.f32.gmra.mrb[0].mxu0 %v4406
        %v4480 = vpop.f32.mrb[0].mxu0
        %v4481 = vadd.f32 0.0, %v4480
        %v4482 = vpop.f32.mrb[0].mxu0
        %v4483 = vadd.f32 0.0, %v4482
        %4484 = vdwg.mxu0
        %4485 = vmatprep.subr.mxu0 %v4212
        %4486 = vmatpush1.msra.mxu0 %v4211
        %4487 = vmatprep.subr.mxu0 %v4216
        %4488 = vmatpush1.msra.mxu0 %v4215
        %4489 = vmatprep.subr.mxu0 %v4220
        %4490 = vmatpush1.msra.mxu0 %v4219
        %4491 = vmatprep.subr.mxu0 %v4243
        %4492 = vmatpush1.msra.mxu0 %v4240
        %4493 = vmatprep.subr.mxu0 0.0
        %4494 = vmatpush1.msra.mxu0 0.0
        %4495 = vmatprep.subr.mxu0 0.0
        %4496 = vmatpush1.msra.mxu0 0.0
        %4497 = vmatprep.subr.mxu0 0.0
        %4498 = vmatpush1.msra.mxu0 0.0
        %4499 = vmatprep.subr.mxu0 0.0
        %4500 = vmatpush1.msra.mxu0 0.0
        %4501 = vmatprep.subr.mxu0 0.0
        %4502 = vmatpush1.msra.mxu0 0.0
        %4503 = vmatprep.subr.mxu0 0.0
        %4504 = vmatpush1.msra.mxu0 0.0
        %4505 = vmatprep.subr.mxu0 0.0
        %4506 = vmatpush1.msra.mxu0 0.0
        %4507 = vmatprep.subr.mxu0 0.0
        %4508 = vmatpush1.msra.mxu0 0.0
        %4509 = vmatprep.subr.mxu0 0.0
        %4510 = vmatpush1.msra.mxu0 0.0
        %4511 = vmatprep.subr.mxu0 0.0
        %4512 = vmatpush1.msra.mxu0 0.0
        %4513 = vmatprep.subr.mxu0 0.0
        %4514 = vmatpush1.msra.mxu0 0.0
        %4515 = vmatprep.subr.mxu0 0.0
        %4516 = vmatpush1.msra.mxu0 0.0
        %4517 = vmatprep.subr.mxu0 0.0
        %4518 = vmatpush1.msra.mxu0 0.0
        %4519 = vmatprep.subr.mxu0 0.0
        %4520 = vmatpush1.msra.mxu0 0.0
        %4521 = vmatprep.subr.mxu0 0.0
        %4522 = vmatpush1.msra.mxu0 0.0
        %4523 = vmatprep.subr.mxu0 0.0
        %4524 = vmatpush1.msra.mxu0 0.0
        %4525 = vmatprep.subr.mxu0 0.0
        %4526 = vmatpush1.msra.mxu0 0.0
        %4527 = vmatprep.subr.mxu0 0.0
        %4528 = vmatpush1.msra.mxu0 0.0
        %4529 = vmatprep.subr.mxu0 0.0
        %4530 = vmatpush1.msra.mxu0 0.0
        %4531 = vmatprep.subr.mxu0 0.0
        %4532 = vmatpush1.msra.mxu0 0.0
        %4533 = vmatprep.subr.mxu0 0.0
        %4534 = vmatpush1.msra.mxu0 0.0
        %4535 = vmatprep.subr.mxu0 0.0
        %4536 = vmatpush1.msra.mxu0 0.0
        %4537 = vmatprep.subr.mxu0 0.0
        %4538 = vmatpush1.msra.mxu0 0.0
        %4539 = vmatprep.subr.mxu0 0.0
        %4540 = vmatpush1.msra.mxu0 0.0
        %4541 = vmatprep.subr.mxu0 0.0
        %4542 = vmatpush1.msra.mxu0 0.0
        %4543 = vmatprep.subr.mxu0 0.0
        %4544 = vmatpush1.msra.mxu0 0.0
        %4545 = vmatprep.subr.mxu0 0.0
        %4546 = vmatpush1.msra.mxu0 0.0
        %4547 = vmatprep.subr.mxu0 0.0
        %4548 = vmatpush1.msra.mxu0 0.0
        %4549 = vmatprep.mubr.f32.mxu0 0.0
        %4550 = vmatmul.mubr.f32.gmra.mrb[0].mxu0 %v4403
        %v4551 = vpop.f32.mrb[0].mxu0
        %v4552 = vadd.f32 0.0, %v4551
        %v4553 = vpop.f32.mrb[0].mxu0
        %v4554 = vadd.f32 0.0, %v4553
        %4555 = vmatprep.mubr.f32.mxu0 0.0
        %4556 = vmatmul.mubr.f32.gmra.mrb[0].mxu0 %v4406
        %v4557 = vpop.f32.mrb[0].mxu0
        %v4558 = vadd.f32 0.0, %v4557
        %v4559 = vpop.f32.mrb[0].mxu0
        %v4560 = vadd.f32 0.0, %v4559
        %4561 = vdwg.mxu0
        %v4562 = vmax.f32 %v4312, %v4475
        %v4563 = vmax.f32 %v4314, %v4477
        %v4564 = vmax.f32 %v4389, %v4552
        %v4565 = vmax.f32 %v4391, %v4554
        %v4566 = vmax.f32 %v4318, %v4481
        %v4567 = vmax.f32 %v4320, %v4483
        %v4568 = vmax.f32 %v4395, %v4558
        %v4569 = vmax.f32 %v4397, %v4560
        %v4570 = vld [vmem:[#allocation13] sm:$0xff]
        %v4571 = vld [vmem:[#allocation13 + $0x8] sm:$0xff]
        %v4572 = vld [vmem:[#allocation13 + $0x10] sm:$0xff]
        %v4573 = vld [vmem:[#allocation13 + $0x18] sm:$0xff]
        %v4574 = vld [vmem:[#allocation13 + $0x20] sm:$0xff]
        %v4575 = vld [vmem:[#allocation13 + $0x28] sm:$0xff]
        %v4576 = vld [vmem:[#allocation13 + $0x30] sm:$0xff]
        %v4577 = vld [vmem:[#allocation13 + $0x38] sm:$0xff]
        %v4578 = vld [vmem:[#allocation13 + $0x40] sm:$0xff]
        %v4579 = vld [vmem:[#allocation13 + $0x48] sm:$0xff]
        %v4580 = vld [vmem:[#allocation13 + $0x50] sm:$0xff]
        %v4581 = vld [vmem:[#allocation13 + $0x58] sm:$0xff]
        %v4582 = vld [vmem:[#allocation13 + $0x60] sm:$0xff]
        %v4583 = vld [vmem:[#allocation13 + $0x68] sm:$0xff]
        %v4584 = vld [vmem:[#allocation13 + $0x70] sm:$0xff]
        %v4585 = vld [vmem:[#allocation13 + $0x78] sm:$0xff]
        %v4586 = vld [vmem:[#allocation13 + $0x80] sm:$0xff]
        %v4587 = vld [vmem:[#allocation13 + $0x88] sm:$0xff]
        %v4588 = vld [vmem:[#allocation13 + $0x90] sm:$0xff]
        %v4589 = vld [vmem:[#allocation13 + $0x98] sm:$0xff]
        %v4590 = vld [vmem:[#allocation13 + $0xa0] sm:$0xff]
        %v4591 = vld [vmem:[#allocation13 + $0xa8] sm:$0xff]
        %v4592 = vld [vmem:[#allocation13 + $0xb0] sm:$0xff]
        %v4593 = vld [vmem:[#allocation13 + $0xb8] sm:$0xff]
        %v4594 = vld [vmem:[#allocation13 + $0xc0] sm:$0xff]
        %v4595 = vld [vmem:[#allocation13 + $0xc8] sm:$0xff]
        %v4596 = vld [vmem:[#allocation13 + $0xd0] sm:$0xff]
        %v4597 = vld [vmem:[#allocation13 + $0xd8] sm:$0xff]
        %v4598 = vld [vmem:[#allocation13 + $0xe0] sm:$0xff]
        %v4599 = vld [vmem:[#allocation13 + $0xe8] sm:$0xff]
        %v4600 = vld [vmem:[#allocation13 + $0xf0] sm:$0xff]
        %v4601 = vld [vmem:[#allocation13 + $0xf8] sm:$0xff]
        %v4602 = vld [vmem:[#allocation13 + $0x100] sm:$0xff]
        %v4603 = vld [vmem:[#allocation13 + $0x108] sm:$0xff]
        %v4604 = vld [vmem:[#allocation13 + $0x110] sm:$0xff]
        %v4605 = vld [vmem:[#allocation13 + $0x118] sm:$0xff]
        %v4606 = vld [vmem:[#allocation13 + $0x120] sm:$0xff]
        %v4607 = vld [vmem:[#allocation13 + $0x128] sm:$0xff]
        %v4608 = vld [vmem:[#allocation13 + $0x130] sm:$0xff]
        %v4609 = vld [vmem:[#allocation13 + $0x138] sm:$0xff]
        %v4610 = vld [vmem:[#allocation13 + $0x140] sm:$0xff]
        %v4611 = vld [vmem:[#allocation13 + $0x148] sm:$0xff]
        %v4612 = vld [vmem:[#allocation13 + $0x150] sm:$0xff]
        %v4613 = vld [vmem:[#allocation13 + $0x158] sm:$0xff]
        %v4614 = vld [vmem:[#allocation13 + $0x160] sm:$0xff]
        %v4615 = vld [vmem:[#allocation13 + $0x168] sm:$0xff]
        %v4616 = vld [vmem:[#allocation13 + $0x170] sm:$0xff]
        %v4617 = vld [vmem:[#allocation13 + $0x178] sm:$0xff]
        %v4618 = vld [vmem:[#allocation13 + $0x180] sm:$0xff]
        %v4619 = vld [vmem:[#allocation13 + $0x188] sm:$0xff]
        %v4620 = vld [vmem:[#allocation13 + $0x190] sm:$0xff]
        %v4621 = vld [vmem:[#allocation13 + $0x198] sm:$0xff]
        %v4622 = vld [vmem:[#allocation13 + $0x1a0] sm:$0xff]
        %v4623 = vld [vmem:[#allocation13 + $0x1a8] sm:$0xff]
        %v4624 = vld [vmem:[#allocation13 + $0x1b0] sm:$0xff]
        %v4625 = vld [vmem:[#allocation13 + $0x1b8] sm:$0xff]
        %v4626 = vld [vmem:[#allocation13 + $0x1c0] sm:$0xff]
        %v4627 = vld [vmem:[#allocation13 + $0x1c8] sm:$0xff]
        %v4628 = vld [vmem:[#allocation13 + $0x1d0] sm:$0xff]
        %v4629 = vld [vmem:[#allocation13 + $0x1d8] sm:$0xff]
        %v4630 = vld [vmem:[#allocation13 + $0x1e0] sm:$0xff]
        %v4631 = vld [vmem:[#allocation13 + $0x1e8] sm:$0xff]
        %v4632 = vld [vmem:[#allocation13 + $0x1f0] sm:$0xff]
        %v4633 = vld [vmem:[#allocation13 + $0x1f8] sm:$0xff]
        %v4634 = vld [vmem:[#allocation13 + $0x200] sm:$0xff]
        %v4635 = vld [vmem:[#allocation13 + $0x208] sm:$0xff]
        %v4636 = vld [vmem:[#allocation13 + $0x210] sm:$0xff]
        %v4637 = vld [vmem:[#allocation13 + $0x218] sm:$0xff]
        %v4638 = vld [vmem:[#allocation13 + $0x220] sm:$0xff]
        %v4639 = vld [vmem:[#allocation13 + $0x228] sm:$0xff]
        %v4640 = vld [vmem:[#allocation13 + $0x230] sm:$0xff]
        %v4641 = vld [vmem:[#allocation13 + $0x238] sm:$0xff]
        %v4642 = vld [vmem:[#allocation13 + $0x240] sm:$0xff]
        %v4643 = vld [vmem:[#allocation13 + $0x248] sm:$0xff]
        %v4644 = vld [vmem:[#allocation13 + $0x250] sm:$0xff]
        %v4645 = vld [vmem:[#allocation13 + $0x258] sm:$0xff]
        %v4646 = vld [vmem:[#allocation13 + $0x260] sm:$0xff]
        %v4647 = vld [vmem:[#allocation13 + $0x268] sm:$0xff]
        %v4648 = vld [vmem:[#allocation13 + $0x270] sm:$0xff]
        %v4649 = vld [vmem:[#allocation13 + $0x278] sm:$0xff]
        %v4650 = vld [vmem:[#allocation13 + $0x280] sm:$0xff]
        %v4651 = vld [vmem:[#allocation13 + $0x288] sm:$0xff]
        %v4652 = vld [vmem:[#allocation13 + $0x290] sm:$0xff]
        %v4653 = vld [vmem:[#allocation13 + $0x298] sm:$0xff]
        %v4654 = vld [vmem:[#allocation13 + $0x2a0] sm:$0xff]
        %v4655 = vld [vmem:[#allocation13 + $0x2a8] sm:$0xff]
        %v4656 = vld [vmem:[#allocation13 + $0x2b0] sm:$0xff]
        %v4657 = vld [vmem:[#allocation13 + $0x2b8] sm:$0xff]
        %v4658 = vld [vmem:[#allocation13 + $0x2c0] sm:$0xff]
        %v4659 = vld [vmem:[#allocation13 + $0x2c8] sm:$0xff]
        %v4660 = vld [vmem:[#allocation13 + $0x2d0] sm:$0xff]
        %v4661 = vld [vmem:[#allocation13 + $0x2d8] sm:$0xff]
        %v4662 = vld [vmem:[#allocation13 + $0x2e0] sm:$0xff]
        %v4663 = vld [vmem:[#allocation13 + $0x2e8] sm:$0xff]
        %v4664 = vld [vmem:[#allocation13 + $0x2f0] sm:$0xff]
        %v4665 = vld [vmem:[#allocation13 + $0x2f8] sm:$0xff]
        %v4666 = vld [vmem:[#allocation13 + $0x300] sm:$0xff]
        %v4667 = vld [vmem:[#allocation13 + $0x308] sm:$0xff]
        %v4668 = vld [vmem:[#allocation13 + $0x310] sm:$0xff]
        %v4669 = vld [vmem:[#allocation13 + $0x318] sm:$0xff]
        %v4670 = vld [vmem:[#allocation13 + $0x320] sm:$0xff]
        %v4671 = vld [vmem:[#allocation13 + $0x328] sm:$0xff]
        %v4672 = vld [vmem:[#allocation13 + $0x330] sm:$0xff]
        %v4673 = vld [vmem:[#allocation13 + $0x338] sm:$0xff]
        %v4674 = vld [vmem:[#allocation13 + $0x340] sm:$0xff]
        %v4675 = vld [vmem:[#allocation13 + $0x348] sm:$0xff]
        %v4676 = vld [vmem:[#allocation13 + $0x350] sm:$0xff]
        %v4677 = vld [vmem:[#allocation13 + $0x358] sm:$0xff]
        %v4678 = vld [vmem:[#allocation13 + $0x360] sm:$0xff]
        %v4679 = vld [vmem:[#allocation13 + $0x368] sm:$0xff]
        %v4680 = vld [vmem:[#allocation13 + $0x370] sm:$0xff]
        %v4681 = vld [vmem:[#allocation13 + $0x378] sm:$0xff]
        %vm4682 = vcmask 523264
        %v4684 = vsel %vm4682, %v4565, 0
        %v4687 = vsel %vm4682, %v4569, 0
        %4689 = vmatprep.subr.mxu0 %v4571
        %4690 = vmatpush1.msra.mxu0 %v4570
        %4691 = vmatprep.subr.mxu0 %v4573
        %4692 = vmatpush1.msra.mxu0 %v4572
        %4693 = vmatprep.subr.mxu0 %v4575
        %4694 = vmatpush1.msra.mxu0 %v4574
        %4695 = vmatprep.subr.mxu0 %v4577
        %4696 = vmatpush1.msra.mxu0 %v4576
        %4697 = vmatprep.subr.mxu0 %v4579
        %4698 = vmatpush1.msra.mxu0 %v4578
        %4699 = vmatprep.subr.mxu0 %v4581
        %4700 = vmatpush1.msra.mxu0 %v4580
        %4701 = vmatprep.subr.mxu0 %v4583
        %4702 = vmatpush1.msra.mxu0 %v4582
        %4703 = vmatprep.subr.mxu0 %v4585
        %4704 = vmatpush1.msra.mxu0 %v4584
        %4705 = vmatprep.subr.mxu0 %v4587
        %4706 = vmatpush1.msra.mxu0 %v4586
        %4707 = vmatprep.subr.mxu0 %v4589
        %4708 = vmatpush1.msra.mxu0 %v4588
        %4709 = vmatprep.subr.mxu0 %v4591
        %4710 = vmatpush1.msra.mxu0 %v4590
        %4711 = vmatprep.subr.mxu0 %v4593
        %4712 = vmatpush1.msra.mxu0 %v4592
        %4713 = vmatprep.subr.mxu0 %v4595
        %4714 = vmatpush1.msra.mxu0 %v4594
        %4715 = vmatprep.subr.mxu0 %v4597
        %4716 = vmatpush1.msra.mxu0 %v4596
        %4717 = vmatprep.subr.mxu0 %v4599
        %4718 = vmatpush1.msra.mxu0 %v4598
        %4719 = vmatprep.subr.mxu0 %v4601
        %4720 = vmatpush1.msra.mxu0 %v4600
        %4721 = vmatprep.subr.mxu0 %v4603
        %4722 = vmatpush1.msra.mxu0 %v4602
        %4723 = vmatprep.subr.mxu0 %v4605
        %4724 = vmatpush1.msra.mxu0 %v4604
        %4725 = vmatprep.subr.mxu0 %v4607
        %4726 = vmatpush1.msra.mxu0 %v4606
        %4727 = vmatprep.subr.mxu0 %v4609
        %4728 = vmatpush1.msra.mxu0 %v4608
        %4729 = vmatprep.subr.mxu0 %v4611
        %4730 = vmatpush1.msra.mxu0 %v4610
        %4731 = vmatprep.subr.mxu0 %v4613
        %4732 = vmatpush1.msra.mxu0 %v4612
        %4733 = vmatprep.subr.mxu0 %v4615
        %4734 = vmatpush1.msra.mxu0 %v4614
        %4735 = vmatprep.subr.mxu0 %v4617
        %4736 = vmatpush1.msra.mxu0 %v4616
        %4737 = vmatprep.subr.mxu0 %v4619
        %4738 = vmatpush1.msra.mxu0 %v4618
        %4739 = vmatprep.subr.mxu0 %v4621
        %4740 = vmatpush1.msra.mxu0 %v4620
        %4741 = vmatprep.subr.mxu0 %v4623
        %4742 = vmatpush1.msra.mxu0 %v4622
        %4743 = vmatprep.subr.mxu0 %v4625
        %4744 = vmatpush1.msra.mxu0 %v4624
        %4745 = vmatprep.subr.mxu0 %v4627
        %4746 = vmatpush1.msra.mxu0 %v4626
        %4747 = vmatprep.subr.mxu0 %v4629
        %4748 = vmatpush1.msra.mxu0 %v4628
        %4749 = vmatprep.subr.mxu0 %v4631
        %4750 = vmatpush1.msra.mxu0 %v4630
        %4751 = vmatprep.subr.mxu0 %v4633
        %4752 = vmatpush1.msra.mxu0 %v4632
        %4753 = vmatprep.mubr.f32.mxu0 %v4563
        %4754 = vmatmul.mubr.f32.gmra.mrb[0].mxu0 %v4562
        %v4755 = vpop.f32.mrb[0].mxu0
        %v4756 = vadd.f32 0.0, %v4755
        %v4757 = vpop.f32.mrb[0].mxu0
        %v4758 = vadd.f32 0.0, %v4757
        %4759 = vmatprep.mubr.f32.mxu0 %v4567
        %4760 = vmatmul.mubr.f32.gmra.mrb[0].mxu0 %v4566
        %v4761 = vpop.f32.mrb[0].mxu0
        %v4762 = vadd.f32 0.0, %v4761
        %v4763 = vpop.f32.mrb[0].mxu0
        %v4764 = vadd.f32 0.0, %v4763
        %4765 = vdwg.mxu0
        %4766 = vmatprep.subr.mxu0 %v4635
        %4767 = vmatpush1.msra.mxu0 %v4634
        %4768 = vmatprep.subr.mxu0 %v4637
        %4769 = vmatpush1.msra.mxu0 %v4636
        %4770 = vmatprep.subr.mxu0 %v4639
        %4771 = vmatpush1.msra.mxu0 %v4638
        %4772 = vmatprep.subr.mxu0 %v4641
        %4773 = vmatpush1.msra.mxu0 %v4640
        %4774 = vmatprep.subr.mxu0 %v4643
        %4775 = vmatpush1.msra.mxu0 %v4642
        %4776 = vmatprep.subr.mxu0 %v4645
        %4777 = vmatpush1.msra.mxu0 %v4644
        %4778 = vmatprep.subr.mxu0 %v4647
        %4779 = vmatpush1.msra.mxu0 %v4646
        %4780 = vmatprep.subr.mxu0 %v4649
        %4781 = vmatpush1.msra.mxu0 %v4648
        %4782 = vmatprep.subr.mxu0 %v4651
        %4783 = vmatpush1.msra.mxu0 %v4650
        %4784 = vmatprep.subr.mxu0 %v4653
        %4785 = vmatpush1.msra.mxu0 %v4652
        %4786 = vmatprep.subr.mxu0 %v4655
        %4787 = vmatpush1.msra.mxu0 %v4654
        %4788 = vmatprep.subr.mxu0 %v4657
        %4789 = vmatpush1.msra.mxu0 %v4656
        %4790 = vmatprep.subr.mxu0 %v4659
        %4791 = vmatpush1.msra.mxu0 %v4658
        %4792 = vmatprep.subr.mxu0 %v4661
        %4793 = vmatpush1.msra.mxu0 %v4660
        %4794 = vmatprep.subr.mxu0 %v4663
        %4795 = vmatpush1.msra.mxu0 %v4662
        %4796 = vmatprep.subr.mxu0 %v4665
        %4797 = vmatpush1.msra.mxu0 %v4664
        %4798 = vmatprep.subr.mxu0 %v4667
        %4799 = vmatpush1.msra.mxu0 %v4666
        %4800 = vmatprep.subr.mxu0 %v4669
        %4801 = vmatpush1.msra.mxu0 %v4668
        %4802 = vmatprep.subr.mxu0 %v4671
        %4803 = vmatpush1.msra.mxu0 %v4670
        %4804 = vmatprep.subr.mxu0 %v4673
        %4805 = vmatpush1.msra.mxu0 %v4672
        %4806 = vmatprep.subr.mxu0 %v4675
        %4807 = vmatpush1.msra.mxu0 %v4674
        %4808 = vmatprep.subr.mxu0 %v4677
        %4809 = vmatpush1.msra.mxu0 %v4676
        %4810 = vmatprep.subr.mxu0 %v4679
        %4811 = vmatpush1.msra.mxu0 %v4678
        %4812 = vmatprep.subr.mxu0 %v4681
        %4813 = vmatpush1.msra.mxu0 %v4680
        %4814 = vmatprep.subr.mxu0 0.0
        %4815 = vmatpush1.msra.mxu0 0.0
        %4816 = vmatprep.subr.mxu0 0.0
        %4817 = vmatpush1.msra.mxu0 0.0
        %4818 = vmatprep.subr.mxu0 0.0
        %4819 = vmatpush1.msra.mxu0 0.0
        %4820 = vmatprep.subr.mxu0 0.0
        %4821 = vmatpush1.msra.mxu0 0.0
        %4822 = vmatprep.subr.mxu0 0.0
        %4823 = vmatpush1.msra.mxu0 0.0
        %4824 = vmatprep.subr.mxu0 0.0
        %4825 = vmatpush1.msra.mxu0 0.0
        %4826 = vmatprep.subr.mxu0 0.0
        %4827 = vmatpush1.msra.mxu0 0.0
        %4828 = vmatprep.subr.mxu0 0.0
        %4829 = vmatpush1.msra.mxu0 0.0
        %4830 = vmatprep.mubr.f32.mxu0 %v4684
        %4831 = vmatmul.mubr.f32.gmra.mrb[0].mxu0 %v4564
        %v4832 = vpop.f32.mrb[0].mxu0
        %v4833 = vadd.f32 %v4756, %v4832
        %v4834 = vpop.f32.mrb[0].mxu0
        %v4835 = vadd.f32 %v4758, %v4834
        %4836 = vmatprep.mubr.f32.mxu0 %v4687
        %4837 = vmatmul.mubr.f32.gmra.mrb[0].mxu0 %v4568
        %v4838 = vpop.f32.mrb[0].mxu0
        %v4839 = vadd.f32 %v4762, %v4838
        %v4840 = vpop.f32.mrb[0].mxu0
        %v4841 = vadd.f32 %v4764, %v4840
        %4842 = vdwg.mxu0
        %s4843 = scalar_lea.vmem [#allocation13], 896
        %v4844 = vld [vmem:[%s4843] sm:$0xff]
        %v4845 = vld [vmem:[%s4843 + $0x8] sm:$0xff]
        %v4846 = vld [vmem:[%s4843 + $0x10] sm:$0xff]
        %v4847 = vld [vmem:[%s4843 + $0x18] sm:$0xff]
        %v4848 = vld [vmem:[%s4843 + $0x20] sm:$0xff]
        %v4849 = vld [vmem:[%s4843 + $0x28] sm:$0xff]
        %v4850 = vld [vmem:[%s4843 + $0x30] sm:$0xff]
        %v4851 = vld [vmem:[%s4843 + $0x38] sm:$0xff]
        %v4852 = vld [vmem:[%s4843 + $0x40] sm:$0xff]
        %v4853 = vld [vmem:[%s4843 + $0x48] sm:$0xff]
        %v4854 = vld [vmem:[%s4843 + $0x50] sm:$0xff]
        %v4855 = vld [vmem:[%s4843 + $0x58] sm:$0xff]
        %v4856 = vld [vmem:[%s4843 + $0x60] sm:$0xff]
        %v4857 = vld [vmem:[%s4843 + $0x68] sm:$0xff]
        %v4858 = vld [vmem:[%s4843 + $0x70] sm:$0xff]
        %v4859 = vld [vmem:[%s4843 + $0x78] sm:$0xff]
        %v4860 = vld [vmem:[%s4843 + $0x80] sm:$0xff]
        %v4861 = vld [vmem:[%s4843 + $0x88] sm:$0xff]
        %v4862 = vld [vmem:[%s4843 + $0x90] sm:$0xff]
        %v4863 = vld [vmem:[%s4843 + $0x98] sm:$0xff]
        %v4864 = vld [vmem:[%s4843 + $0xa0] sm:$0xff]
        %v4865 = vld [vmem:[%s4843 + $0xa8] sm:$0xff]
        %v4866 = vld [vmem:[%s4843 + $0xb0] sm:$0xff]
        %v4867 = vld [vmem:[%s4843 + $0xb8] sm:$0xff]
        %v4868 = vld [vmem:[%s4843 + $0xc0] sm:$0xff]
        %v4869 = vld [vmem:[%s4843 + $0xc8] sm:$0xff]
        %v4870 = vld [vmem:[%s4843 + $0xd0] sm:$0xff]
        %v4871 = vld [vmem:[%s4843 + $0xd8] sm:$0xff]
        %v4872 = vld [vmem:[%s4843 + $0xe0] sm:$0xff]
        %v4873 = vld [vmem:[%s4843 + $0xe8] sm:$0xff]
        %v4874 = vld [vmem:[%s4843 + $0xf0] sm:$0xff]
        %v4875 = vld [vmem:[%s4843 + $0xf8] sm:$0xff]
        %v4876 = vld [vmem:[%s4843 + $0x100] sm:$0xff]
        %v4877 = vld [vmem:[%s4843 + $0x108] sm:$0xff]
        %v4878 = vld [vmem:[%s4843 + $0x110] sm:$0xff]
        %v4879 = vld [vmem:[%s4843 + $0x118] sm:$0xff]
        %v4880 = vld [vmem:[%s4843 + $0x120] sm:$0xff]
        %v4881 = vld [vmem:[%s4843 + $0x128] sm:$0xff]
        %v4882 = vld [vmem:[%s4843 + $0x130] sm:$0xff]
        %v4883 = vld [vmem:[%s4843 + $0x138] sm:$0xff]
        %v4884 = vld [vmem:[%s4843 + $0x140] sm:$0xff]
        %v4885 = vld [vmem:[%s4843 + $0x148] sm:$0xff]
        %v4886 = vld [vmem:[%s4843 + $0x150] sm:$0xff]
        %v4887 = vld [vmem:[%s4843 + $0x158] sm:$0xff]
        %v4888 = vld [vmem:[%s4843 + $0x160] sm:$0xff]
        %v4889 = vld [vmem:[%s4843 + $0x168] sm:$0xff]
        %v4890 = vld [vmem:[%s4843 + $0x170] sm:$0xff]
        %v4891 = vld [vmem:[%s4843 + $0x178] sm:$0xff]
        %v4892 = vld [vmem:[%s4843 + $0x180] sm:$0xff]
        %v4893 = vld [vmem:[%s4843 + $0x188] sm:$0xff]
        %v4894 = vld [vmem:[%s4843 + $0x190] sm:$0xff]
        %v4895 = vld [vmem:[%s4843 + $0x198] sm:$0xff]
        %v4896 = vld [vmem:[%s4843 + $0x1a0] sm:$0xff]
        %v4897 = vld [vmem:[%s4843 + $0x1a8] sm:$0xff]
        %v4898 = vld [vmem:[%s4843 + $0x1b0] sm:$0xff]
        %v4899 = vld [vmem:[%s4843 + $0x1b8] sm:$0xff]
        %v4900 = vld [vmem:[%s4843 + $0x1c0] sm:$0xff]
        %v4901 = vld [vmem:[%s4843 + $0x1c8] sm:$0xff]
        %v4902 = vld [vmem:[%s4843 + $0x1d0] sm:$0xff]
        %v4903 = vld [vmem:[%s4843 + $0x1d8] sm:$0xff]
        %v4904 = vld [vmem:[%s4843 + $0x1e0] sm:$0xff]
        %v4905 = vld [vmem:[%s4843 + $0x1e8] sm:$0xff]
        %v4906 = vld [vmem:[%s4843 + $0x1f0] sm:$0xff]
        %v4907 = vld [vmem:[%s4843 + $0x1f8] sm:$0xff]
        %v4908 = vld [vmem:[%s4843 + $0x200] sm:$0xff]
        %v4909 = vld [vmem:[%s4843 + $0x208] sm:$0xff]
        %v4910 = vld [vmem:[%s4843 + $0x210] sm:$0xff]
        %v4911 = vld [vmem:[%s4843 + $0x218] sm:$0xff]
        %v4912 = vld [vmem:[%s4843 + $0x220] sm:$0xff]
        %v4913 = vld [vmem:[%s4843 + $0x228] sm:$0xff]
        %v4914 = vld [vmem:[%s4843 + $0x230] sm:$0xff]
        %v4915 = vld [vmem:[%s4843 + $0x238] sm:$0xff]
        %v4916 = vld [vmem:[%s4843 + $0x240] sm:$0xff]
        %v4917 = vld [vmem:[%s4843 + $0x248] sm:$0xff]
        %v4918 = vld [vmem:[%s4843 + $0x250] sm:$0xff]
        %v4919 = vld [vmem:[%s4843 + $0x258] sm:$0xff]
        %v4920 = vld [vmem:[%s4843 + $0x260] sm:$0xff]
        %v4921 = vld [vmem:[%s4843 + $0x268] sm:$0xff]
        %v4922 = vld [vmem:[%s4843 + $0x270] sm:$0xff]
        %v4923 = vld [vmem:[%s4843 + $0x278] sm:$0xff]
        %v4924 = vld [vmem:[%s4843 + $0x280] sm:$0xff]
        %v4925 = vld [vmem:[%s4843 + $0x288] sm:$0xff]
        %v4926 = vld [vmem:[%s4843 + $0x290] sm:$0xff]
        %v4927 = vld [vmem:[%s4843 + $0x298] sm:$0xff]
        %v4928 = vld [vmem:[%s4843 + $0x2a0] sm:$0xff]
        %v4929 = vld [vmem:[%s4843 + $0x2a8] sm:$0xff]
        %v4930 = vld [vmem:[%s4843 + $0x2b0] sm:$0xff]
        %v4931 = vld [vmem:[%s4843 + $0x2b8] sm:$0xff]
        %v4932 = vld [vmem:[%s4843 + $0x2c0] sm:$0xff]
        %v4933 = vld [vmem:[%s4843 + $0x2c8] sm:$0xff]
        %v4934 = vld [vmem:[%s4843 + $0x2d0] sm:$0xff]
        %v4935 = vld [vmem:[%s4843 + $0x2d8] sm:$0xff]
        %v4936 = vld [vmem:[%s4843 + $0x2e0] sm:$0xff]
        %v4937 = vld [vmem:[%s4843 + $0x2e8] sm:$0xff]
        %v4938 = vld [vmem:[%s4843 + $0x2f0] sm:$0xff]
        %v4939 = vld [vmem:[%s4843 + $0x2f8] sm:$0xff]
        %v4940 = vld [vmem:[%s4843 + $0x300] sm:$0xff]
        %v4941 = vld [vmem:[%s4843 + $0x308] sm:$0xff]
        %v4942 = vld [vmem:[%s4843 + $0x310] sm:$0xff]
        %v4943 = vld [vmem:[%s4843 + $0x318] sm:$0xff]
        %v4944 = vld [vmem:[%s4843 + $0x320] sm:$0xff]
        %v4945 = vld [vmem:[%s4843 + $0x328] sm:$0xff]
        %v4946 = vld [vmem:[%s4843 + $0x330] sm:$0xff]
        %v4947 = vld [vmem:[%s4843 + $0x338] sm:$0xff]
        %v4948 = vld [vmem:[%s4843 + $0x340] sm:$0xff]
        %v4949 = vld [vmem:[%s4843 + $0x348] sm:$0xff]
        %v4950 = vld [vmem:[%s4843 + $0x350] sm:$0xff]
        %v4951 = vld [vmem:[%s4843 + $0x358] sm:$0xff]
        %v4952 = vld [vmem:[%s4843 + $0x360] sm:$0xff]
        %v4953 = vld [vmem:[%s4843 + $0x368] sm:$0xff]
        %v4954 = vld [vmem:[%s4843 + $0x370] sm:$0xff]
        %v4955 = vld [vmem:[%s4843 + $0x378] sm:$0xff]
        %4956 = vmatprep.subr.mxu0 %v4845
        %4957 = vmatpush1.msra.mxu0 %v4844
        %4958 = vmatprep.subr.mxu0 %v4847
        %4959 = vmatpush1.msra.mxu0 %v4846
        %4960 = vmatprep.subr.mxu0 %v4849
        %4961 = vmatpush1.msra.mxu0 %v4848
        %4962 = vmatprep.subr.mxu0 %v4851
        %4963 = vmatpush1.msra.mxu0 %v4850
        %4964 = vmatprep.subr.mxu0 %v4853
        %4965 = vmatpush1.msra.mxu0 %v4852
        %4966 = vmatprep.subr.mxu0 %v4855
        %4967 = vmatpush1.msra.mxu0 %v4854
        %4968 = vmatprep.subr.mxu0 %v4857
        %4969 = vmatpush1.msra.mxu0 %v4856
        %4970 = vmatprep.subr.mxu0 %v4859
        %4971 = vmatpush1.msra.mxu0 %v4858
        %4972 = vmatprep.subr.mxu0 %v4861
        %4973 = vmatpush1.msra.mxu0 %v4860
        %4974 = vmatprep.subr.mxu0 %v4863
        %4975 = vmatpush1.msra.mxu0 %v4862
        %4976 = vmatprep.subr.mxu0 %v4865
        %4977 = vmatpush1.msra.mxu0 %v4864
        %4978 = vmatprep.subr.mxu0 %v4867
        %4979 = vmatpush1.msra.mxu0 %v4866
        %4980 = vmatprep.subr.mxu0 %v4869
        %4981 = vmatpush1.msra.mxu0 %v4868
        %4982 = vmatprep.subr.mxu0 %v4871
        %4983 = vmatpush1.msra.mxu0 %v4870
        %4984 = vmatprep.subr.mxu0 %v4873
        %4985 = vmatpush1.msra.mxu0 %v4872
        %4986 = vmatprep.subr.mxu0 %v4875
        %4987 = vmatpush1.msra.mxu0 %v4874
        %4988 = vmatprep.subr.mxu0 %v4877
        %4989 = vmatpush1.msra.mxu0 %v4876
        %4990 = vmatprep.subr.mxu0 %v4879
        %4991 = vmatpush1.msra.mxu0 %v4878
        %4992 = vmatprep.subr.mxu0 %v4881
        %4993 = vmatpush1.msra.mxu0 %v4880
        %4994 = vmatprep.subr.mxu0 %v4883
        %4995 = vmatpush1.msra.mxu0 %v4882
        %4996 = vmatprep.subr.mxu0 %v4885
        %4997 = vmatpush1.msra.mxu0 %v4884
        %4998 = vmatprep.subr.mxu0 %v4887
        %4999 = vmatpush1.msra.mxu0 %v4886
        %5000 = vmatprep.subr.mxu0 %v4889
        %5001 = vmatpush1.msra.mxu0 %v4888
        %5002 = vmatprep.subr.mxu0 %v4891
        %5003 = vmatpush1.msra.mxu0 %v4890
        %5004 = vmatprep.subr.mxu0 %v4893
        %5005 = vmatpush1.msra.mxu0 %v4892
        %5006 = vmatprep.subr.mxu0 %v4895
        %5007 = vmatpush1.msra.mxu0 %v4894
        %5008 = vmatprep.subr.mxu0 %v4897
        %5009 = vmatpush1.msra.mxu0 %v4896
        %5010 = vmatprep.subr.mxu0 %v4899
        %5011 = vmatpush1.msra.mxu0 %v4898
        %5012 = vmatprep.subr.mxu0 %v4901
        %5013 = vmatpush1.msra.mxu0 %v4900
        %5014 = vmatprep.subr.mxu0 %v4903
        %5015 = vmatpush1.msra.mxu0 %v4902
        %5016 = vmatprep.subr.mxu0 %v4905
        %5017 = vmatpush1.msra.mxu0 %v4904
        %5018 = vmatprep.subr.mxu0 %v4907
        %5019 = vmatpush1.msra.mxu0 %v4906
        %5020 = vmatprep.mubr.f32.mxu0 %v4563
        %5021 = vmatmul.mubr.f32.gmra.mrb[0].mxu0 %v4562
        %v5022 = vpop.f32.mrb[0].mxu0
        %v5023 = vadd.f32 0.0, %v5022
        %v5024 = vpop.f32.mrb[0].mxu0
        %v5025 = vadd.f32 0.0, %v5024
        %5026 = vmatprep.mubr.f32.mxu0 %v4567
        %5027 = vmatmul.mubr.f32.gmra.mrb[0].mxu0 %v4566
        %v5028 = vpop.f32.mrb[0].mxu0
        %v5029 = vadd.f32 0.0, %v5028
        %v5030 = vpop.f32.mrb[0].mxu0
        %v5031 = vadd.f32 0.0, %v5030
        %5032 = vdwg.mxu0
        %5033 = vmatprep.subr.mxu0 %v4909
        %5034 = vmatpush1.msra.mxu0 %v4908
        %5035 = vmatprep.subr.mxu0 %v4911
        %5036 = vmatpush1.msra.mxu0 %v4910
        %5037 = vmatprep.subr.mxu0 %v4913
        %5038 = vmatpush1.msra.mxu0 %v4912
        %5039 = vmatprep.subr.mxu0 %v4915
        %5040 = vmatpush1.msra.mxu0 %v4914
        %5041 = vmatprep.subr.mxu0 %v4917
        %5042 = vmatpush1.msra.mxu0 %v4916
        %5043 = vmatprep.subr.mxu0 %v4919
        %5044 = vmatpush1.msra.mxu0 %v4918
        %5045 = vmatprep.subr.mxu0 %v4921
        %5046 = vmatpush1.msra.mxu0 %v4920
        %5047 = vmatprep.subr.mxu0 %v4923
        %5048 = vmatpush1.msra.mxu0 %v4922
        %5049 = vmatprep.subr.mxu0 %v4925
        %5050 = vmatpush1.msra.mxu0 %v4924
        %5051 = vmatprep.subr.mxu0 %v4927
        %5052 = vmatpush1.msra.mxu0 %v4926
        %5053 = vmatprep.subr.mxu0 %v4929
        %5054 = vmatpush1.msra.mxu0 %v4928
        %5055 = vmatprep.subr.mxu0 %v4931
        %5056 = vmatpush1.msra.mxu0 %v4930
        %5057 = vmatprep.subr.mxu0 %v4933
        %5058 = vmatpush1.msra.mxu0 %v4932
        %5059 = vmatprep.subr.mxu0 %v4935
        %5060 = vmatpush1.msra.mxu0 %v4934
        %5061 = vmatprep.subr.mxu0 %v4937
        %5062 = vmatpush1.msra.mxu0 %v4936
        %5063 = vmatprep.subr.mxu0 %v4939
        %5064 = vmatpush1.msra.mxu0 %v4938
        %5065 = vmatprep.subr.mxu0 %v4941
        %5066 = vmatpush1.msra.mxu0 %v4940
        %5067 = vmatprep.subr.mxu0 %v4943
        %5068 = vmatpush1.msra.mxu0 %v4942
        %5069 = vmatprep.subr.mxu0 %v4945
        %5070 = vmatpush1.msra.mxu0 %v4944
        %5071 = vmatprep.subr.mxu0 %v4947
        %5072 = vmatpush1.msra.mxu0 %v4946
        %5073 = vmatprep.subr.mxu0 %v4949
        %5074 = vmatpush1.msra.mxu0 %v4948
        %5075 = vmatprep.subr.mxu0 %v4951
        %5076 = vmatpush1.msra.mxu0 %v4950
        %5077 = vmatprep.subr.mxu0 %v4953
        %5078 = vmatpush1.msra.mxu0 %v4952
        %5079 = vmatprep.subr.mxu0 %v4955
        %5080 = vmatpush1.msra.mxu0 %v4954
        %5081 = vmatprep.subr.mxu0 0.0
        %5082 = vmatpush1.msra.mxu0 0.0
        %5083 = vmatprep.subr.mxu0 0.0
        %5084 = vmatpush1.msra.mxu0 0.0
        %5085 = vmatprep.subr.mxu0 0.0
        %5086 = vmatpush1.msra.mxu0 0.0
        %5087 = vmatprep.subr.mxu0 0.0
        %5088 = vmatpush1.msra.mxu0 0.0
        %5089 = vmatprep.subr.mxu0 0.0
        %5090 = vmatpush1.msra.mxu0 0.0
        %5091 = vmatprep.subr.mxu0 0.0
        %5092 = vmatpush1.msra.mxu0 0.0
        %5093 = vmatprep.subr.mxu0 0.0
        %5094 = vmatpush1.msra.mxu0 0.0
        %5095 = vmatprep.subr.mxu0 0.0
        %5096 = vmatpush1.msra.mxu0 0.0
        %5097 = vmatprep.mubr.f32.mxu0 %v4684
        %5098 = vmatmul.mubr.f32.gmra.mrb[0].mxu0 %v4564
        %v5099 = vpop.f32.mrb[0].mxu0
        %v5100 = vadd.f32 %v5023, %v5099
        %v5101 = vpop.f32.mrb[0].mxu0
        %v5102 = vadd.f32 %v5025, %v5101
        %5103 = vmatprep.mubr.f32.mxu0 %v4687
        %5104 = vmatmul.mubr.f32.gmra.mrb[0].mxu0 %v4568
        %v5105 = vpop.f32.mrb[0].mxu0
        %v5106 = vadd.f32 %v5029, %v5105
        %v5107 = vpop.f32.mrb[0].mxu0
        %v5108 = vadd.f32 %v5031, %v5107
        %5109 = vdwg.mxu0
        %v5110 = vmax.f32 %v4833, %v5100
        %v5111 = vmax.f32 %v4835, %v5102
        %v5112 = vmax.f32 %v4839, %v5106
        %v5113 = vmax.f32 %v4841, %v5108
        %5114 = vst [vmem:[#allocation3] sm:$0xff] 0.0
        %vm5115 = vcmask 785408
        %5116 = vst.msk [vmem:[#allocation3 + $0x8] sm:$0xff] %vm5115, 0.0
        %5117 = vst [vmem:[#allocation3 + $0x10] sm:$0xff] 0.0
        %5118 = vst.msk [vmem:[#allocation3 + $0x18] sm:$0xff] %vm5115, 0.0
        %5119 = vst [vmem:[#allocation3 + $0x20] sm:$0x3] 0.0
        %vm5120 = vcmask 779264
        %5121 = vst.msk [vmem:[#allocation3 + $0x28] sm:$0x3] %vm5120, 0.0
        %vm5126 = vcmask 1041408
        %v5127 = vrot.slane %v5110, 6
        %v5128 = vrot.slane %v5111, 6
        %v5129 = vrot.slane %v5112, 6
        %v5130 = vsel %vm5126, %v5127, %v5129
        %v5131 = vrot.slane %v5113, 6
        %v5132 = vsel %vm5126, %v5128, %v5131
        %5137 = vst [vmem:[#allocation3] sm:$0xfc] %v5127
        %vm5138 = vcmask 785410
        %5139 = vst.msk [vmem:[#allocation3 + $0x8] sm:$0xfc] %vm5138, %v5128
        %5140 = vst [vmem:[#allocation3 + $0x10] sm:$0xff] %v5130
        %5141 = vst.msk [vmem:[#allocation3 + $0x18] sm:$0xff] %vm5115, %v5132
        %v5142 = vld [vmem:[#allocation3] sm:$0xff]
        %v5143 = vld [vmem:[#allocation3 + $0x8] sm:$0xff]
        %v5144 = vld [vmem:[#allocation3 + $0x10] sm:$0x3f]
        %v5145 = vld [vmem:[#allocation3 + $0x18] sm:$0x3f]
        %v5146 = vld [vmem:[#allocation10] sm:$0xff]
        %v5147 = vld [vmem:[#allocation10 + $0x8] sm:$0xff]
        %v5148 = vld [vmem:[#allocation10 + $0x10] sm:$0xff]
        %v5149 = vld [vmem:[#allocation10 + $0x18] sm:$0xff]
        %v5150 = vld [vmem:[#allocation10 + $0x20] sm:$0xff]
        %v5151 = vld [vmem:[#allocation10 + $0x28] sm:$0xff]
        %v5152 = vld [vmem:[#allocation10 + $0x30] sm:$0xff]
        %v5153 = vld [vmem:[#allocation10 + $0x38] sm:$0xff]
        %v5154 = vld [vmem:[#allocation10 + $0x40] sm:$0xff]
        %v5155 = vld [vmem:[#allocation10 + $0x48] sm:$0xff]
        %v5156 = vld [vmem:[#allocation10 + $0x50] sm:$0xff]
        %v5157 = vld [vmem:[#allocation10 + $0x58] sm:$0xff]
        %v5158 = vld [vmem:[#allocation10 + $0x60] sm:$0xff]
        %v5159 = vld [vmem:[#allocation10 + $0x68] sm:$0xff]
        %v5160 = vld [vmem:[#allocation10 + $0x70] sm:$0xff]
        %v5161 = vld [vmem:[#allocation10 + $0x78] sm:$0xff]
        %v5162 = vld [vmem:[#allocation10 + $0x80] sm:$0xff]
        %v5163 = vld [vmem:[#allocation10 + $0x88] sm:$0xff]
        %v5164 = vld [vmem:[#allocation10 + $0x90] sm:$0xff]
        %v5165 = vld [vmem:[#allocation10 + $0x98] sm:$0xff]
        %v5166 = vld [vmem:[#allocation10 + $0xa0] sm:$0xff]
        %v5167 = vld [vmem:[#allocation10 + $0xa8] sm:$0xff]
        %v5168 = vld [vmem:[#allocation10 + $0xb0] sm:$0xff]
        %v5169 = vld [vmem:[#allocation10 + $0xb8] sm:$0xff]
        %v5170 = vld [vmem:[#allocation10 + $0xc0] sm:$0xff]
        %v5171 = vld [vmem:[#allocation10 + $0xc8] sm:$0xff]
        %v5172 = vld [vmem:[#allocation10 + $0xd0] sm:$0xff]
        %v5173 = vld [vmem:[#allocation10 + $0xd8] sm:$0xff]
        %v5174 = vld [vmem:[#allocation10 + $0xe0] sm:$0xff]
        %v5175 = vld [vmem:[#allocation10 + $0xe8] sm:$0xff]
        %v5176 = vld [vmem:[#allocation10 + $0xf0] sm:$0xff]
        %v5177 = vld [vmem:[#allocation10 + $0xf8] sm:$0xff]
        %v5178 = vld [vmem:[#allocation10 + $0x100] sm:$0xff]
        %v5179 = vld [vmem:[#allocation10 + $0x108] sm:$0xff]
        %v5180 = vld [vmem:[#allocation10 + $0x110] sm:$0xff]
        %v5181 = vld [vmem:[#allocation10 + $0x118] sm:$0xff]
        %v5182 = vld [vmem:[#allocation10 + $0x120] sm:$0xff]
        %v5183 = vld [vmem:[#allocation10 + $0x128] sm:$0xff]
        %v5184 = vld [vmem:[#allocation10 + $0x130] sm:$0xff]
        %v5185 = vld [vmem:[#allocation10 + $0x138] sm:$0xff]
        %v5186 = vld [vmem:[#allocation10 + $0x140] sm:$0xff]
        %v5187 = vld [vmem:[#allocation10 + $0x148] sm:$0xff]
        %v5188 = vld [vmem:[#allocation10 + $0x150] sm:$0xff]
        %v5189 = vld [vmem:[#allocation10 + $0x158] sm:$0xff]
        %v5190 = vld [vmem:[#allocation10 + $0x160] sm:$0xff]
        %v5191 = vld [vmem:[#allocation10 + $0x168] sm:$0xff]
        %v5192 = vld [vmem:[#allocation10 + $0x170] sm:$0xff]
        %v5193 = vld [vmem:[#allocation10 + $0x178] sm:$0xff]
        %v5194 = vld [vmem:[#allocation10 + $0x180] sm:$0xff]
        %v5195 = vld [vmem:[#allocation10 + $0x188] sm:$0xff]
        %v5196 = vld [vmem:[#allocation10 + $0x190] sm:$0xff]
        %v5197 = vld [vmem:[#allocation10 + $0x198] sm:$0xff]
        %v5198 = vld [vmem:[#allocation10 + $0x1a0] sm:$0xff]
        %v5199 = vld [vmem:[#allocation10 + $0x1a8] sm:$0xff]
        %v5200 = vld [vmem:[#allocation10 + $0x1b0] sm:$0xff]
        %v5201 = vld [vmem:[#allocation10 + $0x1b8] sm:$0xff]
        %v5202 = vld [vmem:[#allocation10 + $0x1c0] sm:$0xff]
        %v5203 = vld [vmem:[#allocation10 + $0x1c8] sm:$0xff]
        %v5204 = vld [vmem:[#allocation10 + $0x1d0] sm:$0xff]
        %v5205 = vld [vmem:[#allocation10 + $0x1d8] sm:$0xff]
        %v5206 = vld [vmem:[#allocation10 + $0x1e0] sm:$0xff]
        %v5207 = vld [vmem:[#allocation10 + $0x1e8] sm:$0xff]
        %v5208 = vld [vmem:[#allocation10 + $0x1f0] sm:$0xff]
        %v5209 = vld [vmem:[#allocation10 + $0x1f8] sm:$0xff]
        %v5210 = vld [vmem:[#allocation10 + $0x200] sm:$0xff]
        %v5211 = vld [vmem:[#allocation10 + $0x208] sm:$0xff]
        %v5212 = vld [vmem:[#allocation10 + $0x210] sm:$0xff]
        %v5213 = vld [vmem:[#allocation10 + $0x218] sm:$0xff]
        %v5214 = vld [vmem:[#allocation10 + $0x220] sm:$0xff]
        %v5215 = vld [vmem:[#allocation10 + $0x228] sm:$0xff]
        %v5216 = vld [vmem:[#allocation10 + $0x230] sm:$0xff]
        %v5217 = vld [vmem:[#allocation10 + $0x238] sm:$0xff]
        %v5218 = vld [vmem:[#allocation10 + $0x240] sm:$0xff]
        %v5219 = vld [vmem:[#allocation10 + $0x248] sm:$0xff]
        %v5220 = vld [vmem:[#allocation10 + $0x250] sm:$0xff]
        %v5221 = vld [vmem:[#allocation10 + $0x258] sm:$0xff]
        %v5222 = vld [vmem:[#allocation10 + $0x260] sm:$0xff]
        %v5223 = vld [vmem:[#allocation10 + $0x268] sm:$0xff]
        %v5224 = vld [vmem:[#allocation10 + $0x270] sm:$0xff]
        %v5225 = vld [vmem:[#allocation10 + $0x278] sm:$0xff]
        %v5226 = vld [vmem:[#allocation10 + $0x280] sm:$0xff]
        %v5227 = vld [vmem:[#allocation10 + $0x288] sm:$0xff]
        %v5228 = vld [vmem:[#allocation10 + $0x290] sm:$0xff]
        %v5229 = vld [vmem:[#allocation10 + $0x298] sm:$0xff]
        %v5230 = vld [vmem:[#allocation10 + $0x2a0] sm:$0xff]
        %v5231 = vld [vmem:[#allocation10 + $0x2a8] sm:$0xff]
        %v5232 = vld [vmem:[#allocation10 + $0x2b0] sm:$0xff]
        %v5233 = vld [vmem:[#allocation10 + $0x2b8] sm:$0xff]
        %v5234 = vld [vmem:[#allocation10 + $0x2c0] sm:$0xff]
        %v5235 = vld [vmem:[#allocation10 + $0x2c8] sm:$0xff]
        %v5236 = vld [vmem:[#allocation10 + $0x2d0] sm:$0xff]
        %v5237 = vld [vmem:[#allocation10 + $0x2d8] sm:$0xff]
        %v5238 = vld [vmem:[#allocation10 + $0x2e0] sm:$0xff]
        %v5239 = vld [vmem:[#allocation10 + $0x2e8] sm:$0xff]
        %v5240 = vld [vmem:[#allocation10 + $0x2f0] sm:$0xff]
        %v5241 = vld [vmem:[#allocation10 + $0x2f8] sm:$0xff]
        %v5242 = vld [vmem:[#allocation10 + $0x300] sm:$0xff]
        %v5243 = vld [vmem:[#allocation10 + $0x308] sm:$0xff]
        %v5244 = vld [vmem:[#allocation10 + $0x310] sm:$0xff]
        %v5245 = vld [vmem:[#allocation10 + $0x318] sm:$0xff]
        %v5246 = vld [vmem:[#allocation10 + $0x320] sm:$0xff]
        %v5247 = vld [vmem:[#allocation10 + $0x328] sm:$0xff]
        %v5248 = vld [vmem:[#allocation10 + $0x330] sm:$0xff]
        %v5249 = vld [vmem:[#allocation10 + $0x338] sm:$0xff]
        %v5250 = vld [vmem:[#allocation10 + $0x340] sm:$0xff]
        %v5251 = vld [vmem:[#allocation10 + $0x348] sm:$0xff]
        %v5252 = vld [vmem:[#allocation10 + $0x350] sm:$0xff]
        %v5253 = vld [vmem:[#allocation10 + $0x358] sm:$0xff]
        %v5254 = vld [vmem:[#allocation10 + $0x360] sm:$0xff]
        %v5255 = vld [vmem:[#allocation10 + $0x368] sm:$0xff]
        %v5256 = vld [vmem:[#allocation10 + $0x370] sm:$0xff]
        %v5257 = vld [vmem:[#allocation10 + $0x378] sm:$0xff]
        %v5258 = vld [vmem:[#allocation3] sm:$0xfe]
        %v5259 = vld [vmem:[#allocation3 + $0x8] sm:$0xfe]
        %v5260 = vld [vmem:[#allocation3 + $0x10] sm:$0x7f]
        %v5261 = vld [vmem:[#allocation3 + $0x18] sm:$0x7f]
        %s5262 = scalar_lea.vmem [#allocation10], 896
        %v5263 = vld [vmem:[%s5262] sm:$0xff]
        %v5264 = vld [vmem:[%s5262 + $0x8] sm:$0xff]
        %v5265 = vld [vmem:[%s5262 + $0x10] sm:$0xff]
        %v5266 = vld [vmem:[%s5262 + $0x18] sm:$0xff]
        %v5267 = vld [vmem:[%s5262 + $0x20] sm:$0xff]
        %v5268 = vld [vmem:[%s5262 + $0x28] sm:$0xff]
        %v5269 = vld [vmem:[%s5262 + $0x30] sm:$0xff]
        %v5270 = vld [vmem:[%s5262 + $0x38] sm:$0xff]
        %v5271 = vld [vmem:[%s5262 + $0x40] sm:$0xff]
        %v5272 = vld [vmem:[%s5262 + $0x48] sm:$0xff]
        %v5273 = vld [vmem:[%s5262 + $0x50] sm:$0xff]
        %v5274 = vld [vmem:[%s5262 + $0x58] sm:$0xff]
        %v5275 = vld [vmem:[%s5262 + $0x60] sm:$0xff]
        %v5276 = vld [vmem:[%s5262 + $0x68] sm:$0xff]
        %v5277 = vld [vmem:[%s5262 + $0x70] sm:$0xff]
        %v5278 = vld [vmem:[%s5262 + $0x78] sm:$0xff]
        %v5279 = vld [vmem:[%s5262 + $0x80] sm:$0xff]
        %v5280 = vld [vmem:[%s5262 + $0x88] sm:$0xff]
        %v5281 = vld [vmem:[%s5262 + $0x90] sm:$0xff]
        %v5282 = vld [vmem:[%s5262 + $0x98] sm:$0xff]
        %v5283 = vld [vmem:[%s5262 + $0xa0] sm:$0xff]
        %v5284 = vld [vmem:[%s5262 + $0xa8] sm:$0xff]
        %v5285 = vld [vmem:[%s5262 + $0xb0] sm:$0xff]
        %v5286 = vld [vmem:[%s5262 + $0xb8] sm:$0xff]
        %v5287 = vld [vmem:[%s5262 + $0xc0] sm:$0xff]
        %v5288 = vld [vmem:[%s5262 + $0xc8] sm:$0xff]
        %v5289 = vld [vmem:[%s5262 + $0xd0] sm:$0xff]
        %v5290 = vld [vmem:[%s5262 + $0xd8] sm:$0xff]
        %v5291 = vld [vmem:[%s5262 + $0xe0] sm:$0xff]
        %v5292 = vld [vmem:[%s5262 + $0xe8] sm:$0xff]
        %v5293 = vld [vmem:[%s5262 + $0xf0] sm:$0xff]
        %v5294 = vld [vmem:[%s5262 + $0xf8] sm:$0xff]
        %v5295 = vld [vmem:[%s5262 + $0x100] sm:$0xff]
        %v5296 = vld [vmem:[%s5262 + $0x108] sm:$0xff]
        %v5297 = vld [vmem:[%s5262 + $0x110] sm:$0xff]
        %v5298 = vld [vmem:[%s5262 + $0x118] sm:$0xff]
        %v5299 = vld [vmem:[%s5262 + $0x120] sm:$0xff]
        %v5300 = vld [vmem:[%s5262 + $0x128] sm:$0xff]
        %v5301 = vld [vmem:[%s5262 + $0x130] sm:$0xff]
        %v5302 = vld [vmem:[%s5262 + $0x138] sm:$0xff]
        %v5303 = vld [vmem:[%s5262 + $0x140] sm:$0xff]
        %v5304 = vld [vmem:[%s5262 + $0x148] sm:$0xff]
        %v5305 = vld [vmem:[%s5262 + $0x150] sm:$0xff]
        %v5306 = vld [vmem:[%s5262 + $0x158] sm:$0xff]
        %v5307 = vld [vmem:[%s5262 + $0x160] sm:$0xff]
        %v5308 = vld [vmem:[%s5262 + $0x168] sm:$0xff]
        %v5309 = vld [vmem:[%s5262 + $0x170] sm:$0xff]
        %v5310 = vld [vmem:[%s5262 + $0x178] sm:$0xff]
        %v5311 = vld [vmem:[%s5262 + $0x180] sm:$0xff]
        %v5312 = vld [vmem:[%s5262 + $0x188] sm:$0xff]
        %v5313 = vld [vmem:[%s5262 + $0x190] sm:$0xff]
        %v5314 = vld [vmem:[%s5262 + $0x198] sm:$0xff]
        %v5315 = vld [vmem:[%s5262 + $0x1a0] sm:$0xff]
        %v5316 = vld [vmem:[%s5262 + $0x1a8] sm:$0xff]
        %v5317 = vld [vmem:[%s5262 + $0x1b0] sm:$0xff]
        %v5318 = vld [vmem:[%s5262 + $0x1b8] sm:$0xff]
        %v5319 = vld [vmem:[%s5262 + $0x1c0] sm:$0xff]
        %v5320 = vld [vmem:[%s5262 + $0x1c8] sm:$0xff]
        %v5321 = vld [vmem:[%s5262 + $0x1d0] sm:$0xff]
        %v5322 = vld [vmem:[%s5262 + $0x1d8] sm:$0xff]
        %v5323 = vld [vmem:[%s5262 + $0x1e0] sm:$0xff]
        %v5324 = vld [vmem:[%s5262 + $0x1e8] sm:$0xff]
        %v5325 = vld [vmem:[%s5262 + $0x1f0] sm:$0xff]
        %v5326 = vld [vmem:[%s5262 + $0x1f8] sm:$0xff]
        %v5327 = vld [vmem:[%s5262 + $0x200] sm:$0xff]
        %v5328 = vld [vmem:[%s5262 + $0x208] sm:$0xff]
        %v5329 = vld [vmem:[%s5262 + $0x210] sm:$0xff]
        %v5330 = vld [vmem:[%s5262 + $0x218] sm:$0xff]
        %v5331 = vld [vmem:[%s5262 + $0x220] sm:$0xff]
        %v5332 = vld [vmem:[%s5262 + $0x228] sm:$0xff]
        %v5333 = vld [vmem:[%s5262 + $0x230] sm:$0xff]
        %v5334 = vld [vmem:[%s5262 + $0x238] sm:$0xff]
        %v5335 = vld [vmem:[%s5262 + $0x240] sm:$0xff]
        %v5336 = vld [vmem:[%s5262 + $0x248] sm:$0xff]
        %v5337 = vld [vmem:[%s5262 + $0x250] sm:$0xff]
        %v5338 = vld [vmem:[%s5262 + $0x258] sm:$0xff]
        %v5339 = vld [vmem:[%s5262 + $0x260] sm:$0xff]
        %v5340 = vld [vmem:[%s5262 + $0x268] sm:$0xff]
        %v5341 = vld [vmem:[%s5262 + $0x270] sm:$0xff]
        %v5342 = vld [vmem:[%s5262 + $0x278] sm:$0xff]
        %v5343 = vld [vmem:[%s5262 + $0x280] sm:$0xff]
        %v5344 = vld [vmem:[%s5262 + $0x288] sm:$0xff]
        %v5345 = vld [vmem:[%s5262 + $0x290] sm:$0xff]
        %v5346 = vld [vmem:[%s5262 + $0x298] sm:$0xff]
        %v5347 = vld [vmem:[%s5262 + $0x2a0] sm:$0xff]
        %v5348 = vld [vmem:[%s5262 + $0x2a8] sm:$0xff]
        %v5349 = vld [vmem:[%s5262 + $0x2b0] sm:$0xff]
        %v5350 = vld [vmem:[%s5262 + $0x2b8] sm:$0xff]
        %v5351 = vld [vmem:[%s5262 + $0x2c0] sm:$0xff]
        %v5352 = vld [vmem:[%s5262 + $0x2c8] sm:$0xff]
        %v5353 = vld [vmem:[%s5262 + $0x2d0] sm:$0xff]
        %v5354 = vld [vmem:[%s5262 + $0x2d8] sm:$0xff]
        %v5355 = vld [vmem:[%s5262 + $0x2e0] sm:$0xff]
        %v5356 = vld [vmem:[%s5262 + $0x2e8] sm:$0xff]
        %v5357 = vld [vmem:[%s5262 + $0x2f0] sm:$0xff]
        %v5358 = vld [vmem:[%s5262 + $0x2f8] sm:$0xff]
        %v5359 = vld [vmem:[%s5262 + $0x300] sm:$0xff]
        %v5360 = vld [vmem:[%s5262 + $0x308] sm:$0xff]
        %v5361 = vld [vmem:[%s5262 + $0x310] sm:$0xff]
        %v5362 = vld [vmem:[%s5262 + $0x318] sm:$0xff]
        %v5363 = vld [vmem:[%s5262 + $0x320] sm:$0xff]
        %v5364 = vld [vmem:[%s5262 + $0x328] sm:$0xff]
        %v5365 = vld [vmem:[%s5262 + $0x330] sm:$0xff]
        %v5366 = vld [vmem:[%s5262 + $0x338] sm:$0xff]
        %v5367 = vld [vmem:[%s5262 + $0x340] sm:$0xff]
        %v5368 = vld [vmem:[%s5262 + $0x348] sm:$0xff]
        %v5369 = vld [vmem:[%s5262 + $0x350] sm:$0xff]
        %v5370 = vld [vmem:[%s5262 + $0x358] sm:$0xff]
        %v5371 = vld [vmem:[%s5262 + $0x360] sm:$0xff]
        %v5372 = vld [vmem:[%s5262 + $0x368] sm:$0xff]
        %v5373 = vld [vmem:[%s5262 + $0x370] sm:$0xff]
        %v5374 = vld [vmem:[%s5262 + $0x378] sm:$0xff]
        %vm5379 = vcmask 1046528
        %v5380 = vrot.slane %v5258, 1
        %v5381 = vrot.slane %v5260, 1
        %v5382 = vsel %vm5379, %v5380, %v5381
        %v5383 = vrot.slane %v5259, 1
        %v5384 = vrot.slane %v5261, 1
        %v5385 = vsel %vm5379, %v5383, %v5384
        %v5388 = vsel %vm5115, %v5385, 0
        %v5390 = vsel %vm5115, %v5384, 0
        %5392 = vmatprep.subr.mxu0 %v5264
        %5393 = vmatpush1.msra.mxu0 %v5263
        %5394 = vmatprep.subr.mxu0 %v5268
        %5395 = vmatpush1.msra.mxu0 %v5267
        %5396 = vmatprep.subr.mxu0 %v5272
        %5397 = vmatpush1.msra.mxu0 %v5271
        %5398 = vmatprep.subr.mxu0 %v5276
        %5399 = vmatpush1.msra.mxu0 %v5275
        %5400 = vmatprep.subr.mxu0 %v5280
        %5401 = vmatpush1.msra.mxu0 %v5279
        %5402 = vmatprep.subr.mxu0 %v5284
        %5403 = vmatpush1.msra.mxu0 %v5283
        %5404 = vmatprep.subr.mxu0 %v5288
        %5405 = vmatpush1.msra.mxu0 %v5287
        %5406 = vmatprep.subr.mxu0 %v5292
        %5407 = vmatpush1.msra.mxu0 %v5291
        %5408 = vmatprep.subr.mxu0 %v5296
        %5409 = vmatpush1.msra.mxu0 %v5295
        %5410 = vmatprep.subr.mxu0 %v5300
        %5411 = vmatpush1.msra.mxu0 %v5299
        %5412 = vmatprep.subr.mxu0 %v5304
        %5413 = vmatpush1.msra.mxu0 %v5303
        %5414 = vmatprep.subr.mxu0 %v5308
        %5415 = vmatpush1.msra.mxu0 %v5307
        %5416 = vmatprep.subr.mxu0 %v5312
        %5417 = vmatpush1.msra.mxu0 %v5311
        %5418 = vmatprep.subr.mxu0 %v5316
        %5419 = vmatpush1.msra.mxu0 %v5315
        %5420 = vmatprep.subr.mxu0 %v5320
        %5421 = vmatpush1.msra.mxu0 %v5319
        %5422 = vmatprep.subr.mxu0 %v5324
        %5423 = vmatpush1.msra.mxu0 %v5323
        %5424 = vmatprep.subr.mxu0 %v5328
        %5425 = vmatpush1.msra.mxu0 %v5327
        %5426 = vmatprep.subr.mxu0 %v5332
        %5427 = vmatpush1.msra.mxu0 %v5331
        %5428 = vmatprep.subr.mxu0 %v5336
        %5429 = vmatpush1.msra.mxu0 %v5335
        %5430 = vmatprep.subr.mxu0 %v5340
        %5431 = vmatpush1.msra.mxu0 %v5339
        %5432 = vmatprep.subr.mxu0 %v5344
        %5433 = vmatpush1.msra.mxu0 %v5343
        %5434 = vmatprep.subr.mxu0 %v5348
        %5435 = vmatpush1.msra.mxu0 %v5347
        %5436 = vmatprep.subr.mxu0 %v5352
        %5437 = vmatpush1.msra.mxu0 %v5351
        %5438 = vmatprep.subr.mxu0 %v5356
        %5439 = vmatpush1.msra.mxu0 %v5355
        %5440 = vmatprep.subr.mxu0 %v5360
        %5441 = vmatpush1.msra.mxu0 %v5359
        %5442 = vmatprep.subr.mxu0 %v5364
        %5443 = vmatpush1.msra.mxu0 %v5363
        %5444 = vmatprep.subr.mxu0 %v5368
        %5445 = vmatpush1.msra.mxu0 %v5367
        %5446 = vmatprep.subr.mxu0 %v5372
        %5447 = vmatpush1.msra.mxu0 %v5371
        %5448 = vmatprep.subr.mxu0 0.0
        %5449 = vmatpush1.msra.mxu0 0.0
        %5450 = vmatprep.subr.mxu0 0.0
        %5451 = vmatpush1.msra.mxu0 0.0
        %5452 = vmatprep.subr.mxu0 0.0
        %5453 = vmatpush1.msra.mxu0 0.0
        %5454 = vmatprep.subr.mxu0 0.0
        %5455 = vmatpush1.msra.mxu0 0.0
        %5456 = vmatprep.mubr.f32.mxu0 %v5388
        %5457 = vmatmul.mubr.f32.gmra.mrb[0].mxu0 %v5382
        %v5458 = vpop.f32.mrb[0].mxu0
        %v5459 = vadd.f32 0.0, %v5458
        %v5460 = vpop.f32.mrb[0].mxu0
        %v5461 = vadd.f32 0.0, %v5460
        %5462 = vmatprep.mubr.f32.mxu0 %v5390
        %5463 = vmatmul.mubr.f32.gmra.mrb[0].mxu0 %v5381
        %v5464 = vpop.f32.mrb[0].mxu0
        %v5465 = vadd.f32 0.0, %v5464
        %v5466 = vpop.f32.mrb[0].mxu0
        %v5467 = vadd.f32 0.0, %v5466
        %5468 = vdwg.mxu0
        %5469 = vmatprep.subr.mxu0 %v5266
        %5470 = vmatpush1.msra.mxu0 %v5265
        %5471 = vmatprep.subr.mxu0 %v5270
        %5472 = vmatpush1.msra.mxu0 %v5269
        %5473 = vmatprep.subr.mxu0 %v5274
        %5474 = vmatpush1.msra.mxu0 %v5273
        %5475 = vmatprep.subr.mxu0 %v5278
        %5476 = vmatpush1.msra.mxu0 %v5277
        %5477 = vmatprep.subr.mxu0 %v5282
        %5478 = vmatpush1.msra.mxu0 %v5281
        %5479 = vmatprep.subr.mxu0 %v5286
        %5480 = vmatpush1.msra.mxu0 %v5285
        %5481 = vmatprep.subr.mxu0 %v5290
        %5482 = vmatpush1.msra.mxu0 %v5289
        %5483 = vmatprep.subr.mxu0 %v5294
        %5484 = vmatpush1.msra.mxu0 %v5293
        %5485 = vmatprep.subr.mxu0 %v5298
        %5486 = vmatpush1.msra.mxu0 %v5297
        %5487 = vmatprep.subr.mxu0 %v5302
        %5488 = vmatpush1.msra.mxu0 %v5301
        %5489 = vmatprep.subr.mxu0 %v5306
        %5490 = vmatpush1.msra.mxu0 %v5305
        %5491 = vmatprep.subr.mxu0 %v5310
        %5492 = vmatpush1.msra.mxu0 %v5309
        %5493 = vmatprep.subr.mxu0 %v5314
        %5494 = vmatpush1.msra.mxu0 %v5313
        %5495 = vmatprep.subr.mxu0 %v5318
        %5496 = vmatpush1.msra.mxu0 %v5317
        %5497 = vmatprep.subr.mxu0 %v5322
        %5498 = vmatpush1.msra.mxu0 %v5321
        %5499 = vmatprep.subr.mxu0 %v5326
        %5500 = vmatpush1.msra.mxu0 %v5325
        %5501 = vmatprep.subr.mxu0 %v5330
        %5502 = vmatpush1.msra.mxu0 %v5329
        %5503 = vmatprep.subr.mxu0 %v5334
        %5504 = vmatpush1.msra.mxu0 %v5333
        %5505 = vmatprep.subr.mxu0 %v5338
        %5506 = vmatpush1.msra.mxu0 %v5337
        %5507 = vmatprep.subr.mxu0 %v5342
        %5508 = vmatpush1.msra.mxu0 %v5341
        %5509 = vmatprep.subr.mxu0 %v5346
        %5510 = vmatpush1.msra.mxu0 %v5345
        %5511 = vmatprep.subr.mxu0 %v5350
        %5512 = vmatpush1.msra.mxu0 %v5349
        %5513 = vmatprep.subr.mxu0 %v5354
        %5514 = vmatpush1.msra.mxu0 %v5353
        %5515 = vmatprep.subr.mxu0 %v5358
        %5516 = vmatpush1.msra.mxu0 %v5357
        %5517 = vmatprep.subr.mxu0 %v5362
        %5518 = vmatpush1.msra.mxu0 %v5361
        %5519 = vmatprep.subr.mxu0 %v5366
        %5520 = vmatpush1.msra.mxu0 %v5365
        %5521 = vmatprep.subr.mxu0 %v5370
        %5522 = vmatpush1.msra.mxu0 %v5369
        %5523 = vmatprep.subr.mxu0 %v5374
        %5524 = vmatpush1.msra.mxu0 %v5373
        %5525 = vmatprep.subr.mxu0 0.0
        %5526 = vmatpush1.msra.mxu0 0.0
        %5527 = vmatprep.subr.mxu0 0.0
        %5528 = vmatpush1.msra.mxu0 0.0
        %5529 = vmatprep.subr.mxu0 0.0
        %5530 = vmatpush1.msra.mxu0 0.0
        %5531 = vmatprep.subr.mxu0 0.0
        %5532 = vmatpush1.msra.mxu0 0.0
        %5533 = vmatprep.mubr.f32.mxu0 %v5388
        %5534 = vmatmul.mubr.f32.gmra.mrb[0].mxu0 %v5382
        %v5535 = vpop.f32.mrb[0].mxu0
        %v5536 = vadd.f32 0.0, %v5535
        %v5537 = vpop.f32.mrb[0].mxu0
        %v5538 = vadd.f32 0.0, %v5537
        %5539 = vmatprep.mubr.f32.mxu0 %v5390
        %5540 = vmatmul.mubr.f32.gmra.mrb[0].mxu0 %v5381
        %v5541 = vpop.f32.mrb[0].mxu0
        %v5542 = vadd.f32 0.0, %v5541
        %v5543 = vpop.f32.mrb[0].mxu0
        %v5544 = vadd.f32 0.0, %v5543
        %5545 = vdwg.mxu0
        %v5547 = vsel %vm5115, %v5143, 0
        %v5550 = vsel %vm5115, %v5145, 0
        %5552 = vmatprep.subr.mxu0 %v5147
        %5553 = vmatpush1.msra.mxu0 %v5146
        %5554 = vmatprep.subr.mxu0 %v5151
        %5555 = vmatpush1.msra.mxu0 %v5150
        %5556 = vmatprep.subr.mxu0 %v5155
        %5557 = vmatpush1.msra.mxu0 %v5154
        %5558 = vmatprep.subr.mxu0 %v5159
        %5559 = vmatpush1.msra.mxu0 %v5158
        %5560 = vmatprep.subr.mxu0 %v5163
        %5561 = vmatpush1.msra.mxu0 %v5162
        %5562 = vmatprep.subr.mxu0 %v5167
        %5563 = vmatpush1.msra.mxu0 %v5166
        %5564 = vmatprep.subr.mxu0 %v5171
        %5565 = vmatpush1.msra.mxu0 %v5170
        %5566 = vmatprep.subr.mxu0 %v5175
        %5567 = vmatpush1.msra.mxu0 %v5174
        %5568 = vmatprep.subr.mxu0 %v5179
        %5569 = vmatpush1.msra.mxu0 %v5178
        %5570 = vmatprep.subr.mxu0 %v5183
        %5571 = vmatpush1.msra.mxu0 %v5182
        %5572 = vmatprep.subr.mxu0 %v5187
        %5573 = vmatpush1.msra.mxu0 %v5186
        %5574 = vmatprep.subr.mxu0 %v5191
        %5575 = vmatpush1.msra.mxu0 %v5190
        %5576 = vmatprep.subr.mxu0 %v5195
        %5577 = vmatpush1.msra.mxu0 %v5194
        %5578 = vmatprep.subr.mxu0 %v5199
        %5579 = vmatpush1.msra.mxu0 %v5198
        %5580 = vmatprep.subr.mxu0 %v5203
        %5581 = vmatpush1.msra.mxu0 %v5202
        %5582 = vmatprep.subr.mxu0 %v5207
        %5583 = vmatpush1.msra.mxu0 %v5206
        %5584 = vmatprep.subr.mxu0 %v5211
        %5585 = vmatpush1.msra.mxu0 %v5210
        %5586 = vmatprep.subr.mxu0 %v5215
        %5587 = vmatpush1.msra.mxu0 %v5214
        %5588 = vmatprep.subr.mxu0 %v5219
        %5589 = vmatpush1.msra.mxu0 %v5218
        %5590 = vmatprep.subr.mxu0 %v5223
        %5591 = vmatpush1.msra.mxu0 %v5222
        %5592 = vmatprep.subr.mxu0 %v5227
        %5593 = vmatpush1.msra.mxu0 %v5226
        %5594 = vmatprep.subr.mxu0 %v5231
        %5595 = vmatpush1.msra.mxu0 %v5230
        %5596 = vmatprep.subr.mxu0 %v5235
        %5597 = vmatpush1.msra.mxu0 %v5234
        %5598 = vmatprep.subr.mxu0 %v5239
        %5599 = vmatpush1.msra.mxu0 %v5238
        %5600 = vmatprep.subr.mxu0 %v5243
        %5601 = vmatpush1.msra.mxu0 %v5242
        %5602 = vmatprep.subr.mxu0 %v5247
        %5603 = vmatpush1.msra.mxu0 %v5246
        %5604 = vmatprep.subr.mxu0 %v5251
        %5605 = vmatpush1.msra.mxu0 %v5250
        %5606 = vmatprep.subr.mxu0 %v5255
        %5607 = vmatpush1.msra.mxu0 %v5254
        %5608 = vmatprep.subr.mxu0 0.0
        %5609 = vmatpush1.msra.mxu0 0.0
        %5610 = vmatprep.subr.mxu0 0.0
        %5611 = vmatpush1.msra.mxu0 0.0
        %5612 = vmatprep.subr.mxu0 0.0
        %5613 = vmatpush1.msra.mxu0 0.0
        %5614 = vmatprep.subr.mxu0 0.0
        %5615 = vmatpush1.msra.mxu0 0.0
        %5616 = vmatprep.mubr.f32.mxu0 %v5547
        %5617 = vmatmul.mubr.f32.gmra.mrb[0].mxu0 %v5142
        %v5618 = vpop.f32.mrb[0].mxu0
        %v5619 = vadd.f32 %v5459, %v5618
        %v5620 = vpop.f32.mrb[0].mxu0
        %v5621 = vadd.f32 %v5461, %v5620
        %5622 = vmatprep.mubr.f32.mxu0 %v5550
        %5623 = vmatmul.mubr.f32.gmra.mrb[0].mxu0 %v5144
        %v5624 = vpop.f32.mrb[0].mxu0
        %v5625 = vadd.f32 %v5465, %v5624
        %v5626 = vpop.f32.mrb[0].mxu0
        %v5627 = vadd.f32 %v5467, %v5626
        %5628 = vdwg.mxu0
        %5629 = vmatprep.subr.mxu0 %v5149
        %5630 = vmatpush1.msra.mxu0 %v5148
        %5631 = vmatprep.subr.mxu0 %v5153
        %5632 = vmatpush1.msra.mxu0 %v5152
        %5633 = vmatprep.subr.mxu0 %v5157
        %5634 = vmatpush1.msra.mxu0 %v5156
        %5635 = vmatprep.subr.mxu0 %v5161
        %5636 = vmatpush1.msra.mxu0 %v5160
        %5637 = vmatprep.subr.mxu0 %v5165
        %5638 = vmatpush1.msra.mxu0 %v5164
        %5639 = vmatprep.subr.mxu0 %v5169
        %5640 = vmatpush1.msra.mxu0 %v5168
        %5641 = vmatprep.subr.mxu0 %v5173
        %5642 = vmatpush1.msra.mxu0 %v5172
        %5643 = vmatprep.subr.mxu0 %v5177
        %5644 = vmatpush1.msra.mxu0 %v5176
        %5645 = vmatprep.subr.mxu0 %v5181
        %5646 = vmatpush1.msra.mxu0 %v5180
        %5647 = vmatprep.subr.mxu0 %v5185
        %5648 = vmatpush1.msra.mxu0 %v5184
        %5649 = vmatprep.subr.mxu0 %v5189
        %5650 = vmatpush1.msra.mxu0 %v5188
        %5651 = vmatprep.subr.mxu0 %v5193
        %5652 = vmatpush1.msra.mxu0 %v5192
        %5653 = vmatprep.subr.mxu0 %v5197
        %5654 = vmatpush1.msra.mxu0 %v5196
        %5655 = vmatprep.subr.mxu0 %v5201
        %5656 = vmatpush1.msra.mxu0 %v5200
        %5657 = vmatprep.subr.mxu0 %v5205
        %5658 = vmatpush1.msra.mxu0 %v5204
        %5659 = vmatprep.subr.mxu0 %v5209
        %5660 = vmatpush1.msra.mxu0 %v5208
        %5661 = vmatprep.subr.mxu0 %v5213
        %5662 = vmatpush1.msra.mxu0 %v5212
        %5663 = vmatprep.subr.mxu0 %v5217
        %5664 = vmatpush1.msra.mxu0 %v5216
        %5665 = vmatprep.subr.mxu0 %v5221
        %5666 = vmatpush1.msra.mxu0 %v5220
        %5667 = vmatprep.subr.mxu0 %v5225
        %5668 = vmatpush1.msra.mxu0 %v5224
        %5669 = vmatprep.subr.mxu0 %v5229
        %5670 = vmatpush1.msra.mxu0 %v5228
        %5671 = vmatprep.subr.mxu0 %v5233
        %5672 = vmatpush1.msra.mxu0 %v5232
        %5673 = vmatprep.subr.mxu0 %v5237
        %5674 = vmatpush1.msra.mxu0 %v5236
        %5675 = vmatprep.subr.mxu0 %v5241
        %5676 = vmatpush1.msra.mxu0 %v5240
        %5677 = vmatprep.subr.mxu0 %v5245
        %5678 = vmatpush1.msra.mxu0 %v5244
        %5679 = vmatprep.subr.mxu0 %v5249
        %5680 = vmatpush1.msra.mxu0 %v5248
        %5681 = vmatprep.subr.mxu0 %v5253
        %5682 = vmatpush1.msra.mxu0 %v5252
        %5683 = vmatprep.subr.mxu0 %v5257
        %5684 = vmatpush1.msra.mxu0 %v5256
        %5685 = vmatprep.subr.mxu0 0.0
        %5686 = vmatpush1.msra.mxu0 0.0
        %5687 = vmatprep.subr.mxu0 0.0
        %5688 = vmatpush1.msra.mxu0 0.0
        %5689 = vmatprep.subr.mxu0 0.0
        %5690 = vmatpush1.msra.mxu0 0.0
        %5691 = vmatprep.subr.mxu0 0.0
        %5692 = vmatpush1.msra.mxu0 0.0
        %5693 = vmatprep.mubr.f32.mxu0 %v5547
        %5694 = vmatmul.mubr.f32.gmra.mrb[0].mxu0 %v5142
        %v5695 = vpop.f32.mrb[0].mxu0
        %v5696 = vadd.f32 %v5536, %v5695
        %v5697 = vpop.f32.mrb[0].mxu0
        %v5698 = vadd.f32 %v5538, %v5697
        %5699 = vmatprep.mubr.f32.mxu0 %v5550
        %5700 = vmatmul.mubr.f32.gmra.mrb[0].mxu0 %v5144
        %v5701 = vpop.f32.mrb[0].mxu0
        %v5702 = vadd.f32 %v5542, %v5701
        %v5703 = vpop.f32.mrb[0].mxu0
        %v5704 = vadd.f32 %v5544, %v5703
        %5705 = vdwg.mxu0
        %v5706 = vld [vmem:[#allocation3] sm:$0xfc]
        %v5707 = vld [vmem:[#allocation3 + $0x8] sm:$0xfc]
        %v5708 = vld [vmem:[#allocation3 + $0x10] sm:$0xff]
        %v5709 = vld [vmem:[#allocation3 + $0x18] sm:$0xff]
        %s5710 = scalar_lea.vmem [#allocation10], 1792
        %v5711 = vld [vmem:[%s5710] sm:$0xff]
        %v5712 = vld [vmem:[%s5710 + $0x8] sm:$0xff]
        %v5713 = vld [vmem:[%s5710 + $0x10] sm:$0xff]
        %v5714 = vld [vmem:[%s5710 + $0x18] sm:$0xff]
        %v5715 = vld [vmem:[%s5710 + $0x20] sm:$0xff]
        %v5716 = vld [vmem:[%s5710 + $0x28] sm:$0xff]
        %v5717 = vld [vmem:[%s5710 + $0x30] sm:$0xff]
        %v5718 = vld [vmem:[%s5710 + $0x38] sm:$0xff]
        %v5719 = vld [vmem:[%s5710 + $0x40] sm:$0xff]
        %v5720 = vld [vmem:[%s5710 + $0x48] sm:$0xff]
        %v5721 = vld [vmem:[%s5710 + $0x50] sm:$0xff]
        %v5722 = vld [vmem:[%s5710 + $0x58] sm:$0xff]
        %v5723 = vld [vmem:[%s5710 + $0x60] sm:$0xff]
        %v5724 = vld [vmem:[%s5710 + $0x68] sm:$0xff]
        %v5725 = vld [vmem:[%s5710 + $0x70] sm:$0xff]
        %v5726 = vld [vmem:[%s5710 + $0x78] sm:$0xff]
        %v5727 = vld [vmem:[%s5710 + $0x80] sm:$0xff]
        %v5728 = vld [vmem:[%s5710 + $0x88] sm:$0xff]
        %v5729 = vld [vmem:[%s5710 + $0x90] sm:$0xff]
        %v5730 = vld [vmem:[%s5710 + $0x98] sm:$0xff]
        %v5731 = vld [vmem:[%s5710 + $0xa0] sm:$0xff]
        %v5732 = vld [vmem:[%s5710 + $0xa8] sm:$0xff]
        %v5733 = vld [vmem:[%s5710 + $0xb0] sm:$0xff]
        %v5734 = vld [vmem:[%s5710 + $0xb8] sm:$0xff]
        %v5735 = vld [vmem:[%s5710 + $0xc0] sm:$0xff]
        %v5736 = vld [vmem:[%s5710 + $0xc8] sm:$0xff]
        %v5737 = vld [vmem:[%s5710 + $0xd0] sm:$0xff]
        %v5738 = vld [vmem:[%s5710 + $0xd8] sm:$0xff]
        %v5739 = vld [vmem:[%s5710 + $0xe0] sm:$0xff]
        %v5740 = vld [vmem:[%s5710 + $0xe8] sm:$0xff]
        %v5741 = vld [vmem:[%s5710 + $0xf0] sm:$0xff]
        %v5742 = vld [vmem:[%s5710 + $0xf8] sm:$0xff]
        %v5743 = vld [vmem:[%s5710 + $0x100] sm:$0xff]
        %v5744 = vld [vmem:[%s5710 + $0x108] sm:$0xff]
        %v5745 = vld [vmem:[%s5710 + $0x110] sm:$0xff]
        %v5746 = vld [vmem:[%s5710 + $0x118] sm:$0xff]
        %v5747 = vld [vmem:[%s5710 + $0x120] sm:$0xff]
        %v5748 = vld [vmem:[%s5710 + $0x128] sm:$0xff]
        %v5749 = vld [vmem:[%s5710 + $0x130] sm:$0xff]
        %v5750 = vld [vmem:[%s5710 + $0x138] sm:$0xff]
        %v5751 = vld [vmem:[%s5710 + $0x140] sm:$0xff]
        %v5752 = vld [vmem:[%s5710 + $0x148] sm:$0xff]
        %v5753 = vld [vmem:[%s5710 + $0x150] sm:$0xff]
        %v5754 = vld [vmem:[%s5710 + $0x158] sm:$0xff]
        %v5755 = vld [vmem:[%s5710 + $0x160] sm:$0xff]
        %v5756 = vld [vmem:[%s5710 + $0x168] sm:$0xff]
        %v5757 = vld [vmem:[%s5710 + $0x170] sm:$0xff]
        %v5758 = vld [vmem:[%s5710 + $0x178] sm:$0xff]
        %v5759 = vld [vmem:[%s5710 + $0x180] sm:$0xff]
        %v5760 = vld [vmem:[%s5710 + $0x188] sm:$0xff]
        %v5761 = vld [vmem:[%s5710 + $0x190] sm:$0xff]
        %v5762 = vld [vmem:[%s5710 + $0x198] sm:$0xff]
        %v5763 = vld [vmem:[%s5710 + $0x1a0] sm:$0xff]
        %v5764 = vld [vmem:[%s5710 + $0x1a8] sm:$0xff]
        %v5765 = vld [vmem:[%s5710 + $0x1b0] sm:$0xff]
        %v5766 = vld [vmem:[%s5710 + $0x1b8] sm:$0xff]
        %v5767 = vld [vmem:[%s5710 + $0x1c0] sm:$0xff]
        %v5768 = vld [vmem:[%s5710 + $0x1c8] sm:$0xff]
        %v5769 = vld [vmem:[%s5710 + $0x1d0] sm:$0xff]
        %v5770 = vld [vmem:[%s5710 + $0x1d8] sm:$0xff]
        %v5771 = vld [vmem:[%s5710 + $0x1e0] sm:$0xff]
        %v5772 = vld [vmem:[%s5710 + $0x1e8] sm:$0xff]
        %v5773 = vld [vmem:[%s5710 + $0x1f0] sm:$0xff]
        %v5774 = vld [vmem:[%s5710 + $0x1f8] sm:$0xff]
        %v5775 = vld [vmem:[%s5710 + $0x200] sm:$0xff]
        %v5776 = vld [vmem:[%s5710 + $0x208] sm:$0xff]
        %v5777 = vld [vmem:[%s5710 + $0x210] sm:$0xff]
        %v5778 = vld [vmem:[%s5710 + $0x218] sm:$0xff]
        %v5779 = vld [vmem:[%s5710 + $0x220] sm:$0xff]
        %v5780 = vld [vmem:[%s5710 + $0x228] sm:$0xff]
        %v5781 = vld [vmem:[%s5710 + $0x230] sm:$0xff]
        %v5782 = vld [vmem:[%s5710 + $0x238] sm:$0xff]
        %v5783 = vld [vmem:[%s5710 + $0x240] sm:$0xff]
        %v5784 = vld [vmem:[%s5710 + $0x248] sm:$0xff]
        %v5785 = vld [vmem:[%s5710 + $0x250] sm:$0xff]
        %v5786 = vld [vmem:[%s5710 + $0x258] sm:$0xff]
        %v5787 = vld [vmem:[%s5710 + $0x260] sm:$0xff]
        %v5788 = vld [vmem:[%s5710 + $0x268] sm:$0xff]
        %v5789 = vld [vmem:[%s5710 + $0x270] sm:$0xff]
        %v5790 = vld [vmem:[%s5710 + $0x278] sm:$0xff]
        %v5791 = vld [vmem:[%s5710 + $0x280] sm:$0xff]
        %v5792 = vld [vmem:[%s5710 + $0x288] sm:$0xff]
        %v5793 = vld [vmem:[%s5710 + $0x290] sm:$0xff]
        %v5794 = vld [vmem:[%s5710 + $0x298] sm:$0xff]
        %v5795 = vld [vmem:[%s5710 + $0x2a0] sm:$0xff]
        %v5796 = vld [vmem:[%s5710 + $0x2a8] sm:$0xff]
        %v5797 = vld [vmem:[%s5710 + $0x2b0] sm:$0xff]
        %v5798 = vld [vmem:[%s5710 + $0x2b8] sm:$0xff]
        %v5799 = vld [vmem:[%s5710 + $0x2c0] sm:$0xff]
        %v5800 = vld [vmem:[%s5710 + $0x2c8] sm:$0xff]
        %v5801 = vld [vmem:[%s5710 + $0x2d0] sm:$0xff]
        %v5802 = vld [vmem:[%s5710 + $0x2d8] sm:$0xff]
        %v5803 = vld [vmem:[%s5710 + $0x2e0] sm:$0xff]
        %v5804 = vld [vmem:[%s5710 + $0x2e8] sm:$0xff]
        %v5805 = vld [vmem:[%s5710 + $0x2f0] sm:$0xff]
        %v5806 = vld [vmem:[%s5710 + $0x2f8] sm:$0xff]
        %v5807 = vld [vmem:[%s5710 + $0x300] sm:$0xff]
        %v5808 = vld [vmem:[%s5710 + $0x308] sm:$0xff]
        %v5809 = vld [vmem:[%s5710 + $0x310] sm:$0xff]
        %v5810 = vld [vmem:[%s5710 + $0x318] sm:$0xff]
        %v5811 = vld [vmem:[%s5710 + $0x320] sm:$0xff]
        %v5812 = vld [vmem:[%s5710 + $0x328] sm:$0xff]
        %v5813 = vld [vmem:[%s5710 + $0x330] sm:$0xff]
        %v5814 = vld [vmem:[%s5710 + $0x338] sm:$0xff]
        %v5815 = vld [vmem:[%s5710 + $0x340] sm:$0xff]
        %v5816 = vld [vmem:[%s5710 + $0x348] sm:$0xff]
        %v5817 = vld [vmem:[%s5710 + $0x350] sm:$0xff]
        %v5818 = vld [vmem:[%s5710 + $0x358] sm:$0xff]
        %v5819 = vld [vmem:[%s5710 + $0x360] sm:$0xff]
        %v5820 = vld [vmem:[%s5710 + $0x368] sm:$0xff]
        %v5821 = vld [vmem:[%s5710 + $0x370] sm:$0xff]
        %v5822 = vld [vmem:[%s5710 + $0x378] sm:$0xff]
        %vm5827 = vcmask 1045504
        %v5828 = vrot.slane %v5706, 2
        %v5829 = vrot.slane %v5708, 2
        %v5830 = vsel %vm5827, %v5828, %v5829
        %v5831 = vrot.slane %v5707, 2
        %v5832 = vrot.slane %v5709, 2
        %v5833 = vsel %vm5827, %v5831, %v5832
        %v5836 = vsel %vm5115, %v5833, 0
        %v5838 = vsel %vm5115, %v5832, 0
        %5840 = vmatprep.subr.mxu0 %v5712
        %5841 = vmatpush1.msra.mxu0 %v5711
        %5842 = vmatprep.subr.mxu0 %v5716
        %5843 = vmatpush1.msra.mxu0 %v5715
        %5844 = vmatprep.subr.mxu0 %v5720
        %5845 = vmatpush1.msra.mxu0 %v5719
        %5846 = vmatprep.subr.mxu0 %v5724
        %5847 = vmatpush1.msra.mxu0 %v5723
        %5848 = vmatprep.subr.mxu0 %v5728
        %5849 = vmatpush1.msra.mxu0 %v5727
        %5850 = vmatprep.subr.mxu0 %v5732
        %5851 = vmatpush1.msra.mxu0 %v5731
        %5852 = vmatprep.subr.mxu0 %v5736
        %5853 = vmatpush1.msra.mxu0 %v5735
        %5854 = vmatprep.subr.mxu0 %v5740
        %5855 = vmatpush1.msra.mxu0 %v5739
        %5856 = vmatprep.subr.mxu0 %v5744
        %5857 = vmatpush1.msra.mxu0 %v5743
        %5858 = vmatprep.subr.mxu0 %v5748
        %5859 = vmatpush1.msra.mxu0 %v5747
        %5860 = vmatprep.subr.mxu0 %v5752
        %5861 = vmatpush1.msra.mxu0 %v5751
        %5862 = vmatprep.subr.mxu0 %v5756
        %5863 = vmatpush1.msra.mxu0 %v5755
        %5864 = vmatprep.subr.mxu0 %v5760
        %5865 = vmatpush1.msra.mxu0 %v5759
        %5866 = vmatprep.subr.mxu0 %v5764
        %5867 = vmatpush1.msra.mxu0 %v5763
        %5868 = vmatprep.subr.mxu0 %v5768
        %5869 = vmatpush1.msra.mxu0 %v5767
        %5870 = vmatprep.subr.mxu0 %v5772
        %5871 = vmatpush1.msra.mxu0 %v5771
        %5872 = vmatprep.subr.mxu0 %v5776
        %5873 = vmatpush1.msra.mxu0 %v5775
        %5874 = vmatprep.subr.mxu0 %v5780
        %5875 = vmatpush1.msra.mxu0 %v5779
        %5876 = vmatprep.subr.mxu0 %v5784
        %5877 = vmatpush1.msra.mxu0 %v5783
        %5878 = vmatprep.subr.mxu0 %v5788
        %5879 = vmatpush1.msra.mxu0 %v5787
        %5880 = vmatprep.subr.mxu0 %v5792
        %5881 = vmatpush1.msra.mxu0 %v5791
        %5882 = vmatprep.subr.mxu0 %v5796
        %5883 = vmatpush1.msra.mxu0 %v5795
        %5884 = vmatprep.subr.mxu0 %v5800
        %5885 = vmatpush1.msra.mxu0 %v5799
        %5886 = vmatprep.subr.mxu0 %v5804
        %5887 = vmatpush1.msra.mxu0 %v5803
        %5888 = vmatprep.subr.mxu0 %v5808
        %5889 = vmatpush1.msra.mxu0 %v5807
        %5890 = vmatprep.subr.mxu0 %v5812
        %5891 = vmatpush1.msra.mxu0 %v5811
        %5892 = vmatprep.subr.mxu0 %v5816
        %5893 = vmatpush1.msra.mxu0 %v5815
        %5894 = vmatprep.subr.mxu0 %v5820
        %5895 = vmatpush1.msra.mxu0 %v5819
        %5896 = vmatprep.subr.mxu0 0.0
        %5897 = vmatpush1.msra.mxu0 0.0
        %5898 = vmatprep.subr.mxu0 0.0
        %5899 = vmatpush1.msra.mxu0 0.0
        %5900 = vmatprep.subr.mxu0 0.0
        %5901 = vmatpush1.msra.mxu0 0.0
        %5902 = vmatprep.subr.mxu0 0.0
        %5903 = vmatpush1.msra.mxu0 0.0
        %5904 = vmatprep.mubr.f32.mxu0 %v5836
        %5905 = vmatmul.mubr.f32.gmra.mrb[0].mxu0 %v5830
        %v5906 = vpop.f32.mrb[0].mxu0
        %v5907 = vadd.f32 0.0, %v5906
        %v5908 = vpop.f32.mrb[0].mxu0
        %v5909 = vadd.f32 0.0, %v5908
        %5910 = vmatprep.mubr.f32.mxu0 %v5838
        %5911 = vmatmul.mubr.f32.gmra.mrb[0].mxu0 %v5829
        %v5912 = vpop.f32.mrb[0].mxu0
        %v5913 = vadd.f32 0.0, %v5912
        %v5914 = vpop.f32.mrb[0].mxu0
        %v5915 = vadd.f32 0.0, %v5914
        %5916 = vdwg.mxu0
        %5917 = vmatprep.subr.mxu0 %v5714
        %5918 = vmatpush1.msra.mxu0 %v5713
        %5919 = vmatprep.subr.mxu0 %v5718
        %5920 = vmatpush1.msra.mxu0 %v5717
        %5921 = vmatprep.subr.mxu0 %v5722
        %5922 = vmatpush1.msra.mxu0 %v5721
        %5923 = vmatprep.subr.mxu0 %v5726
        %5924 = vmatpush1.msra.mxu0 %v5725
        %5925 = vmatprep.subr.mxu0 %v5730
        %5926 = vmatpush1.msra.mxu0 %v5729
        %5927 = vmatprep.subr.mxu0 %v5734
        %5928 = vmatpush1.msra.mxu0 %v5733
        %5929 = vmatprep.subr.mxu0 %v5738
        %5930 = vmatpush1.msra.mxu0 %v5737
        %5931 = vmatprep.subr.mxu0 %v5742
        %5932 = vmatpush1.msra.mxu0 %v5741
        %5933 = vmatprep.subr.mxu0 %v5746
        %5934 = vmatpush1.msra.mxu0 %v5745
        %5935 = vmatprep.subr.mxu0 %v5750
        %5936 = vmatpush1.msra.mxu0 %v5749
        %5937 = vmatprep.subr.mxu0 %v5754
        %5938 = vmatpush1.msra.mxu0 %v5753
        %5939 = vmatprep.subr.mxu0 %v5758
        %5940 = vmatpush1.msra.mxu0 %v5757
        %5941 = vmatprep.subr.mxu0 %v5762
        %5942 = vmatpush1.msra.mxu0 %v5761
        %5943 = vmatprep.subr.mxu0 %v5766
        %5944 = vmatpush1.msra.mxu0 %v5765
        %5945 = vmatprep.subr.mxu0 %v5770
        %5946 = vmatpush1.msra.mxu0 %v5769
        %5947 = vmatprep.subr.mxu0 %v5774
        %5948 = vmatpush1.msra.mxu0 %v5773
        %5949 = vmatprep.subr.mxu0 %v5778
        %5950 = vmatpush1.msra.mxu0 %v5777
        %5951 = vmatprep.subr.mxu0 %v5782
        %5952 = vmatpush1.msra.mxu0 %v5781
        %5953 = vmatprep.subr.mxu0 %v5786
        %5954 = vmatpush1.msra.mxu0 %v5785
        %5955 = vmatprep.subr.mxu0 %v5790
        %5956 = vmatpush1.msra.mxu0 %v5789
        %5957 = vmatprep.subr.mxu0 %v5794
        %5958 = vmatpush1.msra.mxu0 %v5793
        %5959 = vmatprep.subr.mxu0 %v5798
        %5960 = vmatpush1.msra.mxu0 %v5797
        %5961 = vmatprep.subr.mxu0 %v5802
        %5962 = vmatpush1.msra.mxu0 %v5801
        %5963 = vmatprep.subr.mxu0 %v5806
        %5964 = vmatpush1.msra.mxu0 %v5805
        %5965 = vmatprep.subr.mxu0 %v5810
        %5966 = vmatpush1.msra.mxu0 %v5809
        %5967 = vmatprep.subr.mxu0 %v5814
        %5968 = vmatpush1.msra.mxu0 %v5813
        %5969 = vmatprep.subr.mxu0 %v5818
        %5970 = vmatpush1.msra.mxu0 %v5817
        %5971 = vmatprep.subr.mxu0 %v5822
        %5972 = vmatpush1.msra.mxu0 %v5821
        %5973 = vmatprep.subr.mxu0 0.0
        %5974 = vmatpush1.msra.mxu0 0.0
        %5975 = vmatprep.subr.mxu0 0.0
        %5976 = vmatpush1.msra.mxu0 0.0
        %5977 = vmatprep.subr.mxu0 0.0
        %5978 = vmatpush1.msra.mxu0 0.0
        %5979 = vmatprep.subr.mxu0 0.0
        %5980 = vmatpush1.msra.mxu0 0.0
        %5981 = vmatprep.mubr.f32.mxu0 %v5836
        %5982 = vmatmul.mubr.f32.gmra.mrb[0].mxu0 %v5830
        %v5983 = vpop.f32.mrb[0].mxu0
        %v5984 = vadd.f32 0.0, %v5983
        %v5985 = vpop.f32.mrb[0].mxu0
        %v5986 = vadd.f32 0.0, %v5985
        %5987 = vmatprep.mubr.f32.mxu0 %v5838
        %5988 = vmatmul.mubr.f32.gmra.mrb[0].mxu0 %v5829
        %v5989 = vpop.f32.mrb[0].mxu0
        %v5990 = vadd.f32 0.0, %v5989
        %v5991 = vpop.f32.mrb[0].mxu0
        %v5992 = vadd.f32 0.0, %v5991
        %5993 = vdwg.mxu0
        %v5994 = vadd.f32 %v5619, %v5907
        %v5995 = vadd.f32 %v5621, %v5909
        %v5996 = vadd.f32 %v5696, %v5984
        %v5997 = vadd.f32 %v5698, %v5986
        %v5998 = vadd.f32 %v5625, %v5913
        %v5999 = vadd.f32 %v5627, %v5915
        %v6000 = vadd.f32 %v5702, %v5990
        %v6001 = vadd.f32 %v5704, %v5992
        %v6002 = vld [vmem:[#allocation3] sm:$0xf8]
        %v6003 = vld [vmem:[#allocation3 + $0x8] sm:$0xf8]
        %v6004 = vld [vmem:[#allocation3 + $0x10] sm:$0xff]
        %v6005 = vld [vmem:[#allocation3 + $0x18] sm:$0xff]
        %v6006 = vld [vmem:[#allocation3 + $0x20] sm:$0x1]
        %v6007 = vld [vmem:[#allocation3 + $0x28] sm:$0x1]
        %s6008 = scalar_lea.vmem [#allocation10], 2688
        %v6009 = vld [vmem:[%s6008] sm:$0xff]
        %v6010 = vld [vmem:[%s6008 + $0x8] sm:$0xff]
        %v6011 = vld [vmem:[%s6008 + $0x10] sm:$0xff]
        %v6012 = vld [vmem:[%s6008 + $0x18] sm:$0xff]
        %v6013 = vld [vmem:[%s6008 + $0x20] sm:$0xff]
        %v6014 = vld [vmem:[%s6008 + $0x28] sm:$0xff]
        %v6015 = vld [vmem:[%s6008 + $0x30] sm:$0xff]
        %v6016 = vld [vmem:[%s6008 + $0x38] sm:$0xff]
        %v6017 = vld [vmem:[%s6008 + $0x40] sm:$0xff]
        %v6018 = vld [vmem:[%s6008 + $0x48] sm:$0xff]
        %v6019 = vld [vmem:[%s6008 + $0x50] sm:$0xff]
        %v6020 = vld [vmem:[%s6008 + $0x58] sm:$0xff]
        %v6021 = vld [vmem:[%s6008 + $0x60] sm:$0xff]
        %v6022 = vld [vmem:[%s6008 + $0x68] sm:$0xff]
        %v6023 = vld [vmem:[%s6008 + $0x70] sm:$0xff]
        %v6024 = vld [vmem:[%s6008 + $0x78] sm:$0xff]
        %v6025 = vld [vmem:[%s6008 + $0x80] sm:$0xff]
        %v6026 = vld [vmem:[%s6008 + $0x88] sm:$0xff]
        %v6027 = vld [vmem:[%s6008 + $0x90] sm:$0xff]
        %v6028 = vld [vmem:[%s6008 + $0x98] sm:$0xff]
        %v6029 = vld [vmem:[%s6008 + $0xa0] sm:$0xff]
        %v6030 = vld [vmem:[%s6008 + $0xa8] sm:$0xff]
        %v6031 = vld [vmem:[%s6008 + $0xb0] sm:$0xff]
        %v6032 = vld [vmem:[%s6008 + $0xb8] sm:$0xff]
        %v6033 = vld [vmem:[%s6008 + $0xc0] sm:$0xff]
        %v6034 = vld [vmem:[%s6008 + $0xc8] sm:$0xff]
        %v6035 = vld [vmem:[%s6008 + $0xd0] sm:$0xff]
        %v6036 = vld [vmem:[%s6008 + $0xd8] sm:$0xff]
        %v6037 = vld [vmem:[%s6008 + $0xe0] sm:$0xff]
        %v6038 = vld [vmem:[%s6008 + $0xe8] sm:$0xff]
        %v6039 = vld [vmem:[%s6008 + $0xf0] sm:$0xff]
        %v6040 = vld [vmem:[%s6008 + $0xf8] sm:$0xff]
        %v6041 = vld [vmem:[%s6008 + $0x100] sm:$0xff]
        %v6042 = vld [vmem:[%s6008 + $0x108] sm:$0xff]
        %v6043 = vld [vmem:[%s6008 + $0x110] sm:$0xff]
        %v6044 = vld [vmem:[%s6008 + $0x118] sm:$0xff]
        %v6045 = vld [vmem:[%s6008 + $0x120] sm:$0xff]
        %v6046 = vld [vmem:[%s6008 + $0x128] sm:$0xff]
        %v6047 = vld [vmem:[%s6008 + $0x130] sm:$0xff]
        %v6048 = vld [vmem:[%s6008 + $0x138] sm:$0xff]
        %v6049 = vld [vmem:[%s6008 + $0x140] sm:$0xff]
        %v6050 = vld [vmem:[%s6008 + $0x148] sm:$0xff]
        %v6051 = vld [vmem:[%s6008 + $0x150] sm:$0xff]
        %v6052 = vld [vmem:[%s6008 + $0x158] sm:$0xff]
        %v6053 = vld [vmem:[%s6008 + $0x160] sm:$0xff]
        %v6054 = vld [vmem:[%s6008 + $0x168] sm:$0xff]
        %v6055 = vld [vmem:[%s6008 + $0x170] sm:$0xff]
        %v6056 = vld [vmem:[%s6008 + $0x178] sm:$0xff]
        %v6057 = vld [vmem:[%s6008 + $0x180] sm:$0xff]
        %v6058 = vld [vmem:[%s6008 + $0x188] sm:$0xff]
        %v6059 = vld [vmem:[%s6008 + $0x190] sm:$0xff]
        %v6060 = vld [vmem:[%s6008 + $0x198] sm:$0xff]
        %v6061 = vld [vmem:[%s6008 + $0x1a0] sm:$0xff]
        %v6062 = vld [vmem:[%s6008 + $0x1a8] sm:$0xff]
        %v6063 = vld [vmem:[%s6008 + $0x1b0] sm:$0xff]
        %v6064 = vld [vmem:[%s6008 + $0x1b8] sm:$0xff]
        %v6065 = vld [vmem:[%s6008 + $0x1c0] sm:$0xff]
        %v6066 = vld [vmem:[%s6008 + $0x1c8] sm:$0xff]
        %v6067 = vld [vmem:[%s6008 + $0x1d0] sm:$0xff]
        %v6068 = vld [vmem:[%s6008 + $0x1d8] sm:$0xff]
        %v6069 = vld [vmem:[%s6008 + $0x1e0] sm:$0xff]
        %v6070 = vld [vmem:[%s6008 + $0x1e8] sm:$0xff]
        %v6071 = vld [vmem:[%s6008 + $0x1f0] sm:$0xff]
        %v6072 = vld [vmem:[%s6008 + $0x1f8] sm:$0xff]
        %v6073 = vld [vmem:[%s6008 + $0x200] sm:$0xff]
        %v6074 = vld [vmem:[%s6008 + $0x208] sm:$0xff]
        %v6075 = vld [vmem:[%s6008 + $0x210] sm:$0xff]
        %v6076 = vld [vmem:[%s6008 + $0x218] sm:$0xff]
        %v6077 = vld [vmem:[%s6008 + $0x220] sm:$0xff]
        %v6078 = vld [vmem:[%s6008 + $0x228] sm:$0xff]
        %v6079 = vld [vmem:[%s6008 + $0x230] sm:$0xff]
        %v6080 = vld [vmem:[%s6008 + $0x238] sm:$0xff]
        %v6081 = vld [vmem:[%s6008 + $0x240] sm:$0xff]
        %v6082 = vld [vmem:[%s6008 + $0x248] sm:$0xff]
        %v6083 = vld [vmem:[%s6008 + $0x250] sm:$0xff]
        %v6084 = vld [vmem:[%s6008 + $0x258] sm:$0xff]
        %v6085 = vld [vmem:[%s6008 + $0x260] sm:$0xff]
        %v6086 = vld [vmem:[%s6008 + $0x268] sm:$0xff]
        %v6087 = vld [vmem:[%s6008 + $0x270] sm:$0xff]
        %v6088 = vld [vmem:[%s6008 + $0x278] sm:$0xff]
        %v6089 = vld [vmem:[%s6008 + $0x280] sm:$0xff]
        %v6090 = vld [vmem:[%s6008 + $0x288] sm:$0xff]
        %v6091 = vld [vmem:[%s6008 + $0x290] sm:$0xff]
        %v6092 = vld [vmem:[%s6008 + $0x298] sm:$0xff]
        %v6093 = vld [vmem:[%s6008 + $0x2a0] sm:$0xff]
        %v6094 = vld [vmem:[%s6008 + $0x2a8] sm:$0xff]
        %v6095 = vld [vmem:[%s6008 + $0x2b0] sm:$0xff]
        %v6096 = vld [vmem:[%s6008 + $0x2b8] sm:$0xff]
        %v6097 = vld [vmem:[%s6008 + $0x2c0] sm:$0xff]
        %v6098 = vld [vmem:[%s6008 + $0x2c8] sm:$0xff]
        %v6099 = vld [vmem:[%s6008 + $0x2d0] sm:$0xff]
        %v6100 = vld [vmem:[%s6008 + $0x2d8] sm:$0xff]
        %v6101 = vld [vmem:[%s6008 + $0x2e0] sm:$0xff]
        %v6102 = vld [vmem:[%s6008 + $0x2e8] sm:$0xff]
        %v6103 = vld [vmem:[%s6008 + $0x2f0] sm:$0xff]
        %v6104 = vld [vmem:[%s6008 + $0x2f8] sm:$0xff]
        %v6105 = vld [vmem:[%s6008 + $0x300] sm:$0xff]
        %v6106 = vld [vmem:[%s6008 + $0x308] sm:$0xff]
        %v6107 = vld [vmem:[%s6008 + $0x310] sm:$0xff]
        %v6108 = vld [vmem:[%s6008 + $0x318] sm:$0xff]
        %v6109 = vld [vmem:[%s6008 + $0x320] sm:$0xff]
        %v6110 = vld [vmem:[%s6008 + $0x328] sm:$0xff]
        %v6111 = vld [vmem:[%s6008 + $0x330] sm:$0xff]
        %v6112 = vld [vmem:[%s6008 + $0x338] sm:$0xff]
        %v6113 = vld [vmem:[%s6008 + $0x340] sm:$0xff]
        %v6114 = vld [vmem:[%s6008 + $0x348] sm:$0xff]
        %v6115 = vld [vmem:[%s6008 + $0x350] sm:$0xff]
        %v6116 = vld [vmem:[%s6008 + $0x358] sm:$0xff]
        %v6117 = vld [vmem:[%s6008 + $0x360] sm:$0xff]
        %v6118 = vld [vmem:[%s6008 + $0x368] sm:$0xff]
        %v6119 = vld [vmem:[%s6008 + $0x370] sm:$0xff]
        %v6120 = vld [vmem:[%s6008 + $0x378] sm:$0xff]
        %vm6127 = vcmask 1044480
        %v6128 = vrot.slane %v6002, 3
        %v6129 = vrot.slane %v6004, 3
        %v6130 = vsel %vm6127, %v6128, %v6129
        %v6131 = vrot.slane %v6003, 3
        %v6132 = vrot.slane %v6005, 3
        %v6133 = vsel %vm6127, %v6131, %v6132
        %v6134 = vrot.slane %v6006, 3
        %v6135 = vsel %vm6127, %v6129, %v6134
        %v6136 = vrot.slane %v6007, 3
        %v6137 = vsel %vm6127, %v6132, %v6136
        %v6140 = vsel %vm5115, %v6133, 0
        %v6142 = vsel %vm5115, %v6137, 0
        %6144 = vmatprep.subr.mxu0 %v6010
        %6145 = vmatpush1.msra.mxu0 %v6009
        %6146 = vmatprep.subr.mxu0 %v6014
        %6147 = vmatpush1.msra.mxu0 %v6013
        %6148 = vmatprep.subr.mxu0 %v6018
        %6149 = vmatpush1.msra.mxu0 %v6017
        %6150 = vmatprep.subr.mxu0 %v6022
        %6151 = vmatpush1.msra.mxu0 %v6021
        %6152 = vmatprep.subr.mxu0 %v6026
        %6153 = vmatpush1.msra.mxu0 %v6025
        %6154 = vmatprep.subr.mxu0 %v6030
        %6155 = vmatpush1.msra.mxu0 %v6029
        %6156 = vmatprep.subr.mxu0 %v6034
        %6157 = vmatpush1.msra.mxu0 %v6033
        %6158 = vmatprep.subr.mxu0 %v6038
        %6159 = vmatpush1.msra.mxu0 %v6037
        %6160 = vmatprep.subr.mxu0 %v6042
        %6161 = vmatpush1.msra.mxu0 %v6041
        %6162 = vmatprep.subr.mxu0 %v6046
        %6163 = vmatpush1.msra.mxu0 %v6045
        %6164 = vmatprep.subr.mxu0 %v6050
        %6165 = vmatpush1.msra.mxu0 %v6049
        %6166 = vmatprep.subr.mxu0 %v6054
        %6167 = vmatpush1.msra.mxu0 %v6053
        %6168 = vmatprep.subr.mxu0 %v6058
        %6169 = vmatpush1.msra.mxu0 %v6057
        %6170 = vmatprep.subr.mxu0 %v6062
        %6171 = vmatpush1.msra.mxu0 %v6061
        %6172 = vmatprep.subr.mxu0 %v6066
        %6173 = vmatpush1.msra.mxu0 %v6065
        %6174 = vmatprep.subr.mxu0 %v6070
        %6175 = vmatpush1.msra.mxu0 %v6069
        %6176 = vmatprep.subr.mxu0 %v6074
        %6177 = vmatpush1.msra.mxu0 %v6073
        %6178 = vmatprep.subr.mxu0 %v6078
        %6179 = vmatpush1.msra.mxu0 %v6077
        %6180 = vmatprep.subr.mxu0 %v6082
        %6181 = vmatpush1.msra.mxu0 %v6081
        %6182 = vmatprep.subr.mxu0 %v6086
        %6183 = vmatpush1.msra.mxu0 %v6085
        %6184 = vmatprep.subr.mxu0 %v6090
        %6185 = vmatpush1.msra.mxu0 %v6089
        %6186 = vmatprep.subr.mxu0 %v6094
        %6187 = vmatpush1.msra.mxu0 %v6093
        %6188 = vmatprep.subr.mxu0 %v6098
        %6189 = vmatpush1.msra.mxu0 %v6097
        %6190 = vmatprep.subr.mxu0 %v6102
        %6191 = vmatpush1.msra.mxu0 %v6101
        %6192 = vmatprep.subr.mxu0 %v6106
        %6193 = vmatpush1.msra.mxu0 %v6105
        %6194 = vmatprep.subr.mxu0 %v6110
        %6195 = vmatpush1.msra.mxu0 %v6109
        %6196 = vmatprep.subr.mxu0 %v6114
        %6197 = vmatpush1.msra.mxu0 %v6113
        %6198 = vmatprep.subr.mxu0 %v6118
        %6199 = vmatpush1.msra.mxu0 %v6117
        %6200 = vmatprep.subr.mxu0 0.0
        %6201 = vmatpush1.msra.mxu0 0.0
        %6202 = vmatprep.subr.mxu0 0.0
        %6203 = vmatpush1.msra.mxu0 0.0
        %6204 = vmatprep.subr.mxu0 0.0
        %6205 = vmatpush1.msra.mxu0 0.0
        %6206 = vmatprep.subr.mxu0 0.0
        %6207 = vmatpush1.msra.mxu0 0.0
        %6208 = vmatprep.mubr.f32.mxu0 %v6140
        %6209 = vmatmul.mubr.f32.gmra.mrb[0].mxu0 %v6130
        %v6210 = vpop.f32.mrb[0].mxu0
        %v6211 = vadd.f32 0.0, %v6210
        %v6212 = vpop.f32.mrb[0].mxu0
        %v6213 = vadd.f32 0.0, %v6212
        %6214 = vmatprep.mubr.f32.mxu0 %v6142
        %6215 = vmatmul.mubr.f32.gmra.mrb[0].mxu0 %v6135
        %v6216 = vpop.f32.mrb[0].mxu0
        %v6217 = vadd.f32 0.0, %v6216
        %v6218 = vpop.f32.mrb[0].mxu0
        %v6219 = vadd.f32 0.0, %v6218
        %6220 = vdwg.mxu0
        %6221 = vmatprep.subr.mxu0 %v6012
        %6222 = vmatpush1.msra.mxu0 %v6011
        %6223 = vmatprep.subr.mxu0 %v6016
        %6224 = vmatpush1.msra.mxu0 %v6015
        %6225 = vmatprep.subr.mxu0 %v6020
        %6226 = vmatpush1.msra.mxu0 %v6019
        %6227 = vmatprep.subr.mxu0 %v6024
        %6228 = vmatpush1.msra.mxu0 %v6023
        %6229 = vmatprep.subr.mxu0 %v6028
        %6230 = vmatpush1.msra.mxu0 %v6027
        %6231 = vmatprep.subr.mxu0 %v6032
        %6232 = vmatpush1.msra.mxu0 %v6031
        %6233 = vmatprep.subr.mxu0 %v6036
        %6234 = vmatpush1.msra.mxu0 %v6035
        %6235 = vmatprep.subr.mxu0 %v6040
        %6236 = vmatpush1.msra.mxu0 %v6039
        %6237 = vmatprep.subr.mxu0 %v6044
        %6238 = vmatpush1.msra.mxu0 %v6043
        %6239 = vmatprep.subr.mxu0 %v6048
        %6240 = vmatpush1.msra.mxu0 %v6047
        %6241 = vmatprep.subr.mxu0 %v6052
        %6242 = vmatpush1.msra.mxu0 %v6051
        %6243 = vmatprep.subr.mxu0 %v6056
        %6244 = vmatpush1.msra.mxu0 %v6055
        %6245 = vmatprep.subr.mxu0 %v6060
        %6246 = vmatpush1.msra.mxu0 %v6059
        %6247 = vmatprep.subr.mxu0 %v6064
        %6248 = vmatpush1.msra.mxu0 %v6063
        %6249 = vmatprep.subr.mxu0 %v6068
        %6250 = vmatpush1.msra.mxu0 %v6067
        %6251 = vmatprep.subr.mxu0 %v6072
        %6252 = vmatpush1.msra.mxu0 %v6071
        %6253 = vmatprep.subr.mxu0 %v6076
        %6254 = vmatpush1.msra.mxu0 %v6075
        %6255 = vmatprep.subr.mxu0 %v6080
        %6256 = vmatpush1.msra.mxu0 %v6079
        %6257 = vmatprep.subr.mxu0 %v6084
        %6258 = vmatpush1.msra.mxu0 %v6083
        %6259 = vmatprep.subr.mxu0 %v6088
        %6260 = vmatpush1.msra.mxu0 %v6087
        %6261 = vmatprep.subr.mxu0 %v6092
        %6262 = vmatpush1.msra.mxu0 %v6091
        %6263 = vmatprep.subr.mxu0 %v6096
        %6264 = vmatpush1.msra.mxu0 %v6095
        %6265 = vmatprep.subr.mxu0 %v6100
        %6266 = vmatpush1.msra.mxu0 %v6099
        %6267 = vmatprep.subr.mxu0 %v6104
        %6268 = vmatpush1.msra.mxu0 %v6103
        %6269 = vmatprep.subr.mxu0 %v6108
        %6270 = vmatpush1.msra.mxu0 %v6107
        %6271 = vmatprep.subr.mxu0 %v6112
        %6272 = vmatpush1.msra.mxu0 %v6111
        %6273 = vmatprep.subr.mxu0 %v6116
        %6274 = vmatpush1.msra.mxu0 %v6115
        %6275 = vmatprep.subr.mxu0 %v6120
        %6276 = vmatpush1.msra.mxu0 %v6119
        %6277 = vmatprep.subr.mxu0 0.0
        %6278 = vmatpush1.msra.mxu0 0.0
        %6279 = vmatprep.subr.mxu0 0.0
        %6280 = vmatpush1.msra.mxu0 0.0
        %6281 = vmatprep.subr.mxu0 0.0
        %6282 = vmatpush1.msra.mxu0 0.0
        %6283 = vmatprep.subr.mxu0 0.0
        %6284 = vmatpush1.msra.mxu0 0.0
        %6285 = vmatprep.mubr.f32.mxu0 %v6140
        %6286 = vmatmul.mubr.f32.gmra.mrb[0].mxu0 %v6130
        %v6287 = vpop.f32.mrb[0].mxu0
        %v6288 = vadd.f32 0.0, %v6287
        %v6289 = vpop.f32.mrb[0].mxu0
        %v6290 = vadd.f32 0.0, %v6289
        %6291 = vmatprep.mubr.f32.mxu0 %v6142
        %6292 = vmatmul.mubr.f32.gmra.mrb[0].mxu0 %v6135
        %v6293 = vpop.f32.mrb[0].mxu0
        %v6294 = vadd.f32 0.0, %v6293
        %v6295 = vpop.f32.mrb[0].mxu0
        %v6296 = vadd.f32 0.0, %v6295
        %6297 = vdwg.mxu0
        %v6298 = vadd.f32 %v5994, %v6211
        %v6299 = vadd.f32 %v5995, %v6213
        %v6300 = vadd.f32 %v5996, %v6288
        %v6301 = vadd.f32 %v5997, %v6290
        %v6302 = vadd.f32 %v5998, %v6217
        %v6303 = vadd.f32 %v5999, %v6219
        %v6304 = vadd.f32 %v6000, %v6294
        %v6305 = vadd.f32 %v6001, %v6296
        %v6306 = vld [vmem:[#allocation3] sm:$0xf0]
        %v6307 = vld [vmem:[#allocation3 + $0x8] sm:$0xf0]
        %v6308 = vld [vmem:[#allocation3 + $0x20] sm:$0x3]
        %v6309 = vld [vmem:[#allocation3 + $0x28] sm:$0x3]
        %s6310 = scalar_lea.vmem [#allocation10], 3584
        %v6311 = vld [vmem:[%s6310] sm:$0xff]
        %v6312 = vld [vmem:[%s6310 + $0x8] sm:$0xff]
        %v6313 = vld [vmem:[%s6310 + $0x10] sm:$0xff]
        %v6314 = vld [vmem:[%s6310 + $0x18] sm:$0xff]
        %v6315 = vld [vmem:[%s6310 + $0x20] sm:$0xff]
        %v6316 = vld [vmem:[%s6310 + $0x28] sm:$0xff]
        %v6317 = vld [vmem:[%s6310 + $0x30] sm:$0xff]
        %v6318 = vld [vmem:[%s6310 + $0x38] sm:$0xff]
        %v6319 = vld [vmem:[%s6310 + $0x40] sm:$0xff]
        %v6320 = vld [vmem:[%s6310 + $0x48] sm:$0xff]
        %v6321 = vld [vmem:[%s6310 + $0x50] sm:$0xff]
        %v6322 = vld [vmem:[%s6310 + $0x58] sm:$0xff]
        %v6323 = vld [vmem:[%s6310 + $0x60] sm:$0xff]
        %v6324 = vld [vmem:[%s6310 + $0x68] sm:$0xff]
        %v6325 = vld [vmem:[%s6310 + $0x70] sm:$0xff]
        %v6326 = vld [vmem:[%s6310 + $0x78] sm:$0xff]
        %v6327 = vld [vmem:[%s6310 + $0x80] sm:$0xff]
        %v6328 = vld [vmem:[%s6310 + $0x88] sm:$0xff]
        %v6329 = vld [vmem:[%s6310 + $0x90] sm:$0xff]
        %v6330 = vld [vmem:[%s6310 + $0x98] sm:$0xff]
        %v6331 = vld [vmem:[%s6310 + $0xa0] sm:$0xff]
        %v6332 = vld [vmem:[%s6310 + $0xa8] sm:$0xff]
        %v6333 = vld [vmem:[%s6310 + $0xb0] sm:$0xff]
        %v6334 = vld [vmem:[%s6310 + $0xb8] sm:$0xff]
        %v6335 = vld [vmem:[%s6310 + $0xc0] sm:$0xff]
        %v6336 = vld [vmem:[%s6310 + $0xc8] sm:$0xff]
        %v6337 = vld [vmem:[%s6310 + $0xd0] sm:$0xff]
        %v6338 = vld [vmem:[%s6310 + $0xd8] sm:$0xff]
        %v6339 = vld [vmem:[%s6310 + $0xe0] sm:$0xff]
        %v6340 = vld [vmem:[%s6310 + $0xe8] sm:$0xff]
        %v6341 = vld [vmem:[%s6310 + $0xf0] sm:$0xff]
        %v6342 = vld [vmem:[%s6310 + $0xf8] sm:$0xff]
        %v6343 = vld [vmem:[%s6310 + $0x100] sm:$0xff]
        %v6344 = vld [vmem:[%s6310 + $0x108] sm:$0xff]
        %v6345 = vld [vmem:[%s6310 + $0x110] sm:$0xff]
        %v6346 = vld [vmem:[%s6310 + $0x118] sm:$0xff]
        %v6347 = vld [vmem:[%s6310 + $0x120] sm:$0xff]
        %v6348 = vld [vmem:[%s6310 + $0x128] sm:$0xff]
        %v6349 = vld [vmem:[%s6310 + $0x130] sm:$0xff]
        %v6350 = vld [vmem:[%s6310 + $0x138] sm:$0xff]
        %v6351 = vld [vmem:[%s6310 + $0x140] sm:$0xff]
        %v6352 = vld [vmem:[%s6310 + $0x148] sm:$0xff]
        %v6353 = vld [vmem:[%s6310 + $0x150] sm:$0xff]
        %v6354 = vld [vmem:[%s6310 + $0x158] sm:$0xff]
        %v6355 = vld [vmem:[%s6310 + $0x160] sm:$0xff]
        %v6356 = vld [vmem:[%s6310 + $0x168] sm:$0xff]
        %v6357 = vld [vmem:[%s6310 + $0x170] sm:$0xff]
        %v6358 = vld [vmem:[%s6310 + $0x178] sm:$0xff]
        %v6359 = vld [vmem:[%s6310 + $0x180] sm:$0xff]
        %v6360 = vld [vmem:[%s6310 + $0x188] sm:$0xff]
        %v6361 = vld [vmem:[%s6310 + $0x190] sm:$0xff]
        %v6362 = vld [vmem:[%s6310 + $0x198] sm:$0xff]
        %v6363 = vld [vmem:[%s6310 + $0x1a0] sm:$0xff]
        %v6364 = vld [vmem:[%s6310 + $0x1a8] sm:$0xff]
        %v6365 = vld [vmem:[%s6310 + $0x1b0] sm:$0xff]
        %v6366 = vld [vmem:[%s6310 + $0x1b8] sm:$0xff]
        %v6367 = vld [vmem:[%s6310 + $0x1c0] sm:$0xff]
        %v6368 = vld [vmem:[%s6310 + $0x1c8] sm:$0xff]
        %v6369 = vld [vmem:[%s6310 + $0x1d0] sm:$0xff]
        %v6370 = vld [vmem:[%s6310 + $0x1d8] sm:$0xff]
        %v6371 = vld [vmem:[%s6310 + $0x1e0] sm:$0xff]
        %v6372 = vld [vmem:[%s6310 + $0x1e8] sm:$0xff]
        %v6373 = vld [vmem:[%s6310 + $0x1f0] sm:$0xff]
        %v6374 = vld [vmem:[%s6310 + $0x1f8] sm:$0xff]
        %v6375 = vld [vmem:[%s6310 + $0x200] sm:$0xff]
        %v6376 = vld [vmem:[%s6310 + $0x208] sm:$0xff]
        %v6377 = vld [vmem:[%s6310 + $0x210] sm:$0xff]
        %v6378 = vld [vmem:[%s6310 + $0x218] sm:$0xff]
        %v6379 = vld [vmem:[%s6310 + $0x220] sm:$0xff]
        %v6380 = vld [vmem:[%s6310 + $0x228] sm:$0xff]
        %v6381 = vld [vmem:[%s6310 + $0x230] sm:$0xff]
        %v6382 = vld [vmem:[%s6310 + $0x238] sm:$0xff]
        %v6383 = vld [vmem:[%s6310 + $0x240] sm:$0xff]
        %v6384 = vld [vmem:[%s6310 + $0x248] sm:$0xff]
        %v6385 = vld [vmem:[%s6310 + $0x250] sm:$0xff]
        %v6386 = vld [vmem:[%s6310 + $0x258] sm:$0xff]
        %v6387 = vld [vmem:[%s6310 + $0x260] sm:$0xff]
        %v6388 = vld [vmem:[%s6310 + $0x268] sm:$0xff]
        %v6389 = vld [vmem:[%s6310 + $0x270] sm:$0xff]
        %v6390 = vld [vmem:[%s6310 + $0x278] sm:$0xff]
        %v6391 = vld [vmem:[%s6310 + $0x280] sm:$0xff]
        %v6392 = vld [vmem:[%s6310 + $0x288] sm:$0xff]
        %v6393 = vld [vmem:[%s6310 + $0x290] sm:$0xff]
        %v6394 = vld [vmem:[%s6310 + $0x298] sm:$0xff]
        %v6395 = vld [vmem:[%s6310 + $0x2a0] sm:$0xff]
        %v6396 = vld [vmem:[%s6310 + $0x2a8] sm:$0xff]
        %v6397 = vld [vmem:[%s6310 + $0x2b0] sm:$0xff]
        %v6398 = vld [vmem:[%s6310 + $0x2b8] sm:$0xff]
        %v6399 = vld [vmem:[%s6310 + $0x2c0] sm:$0xff]
        %v6400 = vld [vmem:[%s6310 + $0x2c8] sm:$0xff]
        %v6401 = vld [vmem:[%s6310 + $0x2d0] sm:$0xff]
        %v6402 = vld [vmem:[%s6310 + $0x2d8] sm:$0xff]
        %v6403 = vld [vmem:[%s6310 + $0x2e0] sm:$0xff]
        %v6404 = vld [vmem:[%s6310 + $0x2e8] sm:$0xff]
        %v6405 = vld [vmem:[%s6310 + $0x2f0] sm:$0xff]
        %v6406 = vld [vmem:[%s6310 + $0x2f8] sm:$0xff]
        %v6407 = vld [vmem:[%s6310 + $0x300] sm:$0xff]
        %v6408 = vld [vmem:[%s6310 + $0x308] sm:$0xff]
        %v6409 = vld [vmem:[%s6310 + $0x310] sm:$0xff]
        %v6410 = vld [vmem:[%s6310 + $0x318] sm:$0xff]
        %v6411 = vld [vmem:[%s6310 + $0x320] sm:$0xff]
        %v6412 = vld [vmem:[%s6310 + $0x328] sm:$0xff]
        %v6413 = vld [vmem:[%s6310 + $0x330] sm:$0xff]
        %v6414 = vld [vmem:[%s6310 + $0x338] sm:$0xff]
        %v6415 = vld [vmem:[%s6310 + $0x340] sm:$0xff]
        %v6416 = vld [vmem:[%s6310 + $0x348] sm:$0xff]
        %v6417 = vld [vmem:[%s6310 + $0x350] sm:$0xff]
        %v6418 = vld [vmem:[%s6310 + $0x358] sm:$0xff]
        %v6419 = vld [vmem:[%s6310 + $0x360] sm:$0xff]
        %v6420 = vld [vmem:[%s6310 + $0x368] sm:$0xff]
        %v6421 = vld [vmem:[%s6310 + $0x370] sm:$0xff]
        %v6422 = vld [vmem:[%s6310 + $0x378] sm:$0xff]
        %v6427 = vrot.slane %v6306, 4
        %v6428 = vrot.slane %v6004, 4
        %v6429 = vsel %vm671, %v6427, %v6428
        %v6430 = vrot.slane %v6307, 4
        %v6431 = vrot.slane %v6005, 4
        %v6432 = vsel %vm671, %v6430, %v6431
        %v6433 = vrot.slane %v6308, 4
        %v6434 = vsel %vm671, %v6428, %v6433
        %v6435 = vrot.slane %v6309, 4
        %v6436 = vsel %vm671, %v6431, %v6435
        %v6439 = vsel %vm5115, %v6432, 0
        %v6441 = vsel %vm5115, %v6436, 0
        %6443 = vmatprep.subr.mxu0 %v6312
        %6444 = vmatpush1.msra.mxu0 %v6311
        %6445 = vmatprep.subr.mxu0 %v6316
        %6446 = vmatpush1.msra.mxu0 %v6315
        %6447 = vmatprep.subr.mxu0 %v6320
        %6448 = vmatpush1.msra.mxu0 %v6319
        %6449 = vmatprep.subr.mxu0 %v6324
        %6450 = vmatpush1.msra.mxu0 %v6323
        %6451 = vmatprep.subr.mxu0 %v6328
        %6452 = vmatpush1.msra.mxu0 %v6327
        %6453 = vmatprep.subr.mxu0 %v6332
        %6454 = vmatpush1.msra.mxu0 %v6331
        %6455 = vmatprep.subr.mxu0 %v6336
        %6456 = vmatpush1.msra.mxu0 %v6335
        %6457 = vmatprep.subr.mxu0 %v6340
        %6458 = vmatpush1.msra.mxu0 %v6339
        %6459 = vmatprep.subr.mxu0 %v6344
        %6460 = vmatpush1.msra.mxu0 %v6343
        %6461 = vmatprep.subr.mxu0 %v6348
        %6462 = vmatpush1.msra.mxu0 %v6347
        %6463 = vmatprep.subr.mxu0 %v6352
        %6464 = vmatpush1.msra.mxu0 %v6351
        %6465 = vmatprep.subr.mxu0 %v6356
        %6466 = vmatpush1.msra.mxu0 %v6355
        %6467 = vmatprep.subr.mxu0 %v6360
        %6468 = vmatpush1.msra.mxu0 %v6359
        %6469 = vmatprep.subr.mxu0 %v6364
        %6470 = vmatpush1.msra.mxu0 %v6363
        %6471 = vmatprep.subr.mxu0 %v6368
        %6472 = vmatpush1.msra.mxu0 %v6367
        %6473 = vmatprep.subr.mxu0 %v6372
        %6474 = vmatpush1.msra.mxu0 %v6371
        %6475 = vmatprep.subr.mxu0 %v6376
        %6476 = vmatpush1.msra.mxu0 %v6375
        %6477 = vmatprep.subr.mxu0 %v6380
        %6478 = vmatpush1.msra.mxu0 %v6379
        %6479 = vmatprep.subr.mxu0 %v6384
        %6480 = vmatpush1.msra.mxu0 %v6383
        %6481 = vmatprep.subr.mxu0 %v6388
        %6482 = vmatpush1.msra.mxu0 %v6387
        %6483 = vmatprep.subr.mxu0 %v6392
        %6484 = vmatpush1.msra.mxu0 %v6391
        %6485 = vmatprep.subr.mxu0 %v6396
        %6486 = vmatpush1.msra.mxu0 %v6395
        %6487 = vmatprep.subr.mxu0 %v6400
        %6488 = vmatpush1.msra.mxu0 %v6399
        %6489 = vmatprep.subr.mxu0 %v6404
        %6490 = vmatpush1.msra.mxu0 %v6403
        %6491 = vmatprep.subr.mxu0 %v6408
        %6492 = vmatpush1.msra.mxu0 %v6407
        %6493 = vmatprep.subr.mxu0 %v6412
        %6494 = vmatpush1.msra.mxu0 %v6411
        %6495 = vmatprep.subr.mxu0 %v6416
        %6496 = vmatpush1.msra.mxu0 %v6415
        %6497 = vmatprep.subr.mxu0 %v6420
        %6498 = vmatpush1.msra.mxu0 %v6419
        %6499 = vmatprep.subr.mxu0 0.0
        %6500 = vmatpush1.msra.mxu0 0.0
        %6501 = vmatprep.subr.mxu0 0.0
        %6502 = vmatpush1.msra.mxu0 0.0
        %6503 = vmatprep.subr.mxu0 0.0
        %6504 = vmatpush1.msra.mxu0 0.0
        %6505 = vmatprep.subr.mxu0 0.0
        %6506 = vmatpush1.msra.mxu0 0.0
        %6507 = vmatprep.mubr.f32.mxu0 %v6439
        %6508 = vmatmul.mubr.f32.gmra.mrb[0].mxu0 %v6429
        %v6509 = vpop.f32.mrb[0].mxu0
        %v6510 = vadd.f32 0.0, %v6509
        %v6511 = vpop.f32.mrb[0].mxu0
        %v6512 = vadd.f32 0.0, %v6511
        %6513 = vmatprep.mubr.f32.mxu0 %v6441
        %6514 = vmatmul.mubr.f32.gmra.mrb[0].mxu0 %v6434
        %v6515 = vpop.f32.mrb[0].mxu0
        %v6516 = vadd.f32 0.0, %v6515
        %v6517 = vpop.f32.mrb[0].mxu0
        %v6518 = vadd.f32 0.0, %v6517
        %6519 = vdwg.mxu0
        %6520 = vmatprep.subr.mxu0 %v6314
        %6521 = vmatpush1.msra.mxu0 %v6313
        %6522 = vmatprep.subr.mxu0 %v6318
        %6523 = vmatpush1.msra.mxu0 %v6317
        %6524 = vmatprep.subr.mxu0 %v6322
        %6525 = vmatpush1.msra.mxu0 %v6321
        %6526 = vmatprep.subr.mxu0 %v6326
        %6527 = vmatpush1.msra.mxu0 %v6325
        %6528 = vmatprep.subr.mxu0 %v6330
        %6529 = vmatpush1.msra.mxu0 %v6329
        %6530 = vmatprep.subr.mxu0 %v6334
        %6531 = vmatpush1.msra.mxu0 %v6333
        %6532 = vmatprep.subr.mxu0 %v6338
        %6533 = vmatpush1.msra.mxu0 %v6337
        %6534 = vmatprep.subr.mxu0 %v6342
        %6535 = vmatpush1.msra.mxu0 %v6341
        %6536 = vmatprep.subr.mxu0 %v6346
        %6537 = vmatpush1.msra.mxu0 %v6345
        %6538 = vmatprep.subr.mxu0 %v6350
        %6539 = vmatpush1.msra.mxu0 %v6349
        %6540 = vmatprep.subr.mxu0 %v6354
        %6541 = vmatpush1.msra.mxu0 %v6353
        %6542 = vmatprep.subr.mxu0 %v6358
        %6543 = vmatpush1.msra.mxu0 %v6357
        %6544 = vmatprep.subr.mxu0 %v6362
        %6545 = vmatpush1.msra.mxu0 %v6361
        %6546 = vmatprep.subr.mxu0 %v6366
        %6547 = vmatpush1.msra.mxu0 %v6365
        %6548 = vmatprep.subr.mxu0 %v6370
        %6549 = vmatpush1.msra.mxu0 %v6369
        %6550 = vmatprep.subr.mxu0 %v6374
        %6551 = vmatpush1.msra.mxu0 %v6373
        %6552 = vmatprep.subr.mxu0 %v6378
        %6553 = vmatpush1.msra.mxu0 %v6377
        %6554 = vmatprep.subr.mxu0 %v6382
        %6555 = vmatpush1.msra.mxu0 %v6381
        %6556 = vmatprep.subr.mxu0 %v6386
        %6557 = vmatpush1.msra.mxu0 %v6385
        %6558 = vmatprep.subr.mxu0 %v6390
        %6559 = vmatpush1.msra.mxu0 %v6389
        %6560 = vmatprep.subr.mxu0 %v6394
        %6561 = vmatpush1.msra.mxu0 %v6393
        %6562 = vmatprep.subr.mxu0 %v6398
        %6563 = vmatpush1.msra.mxu0 %v6397
        %6564 = vmatprep.subr.mxu0 %v6402
        %6565 = vmatpush1.msra.mxu0 %v6401
        %6566 = vmatprep.subr.mxu0 %v6406
        %6567 = vmatpush1.msra.mxu0 %v6405
        %6568 = vmatprep.subr.mxu0 %v6410
        %6569 = vmatpush1.msra.mxu0 %v6409
        %6570 = vmatprep.subr.mxu0 %v6414
        %6571 = vmatpush1.msra.mxu0 %v6413
        %6572 = vmatprep.subr.mxu0 %v6418
        %6573 = vmatpush1.msra.mxu0 %v6417
        %6574 = vmatprep.subr.mxu0 %v6422
        %6575 = vmatpush1.msra.mxu0 %v6421
        %6576 = vmatprep.subr.mxu0 0.0
        %6577 = vmatpush1.msra.mxu0 0.0
        %6578 = vmatprep.subr.mxu0 0.0
        %6579 = vmatpush1.msra.mxu0 0.0
        %6580 = vmatprep.subr.mxu0 0.0
        %6581 = vmatpush1.msra.mxu0 0.0
        %6582 = vmatprep.subr.mxu0 0.0
        %6583 = vmatpush1.msra.mxu0 0.0
        %6584 = vmatprep.mubr.f32.mxu0 %v6439
        %6585 = vmatmul.mubr.f32.gmra.mrb[0].mxu0 %v6429
        %v6586 = vpop.f32.mrb[0].mxu0
        %v6587 = vadd.f32 0.0, %v6586
        %v6588 = vpop.f32.mrb[0].mxu0
        %v6589 = vadd.f32 0.0, %v6588
        %6590 = vmatprep.mubr.f32.mxu0 %v6441
        %6591 = vmatmul.mubr.f32.gmra.mrb[0].mxu0 %v6434
        %v6592 = vpop.f32.mrb[0].mxu0
        %v6593 = vadd.f32 0.0, %v6592
        %v6594 = vpop.f32.mrb[0].mxu0
        %v6595 = vadd.f32 0.0, %v6594
        %6596 = vdwg.mxu0
        %v6597 = vadd.f32 %v6298, %v6510
        %v6598 = vadd.f32 %v6299, %v6512
        %v6599 = vadd.f32 %v6300, %v6587
        %v6600 = vadd.f32 %v6301, %v6589
        %v6601 = vadd.f32 %v6302, %v6516
        %v6602 = vadd.f32 %v6303, %v6518
        %v6603 = vadd.f32 %v6304, %v6593
        %v6604 = vadd.f32 %v6305, %v6595
        %v6605 = vld [vmem:[#allocation11] sm:$0xf]
        %v6607 = vlaneseq
        %v6608 = vshrl.u32 %v6607, 7
        %v6609 = vsub.s32 0, %v6608
        %v6610 = vrot.slane %v6605, %v6609
        %v6611 = vlaneseq
        %v6612 = vshrl.u32 %v6611, 7
        %v6613 = vsub.s32 1, %v6612
        %v6614 = vrot.slane %v6605, %v6613
        %v6615 = vlaneseq
        %v6616 = vshrl.u32 %v6615, 7
        %v6617 = vsub.s32 2, %v6616
        %v6618 = vrot.slane %v6605, %v6617
        %v6619 = vlaneseq
        %v6620 = vshrl.u32 %v6619, 7
        %v6621 = vsub.s32 3, %v6620
        %v6622 = vrot.slane %v6605, %v6621
        %v6627 = vadd.f32 %v6597, %v6610
        %v6628 = vadd.f32 %v6598, %v6614
        %v6629 = vadd.f32 %v6599, %v6618
        %v6630 = vadd.f32 %v6600, %v6622
        %v6631 = vadd.f32 %v6601, %v6610
        %v6632 = vadd.f32 %v6602, %v6614
        %v6633 = vadd.f32 %v6603, %v6618
        %v6634 = vadd.f32 %v6604, %v6622
        %v6635 = vmax.f32 %v6627, 0.0
        %v6636 = vmax.f32 %v6628, 0.0
        %v6637 = vmax.f32 %v6629, 0.0
        %v6638 = vmax.f32 %v6630, 0.0
        %v6639 = vmax.f32 %v6631, 0.0
        %v6640 = vmax.f32 %v6632, 0.0
        %v6641 = vmax.f32 %v6633, 0.0
        %v6642 = vmax.f32 %v6634, 0.0
        %v6643 = vld [vmem:[%s7] sm:$0x7f]
        %vm6644 = vcmask 113664
        %v6646 = vsel %vm6644, %v6643, 0
        %v6649 = vsel %vm5827, %v6639, 0
        %v6652 = vsel %vm5827, %v6640, 0
        %v6655 = vsel %vm5827, %v6641, 0
        %v6658 = vsel %vm5827, %v6642, 0
        %6660 = vmatprep.subr.mxu0 %v6636
        %6661 = vmatpush1.msra.mxu0 %v6635
        %6662 = vmatprep.subr.mxu0 %v6652
        %6663 = vmatpush1.msra.mxu0 %v6649
        %6664 = vmatprep.subr.mxu0 0.0
        %6665 = vmatpush1.msra.mxu0 0.0
        %6666 = vmatprep.subr.mxu0 0.0
        %6667 = vmatpush1.msra.mxu0 0.0
        %6668 = vmatprep.subr.mxu0 0.0
        %6669 = vmatpush1.msra.mxu0 0.0
        %6670 = vmatprep.subr.mxu0 0.0
        %6671 = vmatpush1.msra.mxu0 0.0
        %6672 = vmatprep.subr.mxu0 0.0
        %6673 = vmatpush1.msra.mxu0 0.0
        %6674 = vmatprep.subr.mxu0 0.0
        %6675 = vmatpush1.msra.mxu0 0.0
        %6676 = vmatprep.subr.mxu0 0.0
        %6677 = vmatpush1.msra.mxu0 0.0
        %6678 = vmatprep.subr.mxu0 0.0
        %6679 = vmatpush1.msra.mxu0 0.0
        %6680 = vmatprep.subr.mxu0 0.0
        %6681 = vmatpush1.msra.mxu0 0.0
        %6682 = vmatprep.subr.mxu0 0.0
        %6683 = vmatpush1.msra.mxu0 0.0
        %6684 = vmatprep.subr.mxu0 0.0
        %6685 = vmatpush1.msra.mxu0 0.0
        %6686 = vmatprep.subr.mxu0 0.0
        %6687 = vmatpush1.msra.mxu0 0.0
        %6688 = vmatprep.subr.mxu0 0.0
        %6689 = vmatpush1.msra.mxu0 0.0
        %6690 = vmatprep.subr.mxu0 0.0
        %6691 = vmatpush1.msra.mxu0 0.0
        %6692 = vmatprep.subr.mxu0 0.0
        %6693 = vmatpush1.msra.mxu0 0.0
        %6694 = vmatprep.subr.mxu0 0.0
        %6695 = vmatpush1.msra.mxu0 0.0
        %6696 = vmatprep.subr.mxu0 0.0
        %6697 = vmatpush1.msra.mxu0 0.0
        %6698 = vmatprep.subr.mxu0 0.0
        %6699 = vmatpush1.msra.mxu0 0.0
        %6700 = vmatprep.subr.mxu0 0.0
        %6701 = vmatpush1.msra.mxu0 0.0
        %6702 = vmatprep.subr.mxu0 0.0
        %6703 = vmatpush1.msra.mxu0 0.0
        %6704 = vmatprep.subr.mxu0 0.0
        %6705 = vmatpush1.msra.mxu0 0.0
        %6706 = vmatprep.subr.mxu0 0.0
        %6707 = vmatpush1.msra.mxu0 0.0
        %6708 = vmatprep.subr.mxu0 0.0
        %6709 = vmatpush1.msra.mxu0 0.0
        %6710 = vmatprep.subr.mxu0 0.0
        %6711 = vmatpush1.msra.mxu0 0.0
        %6712 = vmatprep.subr.mxu0 0.0
        %6713 = vmatpush1.msra.mxu0 0.0
        %6714 = vmatprep.subr.mxu0 0.0
        %6715 = vmatpush1.msra.mxu0 0.0
        %6716 = vmatprep.subr.mxu0 0.0
        %6717 = vmatpush1.msra.mxu0 0.0
        %6718 = vmatprep.subr.mxu0 0.0
        %6719 = vmatpush1.msra.mxu0 0.0
        %6720 = vmatprep.subr.mxu0 0.0
        %6721 = vmatpush1.msra.mxu0 0.0
        %6722 = vmatprep.subr.mxu0 0.0
        %6723 = vmatpush1.msra.mxu0 0.0
        %6724 = vmatprep.mubr.f32.mxu0 0.0
        %6725 = vmatmul.mubr.f32.gmra.mrb[0].mxu0 %v6646
        %v6726 = vpop.f32.mrb[0].mxu0
        %v6727 = vadd.f32 0.0, %v6726
        %v6728 = vpop.f32.mrb[0].mxu0
        %v6729 = vadd.f32 0.0, %v6728
        %6730 = vdwg.mxu0
        %6731 = vmatprep.subr.mxu0 %v6638
        %6732 = vmatpush1.msra.mxu0 %v6637
        %6733 = vmatprep.subr.mxu0 %v6658
        %6734 = vmatpush1.msra.mxu0 %v6655
        %6735 = vmatprep.subr.mxu0 0.0
        %6736 = vmatpush1.msra.mxu0 0.0
        %6737 = vmatprep.subr.mxu0 0.0
        %6738 = vmatpush1.msra.mxu0 0.0
        %6739 = vmatprep.subr.mxu0 0.0
        %6740 = vmatpush1.msra.mxu0 0.0
        %6741 = vmatprep.subr.mxu0 0.0
        %6742 = vmatpush1.msra.mxu0 0.0
        %6743 = vmatprep.subr.mxu0 0.0
        %6744 = vmatpush1.msra.mxu0 0.0
        %6745 = vmatprep.subr.mxu0 0.0
        %6746 = vmatpush1.msra.mxu0 0.0
        %6747 = vmatprep.subr.mxu0 0.0
        %6748 = vmatpush1.msra.mxu0 0.0
        %6749 = vmatprep.subr.mxu0 0.0
        %6750 = vmatpush1.msra.mxu0 0.0
        %6751 = vmatprep.subr.mxu0 0.0
        %6752 = vmatpush1.msra.mxu0 0.0
        %6753 = vmatprep.subr.mxu0 0.0
        %6754 = vmatpush1.msra.mxu0 0.0
        %6755 = vmatprep.subr.mxu0 0.0
        %6756 = vmatpush1.msra.mxu0 0.0
        %6757 = vmatprep.subr.mxu0 0.0
        %6758 = vmatpush1.msra.mxu0 0.0
        %6759 = vmatprep.subr.mxu0 0.0
        %6760 = vmatpush1.msra.mxu0 0.0
        %6761 = vmatprep.subr.mxu0 0.0
        %6762 = vmatpush1.msra.mxu0 0.0
        %6763 = vmatprep.subr.mxu0 0.0
        %6764 = vmatpush1.msra.mxu0 0.0
        %6765 = vmatprep.subr.mxu0 0.0
        %6766 = vmatpush1.msra.mxu0 0.0
        %6767 = vmatprep.subr.mxu0 0.0
        %6768 = vmatpush1.msra.mxu0 0.0
        %6769 = vmatprep.subr.mxu0 0.0
        %6770 = vmatpush1.msra.mxu0 0.0
        %6771 = vmatprep.subr.mxu0 0.0
        %6772 = vmatpush1.msra.mxu0 0.0
        %6773 = vmatprep.subr.mxu0 0.0
        %6774 = vmatpush1.msra.mxu0 0.0
        %6775 = vmatprep.subr.mxu0 0.0
        %6776 = vmatpush1.msra.mxu0 0.0
        %6777 = vmatprep.subr.mxu0 0.0
        %6778 = vmatpush1.msra.mxu0 0.0
        %6779 = vmatprep.subr.mxu0 0.0
        %6780 = vmatpush1.msra.mxu0 0.0
        %6781 = vmatprep.subr.mxu0 0.0
        %6782 = vmatpush1.msra.mxu0 0.0
        %6783 = vmatprep.subr.mxu0 0.0
        %6784 = vmatpush1.msra.mxu0 0.0
        %6785 = vmatprep.subr.mxu0 0.0
        %6786 = vmatpush1.msra.mxu0 0.0
        %6787 = vmatprep.subr.mxu0 0.0
        %6788 = vmatpush1.msra.mxu0 0.0
        %6789 = vmatprep.subr.mxu0 0.0
        %6790 = vmatpush1.msra.mxu0 0.0
        %6791 = vmatprep.subr.mxu0 0.0
        %6792 = vmatpush1.msra.mxu0 0.0
        %6793 = vmatprep.subr.mxu0 0.0
        %6794 = vmatpush1.msra.mxu0 0.0
        %6795 = vmatprep.mubr.f32.mxu0 0.0
        %6796 = vmatmul.mubr.f32.gmra.mrb[0].mxu0 %v6646
        %v6797 = vpop.f32.mrb[0].mxu0
        %v6798 = vadd.f32 0.0, %v6797
        %v6799 = vpop.f32.mrb[0].mxu0
        %v6800 = vadd.f32 0.0, %v6799
        %6801 = vdwg.mxu0
        %s6802 = scalar_lea.vmem %s7, 8
        %v6803 = vld [vmem:[%s6802] sm:$0x7f]
        %v6805 = vsel %vm6644, %v6803, 0
        %6807 = vmatprep.subr.mxu0 %v6636
        %6808 = vmatpush1.msra.mxu0 %v6635
        %6809 = vmatprep.subr.mxu0 %v6652
        %6810 = vmatpush1.msra.mxu0 %v6649
        %6811 = vmatprep.subr.mxu0 0.0
        %6812 = vmatpush1.msra.mxu0 0.0
        %6813 = vmatprep.subr.mxu0 0.0
        %6814 = vmatpush1.msra.mxu0 0.0
        %6815 = vmatprep.subr.mxu0 0.0
        %6816 = vmatpush1.msra.mxu0 0.0
        %6817 = vmatprep.subr.mxu0 0.0
        %6818 = vmatpush1.msra.mxu0 0.0
        %6819 = vmatprep.subr.mxu0 0.0
        %6820 = vmatpush1.msra.mxu0 0.0
        %6821 = vmatprep.subr.mxu0 0.0
        %6822 = vmatpush1.msra.mxu0 0.0
        %6823 = vmatprep.subr.mxu0 0.0
        %6824 = vmatpush1.msra.mxu0 0.0
        %6825 = vmatprep.subr.mxu0 0.0
        %6826 = vmatpush1.msra.mxu0 0.0
        %6827 = vmatprep.subr.mxu0 0.0
        %6828 = vmatpush1.msra.mxu0 0.0
        %6829 = vmatprep.subr.mxu0 0.0
        %6830 = vmatpush1.msra.mxu0 0.0
        %6831 = vmatprep.subr.mxu0 0.0
        %6832 = vmatpush1.msra.mxu0 0.0
        %6833 = vmatprep.subr.mxu0 0.0
        %6834 = vmatpush1.msra.mxu0 0.0
        %6835 = vmatprep.subr.mxu0 0.0
        %6836 = vmatpush1.msra.mxu0 0.0
        %6837 = vmatprep.subr.mxu0 0.0
        %6838 = vmatpush1.msra.mxu0 0.0
        %6839 = vmatprep.subr.mxu0 0.0
        %6840 = vmatpush1.msra.mxu0 0.0
        %6841 = vmatprep.subr.mxu0 0.0
        %6842 = vmatpush1.msra.mxu0 0.0
        %6843 = vmatprep.subr.mxu0 0.0
        %6844 = vmatpush1.msra.mxu0 0.0
        %6845 = vmatprep.subr.mxu0 0.0
        %6846 = vmatpush1.msra.mxu0 0.0
        %6847 = vmatprep.subr.mxu0 0.0
        %6848 = vmatpush1.msra.mxu0 0.0
        %6849 = vmatprep.subr.mxu0 0.0
        %6850 = vmatpush1.msra.mxu0 0.0
        %6851 = vmatprep.subr.mxu0 0.0
        %6852 = vmatpush1.msra.mxu0 0.0
        %6853 = vmatprep.subr.mxu0 0.0
        %6854 = vmatpush1.msra.mxu0 0.0
        %6855 = vmatprep.subr.mxu0 0.0
        %6856 = vmatpush1.msra.mxu0 0.0
        %6857 = vmatprep.subr.mxu0 0.0
        %6858 = vmatpush1.msra.mxu0 0.0
        %6859 = vmatprep.subr.mxu0 0.0
        %6860 = vmatpush1.msra.mxu0 0.0
        %6861 = vmatprep.subr.mxu0 0.0
        %6862 = vmatpush1.msra.mxu0 0.0
        %6863 = vmatprep.subr.mxu0 0.0
        %6864 = vmatpush1.msra.mxu0 0.0
        %6865 = vmatprep.subr.mxu0 0.0
        %6866 = vmatpush1.msra.mxu0 0.0
        %6867 = vmatprep.subr.mxu0 0.0
        %6868 = vmatpush1.msra.mxu0 0.0
        %6869 = vmatprep.subr.mxu0 0.0
        %6870 = vmatpush1.msra.mxu0 0.0
        %6871 = vmatprep.mubr.f32.mxu0 0.0
        %6872 = vmatmul.mubr.f32.gmra.mrb[0].mxu0 %v6805
        %v6873 = vpop.f32.mrb[0].mxu0
        %v6874 = vadd.f32 0.0, %v6873
        %v6875 = vpop.f32.mrb[0].mxu0
        %v6876 = vadd.f32 0.0, %v6875
        %6877 = vdwg.mxu0
        %6878 = vmatprep.subr.mxu0 %v6638
        %6879 = vmatpush1.msra.mxu0 %v6637
        %6880 = vmatprep.subr.mxu0 %v6658
        %6881 = vmatpush1.msra.mxu0 %v6655
        %6882 = vmatprep.subr.mxu0 0.0
        %6883 = vmatpush1.msra.mxu0 0.0
        %6884 = vmatprep.subr.mxu0 0.0
        %6885 = vmatpush1.msra.mxu0 0.0
        %6886 = vmatprep.subr.mxu0 0.0
        %6887 = vmatpush1.msra.mxu0 0.0
        %6888 = vmatprep.subr.mxu0 0.0
        %6889 = vmatpush1.msra.mxu0 0.0
        %6890 = vmatprep.subr.mxu0 0.0
        %6891 = vmatpush1.msra.mxu0 0.0
        %6892 = vmatprep.subr.mxu0 0.0
        %6893 = vmatpush1.msra.mxu0 0.0
        %6894 = vmatprep.subr.mxu0 0.0
        %6895 = vmatpush1.msra.mxu0 0.0
        %6896 = vmatprep.subr.mxu0 0.0
        %6897 = vmatpush1.msra.mxu0 0.0
        %6898 = vmatprep.subr.mxu0 0.0
        %6899 = vmatpush1.msra.mxu0 0.0
        %6900 = vmatprep.subr.mxu0 0.0
        %6901 = vmatpush1.msra.mxu0 0.0
        %6902 = vmatprep.subr.mxu0 0.0
        %6903 = vmatpush1.msra.mxu0 0.0
        %6904 = vmatprep.subr.mxu0 0.0
        %6905 = vmatpush1.msra.mxu0 0.0
        %6906 = vmatprep.subr.mxu0 0.0
        %6907 = vmatpush1.msra.mxu0 0.0
        %6908 = vmatprep.subr.mxu0 0.0
        %6909 = vmatpush1.msra.mxu0 0.0
        %6910 = vmatprep.subr.mxu0 0.0
        %6911 = vmatpush1.msra.mxu0 0.0
        %6912 = vmatprep.subr.mxu0 0.0
        %6913 = vmatpush1.msra.mxu0 0.0
        %6914 = vmatprep.subr.mxu0 0.0
        %6915 = vmatpush1.msra.mxu0 0.0
        %6916 = vmatprep.subr.mxu0 0.0
        %6917 = vmatpush1.msra.mxu0 0.0
        %6918 = vmatprep.subr.mxu0 0.0
        %6919 = vmatpush1.msra.mxu0 0.0
        %6920 = vmatprep.subr.mxu0 0.0
        %6921 = vmatpush1.msra.mxu0 0.0
        %6922 = vmatprep.subr.mxu0 0.0
        %6923 = vmatpush1.msra.mxu0 0.0
        %6924 = vmatprep.subr.mxu0 0.0
        %6925 = vmatpush1.msra.mxu0 0.0
        %6926 = vmatprep.subr.mxu0 0.0
        %6927 = vmatpush1.msra.mxu0 0.0
        %6928 = vmatprep.subr.mxu0 0.0
        %6929 = vmatpush1.msra.mxu0 0.0
        %6930 = vmatprep.subr.mxu0 0.0
        %6931 = vmatpush1.msra.mxu0 0.0
        %6932 = vmatprep.subr.mxu0 0.0
        %6933 = vmatpush1.msra.mxu0 0.0
        %6934 = vmatprep.subr.mxu0 0.0
        %6935 = vmatpush1.msra.mxu0 0.0
        %6936 = vmatprep.subr.mxu0 0.0
        %6937 = vmatpush1.msra.mxu0 0.0
        %6938 = vmatprep.subr.mxu0 0.0
        %6939 = vmatpush1.msra.mxu0 0.0
        %6940 = vmatprep.subr.mxu0 0.0
        %6941 = vmatpush1.msra.mxu0 0.0
        %6942 = vmatprep.mubr.f32.mxu0 0.0
        %6943 = vmatmul.mubr.f32.gmra.mrb[0].mxu0 %v6805
        %v6944 = vpop.f32.mrb[0].mxu0
        %v6945 = vadd.f32 0.0, %v6944
        %v6946 = vpop.f32.mrb[0].mxu0
        %v6947 = vadd.f32 0.0, %v6946
        %6948 = vdwg.mxu0
        %v6949 = vmax.f32 %v6727, %v6874
        %v6950 = vmax.f32 %v6729, %v6876
        %v6951 = vmax.f32 %v6798, %v6945
        %v6952 = vmax.f32 %v6800, %v6947
        %v6953 = vld [vmem:[#allocation14] sm:$0xff]
        %v6954 = vld [vmem:[#allocation14 + $0x8] sm:$0xff]
        %v6955 = vld [vmem:[#allocation14 + $0x10] sm:$0xff]
        %v6956 = vld [vmem:[#allocation14 + $0x18] sm:$0xff]
        %v6957 = vld [vmem:[#allocation14 + $0x20] sm:$0xff]
        %v6958 = vld [vmem:[#allocation14 + $0x28] sm:$0xff]
        %v6959 = vld [vmem:[#allocation14 + $0x30] sm:$0xff]
        %v6960 = vld [vmem:[#allocation14 + $0x38] sm:$0xff]
        %v6961 = vld [vmem:[#allocation14 + $0x40] sm:$0xff]
        %v6962 = vld [vmem:[#allocation14 + $0x48] sm:$0xff]
        %v6963 = vld [vmem:[#allocation14 + $0x50] sm:$0xff]
        %v6964 = vld [vmem:[#allocation14 + $0x58] sm:$0xff]
        %v6965 = vld [vmem:[#allocation14 + $0x60] sm:$0xff]
        %v6966 = vld [vmem:[#allocation14 + $0x68] sm:$0xff]
        %v6967 = vld [vmem:[#allocation14 + $0x70] sm:$0xff]
        %v6968 = vld [vmem:[#allocation14 + $0x78] sm:$0xff]
        %v6969 = vld [vmem:[#allocation14 + $0x80] sm:$0xff]
        %v6970 = vld [vmem:[#allocation14 + $0x88] sm:$0xff]
        %v6971 = vld [vmem:[#allocation14 + $0x90] sm:$0xff]
        %v6972 = vld [vmem:[#allocation14 + $0x98] sm:$0xff]
        %v6973 = vld [vmem:[#allocation14 + $0xa0] sm:$0xff]
        %v6974 = vld [vmem:[#allocation14 + $0xa8] sm:$0xff]
        %v6975 = vld [vmem:[#allocation14 + $0xb0] sm:$0xff]
        %v6976 = vld [vmem:[#allocation14 + $0xb8] sm:$0xff]
        %v6977 = vld [vmem:[#allocation14 + $0xc0] sm:$0xff]
        %v6978 = vld [vmem:[#allocation14 + $0xc8] sm:$0xff]
        %v6979 = vld [vmem:[#allocation14 + $0xd0] sm:$0xff]
        %v6980 = vld [vmem:[#allocation14 + $0xd8] sm:$0xff]
        %v6981 = vld [vmem:[#allocation14 + $0xe0] sm:$0xff]
        %v6982 = vld [vmem:[#allocation14 + $0xe8] sm:$0xff]
        %v6983 = vld [vmem:[#allocation14 + $0xf0] sm:$0xff]
        %v6984 = vld [vmem:[#allocation14 + $0xf8] sm:$0xff]
        %v6985 = vld [vmem:[#allocation14 + $0x100] sm:$0xff]
        %v6986 = vld [vmem:[#allocation14 + $0x108] sm:$0xff]
        %v6987 = vld [vmem:[#allocation14 + $0x110] sm:$0xff]
        %v6988 = vld [vmem:[#allocation14 + $0x118] sm:$0xff]
        %v6989 = vld [vmem:[#allocation14 + $0x120] sm:$0xff]
        %v6990 = vld [vmem:[#allocation14 + $0x128] sm:$0xff]
        %v6991 = vld [vmem:[#allocation14 + $0x130] sm:$0xff]
        %v6992 = vld [vmem:[#allocation14 + $0x138] sm:$0xff]
        %v6993 = vld [vmem:[#allocation14 + $0x140] sm:$0xff]
        %v6994 = vld [vmem:[#allocation14 + $0x148] sm:$0xff]
        %v6995 = vld [vmem:[#allocation14 + $0x150] sm:$0xff]
        %v6996 = vld [vmem:[#allocation14 + $0x158] sm:$0xff]
        %v6997 = vld [vmem:[#allocation14 + $0x160] sm:$0xff]
        %v6998 = vld [vmem:[#allocation14 + $0x168] sm:$0xff]
        %v6999 = vld [vmem:[#allocation14 + $0x170] sm:$0xff]
        %v7000 = vld [vmem:[#allocation14 + $0x178] sm:$0xff]
        %v7001 = vld [vmem:[#allocation14 + $0x180] sm:$0xff]
        %v7002 = vld [vmem:[#allocation14 + $0x188] sm:$0xff]
        %v7003 = vld [vmem:[#allocation14 + $0x190] sm:$0xff]
        %v7004 = vld [vmem:[#allocation14 + $0x198] sm:$0xff]
        %v7005 = vld [vmem:[#allocation14 + $0x1a0] sm:$0xff]
        %v7006 = vld [vmem:[#allocation14 + $0x1a8] sm:$0xff]
        %v7007 = vld [vmem:[#allocation14 + $0x1b0] sm:$0xff]
        %v7008 = vld [vmem:[#allocation14 + $0x1b8] sm:$0xff]
        %v7009 = vld [vmem:[#allocation14 + $0x1c0] sm:$0xff]
        %v7010 = vld [vmem:[#allocation14 + $0x1c8] sm:$0xff]
        %v7011 = vld [vmem:[#allocation14 + $0x1d0] sm:$0xff]
        %v7012 = vld [vmem:[#allocation14 + $0x1d8] sm:$0xff]
        %v7013 = vld [vmem:[#allocation14 + $0x1e0] sm:$0xff]
        %v7014 = vld [vmem:[#allocation14 + $0x1e8] sm:$0xff]
        %v7015 = vld [vmem:[#allocation14 + $0x1f0] sm:$0xff]
        %v7016 = vld [vmem:[#allocation14 + $0x1f8] sm:$0xff]
        %v7017 = vld [vmem:[#allocation14 + $0x200] sm:$0xff]
        %v7018 = vld [vmem:[#allocation14 + $0x208] sm:$0xff]
        %v7019 = vld [vmem:[#allocation14 + $0x210] sm:$0xff]
        %v7020 = vld [vmem:[#allocation14 + $0x218] sm:$0xff]
        %v7021 = vld [vmem:[#allocation14 + $0x220] sm:$0xff]
        %v7022 = vld [vmem:[#allocation14 + $0x228] sm:$0xff]
        %v7023 = vld [vmem:[#allocation14 + $0x230] sm:$0xff]
        %v7024 = vld [vmem:[#allocation14 + $0x238] sm:$0xff]
        %v7025 = vld [vmem:[#allocation14 + $0x240] sm:$0xff]
        %v7026 = vld [vmem:[#allocation14 + $0x248] sm:$0xff]
        %v7027 = vld [vmem:[#allocation14 + $0x250] sm:$0xff]
        %v7028 = vld [vmem:[#allocation14 + $0x258] sm:$0xff]
        %v7029 = vld [vmem:[#allocation14 + $0x260] sm:$0xff]
        %v7030 = vld [vmem:[#allocation14 + $0x268] sm:$0xff]
        %v7031 = vld [vmem:[#allocation14 + $0x270] sm:$0xff]
        %v7032 = vld [vmem:[#allocation14 + $0x278] sm:$0xff]
        %v7033 = vld [vmem:[#allocation14 + $0x280] sm:$0xff]
        %v7034 = vld [vmem:[#allocation14 + $0x288] sm:$0xff]
        %v7035 = vld [vmem:[#allocation14 + $0x290] sm:$0xff]
        %v7036 = vld [vmem:[#allocation14 + $0x298] sm:$0xff]
        %v7037 = vld [vmem:[#allocation14 + $0x2a0] sm:$0xff]
        %v7038 = vld [vmem:[#allocation14 + $0x2a8] sm:$0xff]
        %v7039 = vld [vmem:[#allocation14 + $0x2b0] sm:$0xff]
        %v7040 = vld [vmem:[#allocation14 + $0x2b8] sm:$0xff]
        %v7041 = vld [vmem:[#allocation14 + $0x2c0] sm:$0xff]
        %v7042 = vld [vmem:[#allocation14 + $0x2c8] sm:$0xff]
        %v7043 = vld [vmem:[#allocation14 + $0x2d0] sm:$0xff]
        %v7044 = vld [vmem:[#allocation14 + $0x2d8] sm:$0xff]
        %v7045 = vld [vmem:[#allocation14 + $0x2e0] sm:$0xff]
        %v7046 = vld [vmem:[#allocation14 + $0x2e8] sm:$0xff]
        %v7047 = vld [vmem:[#allocation14 + $0x2f0] sm:$0xff]
        %v7048 = vld [vmem:[#allocation14 + $0x2f8] sm:$0xff]
        %v7049 = vld [vmem:[#allocation14 + $0x300] sm:$0xff]
        %v7050 = vld [vmem:[#allocation14 + $0x308] sm:$0xff]
        %v7051 = vld [vmem:[#allocation14 + $0x310] sm:$0xff]
        %v7052 = vld [vmem:[#allocation14 + $0x318] sm:$0xff]
        %v7053 = vld [vmem:[#allocation14 + $0x320] sm:$0xff]
        %v7054 = vld [vmem:[#allocation14 + $0x328] sm:$0xff]
        %v7055 = vld [vmem:[#allocation14 + $0x330] sm:$0xff]
        %v7056 = vld [vmem:[#allocation14 + $0x338] sm:$0xff]
        %v7057 = vld [vmem:[#allocation14 + $0x340] sm:$0xff]
        %v7058 = vld [vmem:[#allocation14 + $0x348] sm:$0xff]
        %v7059 = vld [vmem:[#allocation14 + $0x350] sm:$0xff]
        %v7060 = vld [vmem:[#allocation14 + $0x358] sm:$0xff]
        %v7061 = vld [vmem:[#allocation14 + $0x360] sm:$0xff]
        %v7062 = vld [vmem:[#allocation14 + $0x368] sm:$0xff]
        %v7063 = vld [vmem:[#allocation14 + $0x370] sm:$0xff]
        %v7064 = vld [vmem:[#allocation14 + $0x378] sm:$0xff]
        %v7066 = vsel %vm4682, %v6952, 0
        %7068 = vmatprep.subr.mxu0 %v6954
        %7069 = vmatpush1.msra.mxu0 %v6953
        %7070 = vmatprep.subr.mxu0 %v6956
        %7071 = vmatpush1.msra.mxu0 %v6955
        %7072 = vmatprep.subr.mxu0 %v6958
        %7073 = vmatpush1.msra.mxu0 %v6957
        %7074 = vmatprep.subr.mxu0 %v6960
        %7075 = vmatpush1.msra.mxu0 %v6959
        %7076 = vmatprep.subr.mxu0 %v6962
        %7077 = vmatpush1.msra.mxu0 %v6961
        %7078 = vmatprep.subr.mxu0 %v6964
        %7079 = vmatpush1.msra.mxu0 %v6963
        %7080 = vmatprep.subr.mxu0 %v6966
        %7081 = vmatpush1.msra.mxu0 %v6965
        %7082 = vmatprep.subr.mxu0 %v6968
        %7083 = vmatpush1.msra.mxu0 %v6967
        %7084 = vmatprep.subr.mxu0 %v6970
        %7085 = vmatpush1.msra.mxu0 %v6969
        %7086 = vmatprep.subr.mxu0 %v6972
        %7087 = vmatpush1.msra.mxu0 %v6971
        %7088 = vmatprep.subr.mxu0 %v6974
        %7089 = vmatpush1.msra.mxu0 %v6973
        %7090 = vmatprep.subr.mxu0 %v6976
        %7091 = vmatpush1.msra.mxu0 %v6975
        %7092 = vmatprep.subr.mxu0 %v6978
        %7093 = vmatpush1.msra.mxu0 %v6977
        %7094 = vmatprep.subr.mxu0 %v6980
        %7095 = vmatpush1.msra.mxu0 %v6979
        %7096 = vmatprep.subr.mxu0 %v6982
        %7097 = vmatpush1.msra.mxu0 %v6981
        %7098 = vmatprep.subr.mxu0 %v6984
        %7099 = vmatpush1.msra.mxu0 %v6983
        %7100 = vmatprep.subr.mxu0 %v6986
        %7101 = vmatpush1.msra.mxu0 %v6985
        %7102 = vmatprep.subr.mxu0 %v6988
        %7103 = vmatpush1.msra.mxu0 %v6987
        %7104 = vmatprep.subr.mxu0 %v6990
        %7105 = vmatpush1.msra.mxu0 %v6989
        %7106 = vmatprep.subr.mxu0 %v6992
        %7107 = vmatpush1.msra.mxu0 %v6991
        %7108 = vmatprep.subr.mxu0 %v6994
        %7109 = vmatpush1.msra.mxu0 %v6993
        %7110 = vmatprep.subr.mxu0 %v6996
        %7111 = vmatpush1.msra.mxu0 %v6995
        %7112 = vmatprep.subr.mxu0 %v6998
        %7113 = vmatpush1.msra.mxu0 %v6997
        %7114 = vmatprep.subr.mxu0 %v7000
        %7115 = vmatpush1.msra.mxu0 %v6999
        %7116 = vmatprep.subr.mxu0 %v7002
        %7117 = vmatpush1.msra.mxu0 %v7001
        %7118 = vmatprep.subr.mxu0 %v7004
        %7119 = vmatpush1.msra.mxu0 %v7003
        %7120 = vmatprep.subr.mxu0 %v7006
        %7121 = vmatpush1.msra.mxu0 %v7005
        %7122 = vmatprep.subr.mxu0 %v7008
        %7123 = vmatpush1.msra.mxu0 %v7007
        %7124 = vmatprep.subr.mxu0 %v7010
        %7125 = vmatpush1.msra.mxu0 %v7009
        %7126 = vmatprep.subr.mxu0 %v7012
        %7127 = vmatpush1.msra.mxu0 %v7011
        %7128 = vmatprep.subr.mxu0 %v7014
        %7129 = vmatpush1.msra.mxu0 %v7013
        %7130 = vmatprep.subr.mxu0 %v7016
        %7131 = vmatpush1.msra.mxu0 %v7015
        %7132 = vmatprep.mubr.f32.mxu0 %v6950
        %7133 = vmatmul.mubr.f32.gmra.mrb[0].mxu0 %v6949
        %v7134 = vpop.f32.mrb[0].mxu0
        %v7135 = vadd.f32 0.0, %v7134
        %v7136 = vpop.f32.mrb[0].mxu0
        %v7137 = vadd.f32 0.0, %v7136
        %7138 = vdwg.mxu0
        %7139 = vmatprep.subr.mxu0 %v7018
        %7140 = vmatpush1.msra.mxu0 %v7017
        %7141 = vmatprep.subr.mxu0 %v7020
        %7142 = vmatpush1.msra.mxu0 %v7019
        %7143 = vmatprep.subr.mxu0 %v7022
        %7144 = vmatpush1.msra.mxu0 %v7021
        %7145 = vmatprep.subr.mxu0 %v7024
        %7146 = vmatpush1.msra.mxu0 %v7023
        %7147 = vmatprep.subr.mxu0 %v7026
        %7148 = vmatpush1.msra.mxu0 %v7025
        %7149 = vmatprep.subr.mxu0 %v7028
        %7150 = vmatpush1.msra.mxu0 %v7027
        %7151 = vmatprep.subr.mxu0 %v7030
        %7152 = vmatpush1.msra.mxu0 %v7029
        %7153 = vmatprep.subr.mxu0 %v7032
        %7154 = vmatpush1.msra.mxu0 %v7031
        %7155 = vmatprep.subr.mxu0 %v7034
        %7156 = vmatpush1.msra.mxu0 %v7033
        %7157 = vmatprep.subr.mxu0 %v7036
        %7158 = vmatpush1.msra.mxu0 %v7035
        %7159 = vmatprep.subr.mxu0 %v7038
        %7160 = vmatpush1.msra.mxu0 %v7037
        %7161 = vmatprep.subr.mxu0 %v7040
        %7162 = vmatpush1.msra.mxu0 %v7039
        %7163 = vmatprep.subr.mxu0 %v7042
        %7164 = vmatpush1.msra.mxu0 %v7041
        %7165 = vmatprep.subr.mxu0 %v7044
        %7166 = vmatpush1.msra.mxu0 %v7043
        %7167 = vmatprep.subr.mxu0 %v7046
        %7168 = vmatpush1.msra.mxu0 %v7045
        %7169 = vmatprep.subr.mxu0 %v7048
        %7170 = vmatpush1.msra.mxu0 %v7047
        %7171 = vmatprep.subr.mxu0 %v7050
        %7172 = vmatpush1.msra.mxu0 %v7049
        %7173 = vmatprep.subr.mxu0 %v7052
        %7174 = vmatpush1.msra.mxu0 %v7051
        %7175 = vmatprep.subr.mxu0 %v7054
        %7176 = vmatpush1.msra.mxu0 %v7053
        %7177 = vmatprep.subr.mxu0 %v7056
        %7178 = vmatpush1.msra.mxu0 %v7055
        %7179 = vmatprep.subr.mxu0 %v7058
        %7180 = vmatpush1.msra.mxu0 %v7057
        %7181 = vmatprep.subr.mxu0 %v7060
        %7182 = vmatpush1.msra.mxu0 %v7059
        %7183 = vmatprep.subr.mxu0 %v7062
        %7184 = vmatpush1.msra.mxu0 %v7061
        %7185 = vmatprep.subr.mxu0 %v7064
        %7186 = vmatpush1.msra.mxu0 %v7063
        %7187 = vmatprep.subr.mxu0 0.0
        %7188 = vmatpush1.msra.mxu0 0.0
        %7189 = vmatprep.subr.mxu0 0.0
        %7190 = vmatpush1.msra.mxu0 0.0
        %7191 = vmatprep.subr.mxu0 0.0
        %7192 = vmatpush1.msra.mxu0 0.0
        %7193 = vmatprep.subr.mxu0 0.0
        %7194 = vmatpush1.msra.mxu0 0.0
        %7195 = vmatprep.subr.mxu0 0.0
        %7196 = vmatpush1.msra.mxu0 0.0
        %7197 = vmatprep.subr.mxu0 0.0
        %7198 = vmatpush1.msra.mxu0 0.0
        %7199 = vmatprep.subr.mxu0 0.0
        %7200 = vmatpush1.msra.mxu0 0.0
        %7201 = vmatprep.subr.mxu0 0.0
        %7202 = vmatpush1.msra.mxu0 0.0
        %7203 = vmatprep.mubr.f32.mxu0 %v7066
        %7204 = vmatmul.mubr.f32.gmra.mrb[0].mxu0 %v6951
        %v7205 = vpop.f32.mrb[0].mxu0
        %v7206 = vadd.f32 %v7135, %v7205
        %v7207 = vpop.f32.mrb[0].mxu0
        %v7208 = vadd.f32 %v7137, %v7207
        %7209 = vdwg.mxu0
        %s7210 = scalar_lea.vmem [#allocation14], 896
        %v7211 = vld [vmem:[%s7210] sm:$0xff]
        %v7212 = vld [vmem:[%s7210 + $0x8] sm:$0xff]
        %v7213 = vld [vmem:[%s7210 + $0x10] sm:$0xff]
        %v7214 = vld [vmem:[%s7210 + $0x18] sm:$0xff]
        %v7215 = vld [vmem:[%s7210 + $0x20] sm:$0xff]
        %v7216 = vld [vmem:[%s7210 + $0x28] sm:$0xff]
        %v7217 = vld [vmem:[%s7210 + $0x30] sm:$0xff]
        %v7218 = vld [vmem:[%s7210 + $0x38] sm:$0xff]
        %v7219 = vld [vmem:[%s7210 + $0x40] sm:$0xff]
        %v7220 = vld [vmem:[%s7210 + $0x48] sm:$0xff]
        %v7221 = vld [vmem:[%s7210 + $0x50] sm:$0xff]
        %v7222 = vld [vmem:[%s7210 + $0x58] sm:$0xff]
        %v7223 = vld [vmem:[%s7210 + $0x60] sm:$0xff]
        %v7224 = vld [vmem:[%s7210 + $0x68] sm:$0xff]
        %v7225 = vld [vmem:[%s7210 + $0x70] sm:$0xff]
        %v7226 = vld [vmem:[%s7210 + $0x78] sm:$0xff]
        %v7227 = vld [vmem:[%s7210 + $0x80] sm:$0xff]
        %v7228 = vld [vmem:[%s7210 + $0x88] sm:$0xff]
        %v7229 = vld [vmem:[%s7210 + $0x90] sm:$0xff]
        %v7230 = vld [vmem:[%s7210 + $0x98] sm:$0xff]
        %v7231 = vld [vmem:[%s7210 + $0xa0] sm:$0xff]
        %v7232 = vld [vmem:[%s7210 + $0xa8] sm:$0xff]
        %v7233 = vld [vmem:[%s7210 + $0xb0] sm:$0xff]
        %v7234 = vld [vmem:[%s7210 + $0xb8] sm:$0xff]
        %v7235 = vld [vmem:[%s7210 + $0xc0] sm:$0xff]
        %v7236 = vld [vmem:[%s7210 + $0xc8] sm:$0xff]
        %v7237 = vld [vmem:[%s7210 + $0xd0] sm:$0xff]
        %v7238 = vld [vmem:[%s7210 + $0xd8] sm:$0xff]
        %v7239 = vld [vmem:[%s7210 + $0xe0] sm:$0xff]
        %v7240 = vld [vmem:[%s7210 + $0xe8] sm:$0xff]
        %v7241 = vld [vmem:[%s7210 + $0xf0] sm:$0xff]
        %v7242 = vld [vmem:[%s7210 + $0xf8] sm:$0xff]
        %v7243 = vld [vmem:[%s7210 + $0x100] sm:$0xff]
        %v7244 = vld [vmem:[%s7210 + $0x108] sm:$0xff]
        %v7245 = vld [vmem:[%s7210 + $0x110] sm:$0xff]
        %v7246 = vld [vmem:[%s7210 + $0x118] sm:$0xff]
        %v7247 = vld [vmem:[%s7210 + $0x120] sm:$0xff]
        %v7248 = vld [vmem:[%s7210 + $0x128] sm:$0xff]
        %v7249 = vld [vmem:[%s7210 + $0x130] sm:$0xff]
        %v7250 = vld [vmem:[%s7210 + $0x138] sm:$0xff]
        %v7251 = vld [vmem:[%s7210 + $0x140] sm:$0xff]
        %v7252 = vld [vmem:[%s7210 + $0x148] sm:$0xff]
        %v7253 = vld [vmem:[%s7210 + $0x150] sm:$0xff]
        %v7254 = vld [vmem:[%s7210 + $0x158] sm:$0xff]
        %v7255 = vld [vmem:[%s7210 + $0x160] sm:$0xff]
        %v7256 = vld [vmem:[%s7210 + $0x168] sm:$0xff]
        %v7257 = vld [vmem:[%s7210 + $0x170] sm:$0xff]
        %v7258 = vld [vmem:[%s7210 + $0x178] sm:$0xff]
        %v7259 = vld [vmem:[%s7210 + $0x180] sm:$0xff]
        %v7260 = vld [vmem:[%s7210 + $0x188] sm:$0xff]
        %v7261 = vld [vmem:[%s7210 + $0x190] sm:$0xff]
        %v7262 = vld [vmem:[%s7210 + $0x198] sm:$0xff]
        %v7263 = vld [vmem:[%s7210 + $0x1a0] sm:$0xff]
        %v7264 = vld [vmem:[%s7210 + $0x1a8] sm:$0xff]
        %v7265 = vld [vmem:[%s7210 + $0x1b0] sm:$0xff]
        %v7266 = vld [vmem:[%s7210 + $0x1b8] sm:$0xff]
        %v7267 = vld [vmem:[%s7210 + $0x1c0] sm:$0xff]
        %v7268 = vld [vmem:[%s7210 + $0x1c8] sm:$0xff]
        %v7269 = vld [vmem:[%s7210 + $0x1d0] sm:$0xff]
        %v7270 = vld [vmem:[%s7210 + $0x1d8] sm:$0xff]
        %v7271 = vld [vmem:[%s7210 + $0x1e0] sm:$0xff]
        %v7272 = vld [vmem:[%s7210 + $0x1e8] sm:$0xff]
        %v7273 = vld [vmem:[%s7210 + $0x1f0] sm:$0xff]
        %v7274 = vld [vmem:[%s7210 + $0x1f8] sm:$0xff]
        %v7275 = vld [vmem:[%s7210 + $0x200] sm:$0xff]
        %v7276 = vld [vmem:[%s7210 + $0x208] sm:$0xff]
        %v7277 = vld [vmem:[%s7210 + $0x210] sm:$0xff]
        %v7278 = vld [vmem:[%s7210 + $0x218] sm:$0xff]
        %v7279 = vld [vmem:[%s7210 + $0x220] sm:$0xff]
        %v7280 = vld [vmem:[%s7210 + $0x228] sm:$0xff]
        %v7281 = vld [vmem:[%s7210 + $0x230] sm:$0xff]
        %v7282 = vld [vmem:[%s7210 + $0x238] sm:$0xff]
        %v7283 = vld [vmem:[%s7210 + $0x240] sm:$0xff]
        %v7284 = vld [vmem:[%s7210 + $0x248] sm:$0xff]
        %v7285 = vld [vmem:[%s7210 + $0x250] sm:$0xff]
        %v7286 = vld [vmem:[%s7210 + $0x258] sm:$0xff]
        %v7287 = vld [vmem:[%s7210 + $0x260] sm:$0xff]
        %v7288 = vld [vmem:[%s7210 + $0x268] sm:$0xff]
        %v7289 = vld [vmem:[%s7210 + $0x270] sm:$0xff]
        %v7290 = vld [vmem:[%s7210 + $0x278] sm:$0xff]
        %v7291 = vld [vmem:[%s7210 + $0x280] sm:$0xff]
        %v7292 = vld [vmem:[%s7210 + $0x288] sm:$0xff]
        %v7293 = vld [vmem:[%s7210 + $0x290] sm:$0xff]
        %v7294 = vld [vmem:[%s7210 + $0x298] sm:$0xff]
        %v7295 = vld [vmem:[%s7210 + $0x2a0] sm:$0xff]
        %v7296 = vld [vmem:[%s7210 + $0x2a8] sm:$0xff]
        %v7297 = vld [vmem:[%s7210 + $0x2b0] sm:$0xff]
        %v7298 = vld [vmem:[%s7210 + $0x2b8] sm:$0xff]
        %v7299 = vld [vmem:[%s7210 + $0x2c0] sm:$0xff]
        %v7300 = vld [vmem:[%s7210 + $0x2c8] sm:$0xff]
        %v7301 = vld [vmem:[%s7210 + $0x2d0] sm:$0xff]
        %v7302 = vld [vmem:[%s7210 + $0x2d8] sm:$0xff]
        %v7303 = vld [vmem:[%s7210 + $0x2e0] sm:$0xff]
        %v7304 = vld [vmem:[%s7210 + $0x2e8] sm:$0xff]
        %v7305 = vld [vmem:[%s7210 + $0x2f0] sm:$0xff]
        %v7306 = vld [vmem:[%s7210 + $0x2f8] sm:$0xff]
        %v7307 = vld [vmem:[%s7210 + $0x300] sm:$0xff]
        %v7308 = vld [vmem:[%s7210 + $0x308] sm:$0xff]
        %v7309 = vld [vmem:[%s7210 + $0x310] sm:$0xff]
        %v7310 = vld [vmem:[%s7210 + $0x318] sm:$0xff]
        %v7311 = vld [vmem:[%s7210 + $0x320] sm:$0xff]
        %v7312 = vld [vmem:[%s7210 + $0x328] sm:$0xff]
        %v7313 = vld [vmem:[%s7210 + $0x330] sm:$0xff]
        %v7314 = vld [vmem:[%s7210 + $0x338] sm:$0xff]
        %v7315 = vld [vmem:[%s7210 + $0x340] sm:$0xff]
        %v7316 = vld [vmem:[%s7210 + $0x348] sm:$0xff]
        %v7317 = vld [vmem:[%s7210 + $0x350] sm:$0xff]
        %v7318 = vld [vmem:[%s7210 + $0x358] sm:$0xff]
        %v7319 = vld [vmem:[%s7210 + $0x360] sm:$0xff]
        %v7320 = vld [vmem:[%s7210 + $0x368] sm:$0xff]
        %v7321 = vld [vmem:[%s7210 + $0x370] sm:$0xff]
        %v7322 = vld [vmem:[%s7210 + $0x378] sm:$0xff]
        %7323 = vmatprep.subr.mxu0 %v7212
        %7324 = vmatpush1.msra.mxu0 %v7211
        %7325 = vmatprep.subr.mxu0 %v7214
        %7326 = vmatpush1.msra.mxu0 %v7213
        %7327 = vmatprep.subr.mxu0 %v7216
        %7328 = vmatpush1.msra.mxu0 %v7215
        %7329 = vmatprep.subr.mxu0 %v7218
        %7330 = vmatpush1.msra.mxu0 %v7217
        %7331 = vmatprep.subr.mxu0 %v7220
        %7332 = vmatpush1.msra.mxu0 %v7219
        %7333 = vmatprep.subr.mxu0 %v7222
        %7334 = vmatpush1.msra.mxu0 %v7221
        %7335 = vmatprep.subr.mxu0 %v7224
        %7336 = vmatpush1.msra.mxu0 %v7223
        %7337 = vmatprep.subr.mxu0 %v7226
        %7338 = vmatpush1.msra.mxu0 %v7225
        %7339 = vmatprep.subr.mxu0 %v7228
        %7340 = vmatpush1.msra.mxu0 %v7227
        %7341 = vmatprep.subr.mxu0 %v7230
        %7342 = vmatpush1.msra.mxu0 %v7229
        %7343 = vmatprep.subr.mxu0 %v7232
        %7344 = vmatpush1.msra.mxu0 %v7231
        %7345 = vmatprep.subr.mxu0 %v7234
        %7346 = vmatpush1.msra.mxu0 %v7233
        %7347 = vmatprep.subr.mxu0 %v7236
        %7348 = vmatpush1.msra.mxu0 %v7235
        %7349 = vmatprep.subr.mxu0 %v7238
        %7350 = vmatpush1.msra.mxu0 %v7237
        %7351 = vmatprep.subr.mxu0 %v7240
        %7352 = vmatpush1.msra.mxu0 %v7239
        %7353 = vmatprep.subr.mxu0 %v7242
        %7354 = vmatpush1.msra.mxu0 %v7241
        %7355 = vmatprep.subr.mxu0 %v7244
        %7356 = vmatpush1.msra.mxu0 %v7243
        %7357 = vmatprep.subr.mxu0 %v7246
        %7358 = vmatpush1.msra.mxu0 %v7245
        %7359 = vmatprep.subr.mxu0 %v7248
        %7360 = vmatpush1.msra.mxu0 %v7247
        %7361 = vmatprep.subr.mxu0 %v7250
        %7362 = vmatpush1.msra.mxu0 %v7249
        %7363 = vmatprep.subr.mxu0 %v7252
        %7364 = vmatpush1.msra.mxu0 %v7251
        %7365 = vmatprep.subr.mxu0 %v7254
        %7366 = vmatpush1.msra.mxu0 %v7253
        %7367 = vmatprep.subr.mxu0 %v7256
        %7368 = vmatpush1.msra.mxu0 %v7255
        %7369 = vmatprep.subr.mxu0 %v7258
        %7370 = vmatpush1.msra.mxu0 %v7257
        %7371 = vmatprep.subr.mxu0 %v7260
        %7372 = vmatpush1.msra.mxu0 %v7259
        %7373 = vmatprep.subr.mxu0 %v7262
        %7374 = vmatpush1.msra.mxu0 %v7261
        %7375 = vmatprep.subr.mxu0 %v7264
        %7376 = vmatpush1.msra.mxu0 %v7263
        %7377 = vmatprep.subr.mxu0 %v7266
        %7378 = vmatpush1.msra.mxu0 %v7265
        %7379 = vmatprep.subr.mxu0 %v7268
        %7380 = vmatpush1.msra.mxu0 %v7267
        %7381 = vmatprep.subr.mxu0 %v7270
        %7382 = vmatpush1.msra.mxu0 %v7269
        %7383 = vmatprep.subr.mxu0 %v7272
        %7384 = vmatpush1.msra.mxu0 %v7271
        %7385 = vmatprep.subr.mxu0 %v7274
        %7386 = vmatpush1.msra.mxu0 %v7273
        %7387 = vmatprep.mubr.f32.mxu0 %v6950
        %7388 = vmatmul.mubr.f32.gmra.mrb[0].mxu0 %v6949
        %v7389 = vpop.f32.mrb[0].mxu0
        %v7390 = vadd.f32 0.0, %v7389
        %v7391 = vpop.f32.mrb[0].mxu0
        %v7392 = vadd.f32 0.0, %v7391
        %7393 = vdwg.mxu0
        %7394 = vmatprep.subr.mxu0 %v7276
        %7395 = vmatpush1.msra.mxu0 %v7275
        %7396 = vmatprep.subr.mxu0 %v7278
        %7397 = vmatpush1.msra.mxu0 %v7277
        %7398 = vmatprep.subr.mxu0 %v7280
        %7399 = vmatpush1.msra.mxu0 %v7279
        %7400 = vmatprep.subr.mxu0 %v7282
        %7401 = vmatpush1.msra.mxu0 %v7281
        %7402 = vmatprep.subr.mxu0 %v7284
        %7403 = vmatpush1.msra.mxu0 %v7283
        %7404 = vmatprep.subr.mxu0 %v7286
        %7405 = vmatpush1.msra.mxu0 %v7285
        %7406 = vmatprep.subr.mxu0 %v7288
        %7407 = vmatpush1.msra.mxu0 %v7287
        %7408 = vmatprep.subr.mxu0 %v7290
        %7409 = vmatpush1.msra.mxu0 %v7289
        %7410 = vmatprep.subr.mxu0 %v7292
        %7411 = vmatpush1.msra.mxu0 %v7291
        %7412 = vmatprep.subr.mxu0 %v7294
        %7413 = vmatpush1.msra.mxu0 %v7293
        %7414 = vmatprep.subr.mxu0 %v7296
        %7415 = vmatpush1.msra.mxu0 %v7295
        %7416 = vmatprep.subr.mxu0 %v7298
        %7417 = vmatpush1.msra.mxu0 %v7297
        %7418 = vmatprep.subr.mxu0 %v7300
        %7419 = vmatpush1.msra.mxu0 %v7299
        %7420 = vmatprep.subr.mxu0 %v7302
        %7421 = vmatpush1.msra.mxu0 %v7301
        %7422 = vmatprep.subr.mxu0 %v7304
        %7423 = vmatpush1.msra.mxu0 %v7303
        %7424 = vmatprep.subr.mxu0 %v7306
        %7425 = vmatpush1.msra.mxu0 %v7305
        %7426 = vmatprep.subr.mxu0 %v7308
        %7427 = vmatpush1.msra.mxu0 %v7307
        %7428 = vmatprep.subr.mxu0 %v7310
        %7429 = vmatpush1.msra.mxu0 %v7309
        %7430 = vmatprep.subr.mxu0 %v7312
        %7431 = vmatpush1.msra.mxu0 %v7311
        %7432 = vmatprep.subr.mxu0 %v7314
        %7433 = vmatpush1.msra.mxu0 %v7313
        %7434 = vmatprep.subr.mxu0 %v7316
        %7435 = vmatpush1.msra.mxu0 %v7315
        %7436 = vmatprep.subr.mxu0 %v7318
        %7437 = vmatpush1.msra.mxu0 %v7317
        %7438 = vmatprep.subr.mxu0 %v7320
        %7439 = vmatpush1.msra.mxu0 %v7319
        %7440 = vmatprep.subr.mxu0 %v7322
        %7441 = vmatpush1.msra.mxu0 %v7321
        %7442 = vmatprep.subr.mxu0 0.0
        %7443 = vmatpush1.msra.mxu0 0.0
        %7444 = vmatprep.subr.mxu0 0.0
        %7445 = vmatpush1.msra.mxu0 0.0
        %7446 = vmatprep.subr.mxu0 0.0
        %7447 = vmatpush1.msra.mxu0 0.0
        %7448 = vmatprep.subr.mxu0 0.0
        %7449 = vmatpush1.msra.mxu0 0.0
        %7450 = vmatprep.subr.mxu0 0.0
        %7451 = vmatpush1.msra.mxu0 0.0
        %7452 = vmatprep.subr.mxu0 0.0
        %7453 = vmatpush1.msra.mxu0 0.0
        %7454 = vmatprep.subr.mxu0 0.0
        %7455 = vmatpush1.msra.mxu0 0.0
        %7456 = vmatprep.subr.mxu0 0.0
        %7457 = vmatpush1.msra.mxu0 0.0
        %7458 = vmatprep.mubr.f32.mxu0 %v7066
        %7459 = vmatmul.mubr.f32.gmra.mrb[0].mxu0 %v6951
        %v7460 = vpop.f32.mrb[0].mxu0
        %v7461 = vadd.f32 %v7390, %v7460
        %v7462 = vpop.f32.mrb[0].mxu0
        %v7463 = vadd.f32 %v7392, %v7462
        %7464 = vdwg.mxu0
        %v7465 = vmax.f32 %v7206, %v7461
        %v7466 = vmax.f32 %v7208, %v7463
        %7467 = vst [vmem:[#allocation4] sm:$0x7f] %v7465
        %vm7468 = vcmask 784384
        %7469 = vst.msk [vmem:[#allocation4 + $0x8] sm:$0x7f] %vm7468, %v7466
        %v7470 = vld [vmem:[#allocation4] ss:$8 sm:$0x3]
        %v7471 = vld [vmem:[#allocation16] sm:$0xff]
        %v7472 = vld [vmem:[#allocation16 + $0x8] sm:$0xff]
        %v7473 = vld [vmem:[#allocation16 + $0x10] sm:$0xff]
        %v7474 = vld [vmem:[#allocation16 + $0x18] sm:$0xff]
        %v7475 = vld [vmem:[#allocation16 + $0x20] sm:$0xff]
        %v7476 = vld [vmem:[#allocation16 + $0x28] sm:$0xff]
        %v7477 = vld [vmem:[#allocation16 + $0x30] sm:$0xff]
        %v7478 = vld [vmem:[#allocation16 + $0x38] sm:$0xff]
        %v7479 = vld [vmem:[#allocation16 + $0x40] sm:$0xff]
        %v7480 = vld [vmem:[#allocation16 + $0x48] sm:$0xff]
        %v7481 = vld [vmem:[#allocation16 + $0x50] sm:$0xff]
        %v7482 = vld [vmem:[#allocation16 + $0x58] sm:$0xff]
        %v7483 = vld [vmem:[#allocation16 + $0x60] sm:$0xff]
        %v7484 = vld [vmem:[#allocation16 + $0x68] sm:$0xff]
        %v7485 = vld [vmem:[#allocation16 + $0x70] sm:$0xff]
        %v7486 = vld [vmem:[#allocation16 + $0x78] sm:$0xff]
        %v7487 = vld [vmem:[#allocation16 + $0x80] sm:$0xff]
        %v7488 = vld [vmem:[#allocation16 + $0x88] sm:$0xff]
        %v7489 = vld [vmem:[#allocation16 + $0x90] sm:$0xff]
        %v7490 = vld [vmem:[#allocation16 + $0x98] sm:$0xff]
        %v7491 = vld [vmem:[#allocation16 + $0xa0] sm:$0xff]
        %v7492 = vld [vmem:[#allocation16 + $0xa8] sm:$0xff]
        %v7493 = vld [vmem:[#allocation16 + $0xb0] sm:$0xff]
        %v7494 = vld [vmem:[#allocation16 + $0xb8] sm:$0xff]
        %v7495 = vld [vmem:[#allocation16 + $0xc0] sm:$0xff]
        %v7496 = vld [vmem:[#allocation16 + $0xc8] sm:$0xff]
        %v7497 = vld [vmem:[#allocation16 + $0xd0] sm:$0xff]
        %v7498 = vld [vmem:[#allocation16 + $0xd8] sm:$0xff]
        %s7499 = scalar_lea.vmem [#allocation4], 1
        %v7500 = vld [vmem:[%s7499] ss:$8 sm:$0x3]
        %s7501 = scalar_lea.vmem [#allocation16], 224
        %v7502 = vld [vmem:[%s7501] sm:$0xff]
        %v7503 = vld [vmem:[%s7501 + $0x8] sm:$0xff]
        %v7504 = vld [vmem:[%s7501 + $0x10] sm:$0xff]
        %v7505 = vld [vmem:[%s7501 + $0x18] sm:$0xff]
        %v7506 = vld [vmem:[%s7501 + $0x20] sm:$0xff]
        %v7507 = vld [vmem:[%s7501 + $0x28] sm:$0xff]
        %v7508 = vld [vmem:[%s7501 + $0x30] sm:$0xff]
        %v7509 = vld [vmem:[%s7501 + $0x38] sm:$0xff]
        %v7510 = vld [vmem:[%s7501 + $0x40] sm:$0xff]
        %v7511 = vld [vmem:[%s7501 + $0x48] sm:$0xff]
        %v7512 = vld [vmem:[%s7501 + $0x50] sm:$0xff]
        %v7513 = vld [vmem:[%s7501 + $0x58] sm:$0xff]
        %v7514 = vld [vmem:[%s7501 + $0x60] sm:$0xff]
        %v7515 = vld [vmem:[%s7501 + $0x68] sm:$0xff]
        %v7516 = vld [vmem:[%s7501 + $0x70] sm:$0xff]
        %v7517 = vld [vmem:[%s7501 + $0x78] sm:$0xff]
        %v7518 = vld [vmem:[%s7501 + $0x80] sm:$0xff]
        %v7519 = vld [vmem:[%s7501 + $0x88] sm:$0xff]
        %v7520 = vld [vmem:[%s7501 + $0x90] sm:$0xff]
        %v7521 = vld [vmem:[%s7501 + $0x98] sm:$0xff]
        %v7522 = vld [vmem:[%s7501 + $0xa0] sm:$0xff]
        %v7523 = vld [vmem:[%s7501 + $0xa8] sm:$0xff]
        %v7524 = vld [vmem:[%s7501 + $0xb0] sm:$0xff]
        %v7525 = vld [vmem:[%s7501 + $0xb8] sm:$0xff]
        %v7526 = vld [vmem:[%s7501 + $0xc0] sm:$0xff]
        %v7527 = vld [vmem:[%s7501 + $0xc8] sm:$0xff]
        %v7528 = vld [vmem:[%s7501 + $0xd0] sm:$0xff]
        %v7529 = vld [vmem:[%s7501 + $0xd8] sm:$0xff]
        %v7531 = vlaneseq
        %v7532 = vshrl.u32 %v7531, 7
        %v7533 = vsub.s32 0, %v7532
        %v7534 = vrot.slane %v7500, %v7533
        %v7535 = vlaneseq
        %v7536 = vshrl.u32 %v7535, 7
        %v7537 = vsub.s32 1, %v7536
        %v7538 = vrot.slane %v7500, %v7537
        %v7540 = vsel %vm5115, %v7538, 0
        %7542 = vmatprep.subr.mxu0 0.0
        %7543 = vmatpush1.msra.mxu0 %v7502
        %7544 = vmatprep.subr.mxu0 0.0
        %7545 = vmatpush1.msra.mxu0 %v7503
        %7546 = vmatprep.subr.mxu0 0.0
        %7547 = vmatpush1.msra.mxu0 %v7504
        %7548 = vmatprep.subr.mxu0 0.0
        %7549 = vmatpush1.msra.mxu0 %v7505
        %7550 = vmatprep.subr.mxu0 0.0
        %7551 = vmatpush1.msra.mxu0 %v7506
        %7552 = vmatprep.subr.mxu0 0.0
        %7553 = vmatpush1.msra.mxu0 %v7507
        %7554 = vmatprep.subr.mxu0 0.0
        %7555 = vmatpush1.msra.mxu0 %v7508
        %7556 = vmatprep.subr.mxu0 0.0
        %7557 = vmatpush1.msra.mxu0 %v7509
        %7558 = vmatprep.subr.mxu0 0.0
        %7559 = vmatpush1.msra.mxu0 %v7510
        %7560 = vmatprep.subr.mxu0 0.0
        %7561 = vmatpush1.msra.mxu0 %v7511
        %7562 = vmatprep.subr.mxu0 0.0
        %7563 = vmatpush1.msra.mxu0 %v7512
        %7564 = vmatprep.subr.mxu0 0.0
        %7565 = vmatpush1.msra.mxu0 %v7513
        %7566 = vmatprep.subr.mxu0 0.0
        %7567 = vmatpush1.msra.mxu0 %v7514
        %7568 = vmatprep.subr.mxu0 0.0
        %7569 = vmatpush1.msra.mxu0 %v7515
        %7570 = vmatprep.subr.mxu0 0.0
        %7571 = vmatpush1.msra.mxu0 %v7516
        %7572 = vmatprep.subr.mxu0 0.0
        %7573 = vmatpush1.msra.mxu0 %v7517
        %7574 = vmatprep.subr.mxu0 0.0
        %7575 = vmatpush1.msra.mxu0 %v7518
        %7576 = vmatprep.subr.mxu0 0.0
        %7577 = vmatpush1.msra.mxu0 %v7519
        %7578 = vmatprep.subr.mxu0 0.0
        %7579 = vmatpush1.msra.mxu0 %v7520
        %7580 = vmatprep.subr.mxu0 0.0
        %7581 = vmatpush1.msra.mxu0 %v7521
        %7582 = vmatprep.subr.mxu0 0.0
        %7583 = vmatpush1.msra.mxu0 %v7522
        %7584 = vmatprep.subr.mxu0 0.0
        %7585 = vmatpush1.msra.mxu0 %v7523
        %7586 = vmatprep.subr.mxu0 0.0
        %7587 = vmatpush1.msra.mxu0 %v7524
        %7588 = vmatprep.subr.mxu0 0.0
        %7589 = vmatpush1.msra.mxu0 %v7525
        %7590 = vmatprep.subr.mxu0 0.0
        %7591 = vmatpush1.msra.mxu0 %v7526
        %7592 = vmatprep.subr.mxu0 0.0
        %7593 = vmatpush1.msra.mxu0 %v7527
        %7594 = vmatprep.subr.mxu0 0.0
        %7595 = vmatpush1.msra.mxu0 %v7528
        %7596 = vmatprep.subr.mxu0 0.0
        %7597 = vmatpush1.msra.mxu0 %v7529
        %7598 = vmatprep.subr.mxu0 0.0
        %7599 = vmatpush1.msra.mxu0 0.0
        %7600 = vmatprep.subr.mxu0 0.0
        %7601 = vmatpush1.msra.mxu0 0.0
        %7602 = vmatprep.subr.mxu0 0.0
        %7603 = vmatpush1.msra.mxu0 0.0
        %7604 = vmatprep.subr.mxu0 0.0
        %7605 = vmatpush1.msra.mxu0 0.0
        %7606 = vmatprep.mubr.f32.mxu0 %v7540
        %7607 = vmatmul.mubr.f32.gmra.mrb[0].mxu0 %v7534
        %v7608 = vpop.f32.mrb[0].mxu0
        %v7609 = vadd.f32 0.0, %v7608
        %v7610 = vpop.f32.mrb[0].mxu0
        %7611 = vdwg.mxu0
        %v7613 = vlaneseq
        %v7614 = vshrl.u32 %v7613, 7
        %v7615 = vsub.s32 0, %v7614
        %v7616 = vrot.slane %v7470, %v7615
        %v7617 = vlaneseq
        %v7618 = vshrl.u32 %v7617, 7
        %v7619 = vsub.s32 1, %v7618
        %v7620 = vrot.slane %v7470, %v7619
        %v7622 = vsel %vm5115, %v7620, 0
        %7624 = vmatprep.subr.mxu0 0.0
        %7625 = vmatpush1.msra.mxu0 %v7471
        %7626 = vmatprep.subr.mxu0 0.0
        %7627 = vmatpush1.msra.mxu0 %v7472
        %7628 = vmatprep.subr.mxu0 0.0
        %7629 = vmatpush1.msra.mxu0 %v7473
        %7630 = vmatprep.subr.mxu0 0.0
        %7631 = vmatpush1.msra.mxu0 %v7474
        %7632 = vmatprep.subr.mxu0 0.0
        %7633 = vmatpush1.msra.mxu0 %v7475
        %7634 = vmatprep.subr.mxu0 0.0
        %7635 = vmatpush1.msra.mxu0 %v7476
        %7636 = vmatprep.subr.mxu0 0.0
        %7637 = vmatpush1.msra.mxu0 %v7477
        %7638 = vmatprep.subr.mxu0 0.0
        %7639 = vmatpush1.msra.mxu0 %v7478
        %7640 = vmatprep.subr.mxu0 0.0
        %7641 = vmatpush1.msra.mxu0 %v7479
        %7642 = vmatprep.subr.mxu0 0.0
        %7643 = vmatpush1.msra.mxu0 %v7480
        %7644 = vmatprep.subr.mxu0 0.0
        %7645 = vmatpush1.msra.mxu0 %v7481
        %7646 = vmatprep.subr.mxu0 0.0
        %7647 = vmatpush1.msra.mxu0 %v7482
        %7648 = vmatprep.subr.mxu0 0.0
        %7649 = vmatpush1.msra.mxu0 %v7483
        %7650 = vmatprep.subr.mxu0 0.0
        %7651 = vmatpush1.msra.mxu0 %v7484
        %7652 = vmatprep.subr.mxu0 0.0
        %7653 = vmatpush1.msra.mxu0 %v7485
        %7654 = vmatprep.subr.mxu0 0.0
        %7655 = vmatpush1.msra.mxu0 %v7486
        %7656 = vmatprep.subr.mxu0 0.0
        %7657 = vmatpush1.msra.mxu0 %v7487
        %7658 = vmatprep.subr.mxu0 0.0
        %7659 = vmatpush1.msra.mxu0 %v7488
        %7660 = vmatprep.subr.mxu0 0.0
        %7661 = vmatpush1.msra.mxu0 %v7489
        %7662 = vmatprep.subr.mxu0 0.0
        %7663 = vmatpush1.msra.mxu0 %v7490
        %7664 = vmatprep.subr.mxu0 0.0
        %7665 = vmatpush1.msra.mxu0 %v7491
        %7666 = vmatprep.subr.mxu0 0.0
        %7667 = vmatpush1.msra.mxu0 %v7492
        %7668 = vmatprep.subr.mxu0 0.0
        %7669 = vmatpush1.msra.mxu0 %v7493
        %7670 = vmatprep.subr.mxu0 0.0
        %7671 = vmatpush1.msra.mxu0 %v7494
        %7672 = vmatprep.subr.mxu0 0.0
        %7673 = vmatpush1.msra.mxu0 %v7495
        %7674 = vmatprep.subr.mxu0 0.0
        %7675 = vmatpush1.msra.mxu0 %v7496
        %7676 = vmatprep.subr.mxu0 0.0
        %7677 = vmatpush1.msra.mxu0 %v7497
        %7678 = vmatprep.subr.mxu0 0.0
        %7679 = vmatpush1.msra.mxu0 %v7498
        %7680 = vmatprep.subr.mxu0 0.0
        %7681 = vmatpush1.msra.mxu0 0.0
        %7682 = vmatprep.subr.mxu0 0.0
        %7683 = vmatpush1.msra.mxu0 0.0
        %7684 = vmatprep.subr.mxu0 0.0
        %7685 = vmatpush1.msra.mxu0 0.0
        %7686 = vmatprep.subr.mxu0 0.0
        %7687 = vmatpush1.msra.mxu0 0.0
        %7688 = vmatprep.mubr.f32.mxu0 %v7622
        %7689 = vmatmul.mubr.f32.gmra.mrb[0].mxu0 %v7616
        %v7690 = vpop.f32.mrb[0].mxu0
        %v7691 = vadd.f32 %v7609, %v7690
        %v7692 = vpop.f32.mrb[0].mxu0
        %7693 = vdwg.mxu0
        %s7694 = scalar_lea.vmem [#allocation4], 2
        %v7695 = vld [vmem:[%s7694] ss:$8 sm:$0x3]
        %s7696 = scalar_lea.vmem [#allocation16], 448
        %v7697 = vld [vmem:[%s7696] sm:$0xff]
        %v7698 = vld [vmem:[%s7696 + $0x8] sm:$0xff]
        %v7699 = vld [vmem:[%s7696 + $0x10] sm:$0xff]
        %v7700 = vld [vmem:[%s7696 + $0x18] sm:$0xff]
        %v7701 = vld [vmem:[%s7696 + $0x20] sm:$0xff]
        %v7702 = vld [vmem:[%s7696 + $0x28] sm:$0xff]
        %v7703 = vld [vmem:[%s7696 + $0x30] sm:$0xff]
        %v7704 = vld [vmem:[%s7696 + $0x38] sm:$0xff]
        %v7705 = vld [vmem:[%s7696 + $0x40] sm:$0xff]
        %v7706 = vld [vmem:[%s7696 + $0x48] sm:$0xff]
        %v7707 = vld [vmem:[%s7696 + $0x50] sm:$0xff]
        %v7708 = vld [vmem:[%s7696 + $0x58] sm:$0xff]
        %v7709 = vld [vmem:[%s7696 + $0x60] sm:$0xff]
        %v7710 = vld [vmem:[%s7696 + $0x68] sm:$0xff]
        %v7711 = vld [vmem:[%s7696 + $0x70] sm:$0xff]
        %v7712 = vld [vmem:[%s7696 + $0x78] sm:$0xff]
        %v7713 = vld [vmem:[%s7696 + $0x80] sm:$0xff]
        %v7714 = vld [vmem:[%s7696 + $0x88] sm:$0xff]
        %v7715 = vld [vmem:[%s7696 + $0x90] sm:$0xff]
        %v7716 = vld [vmem:[%s7696 + $0x98] sm:$0xff]
        %v7717 = vld [vmem:[%s7696 + $0xa0] sm:$0xff]
        %v7718 = vld [vmem:[%s7696 + $0xa8] sm:$0xff]
        %v7719 = vld [vmem:[%s7696 + $0xb0] sm:$0xff]
        %v7720 = vld [vmem:[%s7696 + $0xb8] sm:$0xff]
        %v7721 = vld [vmem:[%s7696 + $0xc0] sm:$0xff]
        %v7722 = vld [vmem:[%s7696 + $0xc8] sm:$0xff]
        %v7723 = vld [vmem:[%s7696 + $0xd0] sm:$0xff]
        %v7724 = vld [vmem:[%s7696 + $0xd8] sm:$0xff]
        %v7726 = vlaneseq
        %v7727 = vshrl.u32 %v7726, 7
        %v7728 = vsub.s32 0, %v7727
        %v7729 = vrot.slane %v7695, %v7728
        %v7730 = vlaneseq
        %v7731 = vshrl.u32 %v7730, 7
        %v7732 = vsub.s32 1, %v7731
        %v7733 = vrot.slane %v7695, %v7732
        %v7735 = vsel %vm5115, %v7733, 0
        %7737 = vmatprep.subr.mxu0 0.0
        %7738 = vmatpush1.msra.mxu0 %v7697
        %7739 = vmatprep.subr.mxu0 0.0
        %7740 = vmatpush1.msra.mxu0 %v7698
        %7741 = vmatprep.subr.mxu0 0.0
        %7742 = vmatpush1.msra.mxu0 %v7699
        %7743 = vmatprep.subr.mxu0 0.0
        %7744 = vmatpush1.msra.mxu0 %v7700
        %7745 = vmatprep.subr.mxu0 0.0
        %7746 = vmatpush1.msra.mxu0 %v7701
        %7747 = vmatprep.subr.mxu0 0.0
        %7748 = vmatpush1.msra.mxu0 %v7702
        %7749 = vmatprep.subr.mxu0 0.0
        %7750 = vmatpush1.msra.mxu0 %v7703
        %7751 = vmatprep.subr.mxu0 0.0
        %7752 = vmatpush1.msra.mxu0 %v7704
        %7753 = vmatprep.subr.mxu0 0.0
        %7754 = vmatpush1.msra.mxu0 %v7705
        %7755 = vmatprep.subr.mxu0 0.0
        %7756 = vmatpush1.msra.mxu0 %v7706
        %7757 = vmatprep.subr.mxu0 0.0
        %7758 = vmatpush1.msra.mxu0 %v7707
        %7759 = vmatprep.subr.mxu0 0.0
        %7760 = vmatpush1.msra.mxu0 %v7708
        %7761 = vmatprep.subr.mxu0 0.0
        %7762 = vmatpush1.msra.mxu0 %v7709
        %7763 = vmatprep.subr.mxu0 0.0
        %7764 = vmatpush1.msra.mxu0 %v7710
        %7765 = vmatprep.subr.mxu0 0.0
        %7766 = vmatpush1.msra.mxu0 %v7711
        %7767 = vmatprep.subr.mxu0 0.0
        %7768 = vmatpush1.msra.mxu0 %v7712
        %7769 = vmatprep.subr.mxu0 0.0
        %7770 = vmatpush1.msra.mxu0 %v7713
        %7771 = vmatprep.subr.mxu0 0.0
        %7772 = vmatpush1.msra.mxu0 %v7714
        %7773 = vmatprep.subr.mxu0 0.0
        %7774 = vmatpush1.msra.mxu0 %v7715
        %7775 = vmatprep.subr.mxu0 0.0
        %7776 = vmatpush1.msra.mxu0 %v7716
        %7777 = vmatprep.subr.mxu0 0.0
        %7778 = vmatpush1.msra.mxu0 %v7717
        %7779 = vmatprep.subr.mxu0 0.0
        %7780 = vmatpush1.msra.mxu0 %v7718
        %7781 = vmatprep.subr.mxu0 0.0
        %7782 = vmatpush1.msra.mxu0 %v7719
        %7783 = vmatprep.subr.mxu0 0.0
        %7784 = vmatpush1.msra.mxu0 %v7720
        %7785 = vmatprep.subr.mxu0 0.0
        %7786 = vmatpush1.msra.mxu0 %v7721
        %7787 = vmatprep.subr.mxu0 0.0
        %7788 = vmatpush1.msra.mxu0 %v7722
        %7789 = vmatprep.subr.mxu0 0.0
        %7790 = vmatpush1.msra.mxu0 %v7723
        %7791 = vmatprep.subr.mxu0 0.0
        %7792 = vmatpush1.msra.mxu0 %v7724
        %7793 = vmatprep.subr.mxu0 0.0
        %7794 = vmatpush1.msra.mxu0 0.0
        %7795 = vmatprep.subr.mxu0 0.0
        %7796 = vmatpush1.msra.mxu0 0.0
        %7797 = vmatprep.subr.mxu0 0.0
        %7798 = vmatpush1.msra.mxu0 0.0
        %7799 = vmatprep.subr.mxu0 0.0
        %7800 = vmatpush1.msra.mxu0 0.0
        %7801 = vmatprep.mubr.f32.mxu0 %v7735
        %7802 = vmatmul.mubr.f32.gmra.mrb[0].mxu0 %v7729
        %v7803 = vpop.f32.mrb[0].mxu0
        %v7804 = vadd.f32 0.0, %v7803
        %v7805 = vpop.f32.mrb[0].mxu0
        %7806 = vdwg.mxu0
        %v7807 = vadd.f32 %v7691, %v7804
        %s7808 = scalar_lea.vmem [#allocation4], 3
        %v7809 = vld [vmem:[%s7808] ss:$8 sm:$0x3]
        %s7810 = scalar_lea.vmem [#allocation16], 672
        %v7811 = vld [vmem:[%s7810] sm:$0xff]
        %v7812 = vld [vmem:[%s7810 + $0x8] sm:$0xff]
        %v7813 = vld [vmem:[%s7810 + $0x10] sm:$0xff]
        %v7814 = vld [vmem:[%s7810 + $0x18] sm:$0xff]
        %v7815 = vld [vmem:[%s7810 + $0x20] sm:$0xff]
        %v7816 = vld [vmem:[%s7810 + $0x28] sm:$0xff]
        %v7817 = vld [vmem:[%s7810 + $0x30] sm:$0xff]
        %v7818 = vld [vmem:[%s7810 + $0x38] sm:$0xff]
        %v7819 = vld [vmem:[%s7810 + $0x40] sm:$0xff]
        %v7820 = vld [vmem:[%s7810 + $0x48] sm:$0xff]
        %v7821 = vld [vmem:[%s7810 + $0x50] sm:$0xff]
        %v7822 = vld [vmem:[%s7810 + $0x58] sm:$0xff]
        %v7823 = vld [vmem:[%s7810 + $0x60] sm:$0xff]
        %v7824 = vld [vmem:[%s7810 + $0x68] sm:$0xff]
        %v7825 = vld [vmem:[%s7810 + $0x70] sm:$0xff]
        %v7826 = vld [vmem:[%s7810 + $0x78] sm:$0xff]
        %v7827 = vld [vmem:[%s7810 + $0x80] sm:$0xff]
        %v7828 = vld [vmem:[%s7810 + $0x88] sm:$0xff]
        %v7829 = vld [vmem:[%s7810 + $0x90] sm:$0xff]
        %v7830 = vld [vmem:[%s7810 + $0x98] sm:$0xff]
        %v7831 = vld [vmem:[%s7810 + $0xa0] sm:$0xff]
        %v7832 = vld [vmem:[%s7810 + $0xa8] sm:$0xff]
        %v7833 = vld [vmem:[%s7810 + $0xb0] sm:$0xff]
        %v7834 = vld [vmem:[%s7810 + $0xb8] sm:$0xff]
        %v7835 = vld [vmem:[%s7810 + $0xc0] sm:$0xff]
        %v7836 = vld [vmem:[%s7810 + $0xc8] sm:$0xff]
        %v7837 = vld [vmem:[%s7810 + $0xd0] sm:$0xff]
        %v7838 = vld [vmem:[%s7810 + $0xd8] sm:$0xff]
        %v7840 = vlaneseq
        %v7841 = vshrl.u32 %v7840, 7
        %v7842 = vsub.s32 0, %v7841
        %v7843 = vrot.slane %v7809, %v7842
        %v7844 = vlaneseq
        %v7845 = vshrl.u32 %v7844, 7
        %v7846 = vsub.s32 1, %v7845
        %v7847 = vrot.slane %v7809, %v7846
        %v7849 = vsel %vm5115, %v7847, 0
        %7851 = vmatprep.subr.mxu0 0.0
        %7852 = vmatpush1.msra.mxu0 %v7811
        %7853 = vmatprep.subr.mxu0 0.0
        %7854 = vmatpush1.msra.mxu0 %v7812
        %7855 = vmatprep.subr.mxu0 0.0
        %7856 = vmatpush1.msra.mxu0 %v7813
        %7857 = vmatprep.subr.mxu0 0.0
        %7858 = vmatpush1.msra.mxu0 %v7814
        %7859 = vmatprep.subr.mxu0 0.0
        %7860 = vmatpush1.msra.mxu0 %v7815
        %7861 = vmatprep.subr.mxu0 0.0
        %7862 = vmatpush1.msra.mxu0 %v7816
        %7863 = vmatprep.subr.mxu0 0.0
        %7864 = vmatpush1.msra.mxu0 %v7817
        %7865 = vmatprep.subr.mxu0 0.0
        %7866 = vmatpush1.msra.mxu0 %v7818
        %7867 = vmatprep.subr.mxu0 0.0
        %7868 = vmatpush1.msra.mxu0 %v7819
        %7869 = vmatprep.subr.mxu0 0.0
        %7870 = vmatpush1.msra.mxu0 %v7820
        %7871 = vmatprep.subr.mxu0 0.0
        %7872 = vmatpush1.msra.mxu0 %v7821
        %7873 = vmatprep.subr.mxu0 0.0
        %7874 = vmatpush1.msra.mxu0 %v7822
        %7875 = vmatprep.subr.mxu0 0.0
        %7876 = vmatpush1.msra.mxu0 %v7823
        %7877 = vmatprep.subr.mxu0 0.0
        %7878 = vmatpush1.msra.mxu0 %v7824
        %7879 = vmatprep.subr.mxu0 0.0
        %7880 = vmatpush1.msra.mxu0 %v7825
        %7881 = vmatprep.subr.mxu0 0.0
        %7882 = vmatpush1.msra.mxu0 %v7826
        %7883 = vmatprep.subr.mxu0 0.0
        %7884 = vmatpush1.msra.mxu0 %v7827
        %7885 = vmatprep.subr.mxu0 0.0
        %7886 = vmatpush1.msra.mxu0 %v7828
        %7887 = vmatprep.subr.mxu0 0.0
        %7888 = vmatpush1.msra.mxu0 %v7829
        %7889 = vmatprep.subr.mxu0 0.0
        %7890 = vmatpush1.msra.mxu0 %v7830
        %7891 = vmatprep.subr.mxu0 0.0
        %7892 = vmatpush1.msra.mxu0 %v7831
        %7893 = vmatprep.subr.mxu0 0.0
        %7894 = vmatpush1.msra.mxu0 %v7832
        %7895 = vmatprep.subr.mxu0 0.0
        %7896 = vmatpush1.msra.mxu0 %v7833
        %7897 = vmatprep.subr.mxu0 0.0
        %7898 = vmatpush1.msra.mxu0 %v7834
        %7899 = vmatprep.subr.mxu0 0.0
        %7900 = vmatpush1.msra.mxu0 %v7835
        %7901 = vmatprep.subr.mxu0 0.0
        %7902 = vmatpush1.msra.mxu0 %v7836
        %7903 = vmatprep.subr.mxu0 0.0
        %7904 = vmatpush1.msra.mxu0 %v7837
        %7905 = vmatprep.subr.mxu0 0.0
        %7906 = vmatpush1.msra.mxu0 %v7838
        %7907 = vmatprep.subr.mxu0 0.0
        %7908 = vmatpush1.msra.mxu0 0.0
        %7909 = vmatprep.subr.mxu0 0.0
        %7910 = vmatpush1.msra.mxu0 0.0
        %7911 = vmatprep.subr.mxu0 0.0
        %7912 = vmatpush1.msra.mxu0 0.0
        %7913 = vmatprep.subr.mxu0 0.0
        %7914 = vmatpush1.msra.mxu0 0.0
        %7915 = vmatprep.mubr.f32.mxu0 %v7849
        %7916 = vmatmul.mubr.f32.gmra.mrb[0].mxu0 %v7843
        %v7917 = vpop.f32.mrb[0].mxu0
        %v7918 = vadd.f32 0.0, %v7917
        %v7919 = vpop.f32.mrb[0].mxu0
        %7920 = vdwg.mxu0
        %v7921 = vadd.f32 %v7807, %v7918
        %s7922 = scalar_lea.vmem [#allocation4], 4
        %v7923 = vld [vmem:[%s7922] ss:$8 sm:$0x3]
        %s7924 = scalar_lea.vmem [#allocation16], 896
        %v7925 = vld [vmem:[%s7924] sm:$0xff]
        %v7926 = vld [vmem:[%s7924 + $0x8] sm:$0xff]
        %v7927 = vld [vmem:[%s7924 + $0x10] sm:$0xff]
        %v7928 = vld [vmem:[%s7924 + $0x18] sm:$0xff]
        %v7929 = vld [vmem:[%s7924 + $0x20] sm:$0xff]
        %v7930 = vld [vmem:[%s7924 + $0x28] sm:$0xff]
        %v7931 = vld [vmem:[%s7924 + $0x30] sm:$0xff]
        %v7932 = vld [vmem:[%s7924 + $0x38] sm:$0xff]
        %v7933 = vld [vmem:[%s7924 + $0x40] sm:$0xff]
        %v7934 = vld [vmem:[%s7924 + $0x48] sm:$0xff]
        %v7935 = vld [vmem:[%s7924 + $0x50] sm:$0xff]
        %v7936 = vld [vmem:[%s7924 + $0x58] sm:$0xff]
        %v7937 = vld [vmem:[%s7924 + $0x60] sm:$0xff]
        %v7938 = vld [vmem:[%s7924 + $0x68] sm:$0xff]
        %v7939 = vld [vmem:[%s7924 + $0x70] sm:$0xff]
        %v7940 = vld [vmem:[%s7924 + $0x78] sm:$0xff]
        %v7941 = vld [vmem:[%s7924 + $0x80] sm:$0xff]
        %v7942 = vld [vmem:[%s7924 + $0x88] sm:$0xff]
        %v7943 = vld [vmem:[%s7924 + $0x90] sm:$0xff]
        %v7944 = vld [vmem:[%s7924 + $0x98] sm:$0xff]
        %v7945 = vld [vmem:[%s7924 + $0xa0] sm:$0xff]
        %v7946 = vld [vmem:[%s7924 + $0xa8] sm:$0xff]
        %v7947 = vld [vmem:[%s7924 + $0xb0] sm:$0xff]
        %v7948 = vld [vmem:[%s7924 + $0xb8] sm:$0xff]
        %v7949 = vld [vmem:[%s7924 + $0xc0] sm:$0xff]
        %v7950 = vld [vmem:[%s7924 + $0xc8] sm:$0xff]
        %v7951 = vld [vmem:[%s7924 + $0xd0] sm:$0xff]
        %v7952 = vld [vmem:[%s7924 + $0xd8] sm:$0xff]
        %v7954 = vlaneseq
        %v7955 = vshrl.u32 %v7954, 7
        %v7956 = vsub.s32 0, %v7955
        %v7957 = vrot.slane %v7923, %v7956
        %v7958 = vlaneseq
        %v7959 = vshrl.u32 %v7958, 7
        %v7960 = vsub.s32 1, %v7959
        %v7961 = vrot.slane %v7923, %v7960
        %v7963 = vsel %vm5115, %v7961, 0
        %7965 = vmatprep.subr.mxu0 0.0
        %7966 = vmatpush1.msra.mxu0 %v7925
        %7967 = vmatprep.subr.mxu0 0.0
        %7968 = vmatpush1.msra.mxu0 %v7926
        %7969 = vmatprep.subr.mxu0 0.0
        %7970 = vmatpush1.msra.mxu0 %v7927
        %7971 = vmatprep.subr.mxu0 0.0
        %7972 = vmatpush1.msra.mxu0 %v7928
        %7973 = vmatprep.subr.mxu0 0.0
        %7974 = vmatpush1.msra.mxu0 %v7929
        %7975 = vmatprep.subr.mxu0 0.0
        %7976 = vmatpush1.msra.mxu0 %v7930
        %7977 = vmatprep.subr.mxu0 0.0
        %7978 = vmatpush1.msra.mxu0 %v7931
        %7979 = vmatprep.subr.mxu0 0.0
        %7980 = vmatpush1.msra.mxu0 %v7932
        %7981 = vmatprep.subr.mxu0 0.0
        %7982 = vmatpush1.msra.mxu0 %v7933
        %7983 = vmatprep.subr.mxu0 0.0
        %7984 = vmatpush1.msra.mxu0 %v7934
        %7985 = vmatprep.subr.mxu0 0.0
        %7986 = vmatpush1.msra.mxu0 %v7935
        %7987 = vmatprep.subr.mxu0 0.0
        %7988 = vmatpush1.msra.mxu0 %v7936
        %7989 = vmatprep.subr.mxu0 0.0
        %7990 = vmatpush1.msra.mxu0 %v7937
        %7991 = vmatprep.subr.mxu0 0.0
        %7992 = vmatpush1.msra.mxu0 %v7938
        %7993 = vmatprep.subr.mxu0 0.0
        %7994 = vmatpush1.msra.mxu0 %v7939
        %7995 = vmatprep.subr.mxu0 0.0
        %7996 = vmatpush1.msra.mxu0 %v7940
        %7997 = vmatprep.subr.mxu0 0.0
        %7998 = vmatpush1.msra.mxu0 %v7941
        %7999 = vmatprep.subr.mxu0 0.0
        %8000 = vmatpush1.msra.mxu0 %v7942
        %8001 = vmatprep.subr.mxu0 0.0
        %8002 = vmatpush1.msra.mxu0 %v7943
        %8003 = vmatprep.subr.mxu0 0.0
        %8004 = vmatpush1.msra.mxu0 %v7944
        %8005 = vmatprep.subr.mxu0 0.0
        %8006 = vmatpush1.msra.mxu0 %v7945
        %8007 = vmatprep.subr.mxu0 0.0
        %8008 = vmatpush1.msra.mxu0 %v7946
        %8009 = vmatprep.subr.mxu0 0.0
        %8010 = vmatpush1.msra.mxu0 %v7947
        %8011 = vmatprep.subr.mxu0 0.0
        %8012 = vmatpush1.msra.mxu0 %v7948
        %8013 = vmatprep.subr.mxu0 0.0
        %8014 = vmatpush1.msra.mxu0 %v7949
        %8015 = vmatprep.subr.mxu0 0.0
        %8016 = vmatpush1.msra.mxu0 %v7950
        %8017 = vmatprep.subr.mxu0 0.0
        %8018 = vmatpush1.msra.mxu0 %v7951
        %8019 = vmatprep.subr.mxu0 0.0
        %8020 = vmatpush1.msra.mxu0 %v7952
        %8021 = vmatprep.subr.mxu0 0.0
        %8022 = vmatpush1.msra.mxu0 0.0
        %8023 = vmatprep.subr.mxu0 0.0
        %8024 = vmatpush1.msra.mxu0 0.0
        %8025 = vmatprep.subr.mxu0 0.0
        %8026 = vmatpush1.msra.mxu0 0.0
        %8027 = vmatprep.subr.mxu0 0.0
        %8028 = vmatpush1.msra.mxu0 0.0
        %8029 = vmatprep.mubr.f32.mxu0 %v7963
        %8030 = vmatmul.mubr.f32.gmra.mrb[0].mxu0 %v7957
        %v8031 = vpop.f32.mrb[0].mxu0
        %v8032 = vadd.f32 0.0, %v8031
        %v8033 = vpop.f32.mrb[0].mxu0
        %8034 = vdwg.mxu0
        %v8035 = vadd.f32 %v7921, %v8032
        %s8036 = scalar_lea.vmem [#allocation4], 5
        %v8037 = vld [vmem:[%s8036] ss:$8 sm:$0x3]
        %s8038 = scalar_lea.vmem [#allocation16], 1120
        %v8039 = vld [vmem:[%s8038] sm:$0xff]
        %v8040 = vld [vmem:[%s8038 + $0x8] sm:$0xff]
        %v8041 = vld [vmem:[%s8038 + $0x10] sm:$0xff]
        %v8042 = vld [vmem:[%s8038 + $0x18] sm:$0xff]
        %v8043 = vld [vmem:[%s8038 + $0x20] sm:$0xff]
        %v8044 = vld [vmem:[%s8038 + $0x28] sm:$0xff]
        %v8045 = vld [vmem:[%s8038 + $0x30] sm:$0xff]
        %v8046 = vld [vmem:[%s8038 + $0x38] sm:$0xff]
        %v8047 = vld [vmem:[%s8038 + $0x40] sm:$0xff]
        %v8048 = vld [vmem:[%s8038 + $0x48] sm:$0xff]
        %v8049 = vld [vmem:[%s8038 + $0x50] sm:$0xff]
        %v8050 = vld [vmem:[%s8038 + $0x58] sm:$0xff]
        %v8051 = vld [vmem:[%s8038 + $0x60] sm:$0xff]
        %v8052 = vld [vmem:[%s8038 + $0x68] sm:$0xff]
        %v8053 = vld [vmem:[%s8038 + $0x70] sm:$0xff]
        %v8054 = vld [vmem:[%s8038 + $0x78] sm:$0xff]
        %v8055 = vld [vmem:[%s8038 + $0x80] sm:$0xff]
        %v8056 = vld [vmem:[%s8038 + $0x88] sm:$0xff]
        %v8057 = vld [vmem:[%s8038 + $0x90] sm:$0xff]
        %v8058 = vld [vmem:[%s8038 + $0x98] sm:$0xff]
        %v8059 = vld [vmem:[%s8038 + $0xa0] sm:$0xff]
        %v8060 = vld [vmem:[%s8038 + $0xa8] sm:$0xff]
        %v8061 = vld [vmem:[%s8038 + $0xb0] sm:$0xff]
        %v8062 = vld [vmem:[%s8038 + $0xb8] sm:$0xff]
        %v8063 = vld [vmem:[%s8038 + $0xc0] sm:$0xff]
        %v8064 = vld [vmem:[%s8038 + $0xc8] sm:$0xff]
        %v8065 = vld [vmem:[%s8038 + $0xd0] sm:$0xff]
        %v8066 = vld [vmem:[%s8038 + $0xd8] sm:$0xff]
        %v8068 = vlaneseq
        %v8069 = vshrl.u32 %v8068, 7
        %v8070 = vsub.s32 0, %v8069
        %v8071 = vrot.slane %v8037, %v8070
        %v8072 = vlaneseq
        %v8073 = vshrl.u32 %v8072, 7
        %v8074 = vsub.s32 1, %v8073
        %v8075 = vrot.slane %v8037, %v8074
        %v8077 = vsel %vm5115, %v8075, 0
        %8079 = vmatprep.subr.mxu0 0.0
        %8080 = vmatpush1.msra.mxu0 %v8039
        %8081 = vmatprep.subr.mxu0 0.0
        %8082 = vmatpush1.msra.mxu0 %v8040
        %8083 = vmatprep.subr.mxu0 0.0
        %8084 = vmatpush1.msra.mxu0 %v8041
        %8085 = vmatprep.subr.mxu0 0.0
        %8086 = vmatpush1.msra.mxu0 %v8042
        %8087 = vmatprep.subr.mxu0 0.0
        %8088 = vmatpush1.msra.mxu0 %v8043
        %8089 = vmatprep.subr.mxu0 0.0
        %8090 = vmatpush1.msra.mxu0 %v8044
        %8091 = vmatprep.subr.mxu0 0.0
        %8092 = vmatpush1.msra.mxu0 %v8045
        %8093 = vmatprep.subr.mxu0 0.0
        %8094 = vmatpush1.msra.mxu0 %v8046
        %8095 = vmatprep.subr.mxu0 0.0
        %8096 = vmatpush1.msra.mxu0 %v8047
        %8097 = vmatprep.subr.mxu0 0.0
        %8098 = vmatpush1.msra.mxu0 %v8048
        %8099 = vmatprep.subr.mxu0 0.0
        %8100 = vmatpush1.msra.mxu0 %v8049
        %8101 = vmatprep.subr.mxu0 0.0
        %8102 = vmatpush1.msra.mxu0 %v8050
        %8103 = vmatprep.subr.mxu0 0.0
        %8104 = vmatpush1.msra.mxu0 %v8051
        %8105 = vmatprep.subr.mxu0 0.0
        %8106 = vmatpush1.msra.mxu0 %v8052
        %8107 = vmatprep.subr.mxu0 0.0
        %8108 = vmatpush1.msra.mxu0 %v8053
        %8109 = vmatprep.subr.mxu0 0.0
        %8110 = vmatpush1.msra.mxu0 %v8054
        %8111 = vmatprep.subr.mxu0 0.0
        %8112 = vmatpush1.msra.mxu0 %v8055
        %8113 = vmatprep.subr.mxu0 0.0
        %8114 = vmatpush1.msra.mxu0 %v8056
        %8115 = vmatprep.subr.mxu0 0.0
        %8116 = vmatpush1.msra.mxu0 %v8057
        %8117 = vmatprep.subr.mxu0 0.0
        %8118 = vmatpush1.msra.mxu0 %v8058
        %8119 = vmatprep.subr.mxu0 0.0
        %8120 = vmatpush1.msra.mxu0 %v8059
        %8121 = vmatprep.subr.mxu0 0.0
        %8122 = vmatpush1.msra.mxu0 %v8060
        %8123 = vmatprep.subr.mxu0 0.0
        %8124 = vmatpush1.msra.mxu0 %v8061
        %8125 = vmatprep.subr.mxu0 0.0
        %8126 = vmatpush1.msra.mxu0 %v8062
        %8127 = vmatprep.subr.mxu0 0.0
        %8128 = vmatpush1.msra.mxu0 %v8063
        %8129 = vmatprep.subr.mxu0 0.0
        %8130 = vmatpush1.msra.mxu0 %v8064
        %8131 = vmatprep.subr.mxu0 0.0
        %8132 = vmatpush1.msra.mxu0 %v8065
        %8133 = vmatprep.subr.mxu0 0.0
        %8134 = vmatpush1.msra.mxu0 %v8066
        %8135 = vmatprep.subr.mxu0 0.0
        %8136 = vmatpush1.msra.mxu0 0.0
        %8137 = vmatprep.subr.mxu0 0.0
        %8138 = vmatpush1.msra.mxu0 0.0
        %8139 = vmatprep.subr.mxu0 0.0
        %8140 = vmatpush1.msra.mxu0 0.0
        %8141 = vmatprep.subr.mxu0 0.0
        %8142 = vmatpush1.msra.mxu0 0.0
        %8143 = vmatprep.mubr.f32.mxu0 %v8077
        %8144 = vmatmul.mubr.f32.gmra.mrb[0].mxu0 %v8071
        %v8145 = vpop.f32.mrb[0].mxu0
        %v8146 = vadd.f32 0.0, %v8145
        %v8147 = vpop.f32.mrb[0].mxu0
        %8148 = vdwg.mxu0
        %v8149 = vadd.f32 %v8035, %v8146
        %s8150 = scalar_lea.vmem [#allocation4], 6
        %v8151 = vld [vmem:[%s8150] ss:$8 sm:$0x3]
        %s8152 = scalar_lea.vmem [#allocation16], 1344
        %v8153 = vld [vmem:[%s8152] sm:$0xff]
        %v8154 = vld [vmem:[%s8152 + $0x8] sm:$0xff]
        %v8155 = vld [vmem:[%s8152 + $0x10] sm:$0xff]
        %v8156 = vld [vmem:[%s8152 + $0x18] sm:$0xff]
        %v8157 = vld [vmem:[%s8152 + $0x20] sm:$0xff]
        %v8158 = vld [vmem:[%s8152 + $0x28] sm:$0xff]
        %v8159 = vld [vmem:[%s8152 + $0x30] sm:$0xff]
        %v8160 = vld [vmem:[%s8152 + $0x38] sm:$0xff]
        %v8161 = vld [vmem:[%s8152 + $0x40] sm:$0xff]
        %v8162 = vld [vmem:[%s8152 + $0x48] sm:$0xff]
        %v8163 = vld [vmem:[%s8152 + $0x50] sm:$0xff]
        %v8164 = vld [vmem:[%s8152 + $0x58] sm:$0xff]
        %v8165 = vld [vmem:[%s8152 + $0x60] sm:$0xff]
        %v8166 = vld [vmem:[%s8152 + $0x68] sm:$0xff]
        %v8167 = vld [vmem:[%s8152 + $0x70] sm:$0xff]
        %v8168 = vld [vmem:[%s8152 + $0x78] sm:$0xff]
        %v8169 = vld [vmem:[%s8152 + $0x80] sm:$0xff]
        %v8170 = vld [vmem:[%s8152 + $0x88] sm:$0xff]
        %v8171 = vld [vmem:[%s8152 + $0x90] sm:$0xff]
        %v8172 = vld [vmem:[%s8152 + $0x98] sm:$0xff]
        %v8173 = vld [vmem:[%s8152 + $0xa0] sm:$0xff]
        %v8174 = vld [vmem:[%s8152 + $0xa8] sm:$0xff]
        %v8175 = vld [vmem:[%s8152 + $0xb0] sm:$0xff]
        %v8176 = vld [vmem:[%s8152 + $0xb8] sm:$0xff]
        %v8177 = vld [vmem:[%s8152 + $0xc0] sm:$0xff]
        %v8178 = vld [vmem:[%s8152 + $0xc8] sm:$0xff]
        %v8179 = vld [vmem:[%s8152 + $0xd0] sm:$0xff]
        %v8180 = vld [vmem:[%s8152 + $0xd8] sm:$0xff]
        %v8182 = vlaneseq
        %v8183 = vshrl.u32 %v8182, 7
        %v8184 = vsub.s32 0, %v8183
        %v8185 = vrot.slane %v8151, %v8184
        %v8186 = vlaneseq
        %v8187 = vshrl.u32 %v8186, 7
        %v8188 = vsub.s32 1, %v8187
        %v8189 = vrot.slane %v8151, %v8188
        %v8191 = vsel %vm5115, %v8189, 0
        %8193 = vmatprep.subr.mxu0 0.0
        %8194 = vmatpush1.msra.mxu0 %v8153
        %8195 = vmatprep.subr.mxu0 0.0
        %8196 = vmatpush1.msra.mxu0 %v8154
        %8197 = vmatprep.subr.mxu0 0.0
        %8198 = vmatpush1.msra.mxu0 %v8155
        %8199 = vmatprep.subr.mxu0 0.0
        %8200 = vmatpush1.msra.mxu0 %v8156
        %8201 = vmatprep.subr.mxu0 0.0
        %8202 = vmatpush1.msra.mxu0 %v8157
        %8203 = vmatprep.subr.mxu0 0.0
        %8204 = vmatpush1.msra.mxu0 %v8158
        %8205 = vmatprep.subr.mxu0 0.0
        %8206 = vmatpush1.msra.mxu0 %v8159
        %8207 = vmatprep.subr.mxu0 0.0
        %8208 = vmatpush1.msra.mxu0 %v8160
        %8209 = vmatprep.subr.mxu0 0.0
        %8210 = vmatpush1.msra.mxu0 %v8161
        %8211 = vmatprep.subr.mxu0 0.0
        %8212 = vmatpush1.msra.mxu0 %v8162
        %8213 = vmatprep.subr.mxu0 0.0
        %8214 = vmatpush1.msra.mxu0 %v8163
        %8215 = vmatprep.subr.mxu0 0.0
        %8216 = vmatpush1.msra.mxu0 %v8164
        %8217 = vmatprep.subr.mxu0 0.0
        %8218 = vmatpush1.msra.mxu0 %v8165
        %8219 = vmatprep.subr.mxu0 0.0
        %8220 = vmatpush1.msra.mxu0 %v8166
        %8221 = vmatprep.subr.mxu0 0.0
        %8222 = vmatpush1.msra.mxu0 %v8167
        %8223 = vmatprep.subr.mxu0 0.0
        %8224 = vmatpush1.msra.mxu0 %v8168
        %8225 = vmatprep.subr.mxu0 0.0
        %8226 = vmatpush1.msra.mxu0 %v8169
        %8227 = vmatprep.subr.mxu0 0.0
        %8228 = vmatpush1.msra.mxu0 %v8170
        %8229 = vmatprep.subr.mxu0 0.0
        %8230 = vmatpush1.msra.mxu0 %v8171
        %8231 = vmatprep.subr.mxu0 0.0
        %8232 = vmatpush1.msra.mxu0 %v8172
        %8233 = vmatprep.subr.mxu0 0.0
        %8234 = vmatpush1.msra.mxu0 %v8173
        %8235 = vmatprep.subr.mxu0 0.0
        %8236 = vmatpush1.msra.mxu0 %v8174
        %8237 = vmatprep.subr.mxu0 0.0
        %8238 = vmatpush1.msra.mxu0 %v8175
        %8239 = vmatprep.subr.mxu0 0.0
        %8240 = vmatpush1.msra.mxu0 %v8176
        %8241 = vmatprep.subr.mxu0 0.0
        %8242 = vmatpush1.msra.mxu0 %v8177
        %8243 = vmatprep.subr.mxu0 0.0
        %8244 = vmatpush1.msra.mxu0 %v8178
        %8245 = vmatprep.subr.mxu0 0.0
        %8246 = vmatpush1.msra.mxu0 %v8179
        %8247 = vmatprep.subr.mxu0 0.0
        %8248 = vmatpush1.msra.mxu0 %v8180
        %8249 = vmatprep.subr.mxu0 0.0
        %8250 = vmatpush1.msra.mxu0 0.0
        %8251 = vmatprep.subr.mxu0 0.0
        %8252 = vmatpush1.msra.mxu0 0.0
        %8253 = vmatprep.subr.mxu0 0.0
        %8254 = vmatpush1.msra.mxu0 0.0
        %8255 = vmatprep.subr.mxu0 0.0
        %8256 = vmatpush1.msra.mxu0 0.0
        %8257 = vmatprep.mubr.f32.mxu0 %v8191
        %8258 = vmatmul.mubr.f32.gmra.mrb[0].mxu0 %v8185
        %v8259 = vpop.f32.mrb[0].mxu0
        %v8260 = vadd.f32 0.0, %v8259
        %v8261 = vpop.f32.mrb[0].mxu0
        %8262 = vdwg.mxu0
        %v8263 = vadd.f32 %v8149, %v8260
        %v8264 = vld [vmem:[#allocation17] sm:$0x1]
        %v8265 = vadd.f32 %v8263, %v8264
        %v8266 = vmax.f32 %v8265, 0.0
        %v8267 = vld [vmem:[#allocation19] sm:$0xff]
        %v8268 = vld [vmem:[#allocation19 + $0x8] sm:$0xff]
        %v8269 = vld [vmem:[#allocation19 + $0x10] sm:$0xff]
        %v8270 = vld [vmem:[#allocation19 + $0x18] sm:$0xff]
        %v8271 = vld [vmem:[#allocation19 + $0x20] sm:$0xff]
        %v8272 = vld [vmem:[#allocation19 + $0x28] sm:$0xff]
        %v8273 = vld [vmem:[#allocation19 + $0x30] sm:$0xff]
        %v8274 = vld [vmem:[#allocation19 + $0x38] sm:$0xff]
        %v8275 = vld [vmem:[#allocation19 + $0x40] sm:$0xff]
        %v8276 = vld [vmem:[#allocation19 + $0x48] sm:$0xff]
        %v8277 = vld [vmem:[#allocation19 + $0x50] sm:$0xff]
        %v8278 = vld [vmem:[#allocation19 + $0x58] sm:$0xff]
        %v8279 = vld [vmem:[#allocation19 + $0x60] sm:$0xff]
        %v8280 = vld [vmem:[#allocation19 + $0x68] sm:$0xff]
        %v8281 = vld [vmem:[#allocation19 + $0x70] sm:$0xff]
        %v8282 = vld [vmem:[#allocation19 + $0x78] sm:$0xff]
        %v8283 = vld [vmem:[#allocation20] sm:$0x1]
        %8284 = vmatprep.subr.mxu0 0.0
        %8285 = vmatpush1.msra.mxu0 %v8267
        %8286 = vmatprep.subr.mxu0 0.0
        %8287 = vmatpush1.msra.mxu0 %v8268
        %8288 = vmatprep.subr.mxu0 0.0
        %8289 = vmatpush1.msra.mxu0 %v8269
        %8290 = vmatprep.subr.mxu0 0.0
        %8291 = vmatpush1.msra.mxu0 %v8270
        %8292 = vmatprep.subr.mxu0 0.0
        %8293 = vmatpush1.msra.mxu0 %v8271
        %8294 = vmatprep.subr.mxu0 0.0
        %8295 = vmatpush1.msra.mxu0 %v8272
        %8296 = vmatprep.subr.mxu0 0.0
        %8297 = vmatpush1.msra.mxu0 %v8273
        %8298 = vmatprep.subr.mxu0 0.0
        %8299 = vmatpush1.msra.mxu0 %v8274
        %8300 = vmatprep.subr.mxu0 0.0
        %8301 = vmatpush1.msra.mxu0 %v8275
        %8302 = vmatprep.subr.mxu0 0.0
        %8303 = vmatpush1.msra.mxu0 %v8276
        %8304 = vmatprep.subr.mxu0 0.0
        %8305 = vmatpush1.msra.mxu0 %v8277
        %8306 = vmatprep.subr.mxu0 0.0
        %8307 = vmatpush1.msra.mxu0 %v8278
        %8308 = vmatprep.subr.mxu0 0.0
        %8309 = vmatpush1.msra.mxu0 %v8279
        %8310 = vmatprep.subr.mxu0 0.0
        %8311 = vmatpush1.msra.mxu0 %v8280
        %8312 = vmatprep.subr.mxu0 0.0
        %8313 = vmatpush1.msra.mxu0 %v8281
        %8314 = vmatprep.subr.mxu0 0.0
        %8315 = vmatpush1.msra.mxu0 %v8282
        %8316 = vmatprep.subr.mxu0 0.0
        %8317 = vmatpush1.msra.mxu0 0.0
        %8318 = vmatprep.subr.mxu0 0.0
        %8319 = vmatpush1.msra.mxu0 0.0
        %8320 = vmatprep.subr.mxu0 0.0
        %8321 = vmatpush1.msra.mxu0 0.0
        %8322 = vmatprep.subr.mxu0 0.0
        %8323 = vmatpush1.msra.mxu0 0.0
        %8324 = vmatprep.subr.mxu0 0.0
        %8325 = vmatpush1.msra.mxu0 0.0
        %8326 = vmatprep.subr.mxu0 0.0
        %8327 = vmatpush1.msra.mxu0 0.0
        %8328 = vmatprep.subr.mxu0 0.0
        %8329 = vmatpush1.msra.mxu0 0.0
        %8330 = vmatprep.subr.mxu0 0.0
        %8331 = vmatpush1.msra.mxu0 0.0
        %8332 = vmatprep.subr.mxu0 0.0
        %8333 = vmatpush1.msra.mxu0 0.0
        %8334 = vmatprep.subr.mxu0 0.0
        %8335 = vmatpush1.msra.mxu0 0.0
        %8336 = vmatprep.subr.mxu0 0.0
        %8337 = vmatpush1.msra.mxu0 0.0
        %8338 = vmatprep.subr.mxu0 0.0
        %8339 = vmatpush1.msra.mxu0 0.0
        %8340 = vmatprep.subr.mxu0 0.0
        %8341 = vmatpush1.msra.mxu0 0.0
        %8342 = vmatprep.subr.mxu0 0.0
        %8343 = vmatpush1.msra.mxu0 0.0
        %8344 = vmatprep.subr.mxu0 0.0
        %8345 = vmatpush1.msra.mxu0 0.0
        %8346 = vmatprep.subr.mxu0 0.0
        %8347 = vmatpush1.msra.mxu0 0.0
        %8348 = vmatprep.mubr.f32.mxu0 0.0
        %8349 = vmatmul.mubr.f32.gmra.mrb[0].mxu0 %v8266
        %v8350 = vpop.f32.mrb[0].mxu0
        %v8351 = vadd.f32 %v8283, %v8350
        %v8352 = vpop.f32.mrb[0].mxu0
        %8353 = vdwg.mxu0
        %8354 = vst [vmem:[%s570] sm:$0x1] %v8351
        %s8355 = sand.u32 %s319, 1
        %s8356 = scalar_lea.sflag [#allocation7], %s8355
        %s8357 = sand.u32 %s319, 1
        %s8358 = scalar_lea.vmem [#allocation22], %s8357
        // Predicated region
        $region113: #{_lambda_.1} parent=71 // pred_check
          %p8359 = pneg %p329
        $region114: #{_lambda_.1} parent=71 // pred_check_branch
          %8361 = sbr.rel (%p8359) target = $region116
        $region115: #{_lambda_.1} parent=71 // pred_region
          %s8363 = ssub.s32 16, 16
          %8364 = vsyncadd %s8356, %s8363
          %s8365 = smul.addr %s33, 16
          %s8366 = scalar_lea.hbm %s13, %s8365
          %s8368 = sshll.u32 %s8358, 4
          %s8369 = int_to_ptr.vmem [resolvable:$true] %s8368
          %8371 = dma.vmem_to_hbm [thread:$0]  %s8369, 16, %s8366, %s8356
        $region116: #{_lambda_.1} parent=71 // pred_fallthru
          _
      $region72: #{_lambda_.1} parent=5 // pred_fallthru
        _
      %p8372 = scmp.le.s32.totalorder 2, %s28
      // Predicated region
      $region117: #{_lambda_.1} parent=5 // pred_check
        %p8373 = pneg %p8372
      $region118: #{_lambda_.1} parent=5 // pred_check_branch
        %8375 = sbr.rel (%p8373) target = $region120
      $region119: #{_lambda_.1} parent=5 // pred_region
        %s8376 = ssub.s32 %s28, 2
        // Predicated region
        $region121: #{_lambda_.1} parent=119 // pred_check
          %p8377 = pneg %p335
        $region122: #{_lambda_.1} parent=119 // pred_check_branch
          %8379 = sbr.rel (%p8377) target = $region124
        $region123: #{_lambda_.1} parent=119 // pred_region
          %s8380 = sand.u32 %s320, 1
          %s8381 = scalar_lea.sflag [#allocation7], %s8380
          %s8382 = sand.u32 %s320, 1
          %s8383 = scalar_lea.vmem [#allocation22], %s8382
          %8384 = dma.done %s8381, 16
        $region124: #{_lambda_.1} parent=119 // pred_fallthru
          _
      $region120: #{_lambda_.1} parent=5 // pred_fallthru
        _
    $region6: #{_lambda_.1} parent=1 // loop_footer
      %s32 = sadd.s32 1, %s28
    $region7: #{_lambda_.1} parent=1 // loop_footer_branch
      %27 = sbr.rel target = $region3
    $region8: #{_lambda_.1} parent=1 // loop_exit
      _
    %8385 = vsyncpa [#allocation6], 1
    %s8386 = scalar_lea.sflag [#allocation6], 1
    %8387 = vsyncpa %s8386, 1
    %8388 = vsyncpa [#allocation9], 1
    %8389 = vsyncpa [#allocation12], 1
    %8390 = vsyncpa [#allocation15], 1
    %8391 = vsyncpa [#allocation18], 1
    %8392 = vsyncpa [#allocation21], 1
    %8393 = vsyncpa [#allocation7], 1
    %s8394 = scalar_lea.sflag [#allocation7], 1
    %8395 = vsyncpa %s8394, 1

</llo_original>
